<compile_context>
chip_gen: v5e
topology: v5e:2x2
jax: 0.10.0
libtpu: 0.0.40
codegen_flags: <defaults>
</compile_context>

<pallas_src>
import jax
import jax.numpy as jnp
import numpy as np
from jax.experimental import pallas as pl
from jax.experimental.pallas import tpu as pltpu

# ----------------------------------------------------------------------------
# Fixed geometry implied by the module (32x32 input).
# ----------------------------------------------------------------------------
H1, W1 = 32, 32
H2, W2 = 16, 16
H3, W3 = 8, 8
HF, WF = 4, 4                    # final pooled spatial (Flatten -> 4*4*64)
C0, C1, C2, C3 = 3, 32, 32, 64   # channels: in, conv1, conv2, conv3
WP2 = W2 + 4                     # 20: padded row stride of stage-2 input
WP3 = W3 + 4                     # 12: padded row stride of stage-3 input
K1 = 25 * C0                     # 75:  conv1 im2col contraction depth
K2 = 5 * C1                      # 160: conv2 kw-packed contraction depth
K3 = 5 * C2                      # 160: conv3 kw-packed contraction depth
R2 = (H2 + 4) * WP2              # 400: rows of stage-2 packed buffer
R3 = (H3 + 4) * WP3              # 144: rows of stage-3 packed buffer


# ----------------------------------------------------------------------------
# Single fused kernel: whole network for one image per grid step.
# ----------------------------------------------------------------------------
def fused_net_kernel(x_ref, w1_ref, b1_ref, w2_ref, b2_ref, w3_ref, b3_ref,
                     w4_ref, b4_ref, w5_ref, b5_ref, o_ref,
                     conv_sc, conv3_sc, wide2, wide3, flat_sc):
    f32 = jnp.float32

    # Zero the kw-packed padded buffers: every row/lane-group that is never
    # written below is exactly the conv zero-padding halo.
    wide2[...] = jnp.zeros(wide2.shape, f32)
    wide3[...] = jnp.zeros(wide3.shape, f32)

    def pool_rows(src_ref, h, w, row_stride, emit):
        """2x2 max-pool of a conv output stored row-major with row stride
        `row_stride` (valid width w); emits one pooled row at a time."""
        wo = w // 2
        col = jax.lax.broadcasted_iota(jnp.int32, (wo, w), 1)
        row = jax.lax.broadcasted_iota(jnp.int32, (wo, w), 0)
        sel_e = (col == 2 * row).astype(f32)        # picks column 2j
        sel_o = (col == 2 * row + 1).astype(f32)    # picks column 2j+1
        for i in range(h // 2):
            top = src_ref[pl.ds((2 * i) * row_stride, w), :]
            bot = src_ref[pl.ds((2 * i + 1) * row_stride, w), :]
            m = jnp.maximum(top, bot)                               # (w, C)
            pooled = jnp.maximum(
                jnp.dot(sel_e, m, preferred_element_type=f32),
                jnp.dot(sel_o, m, preferred_element_type=f32))      # (wo, C)
            emit(i, pooled, wo)

    def emit_wide(dst_ref, wp, c):
        # dst[r, kw*c + ch] == padded_next_input.flat[r + kw, ch]; writing each
        # pooled row into 5 kw-shifted lane groups builds the K = 5*c packed
        # (im2col-along-width) input of the next conv with no reshape/concat.
        def emit(i, pooled, wo):
            base = (i + 2) * wp + 2
            for kw in range(5):
                dst_ref[pl.ds(base - kw, wo), pl.ds(kw * c, c)] = pooled
        return emit

    # ---- stage 1: Conv2d(3,32,5,p=2) as ONE K=75 matmul, + bias, + pool ----
    conv_sc[...] = (jnp.dot(x_ref[0], w1_ref[...],
                            preferred_element_type=f32) + b1_ref[...])
    pool_rows(conv_sc, H1, W1, W1, emit_wide(wide2, WP2, C1))

    # ---- stage 2: Conv2d(32,32,5,p=2) as 5 K=160 matmuls, + bias, + pool ---
    acc = jnp.zeros((H2 * WP2, C2), f32)
    for kh in range(5):
        acc += jnp.dot(wide2[pl.ds(kh * WP2, H2 * WP2), :], w2_ref[kh],
                       preferred_element_type=f32)
    conv_sc[pl.ds(0, H2 * WP2), :] = acc + b2_ref[...]
    pool_rows(conv_sc, H2, W2, WP2, emit_wide(wide3, WP3, C2))

    # ---- stage 3: Conv2d(32,64,5,p=2) as 5 K=160 matmuls, + bias, + pool ---
    acc = jnp.zeros((H3 * WP3, C3), f32)
    for kh in range(5):
        acc += jnp.dot(wide3[pl.ds(kh * WP3, H3 * WP3), :], w3_ref[kh],
                       preferred_element_type=f32)
    conv3_sc[...] = acc + b3_ref[...]

    def emit_flat(i, pooled, wo):
        flat_sc[pl.ds(i * WF, WF), :] = pooled      # row s = i*4 + j
    pool_rows(conv3_sc, H3, W3, WP3, emit_flat)

    # ---- Flatten + Linear(1024,64) + Linear(64,10), all in VMEM ------------
    # w4 is stored as (s, cin, out) so the NHWC (spatial, channel) features
    # contract directly — NCHW-flatten permutation is folded into the weight.
    h = b4_ref[...]                                  # (1, 64)
    for s in range(HF * WF):
        h = h + jnp.dot(flat_sc[pl.ds(s, 1), :], w4_ref[s],
                        preferred_element_type=f32)
    o_ref[0] = (jnp.dot(h, w5_ref[...], preferred_element_type=f32)
                + b5_ref[...])


# ----------------------------------------------------------------------------
# Wrapper: one pallas_call for the whole forward pass.
# ----------------------------------------------------------------------------
def network_forward(x_nchw, params):
    n = x_nchw.shape[0]

    # conv1 im2col (K = 5*5*3 = 75): replaces 25 tiny K=3 MXU pushes with one
    # lane-dense contraction; also absorbs the NCHW->NHWC transpose. The only
    # wrapper-side pad left acts on the tiny 3-channel input.
    x = jnp.transpose(x_nchw, (0, 2, 3, 1))
    xp = jnp.pad(x, ((0, 0), (2, 2), (2, 2), (0, 0)))
    patches = jnp.concatenate(
        [xp[:, kh:kh + H1, kw:kw + W1, :]
         for kh in range(5) for kw in range(5)],
        axis=-1).reshape(n, H1 * W1, K1)

    w1 = params["w1"].reshape(K1, C1)       # rows ordered (kh, kw, cin)
    w2 = params["w2"].reshape(5, K2, C2)    # (kh, kw*Cin + cin, cout)
    w3 = params["w3"].reshape(5, K3, C3)

    def whole(shape):
        return pl.BlockSpec(shape, lambda i: (0,) * len(shape))

    out = pl.pallas_call(
        fused_net_kernel,
        out_shape=jax.ShapeDtypeStruct((n, 1, 10), jnp.float32),
        grid=(n,),
        in_specs=[
            pl.BlockSpec((1, H1 * W1, K1), lambda i: (i, 0, 0)),
            whole((K1, C1)), whole((1, C1)),
            whole((5, K2, C2)), whole((1, C2)),
            whole((5, K3, C3)), whole((1, C3)),
            whole((HF * WF, C3, 64)), whole((1, 64)),
            whole((64, 10)), whole((1, 10)),
        ],
        out_specs=pl.BlockSpec((1, 1, 10), lambda i: (i, 0, 0)),
        scratch_shapes=[
            pltpu.VMEM((H1 * W1, C1), jnp.float32),   # conv1/conv2 output rows
            pltpu.VMEM((H3 * WP3, C3), jnp.float32),  # conv3 output rows
            pltpu.VMEM((R2, K2), jnp.float32),        # stage-2 kw-packed input
            pltpu.VMEM((R3, K3), jnp.float32),        # stage-3 kw-packed input
            pltpu.VMEM((HF * WF, C3), jnp.float32),   # flattened (16, 64) feats
        ],
        compiler_params=pltpu.CompilerParams(
            dimension_semantics=("parallel",)),       # shard batch over 2 TCs (v7x)
    )(patches, w1, params["b1"], w2, params["b2"], w3, params["b3"],
      params["w4"], params["b4"], params["w5"], params["b5"])
    return out.reshape(n, 10)


# ----------------------------------------------------------------------------
# Pure-JAX reference (same math, same weight layout conventions).
# ----------------------------------------------------------------------------
def reference_forward(x_nchw, params):
    x = jnp.transpose(x_nchw, (0, 2, 3, 1))

    def conv(x, w, b):
        y = jax.lax.conv_general_dilated(
            x, w, window_strides=(1, 1), padding="SAME",
            dimension_numbers=("NHWC", "HWIO", "NHWC"))
        return y + b.reshape(1, 1, 1, -1)

    def pool(x):
        n, h, w, c = x.shape
        return x.reshape(n, h // 2, 2, w // 2, 2, c).max(axis=(2, 4))

    x = pool(conv(x, params["w1"], params["b1"]))
    x = pool(conv(x, params["w2"], params["b2"]))
    x = pool(conv(x, params["w3"], params["b3"]))
    h = jnp.einsum("nsc,sco->no", x.reshape(x.shape[0], HF * WF, C3),
                   params["w4"]) + params["b4"]
    return jnp.dot(h, params["w5"]) + params["b5"]


# ----------------------------------------------------------------------------
# Deterministic PyTorch-style init. Conv weights HWIO; fc1 weight stored as
# (s=i*4+j, cin, out), i.e. w4[s, c, o] == torch_fc1.weight[o, c*16 + s]
# (nn.Flatten's NCHW ordering folded into the weight layout).
# ----------------------------------------------------------------------------
def _uniform(key, shape, fan_in):
    bound = 1.0 / np.sqrt(fan_in)
    return jax.random.uniform(key, shape, jnp.float32, -bound, bound)


def init_params(key):
    ks = jax.random.split(key, 10)
    p = {}
    p["w1"] = _uniform(ks[0], (5, 5, 3, 32), 3 * 25)
    p["b1"] = _uniform(ks[1], (1, 32), 3 * 25)
    p["w2"] = _uniform(ks[2], (5, 5, 32, 32), 32 * 25)
    p["b2"] = _uniform(ks[3], (1, 32), 32 * 25)
    p["w3"] = _uniform(ks[4], (5, 5, 32, 64), 32 * 25)
    p["b3"] = _uniform(ks[5], (1, 64), 32 * 25)
    p["w4"] = _uniform(ks[6], (HF * WF, 64, 64), 64 * 4 * 4)
    p["b4"] = _uniform(ks[7], (1, 64), 64 * 4 * 4)
    p["w5"] = _uniform(ks[8], (64, 10), 64)
    p["b5"] = _uniform(ks[9], (1, 10), 64)
    return p


if __name__ == "__main__":
    key = jax.random.PRNGKey(0)
    # Spatial size must be 32 so that 3 pools give 4x4 (Flatten -> 64*4*4).
    x = jax.random.normal(key, (2, 3, 32, 32), jnp.float32)
    params = init_params(jax.random.PRNGKey(42))

    fwd = jax.jit(network_forward)
    out = fwd(x, params)
    jax.block_until_ready(out)

    assert out.shape == (2, 10), out.shape
    assert out.dtype == jnp.float32

    ref = reference_forward(x, params)
    np.testing.assert_allclose(np.asarray(out), np.asarray(ref),
                               rtol=3e-2, atol=3e-2)
    print("KERNEL_OK")
</pallas_src>

<mosaic_0001>
module attributes {stable_mosaic.version = 11 : i64} {
  func.func @fused_net_kernel(%arg0: i32, %arg1: memref<1x1024x75xf32, #tpu.memory_space<vmem>>, %arg2: memref<75x32xf32, #tpu.memory_space<vmem>>, %arg3: memref<1x32xf32, #tpu.memory_space<vmem>>, %arg4: memref<5x160x32xf32, #tpu.memory_space<vmem>>, %arg5: memref<1x32xf32, #tpu.memory_space<vmem>>, %arg6: memref<5x160x64xf32, #tpu.memory_space<vmem>>, %arg7: memref<1x64xf32, #tpu.memory_space<vmem>>, %arg8: memref<16x64x64xf32, #tpu.memory_space<vmem>>, %arg9: memref<1x64xf32, #tpu.memory_space<vmem>>, %arg10: memref<64x10xf32, #tpu.memory_space<vmem>>, %arg11: memref<1x10xf32, #tpu.memory_space<vmem>>, %arg12: memref<1x1x10xf32, #tpu.memory_space<vmem>>, %arg13: memref<1024x32xf32, #tpu.memory_space<vmem>>, %arg14: memref<96x64xf32, #tpu.memory_space<vmem>>, %arg15: memref<400x160xf32, #tpu.memory_space<vmem>>, %arg16: memref<144x160xf32, #tpu.memory_space<vmem>>, %arg17: memref<16x64xf32, #tpu.memory_space<vmem>>) attributes {dimension_semantics = [#tpu.dimension_semantics<parallel>], iteration_bounds = array<i64: 2>, scalar_prefetch = 0 : i64, scratch_operands = 5 : i64, tpu.core_type = #tpu.core_type<tc>, window_params = [{transform_indices = @transform_0, window_bounds = array<i64: 1, 1024, 75>}, {pipeline_mode = #tpu.pipeline_mode<synchronous>, transform_indices = @transform_1, window_bounds = array<i64: 75, 32>}, {pipeline_mode = #tpu.pipeline_mode<synchronous>, transform_indices = @transform_2, window_bounds = array<i64: 1, 32>}, {pipeline_mode = #tpu.pipeline_mode<synchronous>, transform_indices = @transform_3, window_bounds = array<i64: 5, 160, 32>}, {pipeline_mode = #tpu.pipeline_mode<synchronous>, transform_indices = @transform_4, window_bounds = array<i64: 1, 32>}, {pipeline_mode = #tpu.pipeline_mode<synchronous>, transform_indices = @transform_5, window_bounds = array<i64: 5, 160, 64>}, {pipeline_mode = #tpu.pipeline_mode<synchronous>, transform_indices = @transform_6, window_bounds = array<i64: 1, 64>}, {pipeline_mode = #tpu.pipeline_mode<synchronous>, transform_indices = @transform_7, window_bounds = array<i64: 16, 64, 64>}, {pipeline_mode = #tpu.pipeline_mode<synchronous>, transform_indices = @transform_8, window_bounds = array<i64: 1, 64>}, {pipeline_mode = #tpu.pipeline_mode<synchronous>, transform_indices = @transform_9, window_bounds = array<i64: 64, 10>}, {pipeline_mode = #tpu.pipeline_mode<synchronous>, transform_indices = @transform_10, window_bounds = array<i64: 1, 10>}, {transform_indices = @transform_11, window_bounds = array<i64: 1, 1, 10>}]} {
    %cst = arith.constant 0.000000e+00 : f32
    %0 = vector.broadcast %cst : f32 to vector<400x160xf32>
    %c0 = arith.constant 0 : index
    %c0_0 = arith.constant 0 : index
    %1 = vector.load %arg15[%c0, %c0_0] : memref<400x160xf32, #tpu.memory_space<vmem>>, vector<400x160xf32>
    tpu.vector_store %arg15[%c0, %c0_0], %0 {strides = array<i32>} : memref<400x160xf32, #tpu.memory_space<vmem>>, vector<400x160xf32>,
    %cst_1 = arith.constant 0.000000e+00 : f32
    %2 = vector.broadcast %cst_1 : f32 to vector<144x160xf32>
    %c0_2 = arith.constant 0 : index
    %c0_3 = arith.constant 0 : index
    %3 = vector.load %arg16[%c0_2, %c0_3] : memref<144x160xf32, #tpu.memory_space<vmem>>, vector<144x160xf32>
    tpu.vector_store %arg16[%c0_2, %c0_3], %2 {strides = array<i32>} : memref<144x160xf32, #tpu.memory_space<vmem>>, vector<144x160xf32>,
    %c0_4 = arith.constant 0 : index
    %c0_5 = arith.constant 0 : index
    %c0_6 = arith.constant 0 : index
    %4 = vector.load %arg1[%c0_4, %c0_5, %c0_6] : memref<1x1024x75xf32, #tpu.memory_space<vmem>>, vector<1x1024x75xf32>
    %5 = vector.shape_cast %4 : vector<1x1024x75xf32> to vector<1024x75xf32>
    %c0_7 = arith.constant 0 : index
    %c0_8 = arith.constant 0 : index
    %6 = vector.load %arg2[%c0_7, %c0_8] : memref<75x32xf32, #tpu.memory_space<vmem>>, vector<75x32xf32>
    %cst_9 = arith.constant dense<0.000000e+00> : vector<1024x32xf32>
    %7 = tpu.matmul %5, %6, %cst_9 {dimension_numbers = #tpu.dot_dimension_numbers<[1], [0], [0], [1], [0, 0, 1, 1], [], []>} : vector<1024x75xf32>, vector<75x32xf32>, vector<1024x32xf32> -> vector<1024x32xf32>
    %c0_10 = arith.constant 0 : index
    %c0_11 = arith.constant 0 : index
    %8 = vector.load %arg3[%c0_10, %c0_11] : memref<1x32xf32, #tpu.memory_space<vmem>>, vector<1x32xf32>
    %9 = vector.broadcast %8 : vector<1x32xf32> to vector<1024x32xf32>
    %10 = arith.addf %7, %9 : vector<1024x32xf32>
    %c0_12 = arith.constant 0 : index
    %c0_13 = arith.constant 0 : index
    %11 = vector.load %arg13[%c0_12, %c0_13] : memref<1024x32xf32, #tpu.memory_space<vmem>>, vector<1024x32xf32>
    tpu.vector_store %arg13[%c0_12, %c0_13], %10 {strides = array<i32>} : memref<1024x32xf32, #tpu.memory_space<vmem>>, vector<1024x32xf32>,
    %12 = tpu.iota {dimensions = array<i32: 1>} : vector<16x32xi32>
    %13 = tpu.iota {dimensions = array<i32: 0>} : vector<16x32xi32>
    %c2_i32 = arith.constant 2 : i32
    %14 = vector.broadcast %c2_i32 : i32 to vector<16x32xi32>
    %15 = arith.muli %14, %13 : vector<16x32xi32>
    %16 = arith.cmpi eq, %12, %15 : vector<16x32xi32>
    %17 = arith.extui %16 : vector<16x32xi1> to vector<16x32xi32>
    %18 = arith.sitofp %17 : vector<16x32xi32> to vector<16x32xf32>
    %c2_i32_14 = arith.constant 2 : i32
    %19 = vector.broadcast %c2_i32_14 : i32 to vector<16x32xi32>
    %20 = arith.muli %19, %13 : vector<16x32xi32>
    %c1_i32 = arith.constant 1 : i32
    %21 = vector.broadcast %c1_i32 : i32 to vector<16x32xi32>
    %22 = arith.addi %20, %21 : vector<16x32xi32>
    %23 = arith.cmpi eq, %12, %22 : vector<16x32xi32>
    %24 = arith.extui %23 : vector<16x32xi1> to vector<16x32xi32>
    %25 = arith.sitofp %24 : vector<16x32xi32> to vector<16x32xf32>
    %c0_15 = arith.constant 0 : index
    %c0_16 = arith.constant 0 : index
    %26 = vector.load %arg13[%c0_15, %c0_16] : memref<1024x32xf32, #tpu.memory_space<vmem>>, vector<32x32xf32>
    %c32 = arith.constant 32 : index
    %c0_17 = arith.constant 0 : index
    %27 = vector.load %arg13[%c32, %c0_17] : memref<1024x32xf32, #tpu.memory_space<vmem>>, vector<32x32xf32>
    %28 = arith.maximumf %26, %27 : vector<32x32xf32>
    %cst_18 = arith.constant dense<0.000000e+00> : vector<16x32xf32>
    %29 = tpu.matmul %18, %28, %cst_18 {dimension_numbers = #tpu.dot_dimension_numbers<[1], [0], [0], [1], [0, 0, 1, 1], [], []>} : vector<16x32xf32>, vector<32x32xf32>, vector<16x32xf32> -> vector<16x32xf32>
    %cst_19 = arith.constant dense<0.000000e+00> : vector<16x32xf32>
    %30 = tpu.matmul %25, %28, %cst_19 {dimension_numbers = #tpu.dot_dimension_numbers<[1], [0], [0], [1], [0, 0, 1, 1], [], []>} : vector<16x32xf32>, vector<32x32xf32>, vector<16x32xf32> -> vector<16x32xf32>
    %31 = arith.maximumf %29, %30 : vector<16x32xf32>
    %c42 = arith.constant 42 : index
    %c0_20 = arith.constant 0 : index
    %32 = vector.load %arg15[%c42, %c0_20] : memref<400x160xf32, #tpu.memory_space<vmem>>, vector<16x32xf32>
    tpu.vector_store %arg15[%c42, %c0_20], %31 {strides = array<i32>} : memref<400x160xf32, #tpu.memory_space<vmem>>, vector<16x32xf32>,
    %c41 = arith.constant 41 : index
    %c32_21 = arith.constant 32 : index
    %33 = vector.load %arg15[%c41, %c32_21] : memref<400x160xf32, #tpu.memory_space<vmem>>, vector<16x32xf32>
    tpu.vector_store %arg15[%c41, %c32_21], %31 {strides = array<i32>} : memref<400x160xf32, #tpu.memory_space<vmem>>, vector<16x32xf32>,
    %c40 = arith.constant 40 : index
    %c64 = arith.constant 64 : index
    %34 = vector.load %arg15[%c40, %c64] : memref<400x160xf32, #tpu.memory_space<vmem>>, vector<16x32xf32>
    tpu.vector_store %arg15[%c40, %c64], %31 {strides = array<i32>} : memref<400x160xf32, #tpu.memory_space<vmem>>, vector<16x32xf32>,
    %c39 = arith.constant 39 : index
    %c96 = arith.constant 96 : index
    %35 = vector.load %arg15[%c39, %c96] : memref<400x160xf32, #tpu.memory_space<vmem>>, vector<16x32xf32>
    tpu.vector_store %arg15[%c39, %c96], %31 {strides = array<i32>} : memref<400x160xf32, #tpu.memory_space<vmem>>, vector<16x32xf32>,
    %c38 = arith.constant 38 : index
    %c128 = arith.constant 128 : index
    %36 = vector.load %arg15[%c38, %c128] : memref<400x160xf32, #tpu.memory_space<vmem>>, vector<16x32xf32>
    tpu.vector_store %arg15[%c38, %c128], %31 {strides = array<i32>} : memref<400x160xf32, #tpu.memory_space<vmem>>, vector<16x32xf32>,
    %c64_22 = arith.constant 64 : index
    %c0_23 = arith.constant 0 : index
    %37 = vector.load %arg13[%c64_22, %c0_23] : memref<1024x32xf32, #tpu.memory_space<vmem>>, vector<32x32xf32>
    %c96_24 = arith.constant 96 : index
    %c0_25 = arith.constant 0 : index
    %38 = vector.load %arg13[%c96_24, %c0_25] : memref<1024x32xf32, #tpu.memory_space<vmem>>, vector<32x32xf32>
    %39 = arith.maximumf %37, %38 : vector<32x32xf32>
    %cst_26 = arith.constant dense<0.000000e+00> : vector<16x32xf32>
    %40 = tpu.matmul %18, %39, %cst_26 {dimension_numbers = #tpu.dot_dimension_numbers<[1], [0], [0], [1], [0, 0, 1, 1], [], []>} : vector<16x32xf32>, vector<32x32xf32>, vector<16x32xf32> -> vector<16x32xf32>
    %cst_27 = arith.constant dense<0.000000e+00> : vector<16x32xf32>
    %41 = tpu.matmul %25, %39, %cst_27 {dimension_numbers = #tpu.dot_dimension_numbers<[1], [0], [0], [1], [0, 0, 1, 1], [], []>} : vector<16x32xf32>, vector<32x32xf32>, vector<16x32xf32> -> vector<16x32xf32>
    %42 = arith.maximumf %40, %41 : vector<16x32xf32>
    %c62 = arith.constant 62 : index
    %c0_28 = arith.constant 0 : index
    %43 = vector.load %arg15[%c62, %c0_28] : memref<400x160xf32, #tpu.memory_space<vmem>>, vector<16x32xf32>
    tpu.vector_store %arg15[%c62, %c0_28], %42 {strides = array<i32>} : memref<400x160xf32, #tpu.memory_space<vmem>>, vector<16x32xf32>,
    %c61 = arith.constant 61 : index
    %c32_29 = arith.constant 32 : index
    %44 = vector.load %arg15[%c61, %c32_29] : memref<400x160xf32, #tpu.memory_space<vmem>>, vector<16x32xf32>
    tpu.vector_store %arg15[%c61, %c32_29], %42 {strides = array<i32>} : memref<400x160xf32, #tpu.memory_space<vmem>>, vector<16x32xf32>,
    %c60 = arith.constant 60 : index
    %c64_30 = arith.constant 64 : index
    %45 = vector.load %arg15[%c60, %c64_30] : memref<400x160xf32, #tpu.memory_space<vmem>>, vector<16x32xf32>
    tpu.vector_store %arg15[%c60, %c64_30], %42 {strides = array<i32>} : memref<400x160xf32, #tpu.memory_space<vmem>>, vector<16x32xf32>,
    %c59 = arith.constant 59 : index
    %c96_31 = arith.constant 96 : index
    %46 = vector.load %arg15[%c59, %c96_31] : memref<400x160xf32, #tpu.memory_space<vmem>>, vector<16x32xf32>
    tpu.vector_store %arg15[%c59, %c96_31], %42 {strides = array<i32>} : memref<400x160xf32, #tpu.memory_space<vmem>>, vector<16x32xf32>,
    %c58 = arith.constant 58 : index
    %c128_32 = arith.constant 128 : index
    %47 = vector.load %arg15[%c58, %c128_32] : memref<400x160xf32, #tpu.memory_space<vmem>>, vector<16x32xf32>
    tpu.vector_store %arg15[%c58, %c128_32], %42 {strides = array<i32>} : memref<400x160xf32, #tpu.memory_space<vmem>>, vector<16x32xf32>,
    %c128_33 = arith.constant 128 : index
    %c0_34 = arith.constant 0 : index
    %48 = vector.load %arg13[%c128_33, %c0_34] : memref<1024x32xf32, #tpu.memory_space<vmem>>, vector<32x32xf32>
    %c160 = arith.constant 160 : index
    %c0_35 = arith.constant 0 : index
    %49 = vector.load %arg13[%c160, %c0_35] : memref<1024x32xf32, #tpu.memory_space<vmem>>, vector<32x32xf32>
    %50 = arith.maximumf %48, %49 : vector<32x32xf32>
    %cst_36 = arith.constant dense<0.000000e+00> : vector<16x32xf32>
    %51 = tpu.matmul %18, %50, %cst_36 {dimension_numbers = #tpu.dot_dimension_numbers<[1], [0], [0], [1], [0, 0, 1, 1], [], []>} : vector<16x32xf32>, vector<32x32xf32>, vector<16x32xf32> -> vector<16x32xf32>
    %cst_37 = arith.constant dense<0.000000e+00> : vector<16x32xf32>
    %52 = tpu.matmul %25, %50, %cst_37 {dimension_numbers = #tpu.dot_dimension_numbers<[1], [0], [0], [1], [0, 0, 1, 1], [], []>} : vector<16x32xf32>, vector<32x32xf32>, vector<16x32xf32> -> vector<16x32xf32>
    %53 = arith.maximumf %51, %52 : vector<16x32xf32>
    %c82 = arith.constant 82 : index
    %c0_38 = arith.constant 0 : index
    %54 = vector.load %arg15[%c82, %c0_38] : memref<400x160xf32, #tpu.memory_space<vmem>>, vector<16x32xf32>
    tpu.vector_store %arg15[%c82, %c0_38], %53 {strides = array<i32>} : memref<400x160xf32, #tpu.memory_space<vmem>>, vector<16x32xf32>,
    %c81 = arith.constant 81 : index
    %c32_39 = arith.constant 32 : index
    %55 = vector.load %arg15[%c81, %c32_39] : memref<400x160xf32, #tpu.memory_space<vmem>>, vector<16x32xf32>
    tpu.vector_store %arg15[%c81, %c32_39], %53 {strides = array<i32>} : memref<400x160xf32, #tpu.memory_space<vmem>>, vector<16x32xf32>,
    %c80 = arith.constant 80 : index
    %c64_40 = arith.constant 64 : index
    %56 = vector.load %arg15[%c80, %c64_40] : memref<400x160xf32, #tpu.memory_space<vmem>>, vector<16x32xf32>
    tpu.vector_store %arg15[%c80, %c64_40], %53 {strides = array<i32>} : memref<400x160xf32, #tpu.memory_space<vmem>>, vector<16x32xf32>,
    %c79 = arith.constant 79 : index
    %c96_41 = arith.constant 96 : index
    %57 = vector.load %arg15[%c79, %c96_41] : memref<400x160xf32, #tpu.memory_space<vmem>>, vector<16x32xf32>
    tpu.vector_store %arg15[%c79, %c96_41], %53 {strides = array<i32>} : memref<400x160xf32, #tpu.memory_space<vmem>>, vector<16x32xf32>,
    %c78 = arith.constant 78 : index
    %c128_42 = arith.constant 128 : index
    %58 = vector.load %arg15[%c78, %c128_42] : memref<400x160xf32, #tpu.memory_space<vmem>>, vector<16x32xf32>
    tpu.vector_store %arg15[%c78, %c128_42], %53 {strides = array<i32>} : memref<400x160xf32, #tpu.memory_space<vmem>>, vector<16x32xf32>,
    %c192 = arith.constant 192 : index
    %c0_43 = arith.constant 0 : index
    %59 = vector.load %arg13[%c192, %c0_43] : memref<1024x32xf32, #tpu.memory_space<vmem>>, vector<32x32xf32>
    %c224 = arith.constant 224 : index
    %c0_44 = arith.constant 0 : index
    %60 = vector.load %arg13[%c224, %c0_44] : memref<1024x32xf32, #tpu.memory_space<vmem>>, vector<32x32xf32>
    %61 = arith.maximumf %59, %60 : vector<32x32xf32>
    %cst_45 = arith.constant dense<0.000000e+00> : vector<16x32xf32>
    %62 = tpu.matmul %18, %61, %cst_45 {dimension_numbers = #tpu.dot_dimension_numbers<[1], [0], [0], [1], [0, 0, 1, 1], [], []>} : vector<16x32xf32>, vector<32x32xf32>, vector<16x32xf32> -> vector<16x32xf32>
    %cst_46 = arith.constant dense<0.000000e+00> : vector<16x32xf32>
    %63 = tpu.matmul %25, %61, %cst_46 {dimension_numbers = #tpu.dot_dimension_numbers<[1], [0], [0], [1], [0, 0, 1, 1], [], []>} : vector<16x32xf32>, vector<32x32xf32>, vector<16x32xf32> -> vector<16x32xf32>
    %64 = arith.maximumf %62, %63 : vector<16x32xf32>
    %c102 = arith.constant 102 : index
    %c0_47 = arith.constant 0 : index
    %65 = vector.load %arg15[%c102, %c0_47] : memref<400x160xf32, #tpu.memory_space<vmem>>, vector<16x32xf32>
    tpu.vector_store %arg15[%c102, %c0_47], %64 {strides = array<i32>} : memref<400x160xf32, #tpu.memory_space<vmem>>, vector<16x32xf32>,
    %c101 = arith.constant 101 : index
    %c32_48 = arith.constant 32 : index
    %66 = vector.load %arg15[%c101, %c32_48] : memref<400x160xf32, #tpu.memory_space<vmem>>, vector<16x32xf32>
    tpu.vector_store %arg15[%c101, %c32_48], %64 {strides = array<i32>} : memref<400x160xf32, #tpu.memory_space<vmem>>, vector<16x32xf32>,
    %c100 = arith.constant 100 : index
    %c64_49 = arith.constant 64 : index
    %67 = vector.load %arg15[%c100, %c64_49] : memref<400x160xf32, #tpu.memory_space<vmem>>, vector<16x32xf32>
    tpu.vector_store %arg15[%c100, %c64_49], %64 {strides = array<i32>} : memref<400x160xf32, #tpu.memory_space<vmem>>, vector<16x32xf32>,
    %c99 = arith.constant 99 : index
    %c96_50 = arith.constant 96 : index
    %68 = vector.load %arg15[%c99, %c96_50] : memref<400x160xf32, #tpu.memory_space<vmem>>, vector<16x32xf32>
    tpu.vector_store %arg15[%c99, %c96_50], %64 {strides = array<i32>} : memref<400x160xf32, #tpu.memory_space<vmem>>, vector<16x32xf32>,
    %c98 = arith.constant 98 : index
    %c128_51 = arith.constant 128 : index
    %69 = vector.load %arg15[%c98, %c128_51] : memref<400x160xf32, #tpu.memory_space<vmem>>, vector<16x32xf32>
    tpu.vector_store %arg15[%c98, %c128_51], %64 {strides = array<i32>} : memref<400x160xf32, #tpu.memory_space<vmem>>, vector<16x32xf32>,
    %c256 = arith.constant 256 : index
    %c0_52 = arith.constant 0 : index
    %70 = vector.load %arg13[%c256, %c0_52] : memref<1024x32xf32, #tpu.memory_space<vmem>>, vector<32x32xf32>
    %c288 = arith.constant 288 : index
    %c0_53 = arith.constant 0 : index
    %71 = vector.load %arg13[%c288, %c0_53] : memref<1024x32xf32, #tpu.memory_space<vmem>>, vector<32x32xf32>
    %72 = arith.maximumf %70, %71 : vector<32x32xf32>
    %cst_54 = arith.constant dense<0.000000e+00> : vector<16x32xf32>
    %73 = tpu.matmul %18, %72, %cst_54 {dimension_numbers = #tpu.dot_dimension_numbers<[1], [0], [0], [1], [0, 0, 1, 1], [], []>} : vector<16x32xf32>, vector<32x32xf32>, vector<16x32xf32> -> vector<16x32xf32>
    %cst_55 = arith.constant dense<0.000000e+00> : vector<16x32xf32>
    %74 = tpu.matmul %25, %72, %cst_55 {dimension_numbers = #tpu.dot_dimension_numbers<[1], [0], [0], [1], [0, 0, 1, 1], [], []>} : vector<16x32xf32>, vector<32x32xf32>, vector<16x32xf32> -> vector<16x32xf32>
    %75 = arith.maximumf %73, %74 : vector<16x32xf32>
    %c122 = arith.constant 122 : index
    %c0_56 = arith.constant 0 : index
    %76 = vector.load %arg15[%c122, %c0_56] : memref<400x160xf32, #tpu.memory_space<vmem>>, vector<16x32xf32>
    tpu.vector_store %arg15[%c122, %c0_56], %75 {strides = array<i32>} : memref<400x160xf32, #tpu.memory_space<vmem>>, vector<16x32xf32>,
    %c121 = arith.constant 121 : index
    %c32_57 = arith.constant 32 : index
    %77 = vector.load %arg15[%c121, %c32_57] : memref<400x160xf32, #tpu.memory_space<vmem>>, vector<16x32xf32>
    tpu.vector_store %arg15[%c121, %c32_57], %75 {strides = array<i32>} : memref<400x160xf32, #tpu.memory_space<vmem>>, vector<16x32xf32>,
    %c120 = arith.constant 120 : index
    %c64_58 = arith.constant 64 : index
    %78 = vector.load %arg15[%c120, %c64_58] : memref<400x160xf32, #tpu.memory_space<vmem>>, vector<16x32xf32>
    tpu.vector_store %arg15[%c120, %c64_58], %75 {strides = array<i32>} : memref<400x160xf32, #tpu.memory_space<vmem>>, vector<16x32xf32>,
    %c119 = arith.constant 119 : index
    %c96_59 = arith.constant 96 : index
    %79 = vector.load %arg15[%c119, %c96_59] : memref<400x160xf32, #tpu.memory_space<vmem>>, vector<16x32xf32>
    tpu.vector_store %arg15[%c119, %c96_59], %75 {strides = array<i32>} : memref<400x160xf32, #tpu.memory_space<vmem>>, vector<16x32xf32>,
    %c118 = arith.constant 118 : index
    %c128_60 = arith.constant 128 : index
    %80 = vector.load %arg15[%c118, %c128_60] : memref<400x160xf32, #tpu.memory_space<vmem>>, vector<16x32xf32>
    tpu.vector_store %arg15[%c118, %c128_60], %75 {strides = array<i32>} : memref<400x160xf32, #tpu.memory_space<vmem>>, vector<16x32xf32>,
    %c320 = arith.constant 320 : index
    %c0_61 = arith.constant 0 : index
    %81 = vector.load %arg13[%c320, %c0_61] : memref<1024x32xf32, #tpu.memory_space<vmem>>, vector<32x32xf32>
    %c352 = arith.constant 352 : index
    %c0_62 = arith.constant 0 : index
    %82 = vector.load %arg13[%c352, %c0_62] : memref<1024x32xf32, #tpu.memory_space<vmem>>, vector<32x32xf32>
    %83 = arith.maximumf %81, %82 : vector<32x32xf32>
    %cst_63 = arith.constant dense<0.000000e+00> : vector<16x32xf32>
    %84 = tpu.matmul %18, %83, %cst_63 {dimension_numbers = #tpu.dot_dimension_numbers<[1], [0], [0], [1], [0, 0, 1, 1], [], []>} : vector<16x32xf32>, vector<32x32xf32>, vector<16x32xf32> -> vector<16x32xf32>
    %cst_64 = arith.constant dense<0.000000e+00> : vector<16x32xf32>
    %85 = tpu.matmul %25, %83, %cst_64 {dimension_numbers = #tpu.dot_dimension_numbers<[1], [0], [0], [1], [0, 0, 1, 1], [], []>} : vector<16x32xf32>, vector<32x32xf32>, vector<16x32xf32> -> vector<16x32xf32>
    %86 = arith.maximumf %84, %85 : vector<16x32xf32>
    %c142 = arith.constant 142 : index
    %c0_65 = arith.constant 0 : index
    %87 = vector.load %arg15[%c142, %c0_65] : memref<400x160xf32, #tpu.memory_space<vmem>>, vector<16x32xf32>
    tpu.vector_store %arg15[%c142, %c0_65], %86 {strides = array<i32>} : memref<400x160xf32, #tpu.memory_space<vmem>>, vector<16x32xf32>,
    %c141 = arith.constant 141 : index
    %c32_66 = arith.constant 32 : index
    %88 = vector.load %arg15[%c141, %c32_66] : memref<400x160xf32, #tpu.memory_space<vmem>>, vector<16x32xf32>
    tpu.vector_store %arg15[%c141, %c32_66], %86 {strides = array<i32>} : memref<400x160xf32, #tpu.memory_space<vmem>>, vector<16x32xf32>,
    %c140 = arith.constant 140 : index
    %c64_67 = arith.constant 64 : index
    %89 = vector.load %arg15[%c140, %c64_67] : memref<400x160xf32, #tpu.memory_space<vmem>>, vector<16x32xf32>
    tpu.vector_store %arg15[%c140, %c64_67], %86 {strides = array<i32>} : memref<400x160xf32, #tpu.memory_space<vmem>>, vector<16x32xf32>,
    %c139 = arith.constant 139 : index
    %c96_68 = arith.constant 96 : index
    %90 = vector.load %arg15[%c139, %c96_68] : memref<400x160xf32, #tpu.memory_space<vmem>>, vector<16x32xf32>
    tpu.vector_store %arg15[%c139, %c96_68], %86 {strides = array<i32>} : memref<400x160xf32, #tpu.memory_space<vmem>>, vector<16x32xf32>,
    %c138 = arith.constant 138 : index
    %c128_69 = arith.constant 128 : index
    %91 = vector.load %arg15[%c138, %c128_69] : memref<400x160xf32, #tpu.memory_space<vmem>>, vector<16x32xf32>
    tpu.vector_store %arg15[%c138, %c128_69], %86 {strides = array<i32>} : memref<400x160xf32, #tpu.memory_space<vmem>>, vector<16x32xf32>,
    %c384 = arith.constant 384 : index
    %c0_70 = arith.constant 0 : index
    %92 = vector.load %arg13[%c384, %c0_70] : memref<1024x32xf32, #tpu.memory_space<vmem>>, vector<32x32xf32>
    %c416 = arith.constant 416 : index
    %c0_71 = arith.constant 0 : index
    %93 = vector.load %arg13[%c416, %c0_71] : memref<1024x32xf32, #tpu.memory_space<vmem>>, vector<32x32xf32>
    %94 = arith.maximumf %92, %93 : vector<32x32xf32>
    %cst_72 = arith.constant dense<0.000000e+00> : vector<16x32xf32>
    %95 = tpu.matmul %18, %94, %cst_72 {dimension_numbers = #tpu.dot_dimension_numbers<[1], [0], [0], [1], [0, 0, 1, 1], [], []>} : vector<16x32xf32>, vector<32x32xf32>, vector<16x32xf32> -> vector<16x32xf32>
    %cst_73 = arith.constant dense<0.000000e+00> : vector<16x32xf32>
    %96 = tpu.matmul %25, %94, %cst_73 {dimension_numbers = #tpu.dot_dimension_numbers<[1], [0], [0], [1], [0, 0, 1, 1], [], []>} : vector<16x32xf32>, vector<32x32xf32>, vector<16x32xf32> -> vector<16x32xf32>
    %97 = arith.maximumf %95, %96 : vector<16x32xf32>
    %c162 = arith.constant 162 : index
    %c0_74 = arith.constant 0 : index
    %98 = vector.load %arg15[%c162, %c0_74] : memref<400x160xf32, #tpu.memory_space<vmem>>, vector<16x32xf32>
    tpu.vector_store %arg15[%c162, %c0_74], %97 {strides = array<i32>} : memref<400x160xf32, #tpu.memory_space<vmem>>, vector<16x32xf32>,
    %c161 = arith.constant 161 : index
    %c32_75 = arith.constant 32 : index
    %99 = vector.load %arg15[%c161, %c32_75] : memref<400x160xf32, #tpu.memory_space<vmem>>, vector<16x32xf32>
    tpu.vector_store %arg15[%c161, %c32_75], %97 {strides = array<i32>} : memref<400x160xf32, #tpu.memory_space<vmem>>, vector<16x32xf32>,
    %c160_76 = arith.constant 160 : index
    %c64_77 = arith.constant 64 : index
    %100 = vector.load %arg15[%c160_76, %c64_77] : memref<400x160xf32, #tpu.memory_space<vmem>>, vector<16x32xf32>
    tpu.vector_store %arg15[%c160_76, %c64_77], %97 {strides = array<i32>} : memref<400x160xf32, #tpu.memory_space<vmem>>, vector<16x32xf32>,
    %c159 = arith.constant 159 : index
    %c96_78 = arith.constant 96 : index
    %101 = vector.load %arg15[%c159, %c96_78] : memref<400x160xf32, #tpu.memory_space<vmem>>, vector<16x32xf32>
    tpu.vector_store %arg15[%c159, %c96_78], %97 {strides = array<i32>} : memref<400x160xf32, #tpu.memory_space<vmem>>, vector<16x32xf32>,
    %c158 = arith.constant 158 : index
    %c128_79 = arith.constant 128 : index
    %102 = vector.load %arg15[%c158, %c128_79] : memref<400x160xf32, #tpu.memory_space<vmem>>, vector<16x32xf32>
    tpu.vector_store %arg15[%c158, %c128_79], %97 {strides = array<i32>} : memref<400x160xf32, #tpu.memory_space<vmem>>, vector<16x32xf32>,
    %c448 = arith.constant 448 : index
    %c0_80 = arith.constant 0 : index
    %103 = vector.load %arg13[%c448, %c0_80] : memref<1024x32xf32, #tpu.memory_space<vmem>>, vector<32x32xf32>
    %c480 = arith.constant 480 : index
    %c0_81 = arith.constant 0 : index
    %104 = vector.load %arg13[%c480, %c0_81] : memref<1024x32xf32, #tpu.memory_space<vmem>>, vector<32x32xf32>
    %105 = arith.maximumf %103, %104 : vector<32x32xf32>
    %cst_82 = arith.constant dense<0.000000e+00> : vector<16x32xf32>
    %106 = tpu.matmul %18, %105, %cst_82 {dimension_numbers = #tpu.dot_dimension_numbers<[1], [0], [0], [1], [0, 0, 1, 1], [], []>} : vector<16x32xf32>, vector<32x32xf32>, vector<16x32xf32> -> vector<16x32xf32>
    %cst_83 = arith.constant dense<0.000000e+00> : vector<16x32xf32>
    %107 = tpu.matmul %25, %105, %cst_83 {dimension_numbers = #tpu.dot_dimension_numbers<[1], [0], [0], [1], [0, 0, 1, 1], [], []>} : vector<16x32xf32>, vector<32x32xf32>, vector<16x32xf32> -> vector<16x32xf32>
    %108 = arith.maximumf %106, %107 : vector<16x32xf32>
    %c182 = arith.constant 182 : index
    %c0_84 = arith.constant 0 : index
    %109 = vector.load %arg15[%c182, %c0_84] : memref<400x160xf32, #tpu.memory_space<vmem>>, vector<16x32xf32>
    tpu.vector_store %arg15[%c182, %c0_84], %108 {strides = array<i32>} : memref<400x160xf32, #tpu.memory_space<vmem>>, vector<16x32xf32>,
    %c181 = arith.constant 181 : index
    %c32_85 = arith.constant 32 : index
    %110 = vector.load %arg15[%c181, %c32_85] : memref<400x160xf32, #tpu.memory_space<vmem>>, vector<16x32xf32>
    tpu.vector_store %arg15[%c181, %c32_85], %108 {strides = array<i32>} : memref<400x160xf32, #tpu.memory_space<vmem>>, vector<16x32xf32>,
    %c180 = arith.constant 180 : index
    %c64_86 = arith.constant 64 : index
    %111 = vector.load %arg15[%c180, %c64_86] : memref<400x160xf32, #tpu.memory_space<vmem>>, vector<16x32xf32>
    tpu.vector_store %arg15[%c180, %c64_86], %108 {strides = array<i32>} : memref<400x160xf32, #tpu.memory_space<vmem>>, vector<16x32xf32>,
    %c179 = arith.constant 179 : index
    %c96_87 = arith.constant 96 : index
    %112 = vector.load %arg15[%c179, %c96_87] : memref<400x160xf32, #tpu.memory_space<vmem>>, vector<16x32xf32>
    tpu.vector_store %arg15[%c179, %c96_87], %108 {strides = array<i32>} : memref<400x160xf32, #tpu.memory_space<vmem>>, vector<16x32xf32>,
    %c178 = arith.constant 178 : index
    %c128_88 = arith.constant 128 : index
    %113 = vector.load %arg15[%c178, %c128_88] : memref<400x160xf32, #tpu.memory_space<vmem>>, vector<16x32xf32>
    tpu.vector_store %arg15[%c178, %c128_88], %108 {strides = array<i32>} : memref<400x160xf32, #tpu.memory_space<vmem>>, vector<16x32xf32>,
    %c512 = arith.constant 512 : index
    %c0_89 = arith.constant 0 : index
    %114 = vector.load %arg13[%c512, %c0_89] : memref<1024x32xf32, #tpu.memory_space<vmem>>, vector<32x32xf32>
    %c544 = arith.constant 544 : index
    %c0_90 = arith.constant 0 : index
    %115 = vector.load %arg13[%c544, %c0_90] : memref<1024x32xf32, #tpu.memory_space<vmem>>, vector<32x32xf32>
    %116 = arith.maximumf %114, %115 : vector<32x32xf32>
    %cst_91 = arith.constant dense<0.000000e+00> : vector<16x32xf32>
    %117 = tpu.matmul %18, %116, %cst_91 {dimension_numbers = #tpu.dot_dimension_numbers<[1], [0], [0], [1], [0, 0, 1, 1], [], []>} : vector<16x32xf32>, vector<32x32xf32>, vector<16x32xf32> -> vector<16x32xf32>
    %cst_92 = arith.constant dense<0.000000e+00> : vector<16x32xf32>
    %118 = tpu.matmul %25, %116, %cst_92 {dimension_numbers = #tpu.dot_dimension_numbers<[1], [0], [0], [1], [0, 0, 1, 1], [], []>} : vector<16x32xf32>, vector<32x32xf32>, vector<16x32xf32> -> vector<16x32xf32>
    %119 = arith.maximumf %117, %118 : vector<16x32xf32>
    %c202 = arith.constant 202 : index
    %c0_93 = arith.constant 0 : index
    %120 = vector.load %arg15[%c202, %c0_93] : memref<400x160xf32, #tpu.memory_space<vmem>>, vector<16x32xf32>
    tpu.vector_store %arg15[%c202, %c0_93], %119 {strides = array<i32>} : memref<400x160xf32, #tpu.memory_space<vmem>>, vector<16x32xf32>,
    %c201 = arith.constant 201 : index
    %c32_94 = arith.constant 32 : index
    %121 = vector.load %arg15[%c201, %c32_94] : memref<400x160xf32, #tpu.memory_space<vmem>>, vector<16x32xf32>
    tpu.vector_store %arg15[%c201, %c32_94], %119 {strides = array<i32>} : memref<400x160xf32, #tpu.memory_space<vmem>>, vector<16x32xf32>,
    %c200 = arith.constant 200 : index
    %c64_95 = arith.constant 64 : index
    %122 = vector.load %arg15[%c200, %c64_95] : memref<400x160xf32, #tpu.memory_space<vmem>>, vector<16x32xf32>
    tpu.vector_store %arg15[%c200, %c64_95], %119 {strides = array<i32>} : memref<400x160xf32, #tpu.memory_space<vmem>>, vector<16x32xf32>,
    %c199 = arith.constant 199 : index
    %c96_96 = arith.constant 96 : index
    %123 = vector.load %arg15[%c199, %c96_96] : memref<400x160xf32, #tpu.memory_space<vmem>>, vector<16x32xf32>
    tpu.vector_store %arg15[%c199, %c96_96], %119 {strides = array<i32>} : memref<400x160xf32, #tpu.memory_space<vmem>>, vector<16x32xf32>,
    %c198 = arith.constant 198 : index
    %c128_97 = arith.constant 128 : index
    %124 = vector.load %arg15[%c198, %c128_97] : memref<400x160xf32, #tpu.memory_space<vmem>>, vector<16x32xf32>
    tpu.vector_store %arg15[%c198, %c128_97], %119 {strides = array<i32>} : memref<400x160xf32, #tpu.memory_space<vmem>>, vector<16x32xf32>,
    %c576 = arith.constant 576 : index
    %c0_98 = arith.constant 0 : index
    %125 = vector.load %arg13[%c576, %c0_98] : memref<1024x32xf32, #tpu.memory_space<vmem>>, vector<32x32xf32>
    %c608 = arith.constant 608 : index
    %c0_99 = arith.constant 0 : index
    %126 = vector.load %arg13[%c608, %c0_99] : memref<1024x32xf32, #tpu.memory_space<vmem>>, vector<32x32xf32>
    %127 = arith.maximumf %125, %126 : vector<32x32xf32>
    %cst_100 = arith.constant dense<0.000000e+00> : vector<16x32xf32>
    %128 = tpu.matmul %18, %127, %cst_100 {dimension_numbers = #tpu.dot_dimension_numbers<[1], [0], [0], [1], [0, 0, 1, 1], [], []>} : vector<16x32xf32>, vector<32x32xf32>, vector<16x32xf32> -> vector<16x32xf32>
    %cst_101 = arith.constant dense<0.000000e+00> : vector<16x32xf32>
    %129 = tpu.matmul %25, %127, %cst_101 {dimension_numbers = #tpu.dot_dimension_numbers<[1], [0], [0], [1], [0, 0, 1, 1], [], []>} : vector<16x32xf32>, vector<32x32xf32>, vector<16x32xf32> -> vector<16x32xf32>
    %130 = arith.maximumf %128, %129 : vector<16x32xf32>
    %c222 = arith.constant 222 : index
    %c0_102 = arith.constant 0 : index
    %131 = vector.load %arg15[%c222, %c0_102] : memref<400x160xf32, #tpu.memory_space<vmem>>, vector<16x32xf32>
    tpu.vector_store %arg15[%c222, %c0_102], %130 {strides = array<i32>} : memref<400x160xf32, #tpu.memory_space<vmem>>, vector<16x32xf32>,
    %c221 = arith.constant 221 : index
    %c32_103 = arith.constant 32 : index
    %132 = vector.load %arg15[%c221, %c32_103] : memref<400x160xf32, #tpu.memory_space<vmem>>, vector<16x32xf32>
    tpu.vector_store %arg15[%c221, %c32_103], %130 {strides = array<i32>} : memref<400x160xf32, #tpu.memory_space<vmem>>, vector<16x32xf32>,
    %c220 = arith.constant 220 : index
    %c64_104 = arith.constant 64 : index
    %133 = vector.load %arg15[%c220, %c64_104] : memref<400x160xf32, #tpu.memory_space<vmem>>, vector<16x32xf32>
    tpu.vector_store %arg15[%c220, %c64_104], %130 {strides = array<i32>} : memref<400x160xf32, #tpu.memory_space<vmem>>, vector<16x32xf32>,
    %c219 = arith.constant 219 : index
    %c96_105 = arith.constant 96 : index
    %134 = vector.load %arg15[%c219, %c96_105] : memref<400x160xf32, #tpu.memory_space<vmem>>, vector<16x32xf32>
    tpu.vector_store %arg15[%c219, %c96_105], %130 {strides = array<i32>} : memref<400x160xf32, #tpu.memory_space<vmem>>, vector<16x32xf32>,
    %c218 = arith.constant 218 : index
    %c128_106 = arith.constant 128 : index
    %135 = vector.load %arg15[%c218, %c128_106] : memref<400x160xf32, #tpu.memory_space<vmem>>, vector<16x32xf32>
    tpu.vector_store %arg15[%c218, %c128_106], %130 {strides = array<i32>} : memref<400x160xf32, #tpu.memory_space<vmem>>, vector<16x32xf32>,
    %c640 = arith.constant 640 : index
    %c0_107 = arith.constant 0 : index
    %136 = vector.load %arg13[%c640, %c0_107] : memref<1024x32xf32, #tpu.memory_space<vmem>>, vector<32x32xf32>
    %c672 = arith.constant 672 : index
    %c0_108 = arith.constant 0 : index
    %137 = vector.load %arg13[%c672, %c0_108] : memref<1024x32xf32, #tpu.memory_space<vmem>>, vector<32x32xf32>
    %138 = arith.maximumf %136, %137 : vector<32x32xf32>
    %cst_109 = arith.constant dense<0.000000e+00> : vector<16x32xf32>
    %139 = tpu.matmul %18, %138, %cst_109 {dimension_numbers = #tpu.dot_dimension_numbers<[1], [0], [0], [1], [0, 0, 1, 1], [], []>} : vector<16x32xf32>, vector<32x32xf32>, vector<16x32xf32> -> vector<16x32xf32>
    %cst_110 = arith.constant dense<0.000000e+00> : vector<16x32xf32>
    %140 = tpu.matmul %25, %138, %cst_110 {dimension_numbers = #tpu.dot_dimension_numbers<[1], [0], [0], [1], [0, 0, 1, 1], [], []>} : vector<16x32xf32>, vector<32x32xf32>, vector<16x32xf32> -> vector<16x32xf32>
    %141 = arith.maximumf %139, %140 : vector<16x32xf32>
    %c242 = arith.constant 242 : index
    %c0_111 = arith.constant 0 : index
    %142 = vector.load %arg15[%c242, %c0_111] : memref<400x160xf32, #tpu.memory_space<vmem>>, vector<16x32xf32>
    tpu.vector_store %arg15[%c242, %c0_111], %141 {strides = array<i32>} : memref<400x160xf32, #tpu.memory_space<vmem>>, vector<16x32xf32>,
    %c241 = arith.constant 241 : index
    %c32_112 = arith.constant 32 : index
    %143 = vector.load %arg15[%c241, %c32_112] : memref<400x160xf32, #tpu.memory_space<vmem>>, vector<16x32xf32>
    tpu.vector_store %arg15[%c241, %c32_112], %141 {strides = array<i32>} : memref<400x160xf32, #tpu.memory_space<vmem>>, vector<16x32xf32>,
    %c240 = arith.constant 240 : index
    %c64_113 = arith.constant 64 : index
    %144 = vector.load %arg15[%c240, %c64_113] : memref<400x160xf32, #tpu.memory_space<vmem>>, vector<16x32xf32>
    tpu.vector_store %arg15[%c240, %c64_113], %141 {strides = array<i32>} : memref<400x160xf32, #tpu.memory_space<vmem>>, vector<16x32xf32>,
    %c239 = arith.constant 239 : index
    %c96_114 = arith.constant 96 : index
    %145 = vector.load %arg15[%c239, %c96_114] : memref<400x160xf32, #tpu.memory_space<vmem>>, vector<16x32xf32>
    tpu.vector_store %arg15[%c239, %c96_114], %141 {strides = array<i32>} : memref<400x160xf32, #tpu.memory_space<vmem>>, vector<16x32xf32>,
    %c238 = arith.constant 238 : index
    %c128_115 = arith.constant 128 : index
    %146 = vector.load %arg15[%c238, %c128_115] : memref<400x160xf32, #tpu.memory_space<vmem>>, vector<16x32xf32>
    tpu.vector_store %arg15[%c238, %c128_115], %141 {strides = array<i32>} : memref<400x160xf32, #tpu.memory_space<vmem>>, vector<16x32xf32>,
    %c704 = arith.constant 704 : index
    %c0_116 = arith.constant 0 : index
    %147 = vector.load %arg13[%c704, %c0_116] : memref<1024x32xf32, #tpu.memory_space<vmem>>, vector<32x32xf32>
    %c736 = arith.constant 736 : index
    %c0_117 = arith.constant 0 : index
    %148 = vector.load %arg13[%c736, %c0_117] : memref<1024x32xf32, #tpu.memory_space<vmem>>, vector<32x32xf32>
    %149 = arith.maximumf %147, %148 : vector<32x32xf32>
    %cst_118 = arith.constant dense<0.000000e+00> : vector<16x32xf32>
    %150 = tpu.matmul %18, %149, %cst_118 {dimension_numbers = #tpu.dot_dimension_numbers<[1], [0], [0], [1], [0, 0, 1, 1], [], []>} : vector<16x32xf32>, vector<32x32xf32>, vector<16x32xf32> -> vector<16x32xf32>
    %cst_119 = arith.constant dense<0.000000e+00> : vector<16x32xf32>
    %151 = tpu.matmul %25, %149, %cst_119 {dimension_numbers = #tpu.dot_dimension_numbers<[1], [0], [0], [1], [0, 0, 1, 1], [], []>} : vector<16x32xf32>, vector<32x32xf32>, vector<16x32xf32> -> vector<16x32xf32>
    %152 = arith.maximumf %150, %151 : vector<16x32xf32>
    %c262 = arith.constant 262 : index
    %c0_120 = arith.constant 0 : index
    %153 = vector.load %arg15[%c262, %c0_120] : memref<400x160xf32, #tpu.memory_space<vmem>>, vector<16x32xf32>
    tpu.vector_store %arg15[%c262, %c0_120], %152 {strides = array<i32>} : memref<400x160xf32, #tpu.memory_space<vmem>>, vector<16x32xf32>,
    %c261 = arith.constant 261 : index
    %c32_121 = arith.constant 32 : index
    %154 = vector.load %arg15[%c261, %c32_121] : memref<400x160xf32, #tpu.memory_space<vmem>>, vector<16x32xf32>
    tpu.vector_store %arg15[%c261, %c32_121], %152 {strides = array<i32>} : memref<400x160xf32, #tpu.memory_space<vmem>>, vector<16x32xf32>,
    %c260 = arith.constant 260 : index
    %c64_122 = arith.constant 64 : index
    %155 = vector.load %arg15[%c260, %c64_122] : memref<400x160xf32, #tpu.memory_space<vmem>>, vector<16x32xf32>
    tpu.vector_store %arg15[%c260, %c64_122], %152 {strides = array<i32>} : memref<400x160xf32, #tpu.memory_space<vmem>>, vector<16x32xf32>,
    %c259 = arith.constant 259 : index
    %c96_123 = arith.constant 96 : index
    %156 = vector.load %arg15[%c259, %c96_123] : memref<400x160xf32, #tpu.memory_space<vmem>>, vector<16x32xf32>
    tpu.vector_store %arg15[%c259, %c96_123], %152 {strides = array<i32>} : memref<400x160xf32, #tpu.memory_space<vmem>>, vector<16x32xf32>,
    %c258 = arith.constant 258 : index
    %c128_124 = arith.constant 128 : index
    %157 = vector.load %arg15[%c258, %c128_124] : memref<400x160xf32, #tpu.memory_space<vmem>>, vector<16x32xf32>
    tpu.vector_store %arg15[%c258, %c128_124], %152 {strides = array<i32>} : memref<400x160xf32, #tpu.memory_space<vmem>>, vector<16x32xf32>,
    %c768 = arith.constant 768 : index
    %c0_125 = arith.constant 0 : index
    %158 = vector.load %arg13[%c768, %c0_125] : memref<1024x32xf32, #tpu.memory_space<vmem>>, vector<32x32xf32>
    %c800 = arith.constant 800 : index
    %c0_126 = arith.constant 0 : index
    %159 = vector.load %arg13[%c800, %c0_126] : memref<1024x32xf32, #tpu.memory_space<vmem>>, vector<32x32xf32>
    %160 = arith.maximumf %158, %159 : vector<32x32xf32>
    %cst_127 = arith.constant dense<0.000000e+00> : vector<16x32xf32>
    %161 = tpu.matmul %18, %160, %cst_127 {dimension_numbers = #tpu.dot_dimension_numbers<[1], [0], [0], [1], [0, 0, 1, 1], [], []>} : vector<16x32xf32>, vector<32x32xf32>, vector<16x32xf32> -> vector<16x32xf32>
    %cst_128 = arith.constant dense<0.000000e+00> : vector<16x32xf32>
    %162 = tpu.matmul %25, %160, %cst_128 {dimension_numbers = #tpu.dot_dimension_numbers<[1], [0], [0], [1], [0, 0, 1, 1], [], []>} : vector<16x32xf32>, vector<32x32xf32>, vector<16x32xf32> -> vector<16x32xf32>
    %163 = arith.maximumf %161, %162 : vector<16x32xf32>
    %c282 = arith.constant 282 : index
    %c0_129 = arith.constant 0 : index
    %164 = vector.load %arg15[%c282, %c0_129] : memref<400x160xf32, #tpu.memory_space<vmem>>, vector<16x32xf32>
    tpu.vector_store %arg15[%c282, %c0_129], %163 {strides = array<i32>} : memref<400x160xf32, #tpu.memory_space<vmem>>, vector<16x32xf32>,
    %c281 = arith.constant 281 : index
    %c32_130 = arith.constant 32 : index
    %165 = vector.load %arg15[%c281, %c32_130] : memref<400x160xf32, #tpu.memory_space<vmem>>, vector<16x32xf32>
    tpu.vector_store %arg15[%c281, %c32_130], %163 {strides = array<i32>} : memref<400x160xf32, #tpu.memory_space<vmem>>, vector<16x32xf32>,
    %c280 = arith.constant 280 : index
    %c64_131 = arith.constant 64 : index
    %166 = vector.load %arg15[%c280, %c64_131] : memref<400x160xf32, #tpu.memory_space<vmem>>, vector<16x32xf32>
    tpu.vector_store %arg15[%c280, %c64_131], %163 {strides = array<i32>} : memref<400x160xf32, #tpu.memory_space<vmem>>, vector<16x32xf32>,
    %c279 = arith.constant 279 : index
    %c96_132 = arith.constant 96 : index
    %167 = vector.load %arg15[%c279, %c96_132] : memref<400x160xf32, #tpu.memory_space<vmem>>, vector<16x32xf32>
    tpu.vector_store %arg15[%c279, %c96_132], %163 {strides = array<i32>} : memref<400x160xf32, #tpu.memory_space<vmem>>, vector<16x32xf32>,
    %c278 = arith.constant 278 : index
    %c128_133 = arith.constant 128 : index
    %168 = vector.load %arg15[%c278, %c128_133] : memref<400x160xf32, #tpu.memory_space<vmem>>, vector<16x32xf32>
    tpu.vector_store %arg15[%c278, %c128_133], %163 {strides = array<i32>} : memref<400x160xf32, #tpu.memory_space<vmem>>, vector<16x32xf32>,
    %c832 = arith.constant 832 : index
    %c0_134 = arith.constant 0 : index
    %169 = vector.load %arg13[%c832, %c0_134] : memref<1024x32xf32, #tpu.memory_space<vmem>>, vector<32x32xf32>
    %c864 = arith.constant 864 : index
    %c0_135 = arith.constant 0 : index
    %170 = vector.load %arg13[%c864, %c0_135] : memref<1024x32xf32, #tpu.memory_space<vmem>>, vector<32x32xf32>
    %171 = arith.maximumf %169, %170 : vector<32x32xf32>
    %cst_136 = arith.constant dense<0.000000e+00> : vector<16x32xf32>
    %172 = tpu.matmul %18, %171, %cst_136 {dimension_numbers = #tpu.dot_dimension_numbers<[1], [0], [0], [1], [0, 0, 1, 1], [], []>} : vector<16x32xf32>, vector<32x32xf32>, vector<16x32xf32> -> vector<16x32xf32>
    %cst_137 = arith.constant dense<0.000000e+00> : vector<16x32xf32>
    %173 = tpu.matmul %25, %171, %cst_137 {dimension_numbers = #tpu.dot_dimension_numbers<[1], [0], [0], [1], [0, 0, 1, 1], [], []>} : vector<16x32xf32>, vector<32x32xf32>, vector<16x32xf32> -> vector<16x32xf32>
    %174 = arith.maximumf %172, %173 : vector<16x32xf32>
    %c302 = arith.constant 302 : index
    %c0_138 = arith.constant 0 : index
    %175 = vector.load %arg15[%c302, %c0_138] : memref<400x160xf32, #tpu.memory_space<vmem>>, vector<16x32xf32>
    tpu.vector_store %arg15[%c302, %c0_138], %174 {strides = array<i32>} : memref<400x160xf32, #tpu.memory_space<vmem>>, vector<16x32xf32>,
    %c301 = arith.constant 301 : index
    %c32_139 = arith.constant 32 : index
    %176 = vector.load %arg15[%c301, %c32_139] : memref<400x160xf32, #tpu.memory_space<vmem>>, vector<16x32xf32>
    tpu.vector_store %arg15[%c301, %c32_139], %174 {strides = array<i32>} : memref<400x160xf32, #tpu.memory_space<vmem>>, vector<16x32xf32>,
    %c300 = arith.constant 300 : index
    %c64_140 = arith.constant 64 : index
    %177 = vector.load %arg15[%c300, %c64_140] : memref<400x160xf32, #tpu.memory_space<vmem>>, vector<16x32xf32>
    tpu.vector_store %arg15[%c300, %c64_140], %174 {strides = array<i32>} : memref<400x160xf32, #tpu.memory_space<vmem>>, vector<16x32xf32>,
    %c299 = arith.constant 299 : index
    %c96_141 = arith.constant 96 : index
    %178 = vector.load %arg15[%c299, %c96_141] : memref<400x160xf32, #tpu.memory_space<vmem>>, vector<16x32xf32>
    tpu.vector_store %arg15[%c299, %c96_141], %174 {strides = array<i32>} : memref<400x160xf32, #tpu.memory_space<vmem>>, vector<16x32xf32>,
    %c298 = arith.constant 298 : index
    %c128_142 = arith.constant 128 : index
    %179 = vector.load %arg15[%c298, %c128_142] : memref<400x160xf32, #tpu.memory_space<vmem>>, vector<16x32xf32>
    tpu.vector_store %arg15[%c298, %c128_142], %174 {strides = array<i32>} : memref<400x160xf32, #tpu.memory_space<vmem>>, vector<16x32xf32>,
    %c896 = arith.constant 896 : index
    %c0_143 = arith.constant 0 : index
    %180 = vector.load %arg13[%c896, %c0_143] : memref<1024x32xf32, #tpu.memory_space<vmem>>, vector<32x32xf32>
    %c928 = arith.constant 928 : index
    %c0_144 = arith.constant 0 : index
    %181 = vector.load %arg13[%c928, %c0_144] : memref<1024x32xf32, #tpu.memory_space<vmem>>, vector<32x32xf32>
    %182 = arith.maximumf %180, %181 : vector<32x32xf32>
    %cst_145 = arith.constant dense<0.000000e+00> : vector<16x32xf32>
    %183 = tpu.matmul %18, %182, %cst_145 {dimension_numbers = #tpu.dot_dimension_numbers<[1], [0], [0], [1], [0, 0, 1, 1], [], []>} : vector<16x32xf32>, vector<32x32xf32>, vector<16x32xf32> -> vector<16x32xf32>
    %cst_146 = arith.constant dense<0.000000e+00> : vector<16x32xf32>
    %184 = tpu.matmul %25, %182, %cst_146 {dimension_numbers = #tpu.dot_dimension_numbers<[1], [0], [0], [1], [0, 0, 1, 1], [], []>} : vector<16x32xf32>, vector<32x32xf32>, vector<16x32xf32> -> vector<16x32xf32>
    %185 = arith.maximumf %183, %184 : vector<16x32xf32>
    %c322 = arith.constant 322 : index
    %c0_147 = arith.constant 0 : index
    %186 = vector.load %arg15[%c322, %c0_147] : memref<400x160xf32, #tpu.memory_space<vmem>>, vector<16x32xf32>
    tpu.vector_store %arg15[%c322, %c0_147], %185 {strides = array<i32>} : memref<400x160xf32, #tpu.memory_space<vmem>>, vector<16x32xf32>,
    %c321 = arith.constant 321 : index
    %c32_148 = arith.constant 32 : index
    %187 = vector.load %arg15[%c321, %c32_148] : memref<400x160xf32, #tpu.memory_space<vmem>>, vector<16x32xf32>
    tpu.vector_store %arg15[%c321, %c32_148], %185 {strides = array<i32>} : memref<400x160xf32, #tpu.memory_space<vmem>>, vector<16x32xf32>,
    %c320_149 = arith.constant 320 : index
    %c64_150 = arith.constant 64 : index
    %188 = vector.load %arg15[%c320_149, %c64_150] : memref<400x160xf32, #tpu.memory_space<vmem>>, vector<16x32xf32>
    tpu.vector_store %arg15[%c320_149, %c64_150], %185 {strides = array<i32>} : memref<400x160xf32, #tpu.memory_space<vmem>>, vector<16x32xf32>,
    %c319 = arith.constant 319 : index
    %c96_151 = arith.constant 96 : index
    %189 = vector.load %arg15[%c319, %c96_151] : memref<400x160xf32, #tpu.memory_space<vmem>>, vector<16x32xf32>
    tpu.vector_store %arg15[%c319, %c96_151], %185 {strides = array<i32>} : memref<400x160xf32, #tpu.memory_space<vmem>>, vector<16x32xf32>,
    %c318 = arith.constant 318 : index
    %c128_152 = arith.constant 128 : index
    %190 = vector.load %arg15[%c318, %c128_152] : memref<400x160xf32, #tpu.memory_space<vmem>>, vector<16x32xf32>
    tpu.vector_store %arg15[%c318, %c128_152], %185 {strides = array<i32>} : memref<400x160xf32, #tpu.memory_space<vmem>>, vector<16x32xf32>,
    %c960 = arith.constant 960 : index
    %c0_153 = arith.constant 0 : index
    %191 = vector.load %arg13[%c960, %c0_153] : memref<1024x32xf32, #tpu.memory_space<vmem>>, vector<32x32xf32>
    %c992 = arith.constant 992 : index
    %c0_154 = arith.constant 0 : index
    %192 = vector.load %arg13[%c992, %c0_154] : memref<1024x32xf32, #tpu.memory_space<vmem>>, vector<32x32xf32>
    %193 = arith.maximumf %191, %192 : vector<32x32xf32>
    %cst_155 = arith.constant dense<0.000000e+00> : vector<16x32xf32>
    %194 = tpu.matmul %18, %193, %cst_155 {dimension_numbers = #tpu.dot_dimension_numbers<[1], [0], [0], [1], [0, 0, 1, 1], [], []>} : vector<16x32xf32>, vector<32x32xf32>, vector<16x32xf32> -> vector<16x32xf32>
    %cst_156 = arith.constant dense<0.000000e+00> : vector<16x32xf32>
    %195 = tpu.matmul %25, %193, %cst_156 {dimension_numbers = #tpu.dot_dimension_numbers<[1], [0], [0], [1], [0, 0, 1, 1], [], []>} : vector<16x32xf32>, vector<32x32xf32>, vector<16x32xf32> -> vector<16x32xf32>
    %196 = arith.maximumf %194, %195 : vector<16x32xf32>
    %c342 = arith.constant 342 : index
    %c0_157 = arith.constant 0 : index
    %197 = vector.load %arg15[%c342, %c0_157] : memref<400x160xf32, #tpu.memory_space<vmem>>, vector<16x32xf32>
    tpu.vector_store %arg15[%c342, %c0_157], %196 {strides = array<i32>} : memref<400x160xf32, #tpu.memory_space<vmem>>, vector<16x32xf32>,
    %c341 = arith.constant 341 : index
    %c32_158 = arith.constant 32 : index
    %198 = vector.load %arg15[%c341, %c32_158] : memref<400x160xf32, #tpu.memory_space<vmem>>, vector<16x32xf32>
    tpu.vector_store %arg15[%c341, %c32_158], %196 {strides = array<i32>} : memref<400x160xf32, #tpu.memory_space<vmem>>, vector<16x32xf32>,
    %c340 = arith.constant 340 : index
    %c64_159 = arith.constant 64 : index
    %199 = vector.load %arg15[%c340, %c64_159] : memref<400x160xf32, #tpu.memory_space<vmem>>, vector<16x32xf32>
    tpu.vector_store %arg15[%c340, %c64_159], %196 {strides = array<i32>} : memref<400x160xf32, #tpu.memory_space<vmem>>, vector<16x32xf32>,
    %c339 = arith.constant 339 : index
    %c96_160 = arith.constant 96 : index
    %200 = vector.load %arg15[%c339, %c96_160] : memref<400x160xf32, #tpu.memory_space<vmem>>, vector<16x32xf32>
    tpu.vector_store %arg15[%c339, %c96_160], %196 {strides = array<i32>} : memref<400x160xf32, #tpu.memory_space<vmem>>, vector<16x32xf32>,
    %c338 = arith.constant 338 : index
    %c128_161 = arith.constant 128 : index
    %201 = vector.load %arg15[%c338, %c128_161] : memref<400x160xf32, #tpu.memory_space<vmem>>, vector<16x32xf32>
    tpu.vector_store %arg15[%c338, %c128_161], %196 {strides = array<i32>} : memref<400x160xf32, #tpu.memory_space<vmem>>, vector<16x32xf32>,
    %cst_162 = arith.constant 0.000000e+00 : f32
    %202 = vector.broadcast %cst_162 : f32 to vector<320x32xf32>
    %c0_163 = arith.constant 0 : index
    %c0_164 = arith.constant 0 : index
    %203 = vector.load %arg15[%c0_163, %c0_164] : memref<400x160xf32, #tpu.memory_space<vmem>>, vector<320x160xf32>
    %c0_165 = arith.constant 0 : index
    %c0_166 = arith.constant 0 : index
    %c0_167 = arith.constant 0 : index
    %204 = vector.load %arg4[%c0_165, %c0_166, %c0_167] : memref<5x160x32xf32, #tpu.memory_space<vmem>>, vector<1x160x32xf32>
    %205 = vector.shape_cast %204 : vector<1x160x32xf32> to vector<160x32xf32>
    %cst_168 = arith.constant dense<0.000000e+00> : vector<320x32xf32>
    %206 = tpu.matmul %203, %205, %cst_168 {dimension_numbers = #tpu.dot_dimension_numbers<[1], [0], [0], [1], [0, 0, 1, 1], [], []>} : vector<320x160xf32>, vector<160x32xf32>, vector<320x32xf32> -> vector<320x32xf32>
    %207 = arith.addf %202, %206 : vector<320x32xf32>
    %c20 = arith.constant 20 : index
    %c0_169 = arith.constant 0 : index
    %208 = vector.load %arg15[%c20, %c0_169] : memref<400x160xf32, #tpu.memory_space<vmem>>, vector<320x160xf32>
    %c1 = arith.constant 1 : index
    %c0_170 = arith.constant 0 : index
    %c0_171 = arith.constant 0 : index
    %209 = vector.load %arg4[%c1, %c0_170, %c0_171] : memref<5x160x32xf32, #tpu.memory_space<vmem>>, vector<1x160x32xf32>
    %210 = vector.shape_cast %209 : vector<1x160x32xf32> to vector<160x32xf32>
    %cst_172 = arith.constant dense<0.000000e+00> : vector<320x32xf32>
    %211 = tpu.matmul %208, %210, %cst_172 {dimension_numbers = #tpu.dot_dimension_numbers<[1], [0], [0], [1], [0, 0, 1, 1], [], []>} : vector<320x160xf32>, vector<160x32xf32>, vector<320x32xf32> -> vector<320x32xf32>
    %212 = arith.addf %207, %211 : vector<320x32xf32>
    %c40_173 = arith.constant 40 : index
    %c0_174 = arith.constant 0 : index
    %213 = vector.load %arg15[%c40_173, %c0_174] : memref<400x160xf32, #tpu.memory_space<vmem>>, vector<320x160xf32>
    %c2 = arith.constant 2 : index
    %c0_175 = arith.constant 0 : index
    %c0_176 = arith.constant 0 : index
    %214 = vector.load %arg4[%c2, %c0_175, %c0_176] : memref<5x160x32xf32, #tpu.memory_space<vmem>>, vector<1x160x32xf32>
    %215 = vector.shape_cast %214 : vector<1x160x32xf32> to vector<160x32xf32>
    %cst_177 = arith.constant dense<0.000000e+00> : vector<320x32xf32>
    %216 = tpu.matmul %213, %215, %cst_177 {dimension_numbers = #tpu.dot_dimension_numbers<[1], [0], [0], [1], [0, 0, 1, 1], [], []>} : vector<320x160xf32>, vector<160x32xf32>, vector<320x32xf32> -> vector<320x32xf32>
    %217 = arith.addf %212, %216 : vector<320x32xf32>
    %c60_178 = arith.constant 60 : index
    %c0_179 = arith.constant 0 : index
    %218 = vector.load %arg15[%c60_178, %c0_179] : memref<400x160xf32, #tpu.memory_space<vmem>>, vector<320x160xf32>
    %c3 = arith.constant 3 : index
    %c0_180 = arith.constant 0 : index
    %c0_181 = arith.constant 0 : index
    %219 = vector.load %arg4[%c3, %c0_180, %c0_181] : memref<5x160x32xf32, #tpu.memory_space<vmem>>, vector<1x160x32xf32>
    %220 = vector.shape_cast %219 : vector<1x160x32xf32> to vector<160x32xf32>
    %cst_182 = arith.constant dense<0.000000e+00> : vector<320x32xf32>
    %221 = tpu.matmul %218, %220, %cst_182 {dimension_numbers = #tpu.dot_dimension_numbers<[1], [0], [0], [1], [0, 0, 1, 1], [], []>} : vector<320x160xf32>, vector<160x32xf32>, vector<320x32xf32> -> vector<320x32xf32>
    %222 = arith.addf %217, %221 : vector<320x32xf32>
    %c80_183 = arith.constant 80 : index
    %c0_184 = arith.constant 0 : index
    %223 = vector.load %arg15[%c80_183, %c0_184] : memref<400x160xf32, #tpu.memory_space<vmem>>, vector<320x160xf32>
    %c4 = arith.constant 4 : index
    %c0_185 = arith.constant 0 : index
    %c0_186 = arith.constant 0 : index
    %224 = vector.load %arg4[%c4, %c0_185, %c0_186] : memref<5x160x32xf32, #tpu.memory_space<vmem>>, vector<1x160x32xf32>
    %225 = vector.shape_cast %224 : vector<1x160x32xf32> to vector<160x32xf32>
    %cst_187 = arith.constant dense<0.000000e+00> : vector<320x32xf32>
    %226 = tpu.matmul %223, %225, %cst_187 {dimension_numbers = #tpu.dot_dimension_numbers<[1], [0], [0], [1], [0, 0, 1, 1], [], []>} : vector<320x160xf32>, vector<160x32xf32>, vector<320x32xf32> -> vector<320x32xf32>
    %227 = arith.addf %222, %226 : vector<320x32xf32>
    %c0_188 = arith.constant 0 : index
    %c0_189 = arith.constant 0 : index
    %228 = vector.load %arg5[%c0_188, %c0_189] : memref<1x32xf32, #tpu.memory_space<vmem>>, vector<1x32xf32>
    %229 = vector.broadcast %228 : vector<1x32xf32> to vector<320x32xf32>
    %230 = arith.addf %227, %229 : vector<320x32xf32>
    %c0_190 = arith.constant 0 : index
    %c0_191 = arith.constant 0 : index
    %231 = vector.load %arg13[%c0_190, %c0_191] : memref<1024x32xf32, #tpu.memory_space<vmem>>, vector<320x32xf32>
    tpu.vector_store %arg13[%c0_190, %c0_191], %230 {strides = array<i32>} : memref<1024x32xf32, #tpu.memory_space<vmem>>, vector<320x32xf32>,
    %232 = tpu.iota {dimensions = array<i32: 1>} : vector<8x16xi32>
    %233 = tpu.iota {dimensions = array<i32: 0>} : vector<8x16xi32>
    %c2_i32_192 = arith.constant 2 : i32
    %234 = vector.broadcast %c2_i32_192 : i32 to vector<8x16xi32>
    %235 = arith.muli %234, %233 : vector<8x16xi32>
    %236 = arith.cmpi eq, %232, %235 : vector<8x16xi32>
    %237 = arith.extui %236 : vector<8x16xi1> to vector<8x16xi32>
    %238 = arith.sitofp %237 : vector<8x16xi32> to vector<8x16xf32>
    %c2_i32_193 = arith.constant 2 : i32
    %239 = vector.broadcast %c2_i32_193 : i32 to vector<8x16xi32>
    %240 = arith.muli %239, %233 : vector<8x16xi32>
    %c1_i32_194 = arith.constant 1 : i32
    %241 = vector.broadcast %c1_i32_194 : i32 to vector<8x16xi32>
    %242 = arith.addi %240, %241 : vector<8x16xi32>
    %243 = arith.cmpi eq, %232, %242 : vector<8x16xi32>
    %244 = arith.extui %243 : vector<8x16xi1> to vector<8x16xi32>
    %245 = arith.sitofp %244 : vector<8x16xi32> to vector<8x16xf32>
    %c0_195 = arith.constant 0 : index
    %c0_196 = arith.constant 0 : index
    %246 = vector.load %arg13[%c0_195, %c0_196] : memref<1024x32xf32, #tpu.memory_space<vmem>>, vector<16x32xf32>
    %c20_197 = arith.constant 20 : index
    %c0_198 = arith.constant 0 : index
    %247 = vector.load %arg13[%c20_197, %c0_198] : memref<1024x32xf32, #tpu.memory_space<vmem>>, vector<16x32xf32>
    %248 = arith.maximumf %246, %247 : vector<16x32xf32>
    %cst_199 = arith.constant dense<0.000000e+00> : vector<8x32xf32>
    %249 = tpu.matmul %238, %248, %cst_199 {dimension_numbers = #tpu.dot_dimension_numbers<[1], [0], [0], [1], [0, 0, 1, 1], [], []>} : vector<8x16xf32>, vector<16x32xf32>, vector<8x32xf32> -> vector<8x32xf32>
    %cst_200 = arith.constant dense<0.000000e+00> : vector<8x32xf32>
    %250 = tpu.matmul %245, %248, %cst_200 {dimension_numbers = #tpu.dot_dimension_numbers<[1], [0], [0], [1], [0, 0, 1, 1], [], []>} : vector<8x16xf32>, vector<16x32xf32>, vector<8x32xf32> -> vector<8x32xf32>
    %251 = arith.maximumf %249, %250 : vector<8x32xf32>
    %c26 = arith.constant 26 : index
    %c0_201 = arith.constant 0 : index
    %252 = vector.load %arg16[%c26, %c0_201] : memref<144x160xf32, #tpu.memory_space<vmem>>, vector<8x32xf32>
    tpu.vector_store %arg16[%c26, %c0_201], %251 {strides = array<i32>} : memref<144x160xf32, #tpu.memory_space<vmem>>, vector<8x32xf32>,
    %c25 = arith.constant 25 : index
    %c32_202 = arith.constant 32 : index
    %253 = vector.load %arg16[%c25, %c32_202] : memref<144x160xf32, #tpu.memory_space<vmem>>, vector<8x32xf32>
    tpu.vector_store %arg16[%c25, %c32_202], %251 {strides = array<i32>} : memref<144x160xf32, #tpu.memory_space<vmem>>, vector<8x32xf32>,
    %c24 = arith.constant 24 : index
    %c64_203 = arith.constant 64 : index
    %254 = vector.load %arg16[%c24, %c64_203] : memref<144x160xf32, #tpu.memory_space<vmem>>, vector<8x32xf32>
    tpu.vector_store %arg16[%c24, %c64_203], %251 {strides = array<i32>} : memref<144x160xf32, #tpu.memory_space<vmem>>, vector<8x32xf32>,
    %c23 = arith.constant 23 : index
    %c96_204 = arith.constant 96 : index
    %255 = vector.load %arg16[%c23, %c96_204] : memref<144x160xf32, #tpu.memory_space<vmem>>, vector<8x32xf32>
    tpu.vector_store %arg16[%c23, %c96_204], %251 {strides = array<i32>} : memref<144x160xf32, #tpu.memory_space<vmem>>, vector<8x32xf32>,
    %c22 = arith.constant 22 : index
    %c128_205 = arith.constant 128 : index
    %256 = vector.load %arg16[%c22, %c128_205] : memref<144x160xf32, #tpu.memory_space<vmem>>, vector<8x32xf32>
    tpu.vector_store %arg16[%c22, %c128_205], %251 {strides = array<i32>} : memref<144x160xf32, #tpu.memory_space<vmem>>, vector<8x32xf32>,
    %c40_206 = arith.constant 40 : index
    %c0_207 = arith.constant 0 : index
    %257 = vector.load %arg13[%c40_206, %c0_207] : memref<1024x32xf32, #tpu.memory_space<vmem>>, vector<16x32xf32>
    %c60_208 = arith.constant 60 : index
    %c0_209 = arith.constant 0 : index
    %258 = vector.load %arg13[%c60_208, %c0_209] : memref<1024x32xf32, #tpu.memory_space<vmem>>, vector<16x32xf32>
    %259 = arith.maximumf %257, %258 : vector<16x32xf32>
    %cst_210 = arith.constant dense<0.000000e+00> : vector<8x32xf32>
    %260 = tpu.matmul %238, %259, %cst_210 {dimension_numbers = #tpu.dot_dimension_numbers<[1], [0], [0], [1], [0, 0, 1, 1], [], []>} : vector<8x16xf32>, vector<16x32xf32>, vector<8x32xf32> -> vector<8x32xf32>
    %cst_211 = arith.constant dense<0.000000e+00> : vector<8x32xf32>
    %261 = tpu.matmul %245, %259, %cst_211 {dimension_numbers = #tpu.dot_dimension_numbers<[1], [0], [0], [1], [0, 0, 1, 1], [], []>} : vector<8x16xf32>, vector<16x32xf32>, vector<8x32xf32> -> vector<8x32xf32>
    %262 = arith.maximumf %260, %261 : vector<8x32xf32>
    %c38_212 = arith.constant 38 : index
    %c0_213 = arith.constant 0 : index
    %263 = vector.load %arg16[%c38_212, %c0_213] : memref<144x160xf32, #tpu.memory_space<vmem>>, vector<8x32xf32>
    tpu.vector_store %arg16[%c38_212, %c0_213], %262 {strides = array<i32>} : memref<144x160xf32, #tpu.memory_space<vmem>>, vector<8x32xf32>,
    %c37 = arith.constant 37 : index
    %c32_214 = arith.constant 32 : index
    %264 = vector.load %arg16[%c37, %c32_214] : memref<144x160xf32, #tpu.memory_space<vmem>>, vector<8x32xf32>
    tpu.vector_store %arg16[%c37, %c32_214], %262 {strides = array<i32>} : memref<144x160xf32, #tpu.memory_space<vmem>>, vector<8x32xf32>,
    %c36 = arith.constant 36 : index
    %c64_215 = arith.constant 64 : index
    %265 = vector.load %arg16[%c36, %c64_215] : memref<144x160xf32, #tpu.memory_space<vmem>>, vector<8x32xf32>
    tpu.vector_store %arg16[%c36, %c64_215], %262 {strides = array<i32>} : memref<144x160xf32, #tpu.memory_space<vmem>>, vector<8x32xf32>,
    %c35 = arith.constant 35 : index
    %c96_216 = arith.constant 96 : index
    %266 = vector.load %arg16[%c35, %c96_216] : memref<144x160xf32, #tpu.memory_space<vmem>>, vector<8x32xf32>
    tpu.vector_store %arg16[%c35, %c96_216], %262 {strides = array<i32>} : memref<144x160xf32, #tpu.memory_space<vmem>>, vector<8x32xf32>,
    %c34 = arith.constant 34 : index
    %c128_217 = arith.constant 128 : index
    %267 = vector.load %arg16[%c34, %c128_217] : memref<144x160xf32, #tpu.memory_space<vmem>>, vector<8x32xf32>
    tpu.vector_store %arg16[%c34, %c128_217], %262 {strides = array<i32>} : memref<144x160xf32, #tpu.memory_space<vmem>>, vector<8x32xf32>,
    %c80_218 = arith.constant 80 : index
    %c0_219 = arith.constant 0 : index
    %268 = vector.load %arg13[%c80_218, %c0_219] : memref<1024x32xf32, #tpu.memory_space<vmem>>, vector<16x32xf32>
    %c100_220 = arith.constant 100 : index
    %c0_221 = arith.constant 0 : index
    %269 = vector.load %arg13[%c100_220, %c0_221] : memref<1024x32xf32, #tpu.memory_space<vmem>>, vector<16x32xf32>
    %270 = arith.maximumf %268, %269 : vector<16x32xf32>
    %cst_222 = arith.constant dense<0.000000e+00> : vector<8x32xf32>
    %271 = tpu.matmul %238, %270, %cst_222 {dimension_numbers = #tpu.dot_dimension_numbers<[1], [0], [0], [1], [0, 0, 1, 1], [], []>} : vector<8x16xf32>, vector<16x32xf32>, vector<8x32xf32> -> vector<8x32xf32>
    %cst_223 = arith.constant dense<0.000000e+00> : vector<8x32xf32>
    %272 = tpu.matmul %245, %270, %cst_223 {dimension_numbers = #tpu.dot_dimension_numbers<[1], [0], [0], [1], [0, 0, 1, 1], [], []>} : vector<8x16xf32>, vector<16x32xf32>, vector<8x32xf32> -> vector<8x32xf32>
    %273 = arith.maximumf %271, %272 : vector<8x32xf32>
    %c50 = arith.constant 50 : index
    %c0_224 = arith.constant 0 : index
    %274 = vector.load %arg16[%c50, %c0_224] : memref<144x160xf32, #tpu.memory_space<vmem>>, vector<8x32xf32>
    tpu.vector_store %arg16[%c50, %c0_224], %273 {strides = array<i32>} : memref<144x160xf32, #tpu.memory_space<vmem>>, vector<8x32xf32>,
    %c49 = arith.constant 49 : index
    %c32_225 = arith.constant 32 : index
    %275 = vector.load %arg16[%c49, %c32_225] : memref<144x160xf32, #tpu.memory_space<vmem>>, vector<8x32xf32>
    tpu.vector_store %arg16[%c49, %c32_225], %273 {strides = array<i32>} : memref<144x160xf32, #tpu.memory_space<vmem>>, vector<8x32xf32>,
    %c48 = arith.constant 48 : index
    %c64_226 = arith.constant 64 : index
    %276 = vector.load %arg16[%c48, %c64_226] : memref<144x160xf32, #tpu.memory_space<vmem>>, vector<8x32xf32>
    tpu.vector_store %arg16[%c48, %c64_226], %273 {strides = array<i32>} : memref<144x160xf32, #tpu.memory_space<vmem>>, vector<8x32xf32>,
    %c47 = arith.constant 47 : index
    %c96_227 = arith.constant 96 : index
    %277 = vector.load %arg16[%c47, %c96_227] : memref<144x160xf32, #tpu.memory_space<vmem>>, vector<8x32xf32>
    tpu.vector_store %arg16[%c47, %c96_227], %273 {strides = array<i32>} : memref<144x160xf32, #tpu.memory_space<vmem>>, vector<8x32xf32>,
    %c46 = arith.constant 46 : index
    %c128_228 = arith.constant 128 : index
    %278 = vector.load %arg16[%c46, %c128_228] : memref<144x160xf32, #tpu.memory_space<vmem>>, vector<8x32xf32>
    tpu.vector_store %arg16[%c46, %c128_228], %273 {strides = array<i32>} : memref<144x160xf32, #tpu.memory_space<vmem>>, vector<8x32xf32>,
    %c120_229 = arith.constant 120 : index
    %c0_230 = arith.constant 0 : index
    %279 = vector.load %arg13[%c120_229, %c0_230] : memref<1024x32xf32, #tpu.memory_space<vmem>>, vector<16x32xf32>
    %c140_231 = arith.constant 140 : index
    %c0_232 = arith.constant 0 : index
    %280 = vector.load %arg13[%c140_231, %c0_232] : memref<1024x32xf32, #tpu.memory_space<vmem>>, vector<16x32xf32>
    %281 = arith.maximumf %279, %280 : vector<16x32xf32>
    %cst_233 = arith.constant dense<0.000000e+00> : vector<8x32xf32>
    %282 = tpu.matmul %238, %281, %cst_233 {dimension_numbers = #tpu.dot_dimension_numbers<[1], [0], [0], [1], [0, 0, 1, 1], [], []>} : vector<8x16xf32>, vector<16x32xf32>, vector<8x32xf32> -> vector<8x32xf32>
    %cst_234 = arith.constant dense<0.000000e+00> : vector<8x32xf32>
    %283 = tpu.matmul %245, %281, %cst_234 {dimension_numbers = #tpu.dot_dimension_numbers<[1], [0], [0], [1], [0, 0, 1, 1], [], []>} : vector<8x16xf32>, vector<16x32xf32>, vector<8x32xf32> -> vector<8x32xf32>
    %284 = arith.maximumf %282, %283 : vector<8x32xf32>
    %c62_235 = arith.constant 62 : index
    %c0_236 = arith.constant 0 : index
    %285 = vector.load %arg16[%c62_235, %c0_236] : memref<144x160xf32, #tpu.memory_space<vmem>>, vector<8x32xf32>
    tpu.vector_store %arg16[%c62_235, %c0_236], %284 {strides = array<i32>} : memref<144x160xf32, #tpu.memory_space<vmem>>, vector<8x32xf32>,
    %c61_237 = arith.constant 61 : index
    %c32_238 = arith.constant 32 : index
    %286 = vector.load %arg16[%c61_237, %c32_238] : memref<144x160xf32, #tpu.memory_space<vmem>>, vector<8x32xf32>
    tpu.vector_store %arg16[%c61_237, %c32_238], %284 {strides = array<i32>} : memref<144x160xf32, #tpu.memory_space<vmem>>, vector<8x32xf32>,
    %c60_239 = arith.constant 60 : index
    %c64_240 = arith.constant 64 : index
    %287 = vector.load %arg16[%c60_239, %c64_240] : memref<144x160xf32, #tpu.memory_space<vmem>>, vector<8x32xf32>
    tpu.vector_store %arg16[%c60_239, %c64_240], %284 {strides = array<i32>} : memref<144x160xf32, #tpu.memory_space<vmem>>, vector<8x32xf32>,
    %c59_241 = arith.constant 59 : index
    %c96_242 = arith.constant 96 : index
    %288 = vector.load %arg16[%c59_241, %c96_242] : memref<144x160xf32, #tpu.memory_space<vmem>>, vector<8x32xf32>
    tpu.vector_store %arg16[%c59_241, %c96_242], %284 {strides = array<i32>} : memref<144x160xf32, #tpu.memory_space<vmem>>, vector<8x32xf32>,
    %c58_243 = arith.constant 58 : index
    %c128_244 = arith.constant 128 : index
    %289 = vector.load %arg16[%c58_243, %c128_244] : memref<144x160xf32, #tpu.memory_space<vmem>>, vector<8x32xf32>
    tpu.vector_store %arg16[%c58_243, %c128_244], %284 {strides = array<i32>} : memref<144x160xf32, #tpu.memory_space<vmem>>, vector<8x32xf32>,
    %c160_245 = arith.constant 160 : index
    %c0_246 = arith.constant 0 : index
    %290 = vector.load %arg13[%c160_245, %c0_246] : memref<1024x32xf32, #tpu.memory_space<vmem>>, vector<16x32xf32>
    %c180_247 = arith.constant 180 : index
    %c0_248 = arith.constant 0 : index
    %291 = vector.load %arg13[%c180_247, %c0_248] : memref<1024x32xf32, #tpu.memory_space<vmem>>, vector<16x32xf32>
    %292 = arith.maximumf %290, %291 : vector<16x32xf32>
    %cst_249 = arith.constant dense<0.000000e+00> : vector<8x32xf32>
    %293 = tpu.matmul %238, %292, %cst_249 {dimension_numbers = #tpu.dot_dimension_numbers<[1], [0], [0], [1], [0, 0, 1, 1], [], []>} : vector<8x16xf32>, vector<16x32xf32>, vector<8x32xf32> -> vector<8x32xf32>
    %cst_250 = arith.constant dense<0.000000e+00> : vector<8x32xf32>
    %294 = tpu.matmul %245, %292, %cst_250 {dimension_numbers = #tpu.dot_dimension_numbers<[1], [0], [0], [1], [0, 0, 1, 1], [], []>} : vector<8x16xf32>, vector<16x32xf32>, vector<8x32xf32> -> vector<8x32xf32>
    %295 = arith.maximumf %293, %294 : vector<8x32xf32>
    %c74 = arith.constant 74 : index
    %c0_251 = arith.constant 0 : index
    %296 = vector.load %arg16[%c74, %c0_251] : memref<144x160xf32, #tpu.memory_space<vmem>>, vector<8x32xf32>
    tpu.vector_store %arg16[%c74, %c0_251], %295 {strides = array<i32>} : memref<144x160xf32, #tpu.memory_space<vmem>>, vector<8x32xf32>,
    %c73 = arith.constant 73 : index
    %c32_252 = arith.constant 32 : index
    %297 = vector.load %arg16[%c73, %c32_252] : memref<144x160xf32, #tpu.memory_space<vmem>>, vector<8x32xf32>
    tpu.vector_store %arg16[%c73, %c32_252], %295 {strides = array<i32>} : memref<144x160xf32, #tpu.memory_space<vmem>>, vector<8x32xf32>,
    %c72 = arith.constant 72 : index
    %c64_253 = arith.constant 64 : index
    %298 = vector.load %arg16[%c72, %c64_253] : memref<144x160xf32, #tpu.memory_space<vmem>>, vector<8x32xf32>
    tpu.vector_store %arg16[%c72, %c64_253], %295 {strides = array<i32>} : memref<144x160xf32, #tpu.memory_space<vmem>>, vector<8x32xf32>,
    %c71 = arith.constant 71 : index
    %c96_254 = arith.constant 96 : index
    %299 = vector.load %arg16[%c71, %c96_254] : memref<144x160xf32, #tpu.memory_space<vmem>>, vector<8x32xf32>
    tpu.vector_store %arg16[%c71, %c96_254], %295 {strides = array<i32>} : memref<144x160xf32, #tpu.memory_space<vmem>>, vector<8x32xf32>,
    %c70 = arith.constant 70 : index
    %c128_255 = arith.constant 128 : index
    %300 = vector.load %arg16[%c70, %c128_255] : memref<144x160xf32, #tpu.memory_space<vmem>>, vector<8x32xf32>
    tpu.vector_store %arg16[%c70, %c128_255], %295 {strides = array<i32>} : memref<144x160xf32, #tpu.memory_space<vmem>>, vector<8x32xf32>,
    %c200_256 = arith.constant 200 : index
    %c0_257 = arith.constant 0 : index
    %301 = vector.load %arg13[%c200_256, %c0_257] : memref<1024x32xf32, #tpu.memory_space<vmem>>, vector<16x32xf32>
    %c220_258 = arith.constant 220 : index
    %c0_259 = arith.constant 0 : index
    %302 = vector.load %arg13[%c220_258, %c0_259] : memref<1024x32xf32, #tpu.memory_space<vmem>>, vector<16x32xf32>
    %303 = arith.maximumf %301, %302 : vector<16x32xf32>
    %cst_260 = arith.constant dense<0.000000e+00> : vector<8x32xf32>
    %304 = tpu.matmul %238, %303, %cst_260 {dimension_numbers = #tpu.dot_dimension_numbers<[1], [0], [0], [1], [0, 0, 1, 1], [], []>} : vector<8x16xf32>, vector<16x32xf32>, vector<8x32xf32> -> vector<8x32xf32>
    %cst_261 = arith.constant dense<0.000000e+00> : vector<8x32xf32>
    %305 = tpu.matmul %245, %303, %cst_261 {dimension_numbers = #tpu.dot_dimension_numbers<[1], [0], [0], [1], [0, 0, 1, 1], [], []>} : vector<8x16xf32>, vector<16x32xf32>, vector<8x32xf32> -> vector<8x32xf32>
    %306 = arith.maximumf %304, %305 : vector<8x32xf32>
    %c86 = arith.constant 86 : index
    %c0_262 = arith.constant 0 : index
    %307 = vector.load %arg16[%c86, %c0_262] : memref<144x160xf32, #tpu.memory_space<vmem>>, vector<8x32xf32>
    tpu.vector_store %arg16[%c86, %c0_262], %306 {strides = array<i32>} : memref<144x160xf32, #tpu.memory_space<vmem>>, vector<8x32xf32>,
    %c85 = arith.constant 85 : index
    %c32_263 = arith.constant 32 : index
    %308 = vector.load %arg16[%c85, %c32_263] : memref<144x160xf32, #tpu.memory_space<vmem>>, vector<8x32xf32>
    tpu.vector_store %arg16[%c85, %c32_263], %306 {strides = array<i32>} : memref<144x160xf32, #tpu.memory_space<vmem>>, vector<8x32xf32>,
    %c84 = arith.constant 84 : index
    %c64_264 = arith.constant 64 : index
    %309 = vector.load %arg16[%c84, %c64_264] : memref<144x160xf32, #tpu.memory_space<vmem>>, vector<8x32xf32>
    tpu.vector_store %arg16[%c84, %c64_264], %306 {strides = array<i32>} : memref<144x160xf32, #tpu.memory_space<vmem>>, vector<8x32xf32>,
    %c83 = arith.constant 83 : index
    %c96_265 = arith.constant 96 : index
    %310 = vector.load %arg16[%c83, %c96_265] : memref<144x160xf32, #tpu.memory_space<vmem>>, vector<8x32xf32>
    tpu.vector_store %arg16[%c83, %c96_265], %306 {strides = array<i32>} : memref<144x160xf32, #tpu.memory_space<vmem>>, vector<8x32xf32>,
    %c82_266 = arith.constant 82 : index
    %c128_267 = arith.constant 128 : index
    %311 = vector.load %arg16[%c82_266, %c128_267] : memref<144x160xf32, #tpu.memory_space<vmem>>, vector<8x32xf32>
    tpu.vector_store %arg16[%c82_266, %c128_267], %306 {strides = array<i32>} : memref<144x160xf32, #tpu.memory_space<vmem>>, vector<8x32xf32>,
    %c240_268 = arith.constant 240 : index
    %c0_269 = arith.constant 0 : index
    %312 = vector.load %arg13[%c240_268, %c0_269] : memref<1024x32xf32, #tpu.memory_space<vmem>>, vector<16x32xf32>
    %c260_270 = arith.constant 260 : index
    %c0_271 = arith.constant 0 : index
    %313 = vector.load %arg13[%c260_270, %c0_271] : memref<1024x32xf32, #tpu.memory_space<vmem>>, vector<16x32xf32>
    %314 = arith.maximumf %312, %313 : vector<16x32xf32>
    %cst_272 = arith.constant dense<0.000000e+00> : vector<8x32xf32>
    %315 = tpu.matmul %238, %314, %cst_272 {dimension_numbers = #tpu.dot_dimension_numbers<[1], [0], [0], [1], [0, 0, 1, 1], [], []>} : vector<8x16xf32>, vector<16x32xf32>, vector<8x32xf32> -> vector<8x32xf32>
    %cst_273 = arith.constant dense<0.000000e+00> : vector<8x32xf32>
    %316 = tpu.matmul %245, %314, %cst_273 {dimension_numbers = #tpu.dot_dimension_numbers<[1], [0], [0], [1], [0, 0, 1, 1], [], []>} : vector<8x16xf32>, vector<16x32xf32>, vector<8x32xf32> -> vector<8x32xf32>
    %317 = arith.maximumf %315, %316 : vector<8x32xf32>
    %c98_274 = arith.constant 98 : index
    %c0_275 = arith.constant 0 : index
    %318 = vector.load %arg16[%c98_274, %c0_275] : memref<144x160xf32, #tpu.memory_space<vmem>>, vector<8x32xf32>
    tpu.vector_store %arg16[%c98_274, %c0_275], %317 {strides = array<i32>} : memref<144x160xf32, #tpu.memory_space<vmem>>, vector<8x32xf32>,
    %c97 = arith.constant 97 : index
    %c32_276 = arith.constant 32 : index
    %319 = vector.load %arg16[%c97, %c32_276] : memref<144x160xf32, #tpu.memory_space<vmem>>, vector<8x32xf32>
    tpu.vector_store %arg16[%c97, %c32_276], %317 {strides = array<i32>} : memref<144x160xf32, #tpu.memory_space<vmem>>, vector<8x32xf32>,
    %c96_277 = arith.constant 96 : index
    %c64_278 = arith.constant 64 : index
    %320 = vector.load %arg16[%c96_277, %c64_278] : memref<144x160xf32, #tpu.memory_space<vmem>>, vector<8x32xf32>
    tpu.vector_store %arg16[%c96_277, %c64_278], %317 {strides = array<i32>} : memref<144x160xf32, #tpu.memory_space<vmem>>, vector<8x32xf32>,
    %c95 = arith.constant 95 : index
    %c96_279 = arith.constant 96 : index
    %321 = vector.load %arg16[%c95, %c96_279] : memref<144x160xf32, #tpu.memory_space<vmem>>, vector<8x32xf32>
    tpu.vector_store %arg16[%c95, %c96_279], %317 {strides = array<i32>} : memref<144x160xf32, #tpu.memory_space<vmem>>, vector<8x32xf32>,
    %c94 = arith.constant 94 : index
    %c128_280 = arith.constant 128 : index
    %322 = vector.load %arg16[%c94, %c128_280] : memref<144x160xf32, #tpu.memory_space<vmem>>, vector<8x32xf32>
    tpu.vector_store %arg16[%c94, %c128_280], %317 {strides = array<i32>} : memref<144x160xf32, #tpu.memory_space<vmem>>, vector<8x32xf32>,
    %c280_281 = arith.constant 280 : index
    %c0_282 = arith.constant 0 : index
    %323 = vector.load %arg13[%c280_281, %c0_282] : memref<1024x32xf32, #tpu.memory_space<vmem>>, vector<16x32xf32>
    %c300_283 = arith.constant 300 : index
    %c0_284 = arith.constant 0 : index
    %324 = vector.load %arg13[%c300_283, %c0_284] : memref<1024x32xf32, #tpu.memory_space<vmem>>, vector<16x32xf32>
    %325 = arith.maximumf %323, %324 : vector<16x32xf32>
    %cst_285 = arith.constant dense<0.000000e+00> : vector<8x32xf32>
    %326 = tpu.matmul %238, %325, %cst_285 {dimension_numbers = #tpu.dot_dimension_numbers<[1], [0], [0], [1], [0, 0, 1, 1], [], []>} : vector<8x16xf32>, vector<16x32xf32>, vector<8x32xf32> -> vector<8x32xf32>
    %cst_286 = arith.constant dense<0.000000e+00> : vector<8x32xf32>
    %327 = tpu.matmul %245, %325, %cst_286 {dimension_numbers = #tpu.dot_dimension_numbers<[1], [0], [0], [1], [0, 0, 1, 1], [], []>} : vector<8x16xf32>, vector<16x32xf32>, vector<8x32xf32> -> vector<8x32xf32>
    %328 = arith.maximumf %326, %327 : vector<8x32xf32>
    %c110 = arith.constant 110 : index
    %c0_287 = arith.constant 0 : index
    %329 = vector.load %arg16[%c110, %c0_287] : memref<144x160xf32, #tpu.memory_space<vmem>>, vector<8x32xf32>
    tpu.vector_store %arg16[%c110, %c0_287], %328 {strides = array<i32>} : memref<144x160xf32, #tpu.memory_space<vmem>>, vector<8x32xf32>,
    %c109 = arith.constant 109 : index
    %c32_288 = arith.constant 32 : index
    %330 = vector.load %arg16[%c109, %c32_288] : memref<144x160xf32, #tpu.memory_space<vmem>>, vector<8x32xf32>
    tpu.vector_store %arg16[%c109, %c32_288], %328 {strides = array<i32>} : memref<144x160xf32, #tpu.memory_space<vmem>>, vector<8x32xf32>,
    %c108 = arith.constant 108 : index
    %c64_289 = arith.constant 64 : index
    %331 = vector.load %arg16[%c108, %c64_289] : memref<144x160xf32, #tpu.memory_space<vmem>>, vector<8x32xf32>
    tpu.vector_store %arg16[%c108, %c64_289], %328 {strides = array<i32>} : memref<144x160xf32, #tpu.memory_space<vmem>>, vector<8x32xf32>,
    %c107 = arith.constant 107 : index
    %c96_290 = arith.constant 96 : index
    %332 = vector.load %arg16[%c107, %c96_290] : memref<144x160xf32, #tpu.memory_space<vmem>>, vector<8x32xf32>
    tpu.vector_store %arg16[%c107, %c96_290], %328 {strides = array<i32>} : memref<144x160xf32, #tpu.memory_space<vmem>>, vector<8x32xf32>,
    %c106 = arith.constant 106 : index
    %c128_291 = arith.constant 128 : index
    %333 = vector.load %arg16[%c106, %c128_291] : memref<144x160xf32, #tpu.memory_space<vmem>>, vector<8x32xf32>
    tpu.vector_store %arg16[%c106, %c128_291], %328 {strides = array<i32>} : memref<144x160xf32, #tpu.memory_space<vmem>>, vector<8x32xf32>,
    %cst_292 = arith.constant 0.000000e+00 : f32
    %334 = vector.broadcast %cst_292 : f32 to vector<96x64xf32>
    %c0_293 = arith.constant 0 : index
    %c0_294 = arith.constant 0 : index
    %335 = vector.load %arg16[%c0_293, %c0_294] : memref<144x160xf32, #tpu.memory_space<vmem>>, vector<96x160xf32>
    %c0_295 = arith.constant 0 : index
    %c0_296 = arith.constant 0 : index
    %c0_297 = arith.constant 0 : index
    %336 = vector.load %arg6[%c0_295, %c0_296, %c0_297] : memref<5x160x64xf32, #tpu.memory_space<vmem>>, vector<1x160x64xf32>
    %337 = vector.shape_cast %336 : vector<1x160x64xf32> to vector<160x64xf32>
    %cst_298 = arith.constant dense<0.000000e+00> : vector<96x64xf32>
    %338 = tpu.matmul %335, %337, %cst_298 {dimension_numbers = #tpu.dot_dimension_numbers<[1], [0], [0], [1], [0, 0, 1, 1], [], []>} : vector<96x160xf32>, vector<160x64xf32>, vector<96x64xf32> -> vector<96x64xf32>
    %339 = arith.addf %334, %338 : vector<96x64xf32>
    %c12 = arith.constant 12 : index
    %c0_299 = arith.constant 0 : index
    %340 = vector.load %arg16[%c12, %c0_299] : memref<144x160xf32, #tpu.memory_space<vmem>>, vector<96x160xf32>
    %c1_300 = arith.constant 1 : index
    %c0_301 = arith.constant 0 : index
    %c0_302 = arith.constant 0 : index
    %341 = vector.load %arg6[%c1_300, %c0_301, %c0_302] : memref<5x160x64xf32, #tpu.memory_space<vmem>>, vector<1x160x64xf32>
    %342 = vector.shape_cast %341 : vector<1x160x64xf32> to vector<160x64xf32>
    %cst_303 = arith.constant dense<0.000000e+00> : vector<96x64xf32>
    %343 = tpu.matmul %340, %342, %cst_303 {dimension_numbers = #tpu.dot_dimension_numbers<[1], [0], [0], [1], [0, 0, 1, 1], [], []>} : vector<96x160xf32>, vector<160x64xf32>, vector<96x64xf32> -> vector<96x64xf32>
    %344 = arith.addf %339, %343 : vector<96x64xf32>
    %c24_304 = arith.constant 24 : index
    %c0_305 = arith.constant 0 : index
    %345 = vector.load %arg16[%c24_304, %c0_305] : memref<144x160xf32, #tpu.memory_space<vmem>>, vector<96x160xf32>
    %c2_306 = arith.constant 2 : index
    %c0_307 = arith.constant 0 : index
    %c0_308 = arith.constant 0 : index
    %346 = vector.load %arg6[%c2_306, %c0_307, %c0_308] : memref<5x160x64xf32, #tpu.memory_space<vmem>>, vector<1x160x64xf32>
    %347 = vector.shape_cast %346 : vector<1x160x64xf32> to vector<160x64xf32>
    %cst_309 = arith.constant dense<0.000000e+00> : vector<96x64xf32>
    %348 = tpu.matmul %345, %347, %cst_309 {dimension_numbers = #tpu.dot_dimension_numbers<[1], [0], [0], [1], [0, 0, 1, 1], [], []>} : vector<96x160xf32>, vector<160x64xf32>, vector<96x64xf32> -> vector<96x64xf32>
    %349 = arith.addf %344, %348 : vector<96x64xf32>
    %c36_310 = arith.constant 36 : index
    %c0_311 = arith.constant 0 : index
    %350 = vector.load %arg16[%c36_310, %c0_311] : memref<144x160xf32, #tpu.memory_space<vmem>>, vector<96x160xf32>
    %c3_312 = arith.constant 3 : index
    %c0_313 = arith.constant 0 : index
    %c0_314 = arith.constant 0 : index
    %351 = vector.load %arg6[%c3_312, %c0_313, %c0_314] : memref<5x160x64xf32, #tpu.memory_space<vmem>>, vector<1x160x64xf32>
    %352 = vector.shape_cast %351 : vector<1x160x64xf32> to vector<160x64xf32>
    %cst_315 = arith.constant dense<0.000000e+00> : vector<96x64xf32>
    %353 = tpu.matmul %350, %352, %cst_315 {dimension_numbers = #tpu.dot_dimension_numbers<[1], [0], [0], [1], [0, 0, 1, 1], [], []>} : vector<96x160xf32>, vector<160x64xf32>, vector<96x64xf32> -> vector<96x64xf32>
    %354 = arith.addf %349, %353 : vector<96x64xf32>
    %c48_316 = arith.constant 48 : index
    %c0_317 = arith.constant 0 : index
    %355 = vector.load %arg16[%c48_316, %c0_317] : memref<144x160xf32, #tpu.memory_space<vmem>>, vector<96x160xf32>
    %c4_318 = arith.constant 4 : index
    %c0_319 = arith.constant 0 : index
    %c0_320 = arith.constant 0 : index
    %356 = vector.load %arg6[%c4_318, %c0_319, %c0_320] : memref<5x160x64xf32, #tpu.memory_space<vmem>>, vector<1x160x64xf32>
    %357 = vector.shape_cast %356 : vector<1x160x64xf32> to vector<160x64xf32>
    %cst_321 = arith.constant dense<0.000000e+00> : vector<96x64xf32>
    %358 = tpu.matmul %355, %357, %cst_321 {dimension_numbers = #tpu.dot_dimension_numbers<[1], [0], [0], [1], [0, 0, 1, 1], [], []>} : vector<96x160xf32>, vector<160x64xf32>, vector<96x64xf32> -> vector<96x64xf32>
    %359 = arith.addf %354, %358 : vector<96x64xf32>
    %c0_322 = arith.constant 0 : index
    %c0_323 = arith.constant 0 : index
    %360 = vector.load %arg7[%c0_322, %c0_323] : memref<1x64xf32, #tpu.memory_space<vmem>>, vector<1x64xf32>
    %361 = vector.broadcast %360 : vector<1x64xf32> to vector<96x64xf32>
    %362 = arith.addf %359, %361 : vector<96x64xf32>
    %c0_324 = arith.constant 0 : index
    %c0_325 = arith.constant 0 : index
    %363 = vector.load %arg14[%c0_324, %c0_325] : memref<96x64xf32, #tpu.memory_space<vmem>>, vector<96x64xf32>
    tpu.vector_store %arg14[%c0_324, %c0_325], %362 {strides = array<i32>} : memref<96x64xf32, #tpu.memory_space<vmem>>, vector<96x64xf32>,
    %364 = tpu.iota {dimensions = array<i32: 1>} : vector<4x8xi32>
    %365 = tpu.iota {dimensions = array<i32: 0>} : vector<4x8xi32>
    %c2_i32_326 = arith.constant 2 : i32
    %366 = vector.broadcast %c2_i32_326 : i32 to vector<4x8xi32>
    %367 = arith.muli %366, %365 : vector<4x8xi32>
    %368 = arith.cmpi eq, %364, %367 : vector<4x8xi32>
    %369 = arith.extui %368 : vector<4x8xi1> to vector<4x8xi32>
    %370 = arith.sitofp %369 : vector<4x8xi32> to vector<4x8xf32>
    %c2_i32_327 = arith.constant 2 : i32
    %371 = vector.broadcast %c2_i32_327 : i32 to vector<4x8xi32>
    %372 = arith.muli %371, %365 : vector<4x8xi32>
    %c1_i32_328 = arith.constant 1 : i32
    %373 = vector.broadcast %c1_i32_328 : i32 to vector<4x8xi32>
    %374 = arith.addi %372, %373 : vector<4x8xi32>
    %375 = arith.cmpi eq, %364, %374 : vector<4x8xi32>
    %376 = arith.extui %375 : vector<4x8xi1> to vector<4x8xi32>
    %377 = arith.sitofp %376 : vector<4x8xi32> to vector<4x8xf32>
    %c0_329 = arith.constant 0 : index
    %c0_330 = arith.constant 0 : index
    %378 = vector.load %arg14[%c0_329, %c0_330] : memref<96x64xf32, #tpu.memory_space<vmem>>, vector<8x64xf32>
    %c12_331 = arith.constant 12 : index
    %c0_332 = arith.constant 0 : index
    %379 = vector.load %arg14[%c12_331, %c0_332] : memref<96x64xf32, #tpu.memory_space<vmem>>, vector<8x64xf32>
    %380 = arith.maximumf %378, %379 : vector<8x64xf32>
    %cst_333 = arith.constant dense<0.000000e+00> : vector<4x64xf32>
    %381 = tpu.matmul %370, %380, %cst_333 {dimension_numbers = #tpu.dot_dimension_numbers<[1], [0], [0], [1], [0, 0, 1, 1], [], []>} : vector<4x8xf32>, vector<8x64xf32>, vector<4x64xf32> -> vector<4x64xf32>
    %cst_334 = arith.constant dense<0.000000e+00> : vector<4x64xf32>
    %382 = tpu.matmul %377, %380, %cst_334 {dimension_numbers = #tpu.dot_dimension_numbers<[1], [0], [0], [1], [0, 0, 1, 1], [], []>} : vector<4x8xf32>, vector<8x64xf32>, vector<4x64xf32> -> vector<4x64xf32>
    %383 = arith.maximumf %381, %382 : vector<4x64xf32>
    %c0_335 = arith.constant 0 : index
    %c0_336 = arith.constant 0 : index
    %384 = vector.load %arg17[%c0_335, %c0_336] : memref<16x64xf32, #tpu.memory_space<vmem>>, vector<4x64xf32>
    tpu.vector_store %arg17[%c0_335, %c0_336], %383 {strides = array<i32>} : memref<16x64xf32, #tpu.memory_space<vmem>>, vector<4x64xf32>,
    %c24_337 = arith.constant 24 : index
    %c0_338 = arith.constant 0 : index
    %385 = vector.load %arg14[%c24_337, %c0_338] : memref<96x64xf32, #tpu.memory_space<vmem>>, vector<8x64xf32>
    %c36_339 = arith.constant 36 : index
    %c0_340 = arith.constant 0 : index
    %386 = vector.load %arg14[%c36_339, %c0_340] : memref<96x64xf32, #tpu.memory_space<vmem>>, vector<8x64xf32>
    %387 = arith.maximumf %385, %386 : vector<8x64xf32>
    %cst_341 = arith.constant dense<0.000000e+00> : vector<4x64xf32>
    %388 = tpu.matmul %370, %387, %cst_341 {dimension_numbers = #tpu.dot_dimension_numbers<[1], [0], [0], [1], [0, 0, 1, 1], [], []>} : vector<4x8xf32>, vector<8x64xf32>, vector<4x64xf32> -> vector<4x64xf32>
    %cst_342 = arith.constant dense<0.000000e+00> : vector<4x64xf32>
    %389 = tpu.matmul %377, %387, %cst_342 {dimension_numbers = #tpu.dot_dimension_numbers<[1], [0], [0], [1], [0, 0, 1, 1], [], []>} : vector<4x8xf32>, vector<8x64xf32>, vector<4x64xf32> -> vector<4x64xf32>
    %390 = arith.maximumf %388, %389 : vector<4x64xf32>
    %c4_343 = arith.constant 4 : index
    %c0_344 = arith.constant 0 : index
    %391 = vector.load %arg17[%c4_343, %c0_344] : memref<16x64xf32, #tpu.memory_space<vmem>>, vector<4x64xf32>
    tpu.vector_store %arg17[%c4_343, %c0_344], %390 {strides = array<i32>} : memref<16x64xf32, #tpu.memory_space<vmem>>, vector<4x64xf32>,
    %c48_345 = arith.constant 48 : index
    %c0_346 = arith.constant 0 : index
    %392 = vector.load %arg14[%c48_345, %c0_346] : memref<96x64xf32, #tpu.memory_space<vmem>>, vector<8x64xf32>
    %c60_347 = arith.constant 60 : index
    %c0_348 = arith.constant 0 : index
    %393 = vector.load %arg14[%c60_347, %c0_348] : memref<96x64xf32, #tpu.memory_space<vmem>>, vector<8x64xf32>
    %394 = arith.maximumf %392, %393 : vector<8x64xf32>
    %cst_349 = arith.constant dense<0.000000e+00> : vector<4x64xf32>
    %395 = tpu.matmul %370, %394, %cst_349 {dimension_numbers = #tpu.dot_dimension_numbers<[1], [0], [0], [1], [0, 0, 1, 1], [], []>} : vector<4x8xf32>, vector<8x64xf32>, vector<4x64xf32> -> vector<4x64xf32>
    %cst_350 = arith.constant dense<0.000000e+00> : vector<4x64xf32>
    %396 = tpu.matmul %377, %394, %cst_350 {dimension_numbers = #tpu.dot_dimension_numbers<[1], [0], [0], [1], [0, 0, 1, 1], [], []>} : vector<4x8xf32>, vector<8x64xf32>, vector<4x64xf32> -> vector<4x64xf32>
    %397 = arith.maximumf %395, %396 : vector<4x64xf32>
    %c8 = arith.constant 8 : index
    %c0_351 = arith.constant 0 : index
    %398 = vector.load %arg17[%c8, %c0_351] : memref<16x64xf32, #tpu.memory_space<vmem>>, vector<4x64xf32>
    tpu.vector_store %arg17[%c8, %c0_351], %397 {strides = array<i32>} : memref<16x64xf32, #tpu.memory_space<vmem>>, vector<4x64xf32>,
    %c72_352 = arith.constant 72 : index
    %c0_353 = arith.constant 0 : index
    %399 = vector.load %arg14[%c72_352, %c0_353] : memref<96x64xf32, #tpu.memory_space<vmem>>, vector<8x64xf32>
    %c84_354 = arith.constant 84 : index
    %c0_355 = arith.constant 0 : index
    %400 = vector.load %arg14[%c84_354, %c0_355] : memref<96x64xf32, #tpu.memory_space<vmem>>, vector<8x64xf32>
    %401 = arith.maximumf %399, %400 : vector<8x64xf32>
    %cst_356 = arith.constant dense<0.000000e+00> : vector<4x64xf32>
    %402 = tpu.matmul %370, %401, %cst_356 {dimension_numbers = #tpu.dot_dimension_numbers<[1], [0], [0], [1], [0, 0, 1, 1], [], []>} : vector<4x8xf32>, vector<8x64xf32>, vector<4x64xf32> -> vector<4x64xf32>
    %cst_357 = arith.constant dense<0.000000e+00> : vector<4x64xf32>
    %403 = tpu.matmul %377, %401, %cst_357 {dimension_numbers = #tpu.dot_dimension_numbers<[1], [0], [0], [1], [0, 0, 1, 1], [], []>} : vector<4x8xf32>, vector<8x64xf32>, vector<4x64xf32> -> vector<4x64xf32>
    %404 = arith.maximumf %402, %403 : vector<4x64xf32>
    %c12_358 = arith.constant 12 : index
    %c0_359 = arith.constant 0 : index
    %405 = vector.load %arg17[%c12_358, %c0_359] : memref<16x64xf32, #tpu.memory_space<vmem>>, vector<4x64xf32>
    tpu.vector_store %arg17[%c12_358, %c0_359], %404 {strides = array<i32>} : memref<16x64xf32, #tpu.memory_space<vmem>>, vector<4x64xf32>,
    %c0_360 = arith.constant 0 : index
    %c0_361 = arith.constant 0 : index
    %406 = vector.load %arg9[%c0_360, %c0_361] : memref<1x64xf32, #tpu.memory_space<vmem>>, vector<1x64xf32>
    %c0_362 = arith.constant 0 : index
    %c0_363 = arith.constant 0 : index
    %407 = vector.load %arg17[%c0_362, %c0_363] : memref<16x64xf32, #tpu.memory_space<vmem>>, vector<1x64xf32>
    %c0_364 = arith.constant 0 : index
    %c0_365 = arith.constant 0 : index
    %c0_366 = arith.constant 0 : index
    %408 = vector.load %arg8[%c0_364, %c0_365, %c0_366] : memref<16x64x64xf32, #tpu.memory_space<vmem>>, vector<1x64x64xf32>
    %409 = vector.shape_cast %408 : vector<1x64x64xf32> to vector<64x64xf32>
    %cst_367 = arith.constant dense<0.000000e+00> : vector<1x64xf32>
    %410 = tpu.matmul %407, %409, %cst_367 {dimension_numbers = #tpu.dot_dimension_numbers<[1], [0], [0], [1], [0, 0, 1, 1], [], []>} : vector<1x64xf32>, vector<64x64xf32>, vector<1x64xf32> -> vector<1x64xf32>
    %411 = arith.addf %406, %410 : vector<1x64xf32>
    %c1_368 = arith.constant 1 : index
    %c0_369 = arith.constant 0 : index
    %412 = vector.load %arg17[%c1_368, %c0_369] : memref<16x64xf32, #tpu.memory_space<vmem>>, vector<1x64xf32>
    %c1_370 = arith.constant 1 : index
    %c0_371 = arith.constant 0 : index
    %c0_372 = arith.constant 0 : index
    %413 = vector.load %arg8[%c1_370, %c0_371, %c0_372] : memref<16x64x64xf32, #tpu.memory_space<vmem>>, vector<1x64x64xf32>
    %414 = vector.shape_cast %413 : vector<1x64x64xf32> to vector<64x64xf32>
    %cst_373 = arith.constant dense<0.000000e+00> : vector<1x64xf32>
    %415 = tpu.matmul %412, %414, %cst_373 {dimension_numbers = #tpu.dot_dimension_numbers<[1], [0], [0], [1], [0, 0, 1, 1], [], []>} : vector<1x64xf32>, vector<64x64xf32>, vector<1x64xf32> -> vector<1x64xf32>
    %416 = arith.addf %411, %415 : vector<1x64xf32>
    %c2_374 = arith.constant 2 : index
    %c0_375 = arith.constant 0 : index
    %417 = vector.load %arg17[%c2_374, %c0_375] : memref<16x64xf32, #tpu.memory_space<vmem>>, vector<1x64xf32>
    %c2_376 = arith.constant 2 : index
    %c0_377 = arith.constant 0 : index
    %c0_378 = arith.constant 0 : index
    %418 = vector.load %arg8[%c2_376, %c0_377, %c0_378] : memref<16x64x64xf32, #tpu.memory_space<vmem>>, vector<1x64x64xf32>
    %419 = vector.shape_cast %418 : vector<1x64x64xf32> to vector<64x64xf32>
    %cst_379 = arith.constant dense<0.000000e+00> : vector<1x64xf32>
    %420 = tpu.matmul %417, %419, %cst_379 {dimension_numbers = #tpu.dot_dimension_numbers<[1], [0], [0], [1], [0, 0, 1, 1], [], []>} : vector<1x64xf32>, vector<64x64xf32>, vector<1x64xf32> -> vector<1x64xf32>
    %421 = arith.addf %416, %420 : vector<1x64xf32>
    %c3_380 = arith.constant 3 : index
    %c0_381 = arith.constant 0 : index
    %422 = vector.load %arg17[%c3_380, %c0_381] : memref<16x64xf32, #tpu.memory_space<vmem>>, vector<1x64xf32>
    %c3_382 = arith.constant 3 : index
    %c0_383 = arith.constant 0 : index
    %c0_384 = arith.constant 0 : index
    %423 = vector.load %arg8[%c3_382, %c0_383, %c0_384] : memref<16x64x64xf32, #tpu.memory_space<vmem>>, vector<1x64x64xf32>
    %424 = vector.shape_cast %423 : vector<1x64x64xf32> to vector<64x64xf32>
    %cst_385 = arith.constant dense<0.000000e+00> : vector<1x64xf32>
    %425 = tpu.matmul %422, %424, %cst_385 {dimension_numbers = #tpu.dot_dimension_numbers<[1], [0], [0], [1], [0, 0, 1, 1], [], []>} : vector<1x64xf32>, vector<64x64xf32>, vector<1x64xf32> -> vector<1x64xf32>
    %426 = arith.addf %421, %425 : vector<1x64xf32>
    %c4_386 = arith.constant 4 : index
    %c0_387 = arith.constant 0 : index
    %427 = vector.load %arg17[%c4_386, %c0_387] : memref<16x64xf32, #tpu.memory_space<vmem>>, vector<1x64xf32>
    %c4_388 = arith.constant 4 : index
    %c0_389 = arith.constant 0 : index
    %c0_390 = arith.constant 0 : index
    %428 = vector.load %arg8[%c4_388, %c0_389, %c0_390] : memref<16x64x64xf32, #tpu.memory_space<vmem>>, vector<1x64x64xf32>
    %429 = vector.shape_cast %428 : vector<1x64x64xf32> to vector<64x64xf32>
    %cst_391 = arith.constant dense<0.000000e+00> : vector<1x64xf32>
    %430 = tpu.matmul %427, %429, %cst_391 {dimension_numbers = #tpu.dot_dimension_numbers<[1], [0], [0], [1], [0, 0, 1, 1], [], []>} : vector<1x64xf32>, vector<64x64xf32>, vector<1x64xf32> -> vector<1x64xf32>
    %431 = arith.addf %426, %430 : vector<1x64xf32>
    %c5 = arith.constant 5 : index
    %c0_392 = arith.constant 0 : index
    %432 = vector.load %arg17[%c5, %c0_392] : memref<16x64xf32, #tpu.memory_space<vmem>>, vector<1x64xf32>
    %c5_393 = arith.constant 5 : index
    %c0_394 = arith.constant 0 : index
    %c0_395 = arith.constant 0 : index
    %433 = vector.load %arg8[%c5_393, %c0_394, %c0_395] : memref<16x64x64xf32, #tpu.memory_space<vmem>>, vector<1x64x64xf32>
    %434 = vector.shape_cast %433 : vector<1x64x64xf32> to vector<64x64xf32>
    %cst_396 = arith.constant dense<0.000000e+00> : vector<1x64xf32>
    %435 = tpu.matmul %432, %434, %cst_396 {dimension_numbers = #tpu.dot_dimension_numbers<[1], [0], [0], [1], [0, 0, 1, 1], [], []>} : vector<1x64xf32>, vector<64x64xf32>, vector<1x64xf32> -> vector<1x64xf32>
    %436 = arith.addf %431, %435 : vector<1x64xf32>
    %c6 = arith.constant 6 : index
    %c0_397 = arith.constant 0 : index
    %437 = vector.load %arg17[%c6, %c0_397] : memref<16x64xf32, #tpu.memory_space<vmem>>, vector<1x64xf32>
    %c6_398 = arith.constant 6 : index
    %c0_399 = arith.constant 0 : index
    %c0_400 = arith.constant 0 : index
    %438 = vector.load %arg8[%c6_398, %c0_399, %c0_400] : memref<16x64x64xf32, #tpu.memory_space<vmem>>, vector<1x64x64xf32>
    %439 = vector.shape_cast %438 : vector<1x64x64xf32> to vector<64x64xf32>
    %cst_401 = arith.constant dense<0.000000e+00> : vector<1x64xf32>
    %440 = tpu.matmul %437, %439, %cst_401 {dimension_numbers = #tpu.dot_dimension_numbers<[1], [0], [0], [1], [0, 0, 1, 1], [], []>} : vector<1x64xf32>, vector<64x64xf32>, vector<1x64xf32> -> vector<1x64xf32>
    %441 = arith.addf %436, %440 : vector<1x64xf32>
    %c7 = arith.constant 7 : index
    %c0_402 = arith.constant 0 : index
    %442 = vector.load %arg17[%c7, %c0_402] : memref<16x64xf32, #tpu.memory_space<vmem>>, vector<1x64xf32>
    %c7_403 = arith.constant 7 : index
    %c0_404 = arith.constant 0 : index
    %c0_405 = arith.constant 0 : index
    %443 = vector.load %arg8[%c7_403, %c0_404, %c0_405] : memref<16x64x64xf32, #tpu.memory_space<vmem>>, vector<1x64x64xf32>
    %444 = vector.shape_cast %443 : vector<1x64x64xf32> to vector<64x64xf32>
    %cst_406 = arith.constant dense<0.000000e+00> : vector<1x64xf32>
    %445 = tpu.matmul %442, %444, %cst_406 {dimension_numbers = #tpu.dot_dimension_numbers<[1], [0], [0], [1], [0, 0, 1, 1], [], []>} : vector<1x64xf32>, vector<64x64xf32>, vector<1x64xf32> -> vector<1x64xf32>
    %446 = arith.addf %441, %445 : vector<1x64xf32>
    %c8_407 = arith.constant 8 : index
    %c0_408 = arith.constant 0 : index
    %447 = vector.load %arg17[%c8_407, %c0_408] : memref<16x64xf32, #tpu.memory_space<vmem>>, vector<1x64xf32>
    %c8_409 = arith.constant 8 : index
    %c0_410 = arith.constant 0 : index
    %c0_411 = arith.constant 0 : index
    %448 = vector.load %arg8[%c8_409, %c0_410, %c0_411] : memref<16x64x64xf32, #tpu.memory_space<vmem>>, vector<1x64x64xf32>
    %449 = vector.shape_cast %448 : vector<1x64x64xf32> to vector<64x64xf32>
    %cst_412 = arith.constant dense<0.000000e+00> : vector<1x64xf32>
    %450 = tpu.matmul %447, %449, %cst_412 {dimension_numbers = #tpu.dot_dimension_numbers<[1], [0], [0], [1], [0, 0, 1, 1], [], []>} : vector<1x64xf32>, vector<64x64xf32>, vector<1x64xf32> -> vector<1x64xf32>
    %451 = arith.addf %446, %450 : vector<1x64xf32>
    %c9 = arith.constant 9 : index
    %c0_413 = arith.constant 0 : index
    %452 = vector.load %arg17[%c9, %c0_413] : memref<16x64xf32, #tpu.memory_space<vmem>>, vector<1x64xf32>
    %c9_414 = arith.constant 9 : index
    %c0_415 = arith.constant 0 : index
    %c0_416 = arith.constant 0 : index
    %453 = vector.load %arg8[%c9_414, %c0_415, %c0_416] : memref<16x64x64xf32, #tpu.memory_space<vmem>>, vector<1x64x64xf32>
    %454 = vector.shape_cast %453 : vector<1x64x64xf32> to vector<64x64xf32>
    %cst_417 = arith.constant dense<0.000000e+00> : vector<1x64xf32>
    %455 = tpu.matmul %452, %454, %cst_417 {dimension_numbers = #tpu.dot_dimension_numbers<[1], [0], [0], [1], [0, 0, 1, 1], [], []>} : vector<1x64xf32>, vector<64x64xf32>, vector<1x64xf32> -> vector<1x64xf32>
    %456 = arith.addf %451, %455 : vector<1x64xf32>
    %c10 = arith.constant 10 : index
    %c0_418 = arith.constant 0 : index
    %457 = vector.load %arg17[%c10, %c0_418] : memref<16x64xf32, #tpu.memory_space<vmem>>, vector<1x64xf32>
    %c10_419 = arith.constant 10 : index
    %c0_420 = arith.constant 0 : index
    %c0_421 = arith.constant 0 : index
    %458 = vector.load %arg8[%c10_419, %c0_420, %c0_421] : memref<16x64x64xf32, #tpu.memory_space<vmem>>, vector<1x64x64xf32>
    %459 = vector.shape_cast %458 : vector<1x64x64xf32> to vector<64x64xf32>
    %cst_422 = arith.constant dense<0.000000e+00> : vector<1x64xf32>
    %460 = tpu.matmul %457, %459, %cst_422 {dimension_numbers = #tpu.dot_dimension_numbers<[1], [0], [0], [1], [0, 0, 1, 1], [], []>} : vector<1x64xf32>, vector<64x64xf32>, vector<1x64xf32> -> vector<1x64xf32>
    %461 = arith.addf %456, %460 : vector<1x64xf32>
    %c11 = arith.constant 11 : index
    %c0_423 = arith.constant 0 : index
    %462 = vector.load %arg17[%c11, %c0_423] : memref<16x64xf32, #tpu.memory_space<vmem>>, vector<1x64xf32>
    %c11_424 = arith.constant 11 : index
    %c0_425 = arith.constant 0 : index
    %c0_426 = arith.constant 0 : index
    %463 = vector.load %arg8[%c11_424, %c0_425, %c0_426] : memref<16x64x64xf32, #tpu.memory_space<vmem>>, vector<1x64x64xf32>
    %464 = vector.shape_cast %463 : vector<1x64x64xf32> to vector<64x64xf32>
    %cst_427 = arith.constant dense<0.000000e+00> : vector<1x64xf32>
    %465 = tpu.matmul %462, %464, %cst_427 {dimension_numbers = #tpu.dot_dimension_numbers<[1], [0], [0], [1], [0, 0, 1, 1], [], []>} : vector<1x64xf32>, vector<64x64xf32>, vector<1x64xf32> -> vector<1x64xf32>
    %466 = arith.addf %461, %465 : vector<1x64xf32>
    %c12_428 = arith.constant 12 : index
    %c0_429 = arith.constant 0 : index
    %467 = vector.load %arg17[%c12_428, %c0_429] : memref<16x64xf32, #tpu.memory_space<vmem>>, vector<1x64xf32>
    %c12_430 = arith.constant 12 : index
    %c0_431 = arith.constant 0 : index
    %c0_432 = arith.constant 0 : index
    %468 = vector.load %arg8[%c12_430, %c0_431, %c0_432] : memref<16x64x64xf32, #tpu.memory_space<vmem>>, vector<1x64x64xf32>
    %469 = vector.shape_cast %468 : vector<1x64x64xf32> to vector<64x64xf32>
    %cst_433 = arith.constant dense<0.000000e+00> : vector<1x64xf32>
    %470 = tpu.matmul %467, %469, %cst_433 {dimension_numbers = #tpu.dot_dimension_numbers<[1], [0], [0], [1], [0, 0, 1, 1], [], []>} : vector<1x64xf32>, vector<64x64xf32>, vector<1x64xf32> -> vector<1x64xf32>
    %471 = arith.addf %466, %470 : vector<1x64xf32>
    %c13 = arith.constant 13 : index
    %c0_434 = arith.constant 0 : index
    %472 = vector.load %arg17[%c13, %c0_434] : memref<16x64xf32, #tpu.memory_space<vmem>>, vector<1x64xf32>
    %c13_435 = arith.constant 13 : index
    %c0_436 = arith.constant 0 : index
    %c0_437 = arith.constant 0 : index
    %473 = vector.load %arg8[%c13_435, %c0_436, %c0_437] : memref<16x64x64xf32, #tpu.memory_space<vmem>>, vector<1x64x64xf32>
    %474 = vector.shape_cast %473 : vector<1x64x64xf32> to vector<64x64xf32>
    %cst_438 = arith.constant dense<0.000000e+00> : vector<1x64xf32>
    %475 = tpu.matmul %472, %474, %cst_438 {dimension_numbers = #tpu.dot_dimension_numbers<[1], [0], [0], [1], [0, 0, 1, 1], [], []>} : vector<1x64xf32>, vector<64x64xf32>, vector<1x64xf32> -> vector<1x64xf32>
    %476 = arith.addf %471, %475 : vector<1x64xf32>
    %c14 = arith.constant 14 : index
    %c0_439 = arith.constant 0 : index
    %477 = vector.load %arg17[%c14, %c0_439] : memref<16x64xf32, #tpu.memory_space<vmem>>, vector<1x64xf32>
    %c14_440 = arith.constant 14 : index
    %c0_441 = arith.constant 0 : index
    %c0_442 = arith.constant 0 : index
    %478 = vector.load %arg8[%c14_440, %c0_441, %c0_442] : memref<16x64x64xf32, #tpu.memory_space<vmem>>, vector<1x64x64xf32>
    %479 = vector.shape_cast %478 : vector<1x64x64xf32> to vector<64x64xf32>
    %cst_443 = arith.constant dense<0.000000e+00> : vector<1x64xf32>
    %480 = tpu.matmul %477, %479, %cst_443 {dimension_numbers = #tpu.dot_dimension_numbers<[1], [0], [0], [1], [0, 0, 1, 1], [], []>} : vector<1x64xf32>, vector<64x64xf32>, vector<1x64xf32> -> vector<1x64xf32>
    %481 = arith.addf %476, %480 : vector<1x64xf32>
    %c15 = arith.constant 15 : index
    %c0_444 = arith.constant 0 : index
    %482 = vector.load %arg17[%c15, %c0_444] : memref<16x64xf32, #tpu.memory_space<vmem>>, vector<1x64xf32>
    %c15_445 = arith.constant 15 : index
    %c0_446 = arith.constant 0 : index
    %c0_447 = arith.constant 0 : index
    %483 = vector.load %arg8[%c15_445, %c0_446, %c0_447] : memref<16x64x64xf32, #tpu.memory_space<vmem>>, vector<1x64x64xf32>
    %484 = vector.shape_cast %483 : vector<1x64x64xf32> to vector<64x64xf32>
    %cst_448 = arith.constant dense<0.000000e+00> : vector<1x64xf32>
    %485 = tpu.matmul %482, %484, %cst_448 {dimension_numbers = #tpu.dot_dimension_numbers<[1], [0], [0], [1], [0, 0, 1, 1], [], []>} : vector<1x64xf32>, vector<64x64xf32>, vector<1x64xf32> -> vector<1x64xf32>
    %486 = arith.addf %481, %485 : vector<1x64xf32>
    %c0_449 = arith.constant 0 : index
    %c0_450 = arith.constant 0 : index
    %487 = vector.load %arg10[%c0_449, %c0_450] : memref<64x10xf32, #tpu.memory_space<vmem>>, vector<64x10xf32>
    %cst_451 = arith.constant dense<0.000000e+00> : vector<1x10xf32>
    %488 = tpu.matmul %486, %487, %cst_451 {dimension_numbers = #tpu.dot_dimension_numbers<[1], [0], [0], [1], [0, 0, 1, 1], [], []>} : vector<1x64xf32>, vector<64x10xf32>, vector<1x10xf32> -> vector<1x10xf32>
    %c0_452 = arith.constant 0 : index
    %c0_453 = arith.constant 0 : index
    %489 = vector.load %arg11[%c0_452, %c0_453] : memref<1x10xf32, #tpu.memory_space<vmem>>, vector<1x10xf32>
    %490 = arith.addf %488, %489 : vector<1x10xf32>
    %c0_454 = arith.constant 0 : index
    %c0_455 = arith.constant 0 : index
    %c0_456 = arith.constant 0 : index
    %491 = vector.load %arg12[%c0_454, %c0_455, %c0_456] : memref<1x1x10xf32, #tpu.memory_space<vmem>>, vector<1x1x10xf32>
    %492 = vector.shape_cast %491 : vector<1x1x10xf32> to vector<1x10xf32>
    %493 = vector.shape_cast %490 : vector<1x10xf32> to vector<1x1x10xf32>
    tpu.vector_store %arg12[%c0_454, %c0_455, %c0_456], %493 {strides = array<i32>} : memref<1x1x10xf32, #tpu.memory_space<vmem>>, vector<1x1x10xf32>,
    return
  }
  func.func @transform_0(%arg0: i32) -> (i32, i32, i32) {
    %c0_i32 = arith.constant 0 : i32
    %c0_i32_0 = arith.constant 0 : i32
    %c0_i32_1 = arith.constant 0 : i32
    return %arg0, %c0_i32, %c0_i32_0 : i32, i32, i32
  }
  func.func @transform_1(%arg0: i32) -> (i32, i32) {
    %c0_i32 = arith.constant 0 : i32
    %c0_i32_0 = arith.constant 0 : i32
    %c0_i32_1 = arith.constant 0 : i32
    return %c0_i32, %c0_i32_0 : i32, i32
  }
  func.func @transform_2(%arg0: i32) -> (i32, i32) {
    %c0_i32 = arith.constant 0 : i32
    %c0_i32_0 = arith.constant 0 : i32
    %c0_i32_1 = arith.constant 0 : i32
    return %c0_i32, %c0_i32_0 : i32, i32
  }
  func.func @transform_3(%arg0: i32) -> (i32, i32, i32) {
    %c0_i32 = arith.constant 0 : i32
    %c0_i32_0 = arith.constant 0 : i32
    %c0_i32_1 = arith.constant 0 : i32
    %c0_i32_2 = arith.constant 0 : i32
    return %c0_i32, %c0_i32_0, %c0_i32_1 : i32, i32, i32
  }
  func.func @transform_4(%arg0: i32) -> (i32, i32) {
    %c0_i32 = arith.constant 0 : i32
    %c0_i32_0 = arith.constant 0 : i32
    %c0_i32_1 = arith.constant 0 : i32
    return %c0_i32, %c0_i32_0 : i32, i32
  }
  func.func @transform_5(%arg0: i32) -> (i32, i32, i32) {
    %c0_i32 = arith.constant 0 : i32
    %c0_i32_0 = arith.constant 0 : i32
    %c0_i32_1 = arith.constant 0 : i32
    %c0_i32_2 = arith.constant 0 : i32
    return %c0_i32, %c0_i32_0, %c0_i32_1 : i32, i32, i32
  }
  func.func @transform_6(%arg0: i32) -> (i32, i32) {
    %c0_i32 = arith.constant 0 : i32
    %c0_i32_0 = arith.constant 0 : i32
    %c0_i32_1 = arith.constant 0 : i32
    return %c0_i32, %c0_i32_0 : i32, i32
  }
  func.func @transform_7(%arg0: i32) -> (i32, i32, i32) {
    %c0_i32 = arith.constant 0 : i32
    %c0_i32_0 = arith.constant 0 : i32
    %c0_i32_1 = arith.constant 0 : i32
    %c0_i32_2 = arith.constant 0 : i32
    return %c0_i32, %c0_i32_0, %c0_i32_1 : i32, i32, i32
  }
  func.func @transform_8(%arg0: i32) -> (i32, i32) {
    %c0_i32 = arith.constant 0 : i32
    %c0_i32_0 = arith.constant 0 : i32
    %c0_i32_1 = arith.constant 0 : i32
    return %c0_i32, %c0_i32_0 : i32, i32
  }
  func.func @transform_9(%arg0: i32) -> (i32, i32) {
    %c0_i32 = arith.constant 0 : i32
    %c0_i32_0 = arith.constant 0 : i32
    %c0_i32_1 = arith.constant 0 : i32
    return %c0_i32, %c0_i32_0 : i32, i32
  }
  func.func @transform_10(%arg0: i32) -> (i32, i32) {
    %c0_i32 = arith.constant 0 : i32
    %c0_i32_0 = arith.constant 0 : i32
    %c0_i32_1 = arith.constant 0 : i32
    return %c0_i32, %c0_i32_0 : i32, i32
  }
  func.func @transform_11(%arg0: i32) -> (i32, i32, i32) {
    %c0_i32 = arith.constant 0 : i32
    %c0_i32_0 = arith.constant 0 : i32
    %c0_i32_1 = arith.constant 0 : i32
    return %arg0, %c0_i32, %c0_i32_0 : i32, i32, i32
  }
}

</mosaic_0001>

<llo_original>
// kernel: network_forward.1
$region0: #{network_forward.1}
  #allocation0 [shape = 'u32[]', space=smem, size = 0x4, offset = 0x4, fixed_abs, tag = 'smem constant byte address 0x4 - core index']
  #allocation1 [shape = 'u32[72,128]{1,0:T(1,128)}', space=vmem, size = 0x9000, scoped, tag = 'internal scratch']
  #allocation2 [shape = 'f32[1024,32]{1,0:T(8,128)}', space=vmem, size = 0x80000, scoped, tag = 'scratch operand']
  #allocation3 [shape = 'f32[96,64]{1,0:T(8,128)}', space=vmem, size = 0xc000, scoped, tag = 'scratch operand']
  #allocation4 [shape = 'f32[400,160]{1,0:T(8,128)}', space=vmem, size = 0x64000, scoped, tag = 'scratch operand']
  #allocation5 [shape = 'f32[144,160]{1,0:T(8,128)}', space=vmem, size = 0x24000, scoped, tag = 'scratch operand']
  #allocation6 [shape = 'f32[16,64]{1,0:T(8,128)}', space=vmem, size = 0x2000, scoped, tag = 'scratch operand']
  %s0 = inlined_call_operand.vmem [shape: f32[2,1024,75], index: 0, kind: input, shape index: {}]
  %s1 = inlined_call_operand.vmem [shape: f32[75,32], index: 1, kind: input, shape index: {}]
  %s2 = inlined_call_operand.vmem [shape: f32[1,32], index: 2, kind: input, shape index: {}]
  %s3 = inlined_call_operand.vmem [shape: f32[5,160,32], index: 3, kind: input, shape index: {}]
  %s4 = inlined_call_operand.vmem [shape: f32[1,32], index: 4, kind: input, shape index: {}]
  %s5 = inlined_call_operand.vmem [shape: f32[5,160,64], index: 5, kind: input, shape index: {}]
  %s6 = inlined_call_operand.vmem [shape: f32[1,64], index: 6, kind: input, shape index: {}]
  %s7 = inlined_call_operand.vmem [shape: f32[16,64,64], index: 7, kind: input, shape index: {}]
  %s8 = inlined_call_operand.vmem [shape: f32[1,64], index: 8, kind: input, shape index: {}]
  %s9 = inlined_call_operand.vmem [shape: f32[64,10], index: 9, kind: input, shape index: {}]
  %s10 = inlined_call_operand.vmem [shape: f32[1,10], index: 10, kind: input, shape index: {}]
  %s11 = inlined_call_operand.hbm [shape: f32[2,1,10], index: 11, kind: output, shape index: {}]
  %s12 = sld [smem:[#allocation0]]
  $region77: #{network_forward.1} parent=0
    _
  %s14 = ssub.s32 1, %s12
  %s15 = scalar_select 0, %s14, %s12
  $region1: #{network_forward.1} parent=0
    #allocation7 [shape = 'u8[1024]{0}', space=vmem, size = 0x400, scoped, tag = 'output window, operand 0']
    #allocation8 [shape = 's32[2]{0}', space=sflag, size = 0x8, scoped, tag = 'scoped memory for network_forward.1']
    %16 = vsyncpa [#allocation8], 0
    %s17 = scalar_lea.sflag [#allocation8], 1
    %18 = vsyncpa %s17, 0
    loop: start=0, step=1, limit=4
    $region2: #{network_forward.1} parent=1 // loop_pre_header
      _
    $region3: #{network_forward.1} parent=1 // loop_header
      %s20 = sphi 0, %s24
      %p21 = scmp.ge.s32.totalorder %s20, 4
      %s30 = sphi 0, %s32
      %s33 = sphi 0, %s30
      %s34 = sphi 0, %s33
      %s50 = sphi 0, %s34
      %s54 = sphi 0, %s54
      %s56 = sphi 0, %s54
      %s57 = sphi 0, %s56
      %s71 = sphi 0, %s57
      %s75 = sphi 0, %s75
      %s77 = sphi 0, %s75
      %s78 = sphi 0, %s77
      %s92 = sphi 0, %s78
      %s96 = sphi 0, %s96
      %s98 = sphi 0, %s96
      %s99 = sphi 0, %s98
      %s113 = sphi 0, %s99
      %s117 = sphi 0, %s117
      %s119 = sphi 0, %s117
      %s120 = sphi 0, %s119
      %s134 = sphi 0, %s120
      %s138 = sphi 0, %s138
      %s140 = sphi 0, %s138
      %s141 = sphi 0, %s140
      %s155 = sphi 0, %s141
      %s159 = sphi 0, %s159
      %s161 = sphi 0, %s159
      %s162 = sphi 0, %s161
      %s176 = sphi 0, %s162
      %s180 = sphi 0, %s180
      %s182 = sphi 0, %s180
      %s183 = sphi 0, %s182
      %s197 = sphi 0, %s183
      %s201 = sphi 0, %s201
      %s203 = sphi 0, %s201
      %s204 = sphi 0, %s203
      %s218 = sphi 0, %s204
      %s222 = sphi 0, %s222
      %s224 = sphi 0, %s222
      %s225 = sphi 0, %s224
      %s239 = sphi 0, %s225
      %s243 = sphi 0, %s243
      %s245 = sphi 0, %s243
      %s246 = sphi 0, %s245
      %s260 = sphi 0, %s246
      %s266 = sphi 0, %s268
      %s269 = sphi 0, %s266
      %s270 = sphi 0, %s269
      %s286 = sphi 0, %s270
    $region4: #{network_forward.1} parent=1 // loop_header_branch
      %23 = sbr.rel (%p21) target = $region8
    $region5: #{network_forward.1} parent=1 // loop_body
      %s25 = ssub.s32 %s20, 1
      %s26 = ssub.s32 %s20, 2
      %s27 = sadd.s32 %s20, 1
      %s28 = ssub.s32 %s20, %s27
      %p29 = scmp.eq.s32.totalorder %s28, 0
      %s31 = sadd.s32 %s30, 1
      %s32 = scalar_select %p29, %s30, %s31
      %p35 = pneg %p29
      %p36 = scmp.eq.s32.totalorder %s20, 1
      %p37 = por %p35, %p36
      %p38 = scmp.ne.s32.totalorder %s30, %s33
      %p39 = scmp.eq.s32.totalorder %s20, 0
      %p40 = por %p38, %p39
      %p41 = scmp.ne.s32.totalorder %s30, %s33
      %p42 = scmp.eq.s32.totalorder %s25, 1
      %p43 = por %p41, %p42
      %p44 = scmp.ne.s32.totalorder %s33, %s34
      %p45 = scmp.eq.s32.totalorder %s25, 0
      %p46 = por %p44, %p45
      %p47 = scmp.ne.s32.totalorder %s33, %s34
      %p48 = scmp.eq.s32.totalorder %s26, 1
      %p49 = por %p47, %p48
      %p51 = scmp.ne.s32.totalorder %s34, %s50
      %p52 = scmp.eq.s32.totalorder %s26, 0
      %p53 = por %p51, %p52
      %s55 = sadd.s32 %s54, 1
      %p58 = scmp.eq.s32.totalorder %s20, 1
      %p59 = scmp.ne.s32.totalorder %s54, %s56
      %p60 = scmp.eq.s32.totalorder %s20, 0
      %p61 = por %p59, %p60
      %p62 = scmp.ne.s32.totalorder %s54, %s56
      %p63 = scmp.eq.s32.totalorder %s25, 1
      %p64 = por %p62, %p63
      %p65 = scmp.ne.s32.totalorder %s56, %s57
      %p66 = scmp.eq.s32.totalorder %s25, 0
      %p67 = por %p65, %p66
      %p68 = scmp.ne.s32.totalorder %s56, %s57
      %p69 = scmp.eq.s32.totalorder %s26, 1
      %p70 = por %p68, %p69
      %p72 = scmp.ne.s32.totalorder %s57, %s71
      %p73 = scmp.eq.s32.totalorder %s26, 0
      %p74 = por %p72, %p73
      %s76 = sadd.s32 %s75, 1
      %p79 = scmp.eq.s32.totalorder %s20, 1
      %p80 = scmp.ne.s32.totalorder %s75, %s77
      %p81 = scmp.eq.s32.totalorder %s20, 0
      %p82 = por %p80, %p81
      %p83 = scmp.ne.s32.totalorder %s75, %s77
      %p84 = scmp.eq.s32.totalorder %s25, 1
      %p85 = por %p83, %p84
      %p86 = scmp.ne.s32.totalorder %s77, %s78
      %p87 = scmp.eq.s32.totalorder %s25, 0
      %p88 = por %p86, %p87
      %p89 = scmp.ne.s32.totalorder %s77, %s78
      %p90 = scmp.eq.s32.totalorder %s26, 1
      %p91 = por %p89, %p90
      %p93 = scmp.ne.s32.totalorder %s78, %s92
      %p94 = scmp.eq.s32.totalorder %s26, 0
      %p95 = por %p93, %p94
      %s97 = sadd.s32 %s96, 1
      %p100 = scmp.eq.s32.totalorder %s20, 1
      %p101 = scmp.ne.s32.totalorder %s96, %s98
      %p102 = scmp.eq.s32.totalorder %s20, 0
      %p103 = por %p101, %p102
      %p104 = scmp.ne.s32.totalorder %s96, %s98
      %p105 = scmp.eq.s32.totalorder %s25, 1
      %p106 = por %p104, %p105
      %p107 = scmp.ne.s32.totalorder %s98, %s99
      %p108 = scmp.eq.s32.totalorder %s25, 0
      %p109 = por %p107, %p108
      %p110 = scmp.ne.s32.totalorder %s98, %s99
      %p111 = scmp.eq.s32.totalorder %s26, 1
      %p112 = por %p110, %p111
      %p114 = scmp.ne.s32.totalorder %s99, %s113
      %p115 = scmp.eq.s32.totalorder %s26, 0
      %p116 = por %p114, %p115
      %s118 = sadd.s32 %s117, 1
      %p121 = scmp.eq.s32.totalorder %s20, 1
      %p122 = scmp.ne.s32.totalorder %s117, %s119
      %p123 = scmp.eq.s32.totalorder %s20, 0
      %p124 = por %p122, %p123
      %p125 = scmp.ne.s32.totalorder %s117, %s119
      %p126 = scmp.eq.s32.totalorder %s25, 1
      %p127 = por %p125, %p126
      %p128 = scmp.ne.s32.totalorder %s119, %s120
      %p129 = scmp.eq.s32.totalorder %s25, 0
      %p130 = por %p128, %p129
      %p131 = scmp.ne.s32.totalorder %s119, %s120
      %p132 = scmp.eq.s32.totalorder %s26, 1
      %p133 = por %p131, %p132
      %p135 = scmp.ne.s32.totalorder %s120, %s134
      %p136 = scmp.eq.s32.totalorder %s26, 0
      %p137 = por %p135, %p136
      %s139 = sadd.s32 %s138, 1
      %p142 = scmp.eq.s32.totalorder %s20, 1
      %p143 = scmp.ne.s32.totalorder %s138, %s140
      %p144 = scmp.eq.s32.totalorder %s20, 0
      %p145 = por %p143, %p144
      %p146 = scmp.ne.s32.totalorder %s138, %s140
      %p147 = scmp.eq.s32.totalorder %s25, 1
      %p148 = por %p146, %p147
      %p149 = scmp.ne.s32.totalorder %s140, %s141
      %p150 = scmp.eq.s32.totalorder %s25, 0
      %p151 = por %p149, %p150
      %p152 = scmp.ne.s32.totalorder %s140, %s141
      %p153 = scmp.eq.s32.totalorder %s26, 1
      %p154 = por %p152, %p153
      %p156 = scmp.ne.s32.totalorder %s141, %s155
      %p157 = scmp.eq.s32.totalorder %s26, 0
      %p158 = por %p156, %p157
      %s160 = sadd.s32 %s159, 1
      %p163 = scmp.eq.s32.totalorder %s20, 1
      %p164 = scmp.ne.s32.totalorder %s159, %s161
      %p165 = scmp.eq.s32.totalorder %s20, 0
      %p166 = por %p164, %p165
      %p167 = scmp.ne.s32.totalorder %s159, %s161
      %p168 = scmp.eq.s32.totalorder %s25, 1
      %p169 = por %p167, %p168
      %p170 = scmp.ne.s32.totalorder %s161, %s162
      %p171 = scmp.eq.s32.totalorder %s25, 0
      %p172 = por %p170, %p171
      %p173 = scmp.ne.s32.totalorder %s161, %s162
      %p174 = scmp.eq.s32.totalorder %s26, 1
      %p175 = por %p173, %p174
      %p177 = scmp.ne.s32.totalorder %s162, %s176
      %p178 = scmp.eq.s32.totalorder %s26, 0
      %p179 = por %p177, %p178
      %s181 = sadd.s32 %s180, 1
      %p184 = scmp.eq.s32.totalorder %s20, 1
      %p185 = scmp.ne.s32.totalorder %s180, %s182
      %p186 = scmp.eq.s32.totalorder %s20, 0
      %p187 = por %p185, %p186
      %p188 = scmp.ne.s32.totalorder %s180, %s182
      %p189 = scmp.eq.s32.totalorder %s25, 1
      %p190 = por %p188, %p189
      %p191 = scmp.ne.s32.totalorder %s182, %s183
      %p192 = scmp.eq.s32.totalorder %s25, 0
      %p193 = por %p191, %p192
      %p194 = scmp.ne.s32.totalorder %s182, %s183
      %p195 = scmp.eq.s32.totalorder %s26, 1
      %p196 = por %p194, %p195
      %p198 = scmp.ne.s32.totalorder %s183, %s197
      %p199 = scmp.eq.s32.totalorder %s26, 0
      %p200 = por %p198, %p199
      %s202 = sadd.s32 %s201, 1
      %p205 = scmp.eq.s32.totalorder %s20, 1
      %p206 = scmp.ne.s32.totalorder %s201, %s203
      %p207 = scmp.eq.s32.totalorder %s20, 0
      %p208 = por %p206, %p207
      %p209 = scmp.ne.s32.totalorder %s201, %s203
      %p210 = scmp.eq.s32.totalorder %s25, 1
      %p211 = por %p209, %p210
      %p212 = scmp.ne.s32.totalorder %s203, %s204
      %p213 = scmp.eq.s32.totalorder %s25, 0
      %p214 = por %p212, %p213
      %p215 = scmp.ne.s32.totalorder %s203, %s204
      %p216 = scmp.eq.s32.totalorder %s26, 1
      %p217 = por %p215, %p216
      %p219 = scmp.ne.s32.totalorder %s204, %s218
      %p220 = scmp.eq.s32.totalorder %s26, 0
      %p221 = por %p219, %p220
      %s223 = sadd.s32 %s222, 1
      %p226 = scmp.eq.s32.totalorder %s20, 1
      %p227 = scmp.ne.s32.totalorder %s222, %s224
      %p228 = scmp.eq.s32.totalorder %s20, 0
      %p229 = por %p227, %p228
      %p230 = scmp.ne.s32.totalorder %s222, %s224
      %p231 = scmp.eq.s32.totalorder %s25, 1
      %p232 = por %p230, %p231
      %p233 = scmp.ne.s32.totalorder %s224, %s225
      %p234 = scmp.eq.s32.totalorder %s25, 0
      %p235 = por %p233, %p234
      %p236 = scmp.ne.s32.totalorder %s224, %s225
      %p237 = scmp.eq.s32.totalorder %s26, 1
      %p238 = por %p236, %p237
      %p240 = scmp.ne.s32.totalorder %s225, %s239
      %p241 = scmp.eq.s32.totalorder %s26, 0
      %p242 = por %p240, %p241
      %s244 = sadd.s32 %s243, 1
      %p247 = scmp.eq.s32.totalorder %s20, 1
      %p248 = scmp.ne.s32.totalorder %s243, %s245
      %p249 = scmp.eq.s32.totalorder %s20, 0
      %p250 = por %p248, %p249
      %p251 = scmp.ne.s32.totalorder %s243, %s245
      %p252 = scmp.eq.s32.totalorder %s25, 1
      %p253 = por %p251, %p252
      %p254 = scmp.ne.s32.totalorder %s245, %s246
      %p255 = scmp.eq.s32.totalorder %s25, 0
      %p256 = por %p254, %p255
      %p257 = scmp.ne.s32.totalorder %s245, %s246
      %p258 = scmp.eq.s32.totalorder %s26, 1
      %p259 = por %p257, %p258
      %p261 = scmp.ne.s32.totalorder %s246, %s260
      %p262 = scmp.eq.s32.totalorder %s26, 0
      %p263 = por %p261, %p262
      %s264 = ssub.s32 %s20, %s27
      %p265 = scmp.eq.s32.totalorder %s264, 0
      %s267 = sadd.s32 %s266, 1
      %s268 = scalar_select %p265, %s266, %s267
      %p271 = pneg %p265
      %p272 = scmp.eq.s32.totalorder %s20, 1
      %p273 = por %p271, %p272
      %p274 = scmp.ne.s32.totalorder %s266, %s269
      %p275 = scmp.eq.s32.totalorder %s20, 0
      %p276 = por %p274, %p275
      %p277 = scmp.ne.s32.totalorder %s266, %s269
      %p278 = scmp.eq.s32.totalorder %s25, 1
      %p279 = por %p277, %p278
      %p280 = scmp.ne.s32.totalorder %s269, %s270
      %p281 = scmp.eq.s32.totalorder %s25, 0
      %p282 = por %p280, %p281
      %p283 = scmp.ne.s32.totalorder %s269, %s270
      %p284 = scmp.eq.s32.totalorder %s26, 1
      %p285 = por %p283, %p284
      %p287 = scmp.ne.s32.totalorder %s270, %s286
      %p288 = scmp.eq.s32.totalorder %s26, 0
      %p289 = por %p287, %p288
      %p290 = scmp.le.s32.totalorder 1, %s20
      %p291 = scmp.lt.s32.totalorder %s20, 3
      %p292 = pnand %p290, %p291
      %p293 = pneg %p292
      // Predicated region
      $region9: #{network_forward.1} parent=5 // pred_check
        _
      $region10: #{network_forward.1} parent=5 // pred_check_branch
        %295 = sbr.rel (%p292) target = $region12
      $region11: #{network_forward.1} parent=5 // pred_region
        %s296 = ssub.s32 %s20, 1
        // Predicated region
        $region13: #{network_forward.1} parent=11 // pred_check
          %p297 = pneg %p67
        $region14: #{network_forward.1} parent=11 // pred_check_branch
          %299 = sbr.rel (%p297) target = $region16
        $region15: #{network_forward.1} parent=11 // pred_region
          _
        $region16: #{network_forward.1} parent=11 // pred_fallthru
          _
        // Predicated region
        $region17: #{network_forward.1} parent=11 // pred_check
          %p300 = pneg %p88
        $region18: #{network_forward.1} parent=11 // pred_check_branch
          %302 = sbr.rel (%p300) target = $region20
        $region19: #{network_forward.1} parent=11 // pred_region
          _
        $region20: #{network_forward.1} parent=11 // pred_fallthru
          _
        // Predicated region
        $region21: #{network_forward.1} parent=11 // pred_check
          %p303 = pneg %p109
        $region22: #{network_forward.1} parent=11 // pred_check_branch
          %305 = sbr.rel (%p303) target = $region24
        $region23: #{network_forward.1} parent=11 // pred_region
          _
        $region24: #{network_forward.1} parent=11 // pred_fallthru
          _
        // Predicated region
        $region25: #{network_forward.1} parent=11 // pred_check
          %p306 = pneg %p130
        $region26: #{network_forward.1} parent=11 // pred_check_branch
          %308 = sbr.rel (%p306) target = $region28
        $region27: #{network_forward.1} parent=11 // pred_region
          _
        $region28: #{network_forward.1} parent=11 // pred_fallthru
          _
        // Predicated region
        $region29: #{network_forward.1} parent=11 // pred_check
          %p309 = pneg %p151
        $region30: #{network_forward.1} parent=11 // pred_check_branch
          %311 = sbr.rel (%p309) target = $region32
        $region31: #{network_forward.1} parent=11 // pred_region
          _
        $region32: #{network_forward.1} parent=11 // pred_fallthru
          _
        // Predicated region
        $region33: #{network_forward.1} parent=11 // pred_check
          %p312 = pneg %p172
        $region34: #{network_forward.1} parent=11 // pred_check_branch
          %314 = sbr.rel (%p312) target = $region36
        $region35: #{network_forward.1} parent=11 // pred_region
          _
        $region36: #{network_forward.1} parent=11 // pred_fallthru
          _
        // Predicated region
        $region37: #{network_forward.1} parent=11 // pred_check
          %p315 = pneg %p193
        $region38: #{network_forward.1} parent=11 // pred_check_branch
          %317 = sbr.rel (%p315) target = $region40
        $region39: #{network_forward.1} parent=11 // pred_region
          _
        $region40: #{network_forward.1} parent=11 // pred_fallthru
          _
        // Predicated region
        $region41: #{network_forward.1} parent=11 // pred_check
          %p318 = pneg %p214
        $region42: #{network_forward.1} parent=11 // pred_check_branch
          %320 = sbr.rel (%p318) target = $region44
        $region43: #{network_forward.1} parent=11 // pred_region
          _
        $region44: #{network_forward.1} parent=11 // pred_fallthru
          _
        // Predicated region
        $region45: #{network_forward.1} parent=11 // pred_check
          %p321 = pneg %p235
        $region46: #{network_forward.1} parent=11 // pred_check_branch
          %323 = sbr.rel (%p321) target = $region48
        $region47: #{network_forward.1} parent=11 // pred_region
          _
        $region48: #{network_forward.1} parent=11 // pred_fallthru
          _
        // Predicated region
        $region49: #{network_forward.1} parent=11 // pred_check
          %p324 = pneg %p256
        $region50: #{network_forward.1} parent=11 // pred_check_branch
          %326 = sbr.rel (%p324) target = $region52
        $region51: #{network_forward.1} parent=11 // pred_region
          _
        $region52: #{network_forward.1} parent=11 // pred_fallthru
          _
      $region12: #{network_forward.1} parent=5 // pred_fallthru
        _
      %p327 = scmp.lt.s32.totalorder %s20, 2
      // Predicated region
      $region53: #{network_forward.1} parent=5 // pred_check
        %p328 = pneg %p327
      $region54: #{network_forward.1} parent=5 // pred_check_branch
        %330 = sbr.rel (%p328) target = $region56
      $region55: #{network_forward.1} parent=5 // pred_region
        // Predicated region
        $region57: #{network_forward.1} parent=55 // pred_check
          %p331 = pneg %p40
        $region58: #{network_forward.1} parent=55 // pred_check_branch
          %333 = sbr.rel (%p331) target = $region60
        $region59: #{network_forward.1} parent=55 // pred_region
          %p334 = scmp.lt.s32.totalorder %s20, 1
          %s335 = scalar_select %p334, %s20, 1
          %s336 = smul.addr %s335, 128
          %s337 = smul.addr %s336, 8
          %s338 = scalar_lea.vmem %s0, %s337
        $region60: #{network_forward.1} parent=55 // pred_fallthru
          _
      $region56: #{network_forward.1} parent=5 // pred_fallthru
        _
      %p339 = scmp.le.s32.totalorder 1, %s20
      %p340 = scmp.lt.s32.totalorder %s20, 3
      %p341 = pnand %p339, %p340
      %p342 = pneg %p341
      // Predicated region
      $region61: #{network_forward.1} parent=5 // pred_check
        _
      $region62: #{network_forward.1} parent=5 // pred_check_branch
        %344 = sbr.rel (%p341) target = $region64
      $region63: #{network_forward.1} parent=5 // pred_region
        %s345 = ssub.s32 %s20, 1
        %p346 = scmp.lt.s32.totalorder %s25, 1
        %s347 = scalar_select %p346, %s25, 1
        %s348 = smul.addr %s347, 128
        %s349 = smul.addr %s348, 8
        %s350 = scalar_lea.vmem %s0, %s349
        %p351 = pneg %p46
        %p352 = pneg %p43
        %p353 = pneg %p67
        %p354 = pneg %p64
        %p355 = pneg %p88
        %p356 = pneg %p85
        %p357 = pneg %p109
        %p358 = pneg %p106
        %p359 = pneg %p130
        %p360 = pneg %p127
        %p361 = pneg %p151
        %p362 = pneg %p148
        %p363 = pneg %p172
        %p364 = pneg %p169
        %p365 = pneg %p193
        %p366 = pneg %p190
        %p367 = pneg %p214
        %p368 = pneg %p211
        %p369 = pneg %p235
        %p370 = pneg %p232
        %p371 = pneg %p256
        %p372 = pneg %p253
        %p373 = pneg %p282
        %p374 = pneg %p279
        %s375 = sand.u32 %s269, 1
        %s376 = scalar_lea.sflag [#allocation8], %s375
        %s377 = sand.u32 %s269, 1
        %s378 = scalar_lea.vmem [#allocation7], %s377
        %p379 = scmp.lt.s32.totalorder %s25, 1
        %s380 = scalar_select %p379, %s25, 1
        %s381 = smul.addr %s380, 128
        %s382 = smul.addr %s381, 8
        %s383 = scalar_lea.vmem %s0, %s382
        %384 = vst [vmem:[#allocation4] sm:$0xff] 0.0
        %vm385 = vcmask 261120
        %386 = vst.msk [vmem:[#allocation4 + $0x8] sm:$0xff] %vm385, 0.0
        %387 = vst [vmem:[#allocation4 + $0x10] sm:$0xff] 0.0
        %388 = vst.msk [vmem:[#allocation4 + $0x18] sm:$0xff] %vm385, 0.0
        %389 = vst [vmem:[#allocation4 + $0x20] sm:$0xff] 0.0
        %390 = vst.msk [vmem:[#allocation4 + $0x28] sm:$0xff] %vm385, 0.0
        %391 = vst [vmem:[#allocation4 + $0x30] sm:$0xff] 0.0
        %392 = vst.msk [vmem:[#allocation4 + $0x38] sm:$0xff] %vm385, 0.0
        %393 = vst [vmem:[#allocation4 + $0x40] sm:$0xff] 0.0
        %394 = vst.msk [vmem:[#allocation4 + $0x48] sm:$0xff] %vm385, 0.0
        %395 = vst [vmem:[#allocation4 + $0x50] sm:$0xff] 0.0
        %396 = vst.msk [vmem:[#allocation4 + $0x58] sm:$0xff] %vm385, 0.0
        %397 = vst [vmem:[#allocation4 + $0x60] sm:$0xff] 0.0
        %398 = vst.msk [vmem:[#allocation4 + $0x68] sm:$0xff] %vm385, 0.0
        %399 = vst [vmem:[#allocation4 + $0x70] sm:$0xff] 0.0
        %400 = vst.msk [vmem:[#allocation4 + $0x78] sm:$0xff] %vm385, 0.0
        %401 = vst [vmem:[#allocation4 + $0x80] sm:$0xff] 0.0
        %402 = vst.msk [vmem:[#allocation4 + $0x88] sm:$0xff] %vm385, 0.0
        %403 = vst [vmem:[#allocation4 + $0x90] sm:$0xff] 0.0
        %404 = vst.msk [vmem:[#allocation4 + $0x98] sm:$0xff] %vm385, 0.0
        %405 = vst [vmem:[#allocation4 + $0xa0] sm:$0xff] 0.0
        %406 = vst.msk [vmem:[#allocation4 + $0xa8] sm:$0xff] %vm385, 0.0
        %407 = vst [vmem:[#allocation4 + $0xb0] sm:$0xff] 0.0
        %408 = vst.msk [vmem:[#allocation4 + $0xb8] sm:$0xff] %vm385, 0.0
        %409 = vst [vmem:[#allocation4 + $0xc0] sm:$0xff] 0.0
        %410 = vst.msk [vmem:[#allocation4 + $0xc8] sm:$0xff] %vm385, 0.0
        %411 = vst [vmem:[#allocation4 + $0xd0] sm:$0xff] 0.0
        %412 = vst.msk [vmem:[#allocation4 + $0xd8] sm:$0xff] %vm385, 0.0
        %413 = vst [vmem:[#allocation4 + $0xe0] sm:$0xff] 0.0
        %414 = vst.msk [vmem:[#allocation4 + $0xe8] sm:$0xff] %vm385, 0.0
        %415 = vst [vmem:[#allocation4 + $0xf0] sm:$0xff] 0.0
        %416 = vst.msk [vmem:[#allocation4 + $0xf8] sm:$0xff] %vm385, 0.0
        %417 = vst [vmem:[#allocation4 + $0x100] sm:$0xff] 0.0
        %418 = vst.msk [vmem:[#allocation4 + $0x108] sm:$0xff] %vm385, 0.0
        %419 = vst [vmem:[#allocation4 + $0x110] sm:$0xff] 0.0
        %420 = vst.msk [vmem:[#allocation4 + $0x118] sm:$0xff] %vm385, 0.0
        %421 = vst [vmem:[#allocation4 + $0x120] sm:$0xff] 0.0
        %422 = vst.msk [vmem:[#allocation4 + $0x128] sm:$0xff] %vm385, 0.0
        %423 = vst [vmem:[#allocation4 + $0x130] sm:$0xff] 0.0
        %424 = vst.msk [vmem:[#allocation4 + $0x138] sm:$0xff] %vm385, 0.0
        %425 = vst [vmem:[#allocation4 + $0x140] sm:$0xff] 0.0
        %426 = vst.msk [vmem:[#allocation4 + $0x148] sm:$0xff] %vm385, 0.0
        %427 = vst [vmem:[#allocation4 + $0x150] sm:$0xff] 0.0
        %428 = vst.msk [vmem:[#allocation4 + $0x158] sm:$0xff] %vm385, 0.0
        %429 = vst [vmem:[#allocation4 + $0x160] sm:$0xff] 0.0
        %430 = vst.msk [vmem:[#allocation4 + $0x168] sm:$0xff] %vm385, 0.0
        %431 = vst [vmem:[#allocation4 + $0x170] sm:$0xff] 0.0
        %432 = vst.msk [vmem:[#allocation4 + $0x178] sm:$0xff] %vm385, 0.0
        %433 = vst [vmem:[#allocation4 + $0x180] sm:$0xff] 0.0
        %434 = vst.msk [vmem:[#allocation4 + $0x188] sm:$0xff] %vm385, 0.0
        %435 = vst [vmem:[#allocation4 + $0x190] sm:$0xff] 0.0
        %436 = vst.msk [vmem:[#allocation4 + $0x198] sm:$0xff] %vm385, 0.0
        %437 = vst [vmem:[#allocation4 + $0x1a0] sm:$0xff] 0.0
        %438 = vst.msk [vmem:[#allocation4 + $0x1a8] sm:$0xff] %vm385, 0.0
        %439 = vst [vmem:[#allocation4 + $0x1b0] sm:$0xff] 0.0
        %440 = vst.msk [vmem:[#allocation4 + $0x1b8] sm:$0xff] %vm385, 0.0
        %441 = vst [vmem:[#allocation4 + $0x1c0] sm:$0xff] 0.0
        %442 = vst.msk [vmem:[#allocation4 + $0x1c8] sm:$0xff] %vm385, 0.0
        %443 = vst [vmem:[#allocation4 + $0x1d0] sm:$0xff] 0.0
        %444 = vst.msk [vmem:[#allocation4 + $0x1d8] sm:$0xff] %vm385, 0.0
        %445 = vst [vmem:[#allocation4 + $0x1e0] sm:$0xff] 0.0
        %446 = vst.msk [vmem:[#allocation4 + $0x1e8] sm:$0xff] %vm385, 0.0
        %447 = vst [vmem:[#allocation4 + $0x1f0] sm:$0xff] 0.0
        %448 = vst.msk [vmem:[#allocation4 + $0x1f8] sm:$0xff] %vm385, 0.0
        %449 = vst [vmem:[#allocation4 + $0x200] sm:$0xff] 0.0
        %450 = vst.msk [vmem:[#allocation4 + $0x208] sm:$0xff] %vm385, 0.0
        %451 = vst [vmem:[#allocation4 + $0x210] sm:$0xff] 0.0
        %452 = vst.msk [vmem:[#allocation4 + $0x218] sm:$0xff] %vm385, 0.0
        %453 = vst [vmem:[#allocation4 + $0x220] sm:$0xff] 0.0
        %454 = vst.msk [vmem:[#allocation4 + $0x228] sm:$0xff] %vm385, 0.0
        %455 = vst [vmem:[#allocation4 + $0x230] sm:$0xff] 0.0
        %456 = vst.msk [vmem:[#allocation4 + $0x238] sm:$0xff] %vm385, 0.0
        %457 = vst [vmem:[#allocation4 + $0x240] sm:$0xff] 0.0
        %458 = vst.msk [vmem:[#allocation4 + $0x248] sm:$0xff] %vm385, 0.0
        %459 = vst [vmem:[#allocation4 + $0x250] sm:$0xff] 0.0
        %460 = vst.msk [vmem:[#allocation4 + $0x258] sm:$0xff] %vm385, 0.0
        %461 = vst [vmem:[#allocation4 + $0x260] sm:$0xff] 0.0
        %462 = vst.msk [vmem:[#allocation4 + $0x268] sm:$0xff] %vm385, 0.0
        %463 = vst [vmem:[#allocation4 + $0x270] sm:$0xff] 0.0
        %464 = vst.msk [vmem:[#allocation4 + $0x278] sm:$0xff] %vm385, 0.0
        %465 = vst [vmem:[#allocation4 + $0x280] sm:$0xff] 0.0
        %466 = vst.msk [vmem:[#allocation4 + $0x288] sm:$0xff] %vm385, 0.0
        %467 = vst [vmem:[#allocation4 + $0x290] sm:$0xff] 0.0
        %468 = vst.msk [vmem:[#allocation4 + $0x298] sm:$0xff] %vm385, 0.0
        %469 = vst [vmem:[#allocation4 + $0x2a0] sm:$0xff] 0.0
        %470 = vst.msk [vmem:[#allocation4 + $0x2a8] sm:$0xff] %vm385, 0.0
        %471 = vst [vmem:[#allocation4 + $0x2b0] sm:$0xff] 0.0
        %472 = vst.msk [vmem:[#allocation4 + $0x2b8] sm:$0xff] %vm385, 0.0
        %473 = vst [vmem:[#allocation4 + $0x2c0] sm:$0xff] 0.0
        %474 = vst.msk [vmem:[#allocation4 + $0x2c8] sm:$0xff] %vm385, 0.0
        %475 = vst [vmem:[#allocation4 + $0x2d0] sm:$0xff] 0.0
        %476 = vst.msk [vmem:[#allocation4 + $0x2d8] sm:$0xff] %vm385, 0.0
        %477 = vst [vmem:[#allocation4 + $0x2e0] sm:$0xff] 0.0
        %478 = vst.msk [vmem:[#allocation4 + $0x2e8] sm:$0xff] %vm385, 0.0
        %479 = vst [vmem:[#allocation4 + $0x2f0] sm:$0xff] 0.0
        %480 = vst.msk [vmem:[#allocation4 + $0x2f8] sm:$0xff] %vm385, 0.0
        %481 = vst [vmem:[#allocation4 + $0x300] sm:$0xff] 0.0
        %482 = vst.msk [vmem:[#allocation4 + $0x308] sm:$0xff] %vm385, 0.0
        %483 = vst [vmem:[#allocation4 + $0x310] sm:$0xff] 0.0
        %484 = vst.msk [vmem:[#allocation4 + $0x318] sm:$0xff] %vm385, 0.0
        %485 = vst [vmem:[#allocation5] sm:$0xff] 0.0
        %486 = vst.msk [vmem:[#allocation5 + $0x8] sm:$0xff] %vm385, 0.0
        %487 = vst [vmem:[#allocation5 + $0x10] sm:$0xff] 0.0
        %488 = vst.msk [vmem:[#allocation5 + $0x18] sm:$0xff] %vm385, 0.0
        %489 = vst [vmem:[#allocation5 + $0x20] sm:$0xff] 0.0
        %490 = vst.msk [vmem:[#allocation5 + $0x28] sm:$0xff] %vm385, 0.0
        %491 = vst [vmem:[#allocation5 + $0x30] sm:$0xff] 0.0
        %492 = vst.msk [vmem:[#allocation5 + $0x38] sm:$0xff] %vm385, 0.0
        %493 = vst [vmem:[#allocation5 + $0x40] sm:$0xff] 0.0
        %494 = vst.msk [vmem:[#allocation5 + $0x48] sm:$0xff] %vm385, 0.0
        %495 = vst [vmem:[#allocation5 + $0x50] sm:$0xff] 0.0
        %496 = vst.msk [vmem:[#allocation5 + $0x58] sm:$0xff] %vm385, 0.0
        %497 = vst [vmem:[#allocation5 + $0x60] sm:$0xff] 0.0
        %498 = vst.msk [vmem:[#allocation5 + $0x68] sm:$0xff] %vm385, 0.0
        %499 = vst [vmem:[#allocation5 + $0x70] sm:$0xff] 0.0
        %500 = vst.msk [vmem:[#allocation5 + $0x78] sm:$0xff] %vm385, 0.0
        %501 = vst [vmem:[#allocation5 + $0x80] sm:$0xff] 0.0
        %502 = vst.msk [vmem:[#allocation5 + $0x88] sm:$0xff] %vm385, 0.0
        %503 = vst [vmem:[#allocation5 + $0x90] sm:$0xff] 0.0
        %504 = vst.msk [vmem:[#allocation5 + $0x98] sm:$0xff] %vm385, 0.0
        %505 = vst [vmem:[#allocation5 + $0xa0] sm:$0xff] 0.0
        %506 = vst.msk [vmem:[#allocation5 + $0xa8] sm:$0xff] %vm385, 0.0
        %507 = vst [vmem:[#allocation5 + $0xb0] sm:$0xff] 0.0
        %508 = vst.msk [vmem:[#allocation5 + $0xb8] sm:$0xff] %vm385, 0.0
        %509 = vst [vmem:[#allocation5 + $0xc0] sm:$0xff] 0.0
        %510 = vst.msk [vmem:[#allocation5 + $0xc8] sm:$0xff] %vm385, 0.0
        %511 = vst [vmem:[#allocation5 + $0xd0] sm:$0xff] 0.0
        %512 = vst.msk [vmem:[#allocation5 + $0xd8] sm:$0xff] %vm385, 0.0
        %513 = vst [vmem:[#allocation5 + $0xe0] sm:$0xff] 0.0
        %514 = vst.msk [vmem:[#allocation5 + $0xe8] sm:$0xff] %vm385, 0.0
        %515 = vst [vmem:[#allocation5 + $0xf0] sm:$0xff] 0.0
        %516 = vst.msk [vmem:[#allocation5 + $0xf8] sm:$0xff] %vm385, 0.0
        %517 = vst [vmem:[#allocation5 + $0x100] sm:$0xff] 0.0
        %518 = vst.msk [vmem:[#allocation5 + $0x108] sm:$0xff] %vm385, 0.0
        %519 = vst [vmem:[#allocation5 + $0x110] sm:$0xff] 0.0
        %520 = vst.msk [vmem:[#allocation5 + $0x118] sm:$0xff] %vm385, 0.0
        %v521 = vld [vmem:[%s383] sm:$0xff]
        %v522 = vld [vmem:[%s383 + $0x8] sm:$0xff]
        %v523 = vld [vmem:[%s383 + $0x10] sm:$0xff]
        %v524 = vld [vmem:[%s383 + $0x18] sm:$0xff]
        %v525 = vld [vmem:[%s383 + $0x20] sm:$0xff]
        %v526 = vld [vmem:[%s383 + $0x28] sm:$0xff]
        %v527 = vld [vmem:[%s383 + $0x30] sm:$0xff]
        %v528 = vld [vmem:[%s383 + $0x38] sm:$0xff]
        %v529 = vld [vmem:[%s383 + $0x40] sm:$0xff]
        %v530 = vld [vmem:[%s383 + $0x48] sm:$0xff]
        %v531 = vld [vmem:[%s383 + $0x50] sm:$0xff]
        %v532 = vld [vmem:[%s383 + $0x58] sm:$0xff]
        %v533 = vld [vmem:[%s383 + $0x60] sm:$0xff]
        %v534 = vld [vmem:[%s383 + $0x68] sm:$0xff]
        %v535 = vld [vmem:[%s383 + $0x70] sm:$0xff]
        %v536 = vld [vmem:[%s383 + $0x78] sm:$0xff]
        %v537 = vld [vmem:[%s383 + $0x80] sm:$0xff]
        %v538 = vld [vmem:[%s383 + $0x88] sm:$0xff]
        %v539 = vld [vmem:[%s383 + $0x90] sm:$0xff]
        %v540 = vld [vmem:[%s383 + $0x98] sm:$0xff]
        %v541 = vld [vmem:[%s383 + $0xa0] sm:$0xff]
        %v542 = vld [vmem:[%s383 + $0xa8] sm:$0xff]
        %v543 = vld [vmem:[%s383 + $0xb0] sm:$0xff]
        %v544 = vld [vmem:[%s383 + $0xb8] sm:$0xff]
        %v545 = vld [vmem:[%s383 + $0xc0] sm:$0xff]
        %v546 = vld [vmem:[%s383 + $0xc8] sm:$0xff]
        %v547 = vld [vmem:[%s383 + $0xd0] sm:$0xff]
        %v548 = vld [vmem:[%s383 + $0xd8] sm:$0xff]
        %v549 = vld [vmem:[%s383 + $0xe0] sm:$0xff]
        %v550 = vld [vmem:[%s383 + $0xe8] sm:$0xff]
        %v551 = vld [vmem:[%s383 + $0xf0] sm:$0xff]
        %v552 = vld [vmem:[%s383 + $0xf8] sm:$0xff]
        %v553 = vld [vmem:[%s383 + $0x100] sm:$0xff]
        %v554 = vld [vmem:[%s383 + $0x108] sm:$0xff]
        %v555 = vld [vmem:[%s383 + $0x110] sm:$0xff]
        %v556 = vld [vmem:[%s383 + $0x118] sm:$0xff]
        %v557 = vld [vmem:[%s383 + $0x120] sm:$0xff]
        %v558 = vld [vmem:[%s383 + $0x128] sm:$0xff]
        %v559 = vld [vmem:[%s383 + $0x130] sm:$0xff]
        %v560 = vld [vmem:[%s383 + $0x138] sm:$0xff]
        %v561 = vld [vmem:[%s383 + $0x140] sm:$0xff]
        %v562 = vld [vmem:[%s383 + $0x148] sm:$0xff]
        %v563 = vld [vmem:[%s383 + $0x150] sm:$0xff]
        %v564 = vld [vmem:[%s383 + $0x158] sm:$0xff]
        %v565 = vld [vmem:[%s383 + $0x160] sm:$0xff]
        %v566 = vld [vmem:[%s383 + $0x168] sm:$0xff]
        %v567 = vld [vmem:[%s383 + $0x170] sm:$0xff]
        %v568 = vld [vmem:[%s383 + $0x178] sm:$0xff]
        %v569 = vld [vmem:[%s383 + $0x180] sm:$0xff]
        %v570 = vld [vmem:[%s383 + $0x188] sm:$0xff]
        %v571 = vld [vmem:[%s383 + $0x190] sm:$0xff]
        %v572 = vld [vmem:[%s383 + $0x198] sm:$0xff]
        %v573 = vld [vmem:[%s383 + $0x1a0] sm:$0xff]
        %v574 = vld [vmem:[%s383 + $0x1a8] sm:$0xff]
        %v575 = vld [vmem:[%s383 + $0x1b0] sm:$0xff]
        %v576 = vld [vmem:[%s383 + $0x1b8] sm:$0xff]
        %v577 = vld [vmem:[%s383 + $0x1c0] sm:$0xff]
        %v578 = vld [vmem:[%s383 + $0x1c8] sm:$0xff]
        %v579 = vld [vmem:[%s383 + $0x1d0] sm:$0xff]
        %v580 = vld [vmem:[%s383 + $0x1d8] sm:$0xff]
        %v581 = vld [vmem:[%s383 + $0x1e0] sm:$0xff]
        %v582 = vld [vmem:[%s383 + $0x1e8] sm:$0xff]
        %v583 = vld [vmem:[%s383 + $0x1f0] sm:$0xff]
        %v584 = vld [vmem:[%s383 + $0x1f8] sm:$0xff]
        %v585 = vld [vmem:[%s383 + $0x200] sm:$0xff]
        %v586 = vld [vmem:[%s383 + $0x208] sm:$0xff]
        %v587 = vld [vmem:[%s383 + $0x210] sm:$0xff]
        %v588 = vld [vmem:[%s383 + $0x218] sm:$0xff]
        %v589 = vld [vmem:[%s383 + $0x220] sm:$0xff]
        %v590 = vld [vmem:[%s383 + $0x228] sm:$0xff]
        %v591 = vld [vmem:[%s383 + $0x230] sm:$0xff]
        %v592 = vld [vmem:[%s383 + $0x238] sm:$0xff]
        %v593 = vld [vmem:[%s383 + $0x240] sm:$0xff]
        %v594 = vld [vmem:[%s383 + $0x248] sm:$0xff]
        %v595 = vld [vmem:[%s383 + $0x250] sm:$0xff]
        %v596 = vld [vmem:[%s383 + $0x258] sm:$0xff]
        %v597 = vld [vmem:[%s383 + $0x260] sm:$0xff]
        %v598 = vld [vmem:[%s383 + $0x268] sm:$0xff]
        %v599 = vld [vmem:[%s383 + $0x270] sm:$0xff]
        %v600 = vld [vmem:[%s383 + $0x278] sm:$0xff]
        %v601 = vld [vmem:[%s383 + $0x280] sm:$0xff]
        %v602 = vld [vmem:[%s383 + $0x288] sm:$0xff]
        %v603 = vld [vmem:[%s383 + $0x290] sm:$0xff]
        %v604 = vld [vmem:[%s383 + $0x298] sm:$0xff]
        %v605 = vld [vmem:[%s383 + $0x2a0] sm:$0xff]
        %v606 = vld [vmem:[%s383 + $0x2a8] sm:$0xff]
        %v607 = vld [vmem:[%s383 + $0x2b0] sm:$0xff]
        %v608 = vld [vmem:[%s383 + $0x2b8] sm:$0xff]
        %v609 = vld [vmem:[%s383 + $0x2c0] sm:$0xff]
        %v610 = vld [vmem:[%s383 + $0x2c8] sm:$0xff]
        %v611 = vld [vmem:[%s383 + $0x2d0] sm:$0xff]
        %v612 = vld [vmem:[%s383 + $0x2d8] sm:$0xff]
        %v613 = vld [vmem:[%s383 + $0x2e0] sm:$0xff]
        %v614 = vld [vmem:[%s383 + $0x2e8] sm:$0xff]
        %v615 = vld [vmem:[%s383 + $0x2f0] sm:$0xff]
        %v616 = vld [vmem:[%s383 + $0x2f8] sm:$0xff]
        %v617 = vld [vmem:[%s383 + $0x300] sm:$0xff]
        %v618 = vld [vmem:[%s383 + $0x308] sm:$0xff]
        %v619 = vld [vmem:[%s383 + $0x310] sm:$0xff]
        %v620 = vld [vmem:[%s383 + $0x318] sm:$0xff]
        %v621 = vld [vmem:[%s383 + $0x320] sm:$0xff]
        %v622 = vld [vmem:[%s383 + $0x328] sm:$0xff]
        %v623 = vld [vmem:[%s383 + $0x330] sm:$0xff]
        %v624 = vld [vmem:[%s383 + $0x338] sm:$0xff]
        %v625 = vld [vmem:[%s383 + $0x340] sm:$0xff]
        %v626 = vld [vmem:[%s383 + $0x348] sm:$0xff]
        %v627 = vld [vmem:[%s383 + $0x350] sm:$0xff]
        %v628 = vld [vmem:[%s383 + $0x358] sm:$0xff]
        %v629 = vld [vmem:[%s383 + $0x360] sm:$0xff]
        %v630 = vld [vmem:[%s383 + $0x368] sm:$0xff]
        %v631 = vld [vmem:[%s383 + $0x370] sm:$0xff]
        %v632 = vld [vmem:[%s383 + $0x378] sm:$0xff]
        %v633 = vld [vmem:[%s383 + $0x380] sm:$0xff]
        %v634 = vld [vmem:[%s383 + $0x388] sm:$0xff]
        %v635 = vld [vmem:[%s383 + $0x390] sm:$0xff]
        %v636 = vld [vmem:[%s383 + $0x398] sm:$0xff]
        %v637 = vld [vmem:[%s383 + $0x3a0] sm:$0xff]
        %v638 = vld [vmem:[%s383 + $0x3a8] sm:$0xff]
        %v639 = vld [vmem:[%s383 + $0x3b0] sm:$0xff]
        %v640 = vld [vmem:[%s383 + $0x3b8] sm:$0xff]
        %v641 = vld [vmem:[%s383 + $0x3c0] sm:$0xff]
        %v642 = vld [vmem:[%s383 + $0x3c8] sm:$0xff]
        %v643 = vld [vmem:[%s383 + $0x3d0] sm:$0xff]
        %v644 = vld [vmem:[%s383 + $0x3d8] sm:$0xff]
        %v645 = vld [vmem:[%s383 + $0x3e0] sm:$0xff]
        %v646 = vld [vmem:[%s383 + $0x3e8] sm:$0xff]
        %v647 = vld [vmem:[%s383 + $0x3f0] sm:$0xff]
        %v648 = vld [vmem:[%s383 + $0x3f8] sm:$0xff]
        %v649 = vld [vmem:[%s1] sm:$0xff]
        %v650 = vld [vmem:[%s1 + $0x8] sm:$0xff]
        %v651 = vld [vmem:[%s1 + $0x10] sm:$0xff]
        %v652 = vld [vmem:[%s1 + $0x18] sm:$0xff]
        %v653 = vld [vmem:[%s1 + $0x20] sm:$0xff]
        %v654 = vld [vmem:[%s1 + $0x28] sm:$0xff]
        %v655 = vld [vmem:[%s1 + $0x30] sm:$0xff]
        %v656 = vld [vmem:[%s1 + $0x38] sm:$0xff]
        %v657 = vld [vmem:[%s1 + $0x40] sm:$0xff]
        %v658 = vld [vmem:[%s1 + $0x48] sm:$0x7]
        %v659 = vld [vmem:[%s2] sm:$0x1]
        %v661 = vperm.slane %v659, 0
        %vm663 = vcmask 613376
        %v665 = vsel %vm663, %v521, 0
        %v668 = vsel %vm663, %v522, 0
        %v671 = vsel %vm663, %v523, 0
        %v674 = vsel %vm663, %v524, 0
        %v677 = vsel %vm663, %v525, 0
        %v680 = vsel %vm663, %v526, 0
        %v683 = vsel %vm663, %v527, 0
        %v686 = vsel %vm663, %v528, 0
        %v689 = vsel %vm663, %v529, 0
        %v692 = vsel %vm663, %v530, 0
        %v695 = vsel %vm663, %v531, 0
        %v698 = vsel %vm663, %v532, 0
        %v701 = vsel %vm663, %v533, 0
        %v704 = vsel %vm663, %v534, 0
        %v707 = vsel %vm663, %v535, 0
        %v710 = vsel %vm663, %v536, 0
        %v713 = vsel %vm663, %v537, 0
        %v716 = vsel %vm663, %v538, 0
        %v719 = vsel %vm663, %v539, 0
        %v722 = vsel %vm663, %v540, 0
        %v725 = vsel %vm663, %v541, 0
        %v728 = vsel %vm663, %v542, 0
        %v731 = vsel %vm663, %v543, 0
        %v734 = vsel %vm663, %v544, 0
        %v737 = vsel %vm663, %v545, 0
        %v740 = vsel %vm663, %v546, 0
        %v743 = vsel %vm663, %v547, 0
        %v746 = vsel %vm663, %v548, 0
        %v749 = vsel %vm663, %v549, 0
        %v752 = vsel %vm663, %v550, 0
        %v755 = vsel %vm663, %v551, 0
        %v758 = vsel %vm663, %v552, 0
        %v761 = vsel %vm663, %v553, 0
        %v764 = vsel %vm663, %v554, 0
        %v767 = vsel %vm663, %v555, 0
        %v770 = vsel %vm663, %v556, 0
        %v773 = vsel %vm663, %v557, 0
        %v776 = vsel %vm663, %v558, 0
        %v779 = vsel %vm663, %v559, 0
        %v782 = vsel %vm663, %v560, 0
        %v785 = vsel %vm663, %v561, 0
        %v788 = vsel %vm663, %v562, 0
        %v791 = vsel %vm663, %v563, 0
        %v794 = vsel %vm663, %v564, 0
        %v797 = vsel %vm663, %v565, 0
        %v800 = vsel %vm663, %v566, 0
        %v803 = vsel %vm663, %v567, 0
        %v806 = vsel %vm663, %v568, 0
        %v809 = vsel %vm663, %v569, 0
        %v812 = vsel %vm663, %v570, 0
        %v815 = vsel %vm663, %v571, 0
        %v818 = vsel %vm663, %v572, 0
        %v821 = vsel %vm663, %v573, 0
        %v824 = vsel %vm663, %v574, 0
        %v827 = vsel %vm663, %v575, 0
        %v830 = vsel %vm663, %v576, 0
        %v833 = vsel %vm663, %v577, 0
        %v836 = vsel %vm663, %v578, 0
        %v839 = vsel %vm663, %v579, 0
        %v842 = vsel %vm663, %v580, 0
        %v845 = vsel %vm663, %v581, 0
        %v848 = vsel %vm663, %v582, 0
        %v851 = vsel %vm663, %v583, 0
        %v854 = vsel %vm663, %v584, 0
        %v857 = vsel %vm663, %v585, 0
        %v860 = vsel %vm663, %v586, 0
        %v863 = vsel %vm663, %v587, 0
        %v866 = vsel %vm663, %v588, 0
        %v869 = vsel %vm663, %v589, 0
        %v872 = vsel %vm663, %v590, 0
        %v875 = vsel %vm663, %v591, 0
        %v878 = vsel %vm663, %v592, 0
        %v881 = vsel %vm663, %v593, 0
        %v884 = vsel %vm663, %v594, 0
        %v887 = vsel %vm663, %v595, 0
        %v890 = vsel %vm663, %v596, 0
        %v893 = vsel %vm663, %v597, 0
        %v896 = vsel %vm663, %v598, 0
        %v899 = vsel %vm663, %v599, 0
        %v902 = vsel %vm663, %v600, 0
        %v905 = vsel %vm663, %v601, 0
        %v908 = vsel %vm663, %v602, 0
        %v911 = vsel %vm663, %v603, 0
        %v914 = vsel %vm663, %v604, 0
        %v917 = vsel %vm663, %v605, 0
        %v920 = vsel %vm663, %v606, 0
        %v923 = vsel %vm663, %v607, 0
        %v926 = vsel %vm663, %v608, 0
        %v929 = vsel %vm663, %v609, 0
        %v932 = vsel %vm663, %v610, 0
        %v935 = vsel %vm663, %v611, 0
        %v938 = vsel %vm663, %v612, 0
        %v941 = vsel %vm663, %v613, 0
        %v944 = vsel %vm663, %v614, 0
        %v947 = vsel %vm663, %v615, 0
        %v950 = vsel %vm663, %v616, 0
        %v953 = vsel %vm663, %v617, 0
        %v956 = vsel %vm663, %v618, 0
        %v959 = vsel %vm663, %v619, 0
        %v962 = vsel %vm663, %v620, 0
        %v965 = vsel %vm663, %v621, 0
        %v968 = vsel %vm663, %v622, 0
        %v971 = vsel %vm663, %v623, 0
        %v974 = vsel %vm663, %v624, 0
        %v977 = vsel %vm663, %v625, 0
        %v980 = vsel %vm663, %v626, 0
        %v983 = vsel %vm663, %v627, 0
        %v986 = vsel %vm663, %v628, 0
        %v989 = vsel %vm663, %v629, 0
        %v992 = vsel %vm663, %v630, 0
        %v995 = vsel %vm663, %v631, 0
        %v998 = vsel %vm663, %v632, 0
        %v1001 = vsel %vm663, %v633, 0
        %v1004 = vsel %vm663, %v634, 0
        %v1007 = vsel %vm663, %v635, 0
        %v1010 = vsel %vm663, %v636, 0
        %v1013 = vsel %vm663, %v637, 0
        %v1016 = vsel %vm663, %v638, 0
        %v1019 = vsel %vm663, %v639, 0
        %v1022 = vsel %vm663, %v640, 0
        %v1025 = vsel %vm663, %v641, 0
        %v1028 = vsel %vm663, %v642, 0
        %v1031 = vsel %vm663, %v643, 0
        %v1034 = vsel %vm663, %v644, 0
        %v1037 = vsel %vm663, %v645, 0
        %v1040 = vsel %vm663, %v646, 0
        %v1043 = vsel %vm663, %v647, 0
        %v1046 = vsel %vm663, %v648, 0
        %vm1048 = vcmask 1042432
        %v1050 = vsel %vm1048, %v658, 0
        %1052 = vmatpush.msra.mxu0 0.0
        %1053 = vmatpush.msra.mxu0 0.0
        %1054 = vmatpush.msra.mxu0 0.0
        %1055 = vmatpush.msra.mxu0 0.0
        %1056 = vmatpush.msra.mxu0 0.0
        %1057 = vmatpush.msra.mxu0 0.0
        %1058 = vmatpush.msra.mxu0 %v1050
        %1059 = vmatpush.msra.mxu0 %v657
        %1060 = vmatpush.msra.mxu0 %v656
        %1061 = vmatpush.msra.mxu0 %v655
        %1062 = vmatpush.msra.mxu0 %v654
        %1063 = vmatpush.msra.mxu0 %v653
        %1064 = vmatpush.msra.mxu0 %v652
        %1065 = vmatpush.msra.mxu0 %v651
        %1066 = vmatpush.msra.mxu0 %v650
        %1067 = vmatpush.msra.mxu0 %v649
        %1068 = vmatmul.f32.gmra.mxu0 %v665
        %v1069 = vpop.f32.mrf.mxu0
        %v1070 = vadd.f32 %v661, %v1069
        %1071 = vmatmul.f32.gmra.mxu0 %v668
        %v1072 = vpop.f32.mrf.mxu0
        %v1073 = vadd.f32 %v661, %v1072
        %1074 = vmatmul.f32.gmra.mxu0 %v671
        %v1075 = vpop.f32.mrf.mxu0
        %v1076 = vadd.f32 %v661, %v1075
        %1077 = vmatmul.f32.gmra.mxu0 %v674
        %v1078 = vpop.f32.mrf.mxu0
        %v1079 = vadd.f32 %v661, %v1078
        %1080 = vmatmul.f32.gmra.mxu0 %v677
        %v1081 = vpop.f32.mrf.mxu0
        %v1082 = vadd.f32 %v661, %v1081
        %1083 = vmatmul.f32.gmra.mxu0 %v680
        %v1084 = vpop.f32.mrf.mxu0
        %v1085 = vadd.f32 %v661, %v1084
        %1086 = vmatmul.f32.gmra.mxu0 %v683
        %v1087 = vpop.f32.mrf.mxu0
        %v1088 = vadd.f32 %v661, %v1087
        %1089 = vmatmul.f32.gmra.mxu0 %v686
        %v1090 = vpop.f32.mrf.mxu0
        %v1091 = vadd.f32 %v661, %v1090
        %1092 = vmatmul.f32.gmra.mxu0 %v689
        %v1093 = vpop.f32.mrf.mxu0
        %v1094 = vadd.f32 %v661, %v1093
        %1095 = vmatmul.f32.gmra.mxu0 %v692
        %v1096 = vpop.f32.mrf.mxu0
        %v1097 = vadd.f32 %v661, %v1096
        %1098 = vmatmul.f32.gmra.mxu0 %v695
        %v1099 = vpop.f32.mrf.mxu0
        %v1100 = vadd.f32 %v661, %v1099
        %1101 = vmatmul.f32.gmra.mxu0 %v698
        %v1102 = vpop.f32.mrf.mxu0
        %v1103 = vadd.f32 %v661, %v1102
        %1104 = vmatmul.f32.gmra.mxu0 %v701
        %v1105 = vpop.f32.mrf.mxu0
        %v1106 = vadd.f32 %v661, %v1105
        %1107 = vmatmul.f32.gmra.mxu0 %v704
        %v1108 = vpop.f32.mrf.mxu0
        %v1109 = vadd.f32 %v661, %v1108
        %1110 = vmatmul.f32.gmra.mxu0 %v707
        %v1111 = vpop.f32.mrf.mxu0
        %v1112 = vadd.f32 %v661, %v1111
        %1113 = vmatmul.f32.gmra.mxu0 %v710
        %v1114 = vpop.f32.mrf.mxu0
        %v1115 = vadd.f32 %v661, %v1114
        %1116 = vmatmul.f32.gmra.mxu0 %v713
        %v1117 = vpop.f32.mrf.mxu0
        %v1118 = vadd.f32 %v661, %v1117
        %1119 = vmatmul.f32.gmra.mxu0 %v716
        %v1120 = vpop.f32.mrf.mxu0
        %v1121 = vadd.f32 %v661, %v1120
        %1122 = vmatmul.f32.gmra.mxu0 %v719
        %v1123 = vpop.f32.mrf.mxu0
        %v1124 = vadd.f32 %v661, %v1123
        %1125 = vmatmul.f32.gmra.mxu0 %v722
        %v1126 = vpop.f32.mrf.mxu0
        %v1127 = vadd.f32 %v661, %v1126
        %1128 = vmatmul.f32.gmra.mxu0 %v725
        %v1129 = vpop.f32.mrf.mxu0
        %v1130 = vadd.f32 %v661, %v1129
        %1131 = vmatmul.f32.gmra.mxu0 %v728
        %v1132 = vpop.f32.mrf.mxu0
        %v1133 = vadd.f32 %v661, %v1132
        %1134 = vmatmul.f32.gmra.mxu0 %v731
        %v1135 = vpop.f32.mrf.mxu0
        %v1136 = vadd.f32 %v661, %v1135
        %1137 = vmatmul.f32.gmra.mxu0 %v734
        %v1138 = vpop.f32.mrf.mxu0
        %v1139 = vadd.f32 %v661, %v1138
        %1140 = vmatmul.f32.gmra.mxu0 %v737
        %v1141 = vpop.f32.mrf.mxu0
        %v1142 = vadd.f32 %v661, %v1141
        %1143 = vmatmul.f32.gmra.mxu0 %v740
        %v1144 = vpop.f32.mrf.mxu0
        %v1145 = vadd.f32 %v661, %v1144
        %1146 = vmatmul.f32.gmra.mxu0 %v743
        %v1147 = vpop.f32.mrf.mxu0
        %v1148 = vadd.f32 %v661, %v1147
        %1149 = vmatmul.f32.gmra.mxu0 %v746
        %v1150 = vpop.f32.mrf.mxu0
        %v1151 = vadd.f32 %v661, %v1150
        %1152 = vmatmul.f32.gmra.mxu0 %v749
        %v1153 = vpop.f32.mrf.mxu0
        %v1154 = vadd.f32 %v661, %v1153
        %1155 = vmatmul.f32.gmra.mxu0 %v752
        %v1156 = vpop.f32.mrf.mxu0
        %v1157 = vadd.f32 %v661, %v1156
        %1158 = vmatmul.f32.gmra.mxu0 %v755
        %v1159 = vpop.f32.mrf.mxu0
        %v1160 = vadd.f32 %v661, %v1159
        %1161 = vmatmul.f32.gmra.mxu0 %v758
        %v1162 = vpop.f32.mrf.mxu0
        %v1163 = vadd.f32 %v661, %v1162
        %1164 = vmatmul.f32.gmra.mxu0 %v761
        %v1165 = vpop.f32.mrf.mxu0
        %v1166 = vadd.f32 %v661, %v1165
        %1167 = vmatmul.f32.gmra.mxu0 %v764
        %v1168 = vpop.f32.mrf.mxu0
        %v1169 = vadd.f32 %v661, %v1168
        %1170 = vmatmul.f32.gmra.mxu0 %v767
        %v1171 = vpop.f32.mrf.mxu0
        %v1172 = vadd.f32 %v661, %v1171
        %1173 = vmatmul.f32.gmra.mxu0 %v770
        %v1174 = vpop.f32.mrf.mxu0
        %v1175 = vadd.f32 %v661, %v1174
        %1176 = vmatmul.f32.gmra.mxu0 %v773
        %v1177 = vpop.f32.mrf.mxu0
        %v1178 = vadd.f32 %v661, %v1177
        %1179 = vmatmul.f32.gmra.mxu0 %v776
        %v1180 = vpop.f32.mrf.mxu0
        %v1181 = vadd.f32 %v661, %v1180
        %1182 = vmatmul.f32.gmra.mxu0 %v779
        %v1183 = vpop.f32.mrf.mxu0
        %v1184 = vadd.f32 %v661, %v1183
        %1185 = vmatmul.f32.gmra.mxu0 %v782
        %v1186 = vpop.f32.mrf.mxu0
        %v1187 = vadd.f32 %v661, %v1186
        %1188 = vmatmul.f32.gmra.mxu0 %v785
        %v1189 = vpop.f32.mrf.mxu0
        %v1190 = vadd.f32 %v661, %v1189
        %1191 = vmatmul.f32.gmra.mxu0 %v788
        %v1192 = vpop.f32.mrf.mxu0
        %v1193 = vadd.f32 %v661, %v1192
        %1194 = vmatmul.f32.gmra.mxu0 %v791
        %v1195 = vpop.f32.mrf.mxu0
        %v1196 = vadd.f32 %v661, %v1195
        %1197 = vmatmul.f32.gmra.mxu0 %v794
        %v1198 = vpop.f32.mrf.mxu0
        %v1199 = vadd.f32 %v661, %v1198
        %1200 = vmatmul.f32.gmra.mxu0 %v797
        %v1201 = vpop.f32.mrf.mxu0
        %v1202 = vadd.f32 %v661, %v1201
        %1203 = vmatmul.f32.gmra.mxu0 %v800
        %v1204 = vpop.f32.mrf.mxu0
        %v1205 = vadd.f32 %v661, %v1204
        %1206 = vmatmul.f32.gmra.mxu0 %v803
        %v1207 = vpop.f32.mrf.mxu0
        %v1208 = vadd.f32 %v661, %v1207
        %1209 = vmatmul.f32.gmra.mxu0 %v806
        %v1210 = vpop.f32.mrf.mxu0
        %v1211 = vadd.f32 %v661, %v1210
        %1212 = vmatmul.f32.gmra.mxu0 %v809
        %v1213 = vpop.f32.mrf.mxu0
        %v1214 = vadd.f32 %v661, %v1213
        %1215 = vmatmul.f32.gmra.mxu0 %v812
        %v1216 = vpop.f32.mrf.mxu0
        %v1217 = vadd.f32 %v661, %v1216
        %1218 = vmatmul.f32.gmra.mxu0 %v815
        %v1219 = vpop.f32.mrf.mxu0
        %v1220 = vadd.f32 %v661, %v1219
        %1221 = vmatmul.f32.gmra.mxu0 %v818
        %v1222 = vpop.f32.mrf.mxu0
        %v1223 = vadd.f32 %v661, %v1222
        %1224 = vmatmul.f32.gmra.mxu0 %v821
        %v1225 = vpop.f32.mrf.mxu0
        %v1226 = vadd.f32 %v661, %v1225
        %1227 = vmatmul.f32.gmra.mxu0 %v824
        %v1228 = vpop.f32.mrf.mxu0
        %v1229 = vadd.f32 %v661, %v1228
        %1230 = vmatmul.f32.gmra.mxu0 %v827
        %v1231 = vpop.f32.mrf.mxu0
        %v1232 = vadd.f32 %v661, %v1231
        %1233 = vmatmul.f32.gmra.mxu0 %v830
        %v1234 = vpop.f32.mrf.mxu0
        %v1235 = vadd.f32 %v661, %v1234
        %1236 = vmatmul.f32.gmra.mxu0 %v833
        %v1237 = vpop.f32.mrf.mxu0
        %v1238 = vadd.f32 %v661, %v1237
        %1239 = vmatmul.f32.gmra.mxu0 %v836
        %v1240 = vpop.f32.mrf.mxu0
        %v1241 = vadd.f32 %v661, %v1240
        %1242 = vmatmul.f32.gmra.mxu0 %v839
        %v1243 = vpop.f32.mrf.mxu0
        %v1244 = vadd.f32 %v661, %v1243
        %1245 = vmatmul.f32.gmra.mxu0 %v842
        %v1246 = vpop.f32.mrf.mxu0
        %v1247 = vadd.f32 %v661, %v1246
        %1248 = vmatmul.f32.gmra.mxu0 %v845
        %v1249 = vpop.f32.mrf.mxu0
        %v1250 = vadd.f32 %v661, %v1249
        %1251 = vmatmul.f32.gmra.mxu0 %v848
        %v1252 = vpop.f32.mrf.mxu0
        %v1253 = vadd.f32 %v661, %v1252
        %1254 = vmatmul.f32.gmra.mxu0 %v851
        %v1255 = vpop.f32.mrf.mxu0
        %v1256 = vadd.f32 %v661, %v1255
        %1257 = vmatmul.f32.gmra.mxu0 %v854
        %v1258 = vpop.f32.mrf.mxu0
        %v1259 = vadd.f32 %v661, %v1258
        %1260 = vmatmul.f32.gmra.mxu0 %v857
        %v1261 = vpop.f32.mrf.mxu0
        %v1262 = vadd.f32 %v661, %v1261
        %1263 = vmatmul.f32.gmra.mxu0 %v860
        %v1264 = vpop.f32.mrf.mxu0
        %v1265 = vadd.f32 %v661, %v1264
        %1266 = vmatmul.f32.gmra.mxu0 %v863
        %v1267 = vpop.f32.mrf.mxu0
        %v1268 = vadd.f32 %v661, %v1267
        %1269 = vmatmul.f32.gmra.mxu0 %v866
        %v1270 = vpop.f32.mrf.mxu0
        %v1271 = vadd.f32 %v661, %v1270
        %1272 = vmatmul.f32.gmra.mxu0 %v869
        %v1273 = vpop.f32.mrf.mxu0
        %v1274 = vadd.f32 %v661, %v1273
        %1275 = vmatmul.f32.gmra.mxu0 %v872
        %v1276 = vpop.f32.mrf.mxu0
        %v1277 = vadd.f32 %v661, %v1276
        %1278 = vmatmul.f32.gmra.mxu0 %v875
        %v1279 = vpop.f32.mrf.mxu0
        %v1280 = vadd.f32 %v661, %v1279
        %1281 = vmatmul.f32.gmra.mxu0 %v878
        %v1282 = vpop.f32.mrf.mxu0
        %v1283 = vadd.f32 %v661, %v1282
        %1284 = vmatmul.f32.gmra.mxu0 %v881
        %v1285 = vpop.f32.mrf.mxu0
        %v1286 = vadd.f32 %v661, %v1285
        %1287 = vmatmul.f32.gmra.mxu0 %v884
        %v1288 = vpop.f32.mrf.mxu0
        %v1289 = vadd.f32 %v661, %v1288
        %1290 = vmatmul.f32.gmra.mxu0 %v887
        %v1291 = vpop.f32.mrf.mxu0
        %v1292 = vadd.f32 %v661, %v1291
        %1293 = vmatmul.f32.gmra.mxu0 %v890
        %v1294 = vpop.f32.mrf.mxu0
        %v1295 = vadd.f32 %v661, %v1294
        %1296 = vmatmul.f32.gmra.mxu0 %v893
        %v1297 = vpop.f32.mrf.mxu0
        %v1298 = vadd.f32 %v661, %v1297
        %1299 = vmatmul.f32.gmra.mxu0 %v896
        %v1300 = vpop.f32.mrf.mxu0
        %v1301 = vadd.f32 %v661, %v1300
        %1302 = vmatmul.f32.gmra.mxu0 %v899
        %v1303 = vpop.f32.mrf.mxu0
        %v1304 = vadd.f32 %v661, %v1303
        %1305 = vmatmul.f32.gmra.mxu0 %v902
        %v1306 = vpop.f32.mrf.mxu0
        %v1307 = vadd.f32 %v661, %v1306
        %1308 = vmatmul.f32.gmra.mxu0 %v905
        %v1309 = vpop.f32.mrf.mxu0
        %v1310 = vadd.f32 %v661, %v1309
        %1311 = vmatmul.f32.gmra.mxu0 %v908
        %v1312 = vpop.f32.mrf.mxu0
        %v1313 = vadd.f32 %v661, %v1312
        %1314 = vmatmul.f32.gmra.mxu0 %v911
        %v1315 = vpop.f32.mrf.mxu0
        %v1316 = vadd.f32 %v661, %v1315
        %1317 = vmatmul.f32.gmra.mxu0 %v914
        %v1318 = vpop.f32.mrf.mxu0
        %v1319 = vadd.f32 %v661, %v1318
        %1320 = vmatmul.f32.gmra.mxu0 %v917
        %v1321 = vpop.f32.mrf.mxu0
        %v1322 = vadd.f32 %v661, %v1321
        %1323 = vmatmul.f32.gmra.mxu0 %v920
        %v1324 = vpop.f32.mrf.mxu0
        %v1325 = vadd.f32 %v661, %v1324
        %1326 = vmatmul.f32.gmra.mxu0 %v923
        %v1327 = vpop.f32.mrf.mxu0
        %v1328 = vadd.f32 %v661, %v1327
        %1329 = vmatmul.f32.gmra.mxu0 %v926
        %v1330 = vpop.f32.mrf.mxu0
        %v1331 = vadd.f32 %v661, %v1330
        %1332 = vmatmul.f32.gmra.mxu0 %v929
        %v1333 = vpop.f32.mrf.mxu0
        %v1334 = vadd.f32 %v661, %v1333
        %1335 = vmatmul.f32.gmra.mxu0 %v932
        %v1336 = vpop.f32.mrf.mxu0
        %v1337 = vadd.f32 %v661, %v1336
        %1338 = vmatmul.f32.gmra.mxu0 %v935
        %v1339 = vpop.f32.mrf.mxu0
        %v1340 = vadd.f32 %v661, %v1339
        %1341 = vmatmul.f32.gmra.mxu0 %v938
        %v1342 = vpop.f32.mrf.mxu0
        %v1343 = vadd.f32 %v661, %v1342
        %1344 = vmatmul.f32.gmra.mxu0 %v941
        %v1345 = vpop.f32.mrf.mxu0
        %v1346 = vadd.f32 %v661, %v1345
        %1347 = vmatmul.f32.gmra.mxu0 %v944
        %v1348 = vpop.f32.mrf.mxu0
        %v1349 = vadd.f32 %v661, %v1348
        %1350 = vmatmul.f32.gmra.mxu0 %v947
        %v1351 = vpop.f32.mrf.mxu0
        %v1352 = vadd.f32 %v661, %v1351
        %1353 = vmatmul.f32.gmra.mxu0 %v950
        %v1354 = vpop.f32.mrf.mxu0
        %v1355 = vadd.f32 %v661, %v1354
        %1356 = vmatmul.f32.gmra.mxu0 %v953
        %v1357 = vpop.f32.mrf.mxu0
        %v1358 = vadd.f32 %v661, %v1357
        %1359 = vmatmul.f32.gmra.mxu0 %v956
        %v1360 = vpop.f32.mrf.mxu0
        %v1361 = vadd.f32 %v661, %v1360
        %1362 = vmatmul.f32.gmra.mxu0 %v959
        %v1363 = vpop.f32.mrf.mxu0
        %v1364 = vadd.f32 %v661, %v1363
        %1365 = vmatmul.f32.gmra.mxu0 %v962
        %v1366 = vpop.f32.mrf.mxu0
        %v1367 = vadd.f32 %v661, %v1366
        %1368 = vmatmul.f32.gmra.mxu0 %v965
        %v1369 = vpop.f32.mrf.mxu0
        %v1370 = vadd.f32 %v661, %v1369
        %1371 = vmatmul.f32.gmra.mxu0 %v968
        %v1372 = vpop.f32.mrf.mxu0
        %v1373 = vadd.f32 %v661, %v1372
        %1374 = vmatmul.f32.gmra.mxu0 %v971
        %v1375 = vpop.f32.mrf.mxu0
        %v1376 = vadd.f32 %v661, %v1375
        %1377 = vmatmul.f32.gmra.mxu0 %v974
        %v1378 = vpop.f32.mrf.mxu0
        %v1379 = vadd.f32 %v661, %v1378
        %1380 = vmatmul.f32.gmra.mxu0 %v977
        %v1381 = vpop.f32.mrf.mxu0
        %v1382 = vadd.f32 %v661, %v1381
        %1383 = vmatmul.f32.gmra.mxu0 %v980
        %v1384 = vpop.f32.mrf.mxu0
        %v1385 = vadd.f32 %v661, %v1384
        %1386 = vmatmul.f32.gmra.mxu0 %v983
        %v1387 = vpop.f32.mrf.mxu0
        %v1388 = vadd.f32 %v661, %v1387
        %1389 = vmatmul.f32.gmra.mxu0 %v986
        %v1390 = vpop.f32.mrf.mxu0
        %v1391 = vadd.f32 %v661, %v1390
        %1392 = vmatmul.f32.gmra.mxu0 %v989
        %v1393 = vpop.f32.mrf.mxu0
        %v1394 = vadd.f32 %v661, %v1393
        %1395 = vmatmul.f32.gmra.mxu0 %v992
        %v1396 = vpop.f32.mrf.mxu0
        %v1397 = vadd.f32 %v661, %v1396
        %1398 = vmatmul.f32.gmra.mxu0 %v995
        %v1399 = vpop.f32.mrf.mxu0
        %v1400 = vadd.f32 %v661, %v1399
        %1401 = vmatmul.f32.gmra.mxu0 %v998
        %v1402 = vpop.f32.mrf.mxu0
        %v1403 = vadd.f32 %v661, %v1402
        %1404 = vmatmul.f32.gmra.mxu0 %v1001
        %v1405 = vpop.f32.mrf.mxu0
        %v1406 = vadd.f32 %v661, %v1405
        %1407 = vmatmul.f32.gmra.mxu0 %v1004
        %v1408 = vpop.f32.mrf.mxu0
        %v1409 = vadd.f32 %v661, %v1408
        %1410 = vmatmul.f32.gmra.mxu0 %v1007
        %v1411 = vpop.f32.mrf.mxu0
        %v1412 = vadd.f32 %v661, %v1411
        %1413 = vmatmul.f32.gmra.mxu0 %v1010
        %v1414 = vpop.f32.mrf.mxu0
        %v1415 = vadd.f32 %v661, %v1414
        %1416 = vmatmul.f32.gmra.mxu0 %v1013
        %v1417 = vpop.f32.mrf.mxu0
        %v1418 = vadd.f32 %v661, %v1417
        %1419 = vmatmul.f32.gmra.mxu0 %v1016
        %v1420 = vpop.f32.mrf.mxu0
        %v1421 = vadd.f32 %v661, %v1420
        %1422 = vmatmul.f32.gmra.mxu0 %v1019
        %v1423 = vpop.f32.mrf.mxu0
        %v1424 = vadd.f32 %v661, %v1423
        %1425 = vmatmul.f32.gmra.mxu0 %v1022
        %v1426 = vpop.f32.mrf.mxu0
        %v1427 = vadd.f32 %v661, %v1426
        %1428 = vmatmul.f32.gmra.mxu0 %v1025
        %v1429 = vpop.f32.mrf.mxu0
        %v1430 = vadd.f32 %v661, %v1429
        %1431 = vmatmul.f32.gmra.mxu0 %v1028
        %v1432 = vpop.f32.mrf.mxu0
        %v1433 = vadd.f32 %v661, %v1432
        %1434 = vmatmul.f32.gmra.mxu0 %v1031
        %v1435 = vpop.f32.mrf.mxu0
        %v1436 = vadd.f32 %v661, %v1435
        %1437 = vmatmul.f32.gmra.mxu0 %v1034
        %v1438 = vpop.f32.mrf.mxu0
        %v1439 = vadd.f32 %v661, %v1438
        %1440 = vmatmul.f32.gmra.mxu0 %v1037
        %v1441 = vpop.f32.mrf.mxu0
        %v1442 = vadd.f32 %v661, %v1441
        %1443 = vmatmul.f32.gmra.mxu0 %v1040
        %v1444 = vpop.f32.mrf.mxu0
        %v1445 = vadd.f32 %v661, %v1444
        %1446 = vmatmul.f32.gmra.mxu0 %v1043
        %v1447 = vpop.f32.mrf.mxu0
        %v1448 = vadd.f32 %v661, %v1447
        %1449 = vmatmul.f32.gmra.mxu0 %v1046
        %v1450 = vpop.f32.mrf.mxu0
        %v1451 = vadd.f32 %v661, %v1450
        %1452 = vdwg.mxu0
        %1453 = vst.msk [vmem:[#allocation2] sm:$0xff] %vm385, %v1070
        %1454 = vst.msk [vmem:[#allocation2 + $0x8] sm:$0xff] %vm385, %v1073
        %1455 = vst.msk [vmem:[#allocation2 + $0x10] sm:$0xff] %vm385, %v1076
        %1456 = vst.msk [vmem:[#allocation2 + $0x18] sm:$0xff] %vm385, %v1079
        %1457 = vst.msk [vmem:[#allocation2 + $0x20] sm:$0xff] %vm385, %v1082
        %1458 = vst.msk [vmem:[#allocation2 + $0x28] sm:$0xff] %vm385, %v1085
        %1459 = vst.msk [vmem:[#allocation2 + $0x30] sm:$0xff] %vm385, %v1088
        %1460 = vst.msk [vmem:[#allocation2 + $0x38] sm:$0xff] %vm385, %v1091
        %1461 = vst.msk [vmem:[#allocation2 + $0x40] sm:$0xff] %vm385, %v1094
        %1462 = vst.msk [vmem:[#allocation2 + $0x48] sm:$0xff] %vm385, %v1097
        %1463 = vst.msk [vmem:[#allocation2 + $0x50] sm:$0xff] %vm385, %v1100
        %1464 = vst.msk [vmem:[#allocation2 + $0x58] sm:$0xff] %vm385, %v1103
        %1465 = vst.msk [vmem:[#allocation2 + $0x60] sm:$0xff] %vm385, %v1106
        %1466 = vst.msk [vmem:[#allocation2 + $0x68] sm:$0xff] %vm385, %v1109
        %1467 = vst.msk [vmem:[#allocation2 + $0x70] sm:$0xff] %vm385, %v1112
        %1468 = vst.msk [vmem:[#allocation2 + $0x78] sm:$0xff] %vm385, %v1115
        %1469 = vst.msk [vmem:[#allocation2 + $0x80] sm:$0xff] %vm385, %v1118
        %1470 = vst.msk [vmem:[#allocation2 + $0x88] sm:$0xff] %vm385, %v1121
        %1471 = vst.msk [vmem:[#allocation2 + $0x90] sm:$0xff] %vm385, %v1124
        %1472 = vst.msk [vmem:[#allocation2 + $0x98] sm:$0xff] %vm385, %v1127
        %1473 = vst.msk [vmem:[#allocation2 + $0xa0] sm:$0xff] %vm385, %v1130
        %1474 = vst.msk [vmem:[#allocation2 + $0xa8] sm:$0xff] %vm385, %v1133
        %1475 = vst.msk [vmem:[#allocation2 + $0xb0] sm:$0xff] %vm385, %v1136
        %1476 = vst.msk [vmem:[#allocation2 + $0xb8] sm:$0xff] %vm385, %v1139
        %1477 = vst.msk [vmem:[#allocation2 + $0xc0] sm:$0xff] %vm385, %v1142
        %1478 = vst.msk [vmem:[#allocation2 + $0xc8] sm:$0xff] %vm385, %v1145
        %1479 = vst.msk [vmem:[#allocation2 + $0xd0] sm:$0xff] %vm385, %v1148
        %1480 = vst.msk [vmem:[#allocation2 + $0xd8] sm:$0xff] %vm385, %v1151
        %1481 = vst.msk [vmem:[#allocation2 + $0xe0] sm:$0xff] %vm385, %v1154
        %1482 = vst.msk [vmem:[#allocation2 + $0xe8] sm:$0xff] %vm385, %v1157
        %1483 = vst.msk [vmem:[#allocation2 + $0xf0] sm:$0xff] %vm385, %v1160
        %1484 = vst.msk [vmem:[#allocation2 + $0xf8] sm:$0xff] %vm385, %v1163
        %1485 = vst.msk [vmem:[#allocation2 + $0x100] sm:$0xff] %vm385, %v1166
        %1486 = vst.msk [vmem:[#allocation2 + $0x108] sm:$0xff] %vm385, %v1169
        %1487 = vst.msk [vmem:[#allocation2 + $0x110] sm:$0xff] %vm385, %v1172
        %1488 = vst.msk [vmem:[#allocation2 + $0x118] sm:$0xff] %vm385, %v1175
        %1489 = vst.msk [vmem:[#allocation2 + $0x120] sm:$0xff] %vm385, %v1178
        %1490 = vst.msk [vmem:[#allocation2 + $0x128] sm:$0xff] %vm385, %v1181
        %1491 = vst.msk [vmem:[#allocation2 + $0x130] sm:$0xff] %vm385, %v1184
        %1492 = vst.msk [vmem:[#allocation2 + $0x138] sm:$0xff] %vm385, %v1187
        %1493 = vst.msk [vmem:[#allocation2 + $0x140] sm:$0xff] %vm385, %v1190
        %1494 = vst.msk [vmem:[#allocation2 + $0x148] sm:$0xff] %vm385, %v1193
        %1495 = vst.msk [vmem:[#allocation2 + $0x150] sm:$0xff] %vm385, %v1196
        %1496 = vst.msk [vmem:[#allocation2 + $0x158] sm:$0xff] %vm385, %v1199
        %1497 = vst.msk [vmem:[#allocation2 + $0x160] sm:$0xff] %vm385, %v1202
        %1498 = vst.msk [vmem:[#allocation2 + $0x168] sm:$0xff] %vm385, %v1205
        %1499 = vst.msk [vmem:[#allocation2 + $0x170] sm:$0xff] %vm385, %v1208
        %1500 = vst.msk [vmem:[#allocation2 + $0x178] sm:$0xff] %vm385, %v1211
        %1501 = vst.msk [vmem:[#allocation2 + $0x180] sm:$0xff] %vm385, %v1214
        %1502 = vst.msk [vmem:[#allocation2 + $0x188] sm:$0xff] %vm385, %v1217
        %1503 = vst.msk [vmem:[#allocation2 + $0x190] sm:$0xff] %vm385, %v1220
        %1504 = vst.msk [vmem:[#allocation2 + $0x198] sm:$0xff] %vm385, %v1223
        %1505 = vst.msk [vmem:[#allocation2 + $0x1a0] sm:$0xff] %vm385, %v1226
        %1506 = vst.msk [vmem:[#allocation2 + $0x1a8] sm:$0xff] %vm385, %v1229
        %1507 = vst.msk [vmem:[#allocation2 + $0x1b0] sm:$0xff] %vm385, %v1232
        %1508 = vst.msk [vmem:[#allocation2 + $0x1b8] sm:$0xff] %vm385, %v1235
        %1509 = vst.msk [vmem:[#allocation2 + $0x1c0] sm:$0xff] %vm385, %v1238
        %1510 = vst.msk [vmem:[#allocation2 + $0x1c8] sm:$0xff] %vm385, %v1241
        %1511 = vst.msk [vmem:[#allocation2 + $0x1d0] sm:$0xff] %vm385, %v1244
        %1512 = vst.msk [vmem:[#allocation2 + $0x1d8] sm:$0xff] %vm385, %v1247
        %1513 = vst.msk [vmem:[#allocation2 + $0x1e0] sm:$0xff] %vm385, %v1250
        %1514 = vst.msk [vmem:[#allocation2 + $0x1e8] sm:$0xff] %vm385, %v1253
        %1515 = vst.msk [vmem:[#allocation2 + $0x1f0] sm:$0xff] %vm385, %v1256
        %1516 = vst.msk [vmem:[#allocation2 + $0x1f8] sm:$0xff] %vm385, %v1259
        %1517 = vst.msk [vmem:[#allocation2 + $0x200] sm:$0xff] %vm385, %v1262
        %1518 = vst.msk [vmem:[#allocation2 + $0x208] sm:$0xff] %vm385, %v1265
        %1519 = vst.msk [vmem:[#allocation2 + $0x210] sm:$0xff] %vm385, %v1268
        %1520 = vst.msk [vmem:[#allocation2 + $0x218] sm:$0xff] %vm385, %v1271
        %1521 = vst.msk [vmem:[#allocation2 + $0x220] sm:$0xff] %vm385, %v1274
        %1522 = vst.msk [vmem:[#allocation2 + $0x228] sm:$0xff] %vm385, %v1277
        %1523 = vst.msk [vmem:[#allocation2 + $0x230] sm:$0xff] %vm385, %v1280
        %1524 = vst.msk [vmem:[#allocation2 + $0x238] sm:$0xff] %vm385, %v1283
        %1525 = vst.msk [vmem:[#allocation2 + $0x240] sm:$0xff] %vm385, %v1286
        %1526 = vst.msk [vmem:[#allocation2 + $0x248] sm:$0xff] %vm385, %v1289
        %1527 = vst.msk [vmem:[#allocation2 + $0x250] sm:$0xff] %vm385, %v1292
        %1528 = vst.msk [vmem:[#allocation2 + $0x258] sm:$0xff] %vm385, %v1295
        %1529 = vst.msk [vmem:[#allocation2 + $0x260] sm:$0xff] %vm385, %v1298
        %1530 = vst.msk [vmem:[#allocation2 + $0x268] sm:$0xff] %vm385, %v1301
        %1531 = vst.msk [vmem:[#allocation2 + $0x270] sm:$0xff] %vm385, %v1304
        %1532 = vst.msk [vmem:[#allocation2 + $0x278] sm:$0xff] %vm385, %v1307
        %1533 = vst.msk [vmem:[#allocation2 + $0x280] sm:$0xff] %vm385, %v1310
        %1534 = vst.msk [vmem:[#allocation2 + $0x288] sm:$0xff] %vm385, %v1313
        %1535 = vst.msk [vmem:[#allocation2 + $0x290] sm:$0xff] %vm385, %v1316
        %1536 = vst.msk [vmem:[#allocation2 + $0x298] sm:$0xff] %vm385, %v1319
        %1537 = vst.msk [vmem:[#allocation2 + $0x2a0] sm:$0xff] %vm385, %v1322
        %1538 = vst.msk [vmem:[#allocation2 + $0x2a8] sm:$0xff] %vm385, %v1325
        %1539 = vst.msk [vmem:[#allocation2 + $0x2b0] sm:$0xff] %vm385, %v1328
        %1540 = vst.msk [vmem:[#allocation2 + $0x2b8] sm:$0xff] %vm385, %v1331
        %1541 = vst.msk [vmem:[#allocation2 + $0x2c0] sm:$0xff] %vm385, %v1334
        %1542 = vst.msk [vmem:[#allocation2 + $0x2c8] sm:$0xff] %vm385, %v1337
        %1543 = vst.msk [vmem:[#allocation2 + $0x2d0] sm:$0xff] %vm385, %v1340
        %1544 = vst.msk [vmem:[#allocation2 + $0x2d8] sm:$0xff] %vm385, %v1343
        %1545 = vst.msk [vmem:[#allocation2 + $0x2e0] sm:$0xff] %vm385, %v1346
        %1546 = vst.msk [vmem:[#allocation2 + $0x2e8] sm:$0xff] %vm385, %v1349
        %1547 = vst.msk [vmem:[#allocation2 + $0x2f0] sm:$0xff] %vm385, %v1352
        %1548 = vst.msk [vmem:[#allocation2 + $0x2f8] sm:$0xff] %vm385, %v1355
        %1549 = vst.msk [vmem:[#allocation2 + $0x300] sm:$0xff] %vm385, %v1358
        %1550 = vst.msk [vmem:[#allocation2 + $0x308] sm:$0xff] %vm385, %v1361
        %1551 = vst.msk [vmem:[#allocation2 + $0x310] sm:$0xff] %vm385, %v1364
        %1552 = vst.msk [vmem:[#allocation2 + $0x318] sm:$0xff] %vm385, %v1367
        %1553 = vst.msk [vmem:[#allocation2 + $0x320] sm:$0xff] %vm385, %v1370
        %1554 = vst.msk [vmem:[#allocation2 + $0x328] sm:$0xff] %vm385, %v1373
        %1555 = vst.msk [vmem:[#allocation2 + $0x330] sm:$0xff] %vm385, %v1376
        %1556 = vst.msk [vmem:[#allocation2 + $0x338] sm:$0xff] %vm385, %v1379
        %1557 = vst.msk [vmem:[#allocation2 + $0x340] sm:$0xff] %vm385, %v1382
        %1558 = vst.msk [vmem:[#allocation2 + $0x348] sm:$0xff] %vm385, %v1385
        %1559 = vst.msk [vmem:[#allocation2 + $0x350] sm:$0xff] %vm385, %v1388
        %1560 = vst.msk [vmem:[#allocation2 + $0x358] sm:$0xff] %vm385, %v1391
        %1561 = vst.msk [vmem:[#allocation2 + $0x360] sm:$0xff] %vm385, %v1394
        %1562 = vst.msk [vmem:[#allocation2 + $0x368] sm:$0xff] %vm385, %v1397
        %1563 = vst.msk [vmem:[#allocation2 + $0x370] sm:$0xff] %vm385, %v1400
        %1564 = vst.msk [vmem:[#allocation2 + $0x378] sm:$0xff] %vm385, %v1403
        %1565 = vst.msk [vmem:[#allocation2 + $0x380] sm:$0xff] %vm385, %v1406
        %1566 = vst.msk [vmem:[#allocation2 + $0x388] sm:$0xff] %vm385, %v1409
        %1567 = vst.msk [vmem:[#allocation2 + $0x390] sm:$0xff] %vm385, %v1412
        %1568 = vst.msk [vmem:[#allocation2 + $0x398] sm:$0xff] %vm385, %v1415
        %1569 = vst.msk [vmem:[#allocation2 + $0x3a0] sm:$0xff] %vm385, %v1418
        %1570 = vst.msk [vmem:[#allocation2 + $0x3a8] sm:$0xff] %vm385, %v1421
        %1571 = vst.msk [vmem:[#allocation2 + $0x3b0] sm:$0xff] %vm385, %v1424
        %1572 = vst.msk [vmem:[#allocation2 + $0x3b8] sm:$0xff] %vm385, %v1427
        %1573 = vst.msk [vmem:[#allocation2 + $0x3c0] sm:$0xff] %vm385, %v1430
        %1574 = vst.msk [vmem:[#allocation2 + $0x3c8] sm:$0xff] %vm385, %v1433
        %1575 = vst.msk [vmem:[#allocation2 + $0x3d0] sm:$0xff] %vm385, %v1436
        %1576 = vst.msk [vmem:[#allocation2 + $0x3d8] sm:$0xff] %vm385, %v1439
        %1577 = vst.msk [vmem:[#allocation2 + $0x3e0] sm:$0xff] %vm385, %v1442
        %1578 = vst.msk [vmem:[#allocation2 + $0x3e8] sm:$0xff] %vm385, %v1445
        %1579 = vst.msk [vmem:[#allocation2 + $0x3f0] sm:$0xff] %vm385, %v1448
        %1580 = vst.msk [vmem:[#allocation2 + $0x3f8] sm:$0xff] %vm385, %v1451
        %v1581 = vlaneseq
        %v1582 = vand.u32 %v1581, 127
        %v1583 = vlaneseq
        %v1584 = vshrl.u32 %v1583, 7
        %v1585 = vadd.s32 %v1584, 8
        %v1586 = vmul.u32 %v1584, 2
        %v1587 = vmul.u32 %v1585, 2
        %vm1588 = vcmp.eq.s32.totalorder %v1582, %v1586
        %vm1589 = vcmp.eq.s32.totalorder %v1582, %v1587
        %v1590 = vsel %vm1588, 1, 0
        %v1591 = vsel %vm1589, 1, 0
        %v1592 = vcvt.s32.f32 %v1590
        %v1593 = vcvt.s32.f32 %v1591
        %v1594 = vadd.s32 %v1586, 1
        %v1595 = vadd.s32 %v1587, 1
        %vm1596 = vcmp.eq.s32.totalorder %v1582, %v1594
        %vm1597 = vcmp.eq.s32.totalorder %v1582, %v1595
        %v1598 = vsel %vm1596, 1, 0
        %v1599 = vsel %vm1597, 1, 0
        %v1600 = vcvt.s32.f32 %v1598
        %v1601 = vcvt.s32.f32 %v1599
        %v1602 = vld [vmem:[#allocation2] sm:$0xff]
        %v1603 = vld [vmem:[#allocation2 + $0x8] sm:$0xff]
        %v1604 = vld [vmem:[#allocation2 + $0x10] sm:$0xff]
        %v1605 = vld [vmem:[#allocation2 + $0x18] sm:$0xff]
        %v1606 = vld [vmem:[#allocation2 + $0x20] sm:$0xff]
        %v1607 = vld [vmem:[#allocation2 + $0x28] sm:$0xff]
        %v1608 = vld [vmem:[#allocation2 + $0x30] sm:$0xff]
        %v1609 = vld [vmem:[#allocation2 + $0x38] sm:$0xff]
        %v1610 = vmax.f32 %v1602, %v1606
        %v1611 = vmax.f32 %v1603, %v1607
        %v1612 = vmax.f32 %v1604, %v1608
        %v1613 = vmax.f32 %v1605, %v1609
        %v1615 = vsel %vm385, %v1592, 0
        %v1618 = vsel %vm385, %v1593, 0
        %1620 = vmatpush.msra.mxu0 0.0
        %1621 = vmatpush.msra.mxu0 0.0
        %1622 = vmatpush.msra.mxu0 0.0
        %1623 = vmatpush.msra.mxu0 0.0
        %1624 = vmatpush.msra.mxu0 0.0
        %1625 = vmatpush.msra.mxu0 0.0
        %1626 = vmatpush.msra.mxu0 0.0
        %1627 = vmatpush.msra.mxu0 0.0
        %1628 = vmatpush.msra.mxu0 0.0
        %1629 = vmatpush.msra.mxu0 0.0
        %1630 = vmatpush.msra.mxu0 0.0
        %1631 = vmatpush.msra.mxu0 0.0
        %1632 = vmatpush.msra.mxu0 %v1613
        %1633 = vmatpush.msra.mxu0 %v1612
        %1634 = vmatpush.msra.mxu0 %v1611
        %1635 = vmatpush.msra.mxu0 %v1610
        %1636 = vmatmul.f32.gmra.mxu0 %v1615
        %v1637 = vpop.f32.mrf.mxu0
        %v1638 = vadd.f32 0.0, %v1637
        %1639 = vmatmul.f32.gmra.mxu0 %v1618
        %v1640 = vpop.f32.mrf.mxu0
        %v1641 = vadd.f32 0.0, %v1640
        %1642 = vdwg.mxu0
        %v1644 = vsel %vm385, %v1600, 0
        %v1647 = vsel %vm385, %v1601, 0
        %1649 = vmatpush.msra.mxu0 0.0
        %1650 = vmatpush.msra.mxu0 0.0
        %1651 = vmatpush.msra.mxu0 0.0
        %1652 = vmatpush.msra.mxu0 0.0
        %1653 = vmatpush.msra.mxu0 0.0
        %1654 = vmatpush.msra.mxu0 0.0
        %1655 = vmatpush.msra.mxu0 0.0
        %1656 = vmatpush.msra.mxu0 0.0
        %1657 = vmatpush.msra.mxu0 0.0
        %1658 = vmatpush.msra.mxu0 0.0
        %1659 = vmatpush.msra.mxu0 0.0
        %1660 = vmatpush.msra.mxu0 0.0
        %1661 = vmatpush.msra.mxu0 %v1613
        %1662 = vmatpush.msra.mxu0 %v1612
        %1663 = vmatpush.msra.mxu0 %v1611
        %1664 = vmatpush.msra.mxu0 %v1610
        %1665 = vmatmul.f32.gmra.mxu0 %v1644
        %v1666 = vpop.f32.mrf.mxu0
        %v1667 = vadd.f32 0.0, %v1666
        %1668 = vmatmul.f32.gmra.mxu0 %v1647
        %v1669 = vpop.f32.mrf.mxu0
        %v1670 = vadd.f32 0.0, %v1669
        %1671 = vdwg.mxu0
        %v1672 = vmax.f32 %v1638, %v1667
        %v1673 = vmax.f32 %v1641, %v1670
        %vm1676 = vcmask 1041408
        %v1677 = vrot.slane %v1672, 6
        %v1678 = vrot.slane %v1673, 6
        %v1679 = vsel %vm1676, %v1677, %v1678
        %vm1683 = vcmask 261122
        %1684 = vst.msk [vmem:[#allocation4 + $0x50] sm:$0xfc] %vm1683, %v1677
        %1685 = vst.msk [vmem:[#allocation4 + $0x60] sm:$0xff] %vm385, %v1679
        %vm1686 = vcmask 254976
        %1687 = vst.msk [vmem:[#allocation4 + $0x70] sm:$0x3] %vm1686, %v1678
        %vm1688 = vcmask 1040384
        %v1689 = vrot.slane %v1672, 7
        %v1690 = vrot.slane %v1673, 7
        %v1691 = vsel %vm1688, %v1689, %v1690
        %1692 = vrot.lane.b32.xlu0 %v1689, 32
        %v1693 = vpop.permute.xlu0 %1692
        %1694 = vrot.lane.b32.xlu0 %v1691, 32
        %v1695 = vpop.permute.xlu0 %1694
        %1696 = vrot.lane.b32.xlu0 %v1690, 32
        %v1697 = vpop.permute.xlu0 %1696
        %vm1701 = vcmask 523521
        %1702 = vst.msk [vmem:[#allocation4 + $0x50] sm:$0xfe] %vm1701, %v1693
        %vm1703 = vcmask 523520
        %1704 = vst.msk [vmem:[#allocation4 + $0x60] sm:$0xff] %vm1703, %v1695
        %vm1705 = vcmask 516352
        %1706 = vst.msk [vmem:[#allocation4 + $0x70] sm:$0x1] %vm1705, %v1697
        %1707 = vrot.lane.b32.xlu0 %v1672, 64
        %v1708 = vpop.permute.xlu0 %1707
        %1709 = vrot.lane.b32.xlu0 %v1673, 64
        %v1710 = vpop.permute.xlu0 %1709
        %vm1713 = vcmask 785920
        %1714 = vst.msk [vmem:[#allocation4 + $0x50] sm:$0xff] %vm1713, %v1708
        %1715 = vst.msk [vmem:[#allocation4 + $0x60] sm:$0xff] %vm1713, %v1710
        %vm1716 = vcmask 1046528
        %v1717 = vrot.slane %v1672, 1
        %v1718 = vrot.slane %v1673, 1
        %v1719 = vsel %vm1716, %v1717, %v1718
        %1720 = vrot.lane.b32.xlu0 %v1717, 96
        %v1721 = vpop.permute.xlu0 %1720
        %1722 = vrot.lane.b32.xlu0 %v1719, 96
        %v1723 = vpop.permute.xlu0 %1722
        %1724 = vrot.lane.b32.xlu0 %v1718, 96
        %v1725 = vpop.permute.xlu0 %1724
        %vm1729 = vcmask 1048327
        %1730 = vst.msk [vmem:[#allocation4 + $0x40] sm:$0x80] %vm1729, %v1721
        %vm1731 = vcmask 1048320
        %1732 = vst.msk [vmem:[#allocation4 + $0x50] sm:$0xff] %vm1731, %v1723
        %vm1733 = vcmask 1047296
        %1734 = vst.msk [vmem:[#allocation4 + $0x60] sm:$0x7f] %vm1733, %v1725
        %vm1735 = vcmask 1045504
        %v1736 = vrot.slane %v1672, 2
        %v1737 = vrot.slane %v1673, 2
        %v1738 = vsel %vm1735, %v1736, %v1737
        %vm1742 = vcmask 261126
        %1743 = vst.msk [vmem:[#allocation4 + $0x48] sm:$0xc0] %vm1742, %v1736
        %1744 = vst.msk [vmem:[#allocation4 + $0x58] sm:$0xff] %vm385, %v1738
        %vm1745 = vcmask 259072
        %1746 = vst.msk [vmem:[#allocation4 + $0x68] sm:$0x3f] %vm1745, %v1737
        %v1747 = vld [vmem:[#allocation2 + $0x40] sm:$0xff]
        %v1748 = vld [vmem:[#allocation2 + $0x48] sm:$0xff]
        %v1749 = vld [vmem:[#allocation2 + $0x50] sm:$0xff]
        %v1750 = vld [vmem:[#allocation2 + $0x58] sm:$0xff]
        %v1751 = vld [vmem:[#allocation2 + $0x60] sm:$0xff]
        %v1752 = vld [vmem:[#allocation2 + $0x68] sm:$0xff]
        %v1753 = vld [vmem:[#allocation2 + $0x70] sm:$0xff]
        %v1754 = vld [vmem:[#allocation2 + $0x78] sm:$0xff]
        %v1755 = vmax.f32 %v1747, %v1751
        %v1756 = vmax.f32 %v1748, %v1752
        %v1757 = vmax.f32 %v1749, %v1753
        %v1758 = vmax.f32 %v1750, %v1754
        %1759 = vmatpush.msra.mxu0 0.0
        %1760 = vmatpush.msra.mxu0 0.0
        %1761 = vmatpush.msra.mxu0 0.0
        %1762 = vmatpush.msra.mxu0 0.0
        %1763 = vmatpush.msra.mxu0 0.0
        %1764 = vmatpush.msra.mxu0 0.0
        %1765 = vmatpush.msra.mxu0 0.0
        %1766 = vmatpush.msra.mxu0 0.0
        %1767 = vmatpush.msra.mxu0 0.0
        %1768 = vmatpush.msra.mxu0 0.0
        %1769 = vmatpush.msra.mxu0 0.0
        %1770 = vmatpush.msra.mxu0 0.0
        %1771 = vmatpush.msra.mxu0 %v1758
        %1772 = vmatpush.msra.mxu0 %v1757
        %1773 = vmatpush.msra.mxu0 %v1756
        %1774 = vmatpush.msra.mxu0 %v1755
        %1775 = vmatmul.f32.gmra.mxu0 %v1615
        %v1776 = vpop.f32.mrf.mxu0
        %v1777 = vadd.f32 0.0, %v1776
        %1778 = vmatmul.f32.gmra.mxu0 %v1618
        %v1779 = vpop.f32.mrf.mxu0
        %v1780 = vadd.f32 0.0, %v1779
        %1781 = vdwg.mxu0
        %1782 = vmatpush.msra.mxu0 0.0
        %1783 = vmatpush.msra.mxu0 0.0
        %1784 = vmatpush.msra.mxu0 0.0
        %1785 = vmatpush.msra.mxu0 0.0
        %1786 = vmatpush.msra.mxu0 0.0
        %1787 = vmatpush.msra.mxu0 0.0
        %1788 = vmatpush.msra.mxu0 0.0
        %1789 = vmatpush.msra.mxu0 0.0
        %1790 = vmatpush.msra.mxu0 0.0
        %1791 = vmatpush.msra.mxu0 0.0
        %1792 = vmatpush.msra.mxu0 0.0
        %1793 = vmatpush.msra.mxu0 0.0
        %1794 = vmatpush.msra.mxu0 %v1758
        %1795 = vmatpush.msra.mxu0 %v1757
        %1796 = vmatpush.msra.mxu0 %v1756
        %1797 = vmatpush.msra.mxu0 %v1755
        %1798 = vmatmul.f32.gmra.mxu0 %v1644
        %v1799 = vpop.f32.mrf.mxu0
        %v1800 = vadd.f32 0.0, %v1799
        %1801 = vmatmul.f32.gmra.mxu0 %v1647
        %v1802 = vpop.f32.mrf.mxu0
        %v1803 = vadd.f32 0.0, %v1802
        %1804 = vdwg.mxu0
        %v1805 = vmax.f32 %v1777, %v1800
        %v1806 = vmax.f32 %v1780, %v1803
        %v1809 = vrot.slane %v1805, 2
        %v1810 = vrot.slane %v1806, 2
        %v1811 = vsel %vm1735, %v1809, %v1810
        %1815 = vst.msk [vmem:[#allocation4 + $0x70] sm:$0xc0] %vm1742, %v1809
        %1816 = vst.msk [vmem:[#allocation4 + $0x80] sm:$0xff] %vm385, %v1811
        %1817 = vst.msk [vmem:[#allocation4 + $0x90] sm:$0x3f] %vm1745, %v1810
        %vm1818 = vcmask 1044480
        %v1819 = vrot.slane %v1805, 3
        %v1820 = vrot.slane %v1806, 3
        %v1821 = vsel %vm1818, %v1819, %v1820
        %1822 = vrot.lane.b32.xlu0 %v1819, 32
        %v1823 = vpop.permute.xlu0 %1822
        %1824 = vrot.lane.b32.xlu0 %v1821, 32
        %v1825 = vpop.permute.xlu0 %1824
        %1826 = vrot.lane.b32.xlu0 %v1820, 32
        %v1827 = vpop.permute.xlu0 %1826
        %vm1831 = vcmask 523525
        %1832 = vst.msk [vmem:[#allocation4 + $0x70] sm:$0xe0] %vm1831, %v1823
        %1833 = vst.msk [vmem:[#allocation4 + $0x80] sm:$0xff] %vm1703, %v1825
        %vm1834 = vcmask 520448
        %1835 = vst.msk [vmem:[#allocation4 + $0x90] sm:$0x1f] %vm1834, %v1827
        %vm1836 = vcmask 1043456
        %v1837 = vrot.slane %v1805, 4
        %v1838 = vrot.slane %v1806, 4
        %v1839 = vsel %vm1836, %v1837, %v1838
        %1840 = vrot.lane.b32.xlu0 %v1837, 64
        %v1841 = vpop.permute.xlu0 %1840
        %1842 = vrot.lane.b32.xlu0 %v1839, 64
        %v1843 = vpop.permute.xlu0 %1842
        %1844 = vrot.lane.b32.xlu0 %v1838, 64
        %v1845 = vpop.permute.xlu0 %1844
        %vm1849 = vcmask 785924
        %1850 = vst.msk [vmem:[#allocation4 + $0x70] sm:$0xf0] %vm1849, %v1841
        %1851 = vst.msk [vmem:[#allocation4 + $0x80] sm:$0xff] %vm1713, %v1843
        %vm1852 = vcmask 781824
        %1853 = vst.msk [vmem:[#allocation4 + $0x90] sm:$0xf] %vm1852, %v1845
        %v1854 = vrot.slane %v1805, 5
        %v1855 = vrot.slane %v1806, 5
        %v1856 = vsel %vm1048, %v1854, %v1855
        %1857 = vrot.lane.b32.xlu0 %v1854, 96
        %v1858 = vpop.permute.xlu0 %1857
        %1859 = vrot.lane.b32.xlu0 %v1856, 96
        %v1860 = vpop.permute.xlu0 %1859
        %1861 = vrot.lane.b32.xlu0 %v1855, 96
        %v1862 = vpop.permute.xlu0 %1861
        %vm1866 = vcmask 1048323
        %1867 = vst.msk [vmem:[#allocation4 + $0x70] sm:$0xf8] %vm1866, %v1858
        %1868 = vst.msk [vmem:[#allocation4 + $0x80] sm:$0xff] %vm1731, %v1860
        %vm1869 = vcmask 1043200
        %1870 = vst.msk [vmem:[#allocation4 + $0x90] sm:$0x7] %vm1869, %v1862
        %v1871 = vrot.slane %v1805, 6
        %v1872 = vrot.slane %v1806, 6
        %v1873 = vsel %vm1676, %v1871, %v1872
        %1877 = vst.msk [vmem:[#allocation4 + $0x78] sm:$0xfc] %vm1683, %v1871
        %1878 = vst.msk [vmem:[#allocation4 + $0x88] sm:$0xff] %vm385, %v1873
        %1879 = vst.msk [vmem:[#allocation4 + $0x98] sm:$0x3] %vm1686, %v1872
        %v1880 = vld [vmem:[#allocation2 + $0x80] sm:$0xff]
        %v1881 = vld [vmem:[#allocation2 + $0x88] sm:$0xff]
        %v1882 = vld [vmem:[#allocation2 + $0x90] sm:$0xff]
        %v1883 = vld [vmem:[#allocation2 + $0x98] sm:$0xff]
        %v1884 = vld [vmem:[#allocation2 + $0xa0] sm:$0xff]
        %v1885 = vld [vmem:[#allocation2 + $0xa8] sm:$0xff]
        %v1886 = vld [vmem:[#allocation2 + $0xb0] sm:$0xff]
        %v1887 = vld [vmem:[#allocation2 + $0xb8] sm:$0xff]
        %v1888 = vmax.f32 %v1880, %v1884
        %v1889 = vmax.f32 %v1881, %v1885
        %v1890 = vmax.f32 %v1882, %v1886
        %v1891 = vmax.f32 %v1883, %v1887
        %1892 = vmatpush.msra.mxu0 0.0
        %1893 = vmatpush.msra.mxu0 0.0
        %1894 = vmatpush.msra.mxu0 0.0
        %1895 = vmatpush.msra.mxu0 0.0
        %1896 = vmatpush.msra.mxu0 0.0
        %1897 = vmatpush.msra.mxu0 0.0
        %1898 = vmatpush.msra.mxu0 0.0
        %1899 = vmatpush.msra.mxu0 0.0
        %1900 = vmatpush.msra.mxu0 0.0
        %1901 = vmatpush.msra.mxu0 0.0
        %1902 = vmatpush.msra.mxu0 0.0
        %1903 = vmatpush.msra.mxu0 0.0
        %1904 = vmatpush.msra.mxu0 %v1891
        %1905 = vmatpush.msra.mxu0 %v1890
        %1906 = vmatpush.msra.mxu0 %v1889
        %1907 = vmatpush.msra.mxu0 %v1888
        %1908 = vmatmul.f32.gmra.mxu0 %v1615
        %v1909 = vpop.f32.mrf.mxu0
        %v1910 = vadd.f32 0.0, %v1909
        %1911 = vmatmul.f32.gmra.mxu0 %v1618
        %v1912 = vpop.f32.mrf.mxu0
        %v1913 = vadd.f32 0.0, %v1912
        %1914 = vdwg.mxu0
        %1915 = vmatpush.msra.mxu0 0.0
        %1916 = vmatpush.msra.mxu0 0.0
        %1917 = vmatpush.msra.mxu0 0.0
        %1918 = vmatpush.msra.mxu0 0.0
        %1919 = vmatpush.msra.mxu0 0.0
        %1920 = vmatpush.msra.mxu0 0.0
        %1921 = vmatpush.msra.mxu0 0.0
        %1922 = vmatpush.msra.mxu0 0.0
        %1923 = vmatpush.msra.mxu0 0.0
        %1924 = vmatpush.msra.mxu0 0.0
        %1925 = vmatpush.msra.mxu0 0.0
        %1926 = vmatpush.msra.mxu0 0.0
        %1927 = vmatpush.msra.mxu0 %v1891
        %1928 = vmatpush.msra.mxu0 %v1890
        %1929 = vmatpush.msra.mxu0 %v1889
        %1930 = vmatpush.msra.mxu0 %v1888
        %1931 = vmatmul.f32.gmra.mxu0 %v1644
        %v1932 = vpop.f32.mrf.mxu0
        %v1933 = vadd.f32 0.0, %v1932
        %1934 = vmatmul.f32.gmra.mxu0 %v1647
        %v1935 = vpop.f32.mrf.mxu0
        %v1936 = vadd.f32 0.0, %v1935
        %1937 = vdwg.mxu0
        %v1938 = vmax.f32 %v1910, %v1933
        %v1939 = vmax.f32 %v1913, %v1936
        %v1942 = vrot.slane %v1938, 6
        %v1943 = vrot.slane %v1939, 6
        %v1944 = vsel %vm1676, %v1942, %v1943
        %1948 = vst.msk [vmem:[#allocation4 + $0xa0] sm:$0xfc] %vm1683, %v1942
        %1949 = vst.msk [vmem:[#allocation4 + $0xb0] sm:$0xff] %vm385, %v1944
        %1950 = vst.msk [vmem:[#allocation4 + $0xc0] sm:$0x3] %vm1686, %v1943
        %v1951 = vrot.slane %v1938, 7
        %v1952 = vrot.slane %v1939, 7
        %v1953 = vsel %vm1688, %v1951, %v1952
        %1954 = vrot.lane.b32.xlu0 %v1951, 32
        %v1955 = vpop.permute.xlu0 %1954
        %1956 = vrot.lane.b32.xlu0 %v1953, 32
        %v1957 = vpop.permute.xlu0 %1956
        %1958 = vrot.lane.b32.xlu0 %v1952, 32
        %v1959 = vpop.permute.xlu0 %1958
        %1963 = vst.msk [vmem:[#allocation4 + $0xa0] sm:$0xfe] %vm1701, %v1955
        %1964 = vst.msk [vmem:[#allocation4 + $0xb0] sm:$0xff] %vm1703, %v1957
        %1965 = vst.msk [vmem:[#allocation4 + $0xc0] sm:$0x1] %vm1705, %v1959
        %1966 = vrot.lane.b32.xlu0 %v1938, 64
        %v1967 = vpop.permute.xlu0 %1966
        %1968 = vrot.lane.b32.xlu0 %v1939, 64
        %v1969 = vpop.permute.xlu0 %1968
        %1972 = vst.msk [vmem:[#allocation4 + $0xa0] sm:$0xff] %vm1713, %v1967
        %1973 = vst.msk [vmem:[#allocation4 + $0xb0] sm:$0xff] %vm1713, %v1969
        %v1974 = vrot.slane %v1938, 1
        %v1975 = vrot.slane %v1939, 1
        %v1976 = vsel %vm1716, %v1974, %v1975
        %1977 = vrot.lane.b32.xlu0 %v1974, 96
        %v1978 = vpop.permute.xlu0 %1977
        %1979 = vrot.lane.b32.xlu0 %v1976, 96
        %v1980 = vpop.permute.xlu0 %1979
        %1981 = vrot.lane.b32.xlu0 %v1975, 96
        %v1982 = vpop.permute.xlu0 %1981
        %1986 = vst.msk [vmem:[#allocation4 + $0x90] sm:$0x80] %vm1729, %v1978
        %1987 = vst.msk [vmem:[#allocation4 + $0xa0] sm:$0xff] %vm1731, %v1980
        %1988 = vst.msk [vmem:[#allocation4 + $0xb0] sm:$0x7f] %vm1733, %v1982
        %v1989 = vrot.slane %v1938, 2
        %v1990 = vrot.slane %v1939, 2
        %v1991 = vsel %vm1735, %v1989, %v1990
        %1995 = vst.msk [vmem:[#allocation4 + $0x98] sm:$0xc0] %vm1742, %v1989
        %1996 = vst.msk [vmem:[#allocation4 + $0xa8] sm:$0xff] %vm385, %v1991
        %1997 = vst.msk [vmem:[#allocation4 + $0xb8] sm:$0x3f] %vm1745, %v1990
        %v1998 = vld [vmem:[#allocation2 + $0xc0] sm:$0xff]
        %v1999 = vld [vmem:[#allocation2 + $0xc8] sm:$0xff]
        %v2000 = vld [vmem:[#allocation2 + $0xd0] sm:$0xff]
        %v2001 = vld [vmem:[#allocation2 + $0xd8] sm:$0xff]
        %v2002 = vld [vmem:[#allocation2 + $0xe0] sm:$0xff]
        %v2003 = vld [vmem:[#allocation2 + $0xe8] sm:$0xff]
        %v2004 = vld [vmem:[#allocation2 + $0xf0] sm:$0xff]
        %v2005 = vld [vmem:[#allocation2 + $0xf8] sm:$0xff]
        %v2006 = vmax.f32 %v1998, %v2002
        %v2007 = vmax.f32 %v1999, %v2003
        %v2008 = vmax.f32 %v2000, %v2004
        %v2009 = vmax.f32 %v2001, %v2005
        %2010 = vmatpush.msra.mxu0 0.0
        %2011 = vmatpush.msra.mxu0 0.0
        %2012 = vmatpush.msra.mxu0 0.0
        %2013 = vmatpush.msra.mxu0 0.0
        %2014 = vmatpush.msra.mxu0 0.0
        %2015 = vmatpush.msra.mxu0 0.0
        %2016 = vmatpush.msra.mxu0 0.0
        %2017 = vmatpush.msra.mxu0 0.0
        %2018 = vmatpush.msra.mxu0 0.0
        %2019 = vmatpush.msra.mxu0 0.0
        %2020 = vmatpush.msra.mxu0 0.0
        %2021 = vmatpush.msra.mxu0 0.0
        %2022 = vmatpush.msra.mxu0 %v2009
        %2023 = vmatpush.msra.mxu0 %v2008
        %2024 = vmatpush.msra.mxu0 %v2007
        %2025 = vmatpush.msra.mxu0 %v2006
        %2026 = vmatmul.f32.gmra.mxu0 %v1615
        %v2027 = vpop.f32.mrf.mxu0
        %v2028 = vadd.f32 0.0, %v2027
        %2029 = vmatmul.f32.gmra.mxu0 %v1618
        %v2030 = vpop.f32.mrf.mxu0
        %v2031 = vadd.f32 0.0, %v2030
        %2032 = vdwg.mxu0
        %2033 = vmatpush.msra.mxu0 0.0
        %2034 = vmatpush.msra.mxu0 0.0
        %2035 = vmatpush.msra.mxu0 0.0
        %2036 = vmatpush.msra.mxu0 0.0
        %2037 = vmatpush.msra.mxu0 0.0
        %2038 = vmatpush.msra.mxu0 0.0
        %2039 = vmatpush.msra.mxu0 0.0
        %2040 = vmatpush.msra.mxu0 0.0
        %2041 = vmatpush.msra.mxu0 0.0
        %2042 = vmatpush.msra.mxu0 0.0
        %2043 = vmatpush.msra.mxu0 0.0
        %2044 = vmatpush.msra.mxu0 0.0
        %2045 = vmatpush.msra.mxu0 %v2009
        %2046 = vmatpush.msra.mxu0 %v2008
        %2047 = vmatpush.msra.mxu0 %v2007
        %2048 = vmatpush.msra.mxu0 %v2006
        %2049 = vmatmul.f32.gmra.mxu0 %v1644
        %v2050 = vpop.f32.mrf.mxu0
        %v2051 = vadd.f32 0.0, %v2050
        %2052 = vmatmul.f32.gmra.mxu0 %v1647
        %v2053 = vpop.f32.mrf.mxu0
        %v2054 = vadd.f32 0.0, %v2053
        %2055 = vdwg.mxu0
        %v2056 = vmax.f32 %v2028, %v2051
        %v2057 = vmax.f32 %v2031, %v2054
        %v2060 = vrot.slane %v2056, 2
        %v2061 = vrot.slane %v2057, 2
        %v2062 = vsel %vm1735, %v2060, %v2061
        %2066 = vst.msk [vmem:[#allocation4 + $0xc0] sm:$0xc0] %vm1742, %v2060
        %2067 = vst.msk [vmem:[#allocation4 + $0xd0] sm:$0xff] %vm385, %v2062
        %2068 = vst.msk [vmem:[#allocation4 + $0xe0] sm:$0x3f] %vm1745, %v2061
        %v2069 = vrot.slane %v2056, 3
        %v2070 = vrot.slane %v2057, 3
        %v2071 = vsel %vm1818, %v2069, %v2070
        %2072 = vrot.lane.b32.xlu0 %v2069, 32
        %v2073 = vpop.permute.xlu0 %2072
        %2074 = vrot.lane.b32.xlu0 %v2071, 32
        %v2075 = vpop.permute.xlu0 %2074
        %2076 = vrot.lane.b32.xlu0 %v2070, 32
        %v2077 = vpop.permute.xlu0 %2076
        %2081 = vst.msk [vmem:[#allocation4 + $0xc0] sm:$0xe0] %vm1831, %v2073
        %2082 = vst.msk [vmem:[#allocation4 + $0xd0] sm:$0xff] %vm1703, %v2075
        %2083 = vst.msk [vmem:[#allocation4 + $0xe0] sm:$0x1f] %vm1834, %v2077
        %v2084 = vrot.slane %v2056, 4
        %v2085 = vrot.slane %v2057, 4
        %v2086 = vsel %vm1836, %v2084, %v2085
        %2087 = vrot.lane.b32.xlu0 %v2084, 64
        %v2088 = vpop.permute.xlu0 %2087
        %2089 = vrot.lane.b32.xlu0 %v2086, 64
        %v2090 = vpop.permute.xlu0 %2089
        %2091 = vrot.lane.b32.xlu0 %v2085, 64
        %v2092 = vpop.permute.xlu0 %2091
        %2096 = vst.msk [vmem:[#allocation4 + $0xc0] sm:$0xf0] %vm1849, %v2088
        %2097 = vst.msk [vmem:[#allocation4 + $0xd0] sm:$0xff] %vm1713, %v2090
        %2098 = vst.msk [vmem:[#allocation4 + $0xe0] sm:$0xf] %vm1852, %v2092
        %v2099 = vrot.slane %v2056, 5
        %v2100 = vrot.slane %v2057, 5
        %v2101 = vsel %vm1048, %v2099, %v2100
        %2102 = vrot.lane.b32.xlu0 %v2099, 96
        %v2103 = vpop.permute.xlu0 %2102
        %2104 = vrot.lane.b32.xlu0 %v2101, 96
        %v2105 = vpop.permute.xlu0 %2104
        %2106 = vrot.lane.b32.xlu0 %v2100, 96
        %v2107 = vpop.permute.xlu0 %2106
        %2111 = vst.msk [vmem:[#allocation4 + $0xc0] sm:$0xf8] %vm1866, %v2103
        %2112 = vst.msk [vmem:[#allocation4 + $0xd0] sm:$0xff] %vm1731, %v2105
        %2113 = vst.msk [vmem:[#allocation4 + $0xe0] sm:$0x7] %vm1869, %v2107
        %v2114 = vrot.slane %v2056, 6
        %v2115 = vrot.slane %v2057, 6
        %v2116 = vsel %vm1676, %v2114, %v2115
        %2120 = vst.msk [vmem:[#allocation4 + $0xc8] sm:$0xfc] %vm1683, %v2114
        %2121 = vst.msk [vmem:[#allocation4 + $0xd8] sm:$0xff] %vm385, %v2116
        %2122 = vst.msk [vmem:[#allocation4 + $0xe8] sm:$0x3] %vm1686, %v2115
        %v2123 = vld [vmem:[#allocation2 + $0x100] sm:$0xff]
        %v2124 = vld [vmem:[#allocation2 + $0x108] sm:$0xff]
        %v2125 = vld [vmem:[#allocation2 + $0x110] sm:$0xff]
        %v2126 = vld [vmem:[#allocation2 + $0x118] sm:$0xff]
        %v2127 = vld [vmem:[#allocation2 + $0x120] sm:$0xff]
        %v2128 = vld [vmem:[#allocation2 + $0x128] sm:$0xff]
        %v2129 = vld [vmem:[#allocation2 + $0x130] sm:$0xff]
        %v2130 = vld [vmem:[#allocation2 + $0x138] sm:$0xff]
        %v2131 = vmax.f32 %v2123, %v2127
        %v2132 = vmax.f32 %v2124, %v2128
        %v2133 = vmax.f32 %v2125, %v2129
        %v2134 = vmax.f32 %v2126, %v2130
        %2135 = vmatpush.msra.mxu0 0.0
        %2136 = vmatpush.msra.mxu0 0.0
        %2137 = vmatpush.msra.mxu0 0.0
        %2138 = vmatpush.msra.mxu0 0.0
        %2139 = vmatpush.msra.mxu0 0.0
        %2140 = vmatpush.msra.mxu0 0.0
        %2141 = vmatpush.msra.mxu0 0.0
        %2142 = vmatpush.msra.mxu0 0.0
        %2143 = vmatpush.msra.mxu0 0.0
        %2144 = vmatpush.msra.mxu0 0.0
        %2145 = vmatpush.msra.mxu0 0.0
        %2146 = vmatpush.msra.mxu0 0.0
        %2147 = vmatpush.msra.mxu0 %v2134
        %2148 = vmatpush.msra.mxu0 %v2133
        %2149 = vmatpush.msra.mxu0 %v2132
        %2150 = vmatpush.msra.mxu0 %v2131
        %2151 = vmatmul.f32.gmra.mxu0 %v1615
        %v2152 = vpop.f32.mrf.mxu0
        %v2153 = vadd.f32 0.0, %v2152
        %2154 = vmatmul.f32.gmra.mxu0 %v1618
        %v2155 = vpop.f32.mrf.mxu0
        %v2156 = vadd.f32 0.0, %v2155
        %2157 = vdwg.mxu0
        %2158 = vmatpush.msra.mxu0 0.0
        %2159 = vmatpush.msra.mxu0 0.0
        %2160 = vmatpush.msra.mxu0 0.0
        %2161 = vmatpush.msra.mxu0 0.0
        %2162 = vmatpush.msra.mxu0 0.0
        %2163 = vmatpush.msra.mxu0 0.0
        %2164 = vmatpush.msra.mxu0 0.0
        %2165 = vmatpush.msra.mxu0 0.0
        %2166 = vmatpush.msra.mxu0 0.0
        %2167 = vmatpush.msra.mxu0 0.0
        %2168 = vmatpush.msra.mxu0 0.0
        %2169 = vmatpush.msra.mxu0 0.0
        %2170 = vmatpush.msra.mxu0 %v2134
        %2171 = vmatpush.msra.mxu0 %v2133
        %2172 = vmatpush.msra.mxu0 %v2132
        %2173 = vmatpush.msra.mxu0 %v2131
        %2174 = vmatmul.f32.gmra.mxu0 %v1644
        %v2175 = vpop.f32.mrf.mxu0
        %v2176 = vadd.f32 0.0, %v2175
        %2177 = vmatmul.f32.gmra.mxu0 %v1647
        %v2178 = vpop.f32.mrf.mxu0
        %v2179 = vadd.f32 0.0, %v2178
        %2180 = vdwg.mxu0
        %v2181 = vmax.f32 %v2153, %v2176
        %v2182 = vmax.f32 %v2156, %v2179
        %v2185 = vrot.slane %v2181, 6
        %v2186 = vrot.slane %v2182, 6
        %v2187 = vsel %vm1676, %v2185, %v2186
        %2191 = vst.msk [vmem:[#allocation4 + $0xf0] sm:$0xfc] %vm1683, %v2185
        %2192 = vst.msk [vmem:[#allocation4 + $0x100] sm:$0xff] %vm385, %v2187
        %2193 = vst.msk [vmem:[#allocation4 + $0x110] sm:$0x3] %vm1686, %v2186
        %v2194 = vrot.slane %v2181, 7
        %v2195 = vrot.slane %v2182, 7
        %v2196 = vsel %vm1688, %v2194, %v2195
        %2197 = vrot.lane.b32.xlu0 %v2194, 32
        %v2198 = vpop.permute.xlu0 %2197
        %2199 = vrot.lane.b32.xlu0 %v2196, 32
        %v2200 = vpop.permute.xlu0 %2199
        %2201 = vrot.lane.b32.xlu0 %v2195, 32
        %v2202 = vpop.permute.xlu0 %2201
        %2206 = vst.msk [vmem:[#allocation4 + $0xf0] sm:$0xfe] %vm1701, %v2198
        %2207 = vst.msk [vmem:[#allocation4 + $0x100] sm:$0xff] %vm1703, %v2200
        %2208 = vst.msk [vmem:[#allocation4 + $0x110] sm:$0x1] %vm1705, %v2202
        %2209 = vrot.lane.b32.xlu0 %v2181, 64
        %v2210 = vpop.permute.xlu0 %2209
        %2211 = vrot.lane.b32.xlu0 %v2182, 64
        %v2212 = vpop.permute.xlu0 %2211
        %2215 = vst.msk [vmem:[#allocation4 + $0xf0] sm:$0xff] %vm1713, %v2210
        %2216 = vst.msk [vmem:[#allocation4 + $0x100] sm:$0xff] %vm1713, %v2212
        %v2217 = vrot.slane %v2181, 1
        %v2218 = vrot.slane %v2182, 1
        %v2219 = vsel %vm1716, %v2217, %v2218
        %2220 = vrot.lane.b32.xlu0 %v2217, 96
        %v2221 = vpop.permute.xlu0 %2220
        %2222 = vrot.lane.b32.xlu0 %v2219, 96
        %v2223 = vpop.permute.xlu0 %2222
        %2224 = vrot.lane.b32.xlu0 %v2218, 96
        %v2225 = vpop.permute.xlu0 %2224
        %2229 = vst.msk [vmem:[#allocation4 + $0xe0] sm:$0x80] %vm1729, %v2221
        %2230 = vst.msk [vmem:[#allocation4 + $0xf0] sm:$0xff] %vm1731, %v2223
        %2231 = vst.msk [vmem:[#allocation4 + $0x100] sm:$0x7f] %vm1733, %v2225
        %v2232 = vrot.slane %v2181, 2
        %v2233 = vrot.slane %v2182, 2
        %v2234 = vsel %vm1735, %v2232, %v2233
        %2238 = vst.msk [vmem:[#allocation4 + $0xe8] sm:$0xc0] %vm1742, %v2232
        %2239 = vst.msk [vmem:[#allocation4 + $0xf8] sm:$0xff] %vm385, %v2234
        %2240 = vst.msk [vmem:[#allocation4 + $0x108] sm:$0x3f] %vm1745, %v2233
        %v2241 = vld [vmem:[#allocation2 + $0x140] sm:$0xff]
        %v2242 = vld [vmem:[#allocation2 + $0x148] sm:$0xff]
        %v2243 = vld [vmem:[#allocation2 + $0x150] sm:$0xff]
        %v2244 = vld [vmem:[#allocation2 + $0x158] sm:$0xff]
        %v2245 = vld [vmem:[#allocation2 + $0x160] sm:$0xff]
        %v2246 = vld [vmem:[#allocation2 + $0x168] sm:$0xff]
        %v2247 = vld [vmem:[#allocation2 + $0x170] sm:$0xff]
        %v2248 = vld [vmem:[#allocation2 + $0x178] sm:$0xff]
        %v2249 = vmax.f32 %v2241, %v2245
        %v2250 = vmax.f32 %v2242, %v2246
        %v2251 = vmax.f32 %v2243, %v2247
        %v2252 = vmax.f32 %v2244, %v2248
        %2253 = vmatpush.msra.mxu0 0.0
        %2254 = vmatpush.msra.mxu0 0.0
        %2255 = vmatpush.msra.mxu0 0.0
        %2256 = vmatpush.msra.mxu0 0.0
        %2257 = vmatpush.msra.mxu0 0.0
        %2258 = vmatpush.msra.mxu0 0.0
        %2259 = vmatpush.msra.mxu0 0.0
        %2260 = vmatpush.msra.mxu0 0.0
        %2261 = vmatpush.msra.mxu0 0.0
        %2262 = vmatpush.msra.mxu0 0.0
        %2263 = vmatpush.msra.mxu0 0.0
        %2264 = vmatpush.msra.mxu0 0.0
        %2265 = vmatpush.msra.mxu0 %v2252
        %2266 = vmatpush.msra.mxu0 %v2251
        %2267 = vmatpush.msra.mxu0 %v2250
        %2268 = vmatpush.msra.mxu0 %v2249
        %2269 = vmatmul.f32.gmra.mxu0 %v1615
        %v2270 = vpop.f32.mrf.mxu0
        %v2271 = vadd.f32 0.0, %v2270
        %2272 = vmatmul.f32.gmra.mxu0 %v1618
        %v2273 = vpop.f32.mrf.mxu0
        %v2274 = vadd.f32 0.0, %v2273
        %2275 = vdwg.mxu0
        %2276 = vmatpush.msra.mxu0 0.0
        %2277 = vmatpush.msra.mxu0 0.0
        %2278 = vmatpush.msra.mxu0 0.0
        %2279 = vmatpush.msra.mxu0 0.0
        %2280 = vmatpush.msra.mxu0 0.0
        %2281 = vmatpush.msra.mxu0 0.0
        %2282 = vmatpush.msra.mxu0 0.0
        %2283 = vmatpush.msra.mxu0 0.0
        %2284 = vmatpush.msra.mxu0 0.0
        %2285 = vmatpush.msra.mxu0 0.0
        %2286 = vmatpush.msra.mxu0 0.0
        %2287 = vmatpush.msra.mxu0 0.0
        %2288 = vmatpush.msra.mxu0 %v2252
        %2289 = vmatpush.msra.mxu0 %v2251
        %2290 = vmatpush.msra.mxu0 %v2250
        %2291 = vmatpush.msra.mxu0 %v2249
        %2292 = vmatmul.f32.gmra.mxu0 %v1644
        %v2293 = vpop.f32.mrf.mxu0
        %v2294 = vadd.f32 0.0, %v2293
        %2295 = vmatmul.f32.gmra.mxu0 %v1647
        %v2296 = vpop.f32.mrf.mxu0
        %v2297 = vadd.f32 0.0, %v2296
        %2298 = vdwg.mxu0
        %v2299 = vmax.f32 %v2271, %v2294
        %v2300 = vmax.f32 %v2274, %v2297
        %v2303 = vrot.slane %v2299, 2
        %v2304 = vrot.slane %v2300, 2
        %v2305 = vsel %vm1735, %v2303, %v2304
        %2309 = vst.msk [vmem:[#allocation4 + $0x110] sm:$0xc0] %vm1742, %v2303
        %2310 = vst.msk [vmem:[#allocation4 + $0x120] sm:$0xff] %vm385, %v2305
        %2311 = vst.msk [vmem:[#allocation4 + $0x130] sm:$0x3f] %vm1745, %v2304
        %v2312 = vrot.slane %v2299, 3
        %v2313 = vrot.slane %v2300, 3
        %v2314 = vsel %vm1818, %v2312, %v2313
        %2315 = vrot.lane.b32.xlu0 %v2312, 32
        %v2316 = vpop.permute.xlu0 %2315
        %2317 = vrot.lane.b32.xlu0 %v2314, 32
        %v2318 = vpop.permute.xlu0 %2317
        %2319 = vrot.lane.b32.xlu0 %v2313, 32
        %v2320 = vpop.permute.xlu0 %2319
        %2324 = vst.msk [vmem:[#allocation4 + $0x110] sm:$0xe0] %vm1831, %v2316
        %2325 = vst.msk [vmem:[#allocation4 + $0x120] sm:$0xff] %vm1703, %v2318
        %2326 = vst.msk [vmem:[#allocation4 + $0x130] sm:$0x1f] %vm1834, %v2320
        %v2327 = vrot.slane %v2299, 4
        %v2328 = vrot.slane %v2300, 4
        %v2329 = vsel %vm1836, %v2327, %v2328
        %2330 = vrot.lane.b32.xlu0 %v2327, 64
        %v2331 = vpop.permute.xlu0 %2330
        %2332 = vrot.lane.b32.xlu0 %v2329, 64
        %v2333 = vpop.permute.xlu0 %2332
        %2334 = vrot.lane.b32.xlu0 %v2328, 64
        %v2335 = vpop.permute.xlu0 %2334
        %2339 = vst.msk [vmem:[#allocation4 + $0x110] sm:$0xf0] %vm1849, %v2331
        %2340 = vst.msk [vmem:[#allocation4 + $0x120] sm:$0xff] %vm1713, %v2333
        %2341 = vst.msk [vmem:[#allocation4 + $0x130] sm:$0xf] %vm1852, %v2335
        %v2342 = vrot.slane %v2299, 5
        %v2343 = vrot.slane %v2300, 5
        %v2344 = vsel %vm1048, %v2342, %v2343
        %2345 = vrot.lane.b32.xlu0 %v2342, 96
        %v2346 = vpop.permute.xlu0 %2345
        %2347 = vrot.lane.b32.xlu0 %v2344, 96
        %v2348 = vpop.permute.xlu0 %2347
        %2349 = vrot.lane.b32.xlu0 %v2343, 96
        %v2350 = vpop.permute.xlu0 %2349
        %2354 = vst.msk [vmem:[#allocation4 + $0x110] sm:$0xf8] %vm1866, %v2346
        %2355 = vst.msk [vmem:[#allocation4 + $0x120] sm:$0xff] %vm1731, %v2348
        %2356 = vst.msk [vmem:[#allocation4 + $0x130] sm:$0x7] %vm1869, %v2350
        %v2357 = vrot.slane %v2299, 6
        %v2358 = vrot.slane %v2300, 6
        %v2359 = vsel %vm1676, %v2357, %v2358
        %2363 = vst.msk [vmem:[#allocation4 + $0x118] sm:$0xfc] %vm1683, %v2357
        %2364 = vst.msk [vmem:[#allocation4 + $0x128] sm:$0xff] %vm385, %v2359
        %2365 = vst.msk [vmem:[#allocation4 + $0x138] sm:$0x3] %vm1686, %v2358
        %v2366 = vld [vmem:[#allocation2 + $0x180] sm:$0xff]
        %v2367 = vld [vmem:[#allocation2 + $0x188] sm:$0xff]
        %v2368 = vld [vmem:[#allocation2 + $0x190] sm:$0xff]
        %v2369 = vld [vmem:[#allocation2 + $0x198] sm:$0xff]
        %v2370 = vld [vmem:[#allocation2 + $0x1a0] sm:$0xff]
        %v2371 = vld [vmem:[#allocation2 + $0x1a8] sm:$0xff]
        %v2372 = vld [vmem:[#allocation2 + $0x1b0] sm:$0xff]
        %v2373 = vld [vmem:[#allocation2 + $0x1b8] sm:$0xff]
        %v2374 = vmax.f32 %v2366, %v2370
        %v2375 = vmax.f32 %v2367, %v2371
        %v2376 = vmax.f32 %v2368, %v2372
        %v2377 = vmax.f32 %v2369, %v2373
        %2378 = vmatpush.msra.mxu0 0.0
        %2379 = vmatpush.msra.mxu0 0.0
        %2380 = vmatpush.msra.mxu0 0.0
        %2381 = vmatpush.msra.mxu0 0.0
        %2382 = vmatpush.msra.mxu0 0.0
        %2383 = vmatpush.msra.mxu0 0.0
        %2384 = vmatpush.msra.mxu0 0.0
        %2385 = vmatpush.msra.mxu0 0.0
        %2386 = vmatpush.msra.mxu0 0.0
        %2387 = vmatpush.msra.mxu0 0.0
        %2388 = vmatpush.msra.mxu0 0.0
        %2389 = vmatpush.msra.mxu0 0.0
        %2390 = vmatpush.msra.mxu0 %v2377
        %2391 = vmatpush.msra.mxu0 %v2376
        %2392 = vmatpush.msra.mxu0 %v2375
        %2393 = vmatpush.msra.mxu0 %v2374
        %2394 = vmatmul.f32.gmra.mxu0 %v1615
        %v2395 = vpop.f32.mrf.mxu0
        %v2396 = vadd.f32 0.0, %v2395
        %2397 = vmatmul.f32.gmra.mxu0 %v1618
        %v2398 = vpop.f32.mrf.mxu0
        %v2399 = vadd.f32 0.0, %v2398
        %2400 = vdwg.mxu0
        %2401 = vmatpush.msra.mxu0 0.0
        %2402 = vmatpush.msra.mxu0 0.0
        %2403 = vmatpush.msra.mxu0 0.0
        %2404 = vmatpush.msra.mxu0 0.0
        %2405 = vmatpush.msra.mxu0 0.0
        %2406 = vmatpush.msra.mxu0 0.0
        %2407 = vmatpush.msra.mxu0 0.0
        %2408 = vmatpush.msra.mxu0 0.0
        %2409 = vmatpush.msra.mxu0 0.0
        %2410 = vmatpush.msra.mxu0 0.0
        %2411 = vmatpush.msra.mxu0 0.0
        %2412 = vmatpush.msra.mxu0 0.0
        %2413 = vmatpush.msra.mxu0 %v2377
        %2414 = vmatpush.msra.mxu0 %v2376
        %2415 = vmatpush.msra.mxu0 %v2375
        %2416 = vmatpush.msra.mxu0 %v2374
        %2417 = vmatmul.f32.gmra.mxu0 %v1644
        %v2418 = vpop.f32.mrf.mxu0
        %v2419 = vadd.f32 0.0, %v2418
        %2420 = vmatmul.f32.gmra.mxu0 %v1647
        %v2421 = vpop.f32.mrf.mxu0
        %v2422 = vadd.f32 0.0, %v2421
        %2423 = vdwg.mxu0
        %v2424 = vmax.f32 %v2396, %v2419
        %v2425 = vmax.f32 %v2399, %v2422
        %v2428 = vrot.slane %v2424, 6
        %v2429 = vrot.slane %v2425, 6
        %v2430 = vsel %vm1676, %v2428, %v2429
        %2434 = vst.msk [vmem:[#allocation4 + $0x140] sm:$0xfc] %vm1683, %v2428
        %2435 = vst.msk [vmem:[#allocation4 + $0x150] sm:$0xff] %vm385, %v2430
        %2436 = vst.msk [vmem:[#allocation4 + $0x160] sm:$0x3] %vm1686, %v2429
        %v2437 = vrot.slane %v2424, 7
        %v2438 = vrot.slane %v2425, 7
        %v2439 = vsel %vm1688, %v2437, %v2438
        %2440 = vrot.lane.b32.xlu0 %v2437, 32
        %v2441 = vpop.permute.xlu0 %2440
        %2442 = vrot.lane.b32.xlu0 %v2439, 32
        %v2443 = vpop.permute.xlu0 %2442
        %2444 = vrot.lane.b32.xlu0 %v2438, 32
        %v2445 = vpop.permute.xlu0 %2444
        %2449 = vst.msk [vmem:[#allocation4 + $0x140] sm:$0xfe] %vm1701, %v2441
        %2450 = vst.msk [vmem:[#allocation4 + $0x150] sm:$0xff] %vm1703, %v2443
        %2451 = vst.msk [vmem:[#allocation4 + $0x160] sm:$0x1] %vm1705, %v2445
        %2452 = vrot.lane.b32.xlu0 %v2424, 64
        %v2453 = vpop.permute.xlu0 %2452
        %2454 = vrot.lane.b32.xlu0 %v2425, 64
        %v2455 = vpop.permute.xlu0 %2454
        %2458 = vst.msk [vmem:[#allocation4 + $0x140] sm:$0xff] %vm1713, %v2453
        %2459 = vst.msk [vmem:[#allocation4 + $0x150] sm:$0xff] %vm1713, %v2455
        %v2460 = vrot.slane %v2424, 1
        %v2461 = vrot.slane %v2425, 1
        %v2462 = vsel %vm1716, %v2460, %v2461
        %2463 = vrot.lane.b32.xlu0 %v2460, 96
        %v2464 = vpop.permute.xlu0 %2463
        %2465 = vrot.lane.b32.xlu0 %v2462, 96
        %v2466 = vpop.permute.xlu0 %2465
        %2467 = vrot.lane.b32.xlu0 %v2461, 96
        %v2468 = vpop.permute.xlu0 %2467
        %2472 = vst.msk [vmem:[#allocation4 + $0x130] sm:$0x80] %vm1729, %v2464
        %2473 = vst.msk [vmem:[#allocation4 + $0x140] sm:$0xff] %vm1731, %v2466
        %2474 = vst.msk [vmem:[#allocation4 + $0x150] sm:$0x7f] %vm1733, %v2468
        %v2475 = vrot.slane %v2424, 2
        %v2476 = vrot.slane %v2425, 2
        %v2477 = vsel %vm1735, %v2475, %v2476
        %2481 = vst.msk [vmem:[#allocation4 + $0x138] sm:$0xc0] %vm1742, %v2475
        %2482 = vst.msk [vmem:[#allocation4 + $0x148] sm:$0xff] %vm385, %v2477
        %2483 = vst.msk [vmem:[#allocation4 + $0x158] sm:$0x3f] %vm1745, %v2476
        %v2484 = vld [vmem:[#allocation2 + $0x1c0] sm:$0xff]
        %v2485 = vld [vmem:[#allocation2 + $0x1c8] sm:$0xff]
        %v2486 = vld [vmem:[#allocation2 + $0x1d0] sm:$0xff]
        %v2487 = vld [vmem:[#allocation2 + $0x1d8] sm:$0xff]
        %v2488 = vld [vmem:[#allocation2 + $0x1e0] sm:$0xff]
        %v2489 = vld [vmem:[#allocation2 + $0x1e8] sm:$0xff]
        %v2490 = vld [vmem:[#allocation2 + $0x1f0] sm:$0xff]
        %v2491 = vld [vmem:[#allocation2 + $0x1f8] sm:$0xff]
        %v2492 = vmax.f32 %v2484, %v2488
        %v2493 = vmax.f32 %v2485, %v2489
        %v2494 = vmax.f32 %v2486, %v2490
        %v2495 = vmax.f32 %v2487, %v2491
        %2496 = vmatpush.msra.mxu0 0.0
        %2497 = vmatpush.msra.mxu0 0.0
        %2498 = vmatpush.msra.mxu0 0.0
        %2499 = vmatpush.msra.mxu0 0.0
        %2500 = vmatpush.msra.mxu0 0.0
        %2501 = vmatpush.msra.mxu0 0.0
        %2502 = vmatpush.msra.mxu0 0.0
        %2503 = vmatpush.msra.mxu0 0.0
        %2504 = vmatpush.msra.mxu0 0.0
        %2505 = vmatpush.msra.mxu0 0.0
        %2506 = vmatpush.msra.mxu0 0.0
        %2507 = vmatpush.msra.mxu0 0.0
        %2508 = vmatpush.msra.mxu0 %v2495
        %2509 = vmatpush.msra.mxu0 %v2494
        %2510 = vmatpush.msra.mxu0 %v2493
        %2511 = vmatpush.msra.mxu0 %v2492
        %2512 = vmatmul.f32.gmra.mxu0 %v1615
        %v2513 = vpop.f32.mrf.mxu0
        %v2514 = vadd.f32 0.0, %v2513
        %2515 = vmatmul.f32.gmra.mxu0 %v1618
        %v2516 = vpop.f32.mrf.mxu0
        %v2517 = vadd.f32 0.0, %v2516
        %2518 = vdwg.mxu0
        %2519 = vmatpush.msra.mxu0 0.0
        %2520 = vmatpush.msra.mxu0 0.0
        %2521 = vmatpush.msra.mxu0 0.0
        %2522 = vmatpush.msra.mxu0 0.0
        %2523 = vmatpush.msra.mxu0 0.0
        %2524 = vmatpush.msra.mxu0 0.0
        %2525 = vmatpush.msra.mxu0 0.0
        %2526 = vmatpush.msra.mxu0 0.0
        %2527 = vmatpush.msra.mxu0 0.0
        %2528 = vmatpush.msra.mxu0 0.0
        %2529 = vmatpush.msra.mxu0 0.0
        %2530 = vmatpush.msra.mxu0 0.0
        %2531 = vmatpush.msra.mxu0 %v2495
        %2532 = vmatpush.msra.mxu0 %v2494
        %2533 = vmatpush.msra.mxu0 %v2493
        %2534 = vmatpush.msra.mxu0 %v2492
        %2535 = vmatmul.f32.gmra.mxu0 %v1644
        %v2536 = vpop.f32.mrf.mxu0
        %v2537 = vadd.f32 0.0, %v2536
        %2538 = vmatmul.f32.gmra.mxu0 %v1647
        %v2539 = vpop.f32.mrf.mxu0
        %v2540 = vadd.f32 0.0, %v2539
        %2541 = vdwg.mxu0
        %v2542 = vmax.f32 %v2514, %v2537
        %v2543 = vmax.f32 %v2517, %v2540
        %v2546 = vrot.slane %v2542, 2
        %v2547 = vrot.slane %v2543, 2
        %v2548 = vsel %vm1735, %v2546, %v2547
        %2552 = vst.msk [vmem:[#allocation4 + $0x160] sm:$0xc0] %vm1742, %v2546
        %2553 = vst.msk [vmem:[#allocation4 + $0x170] sm:$0xff] %vm385, %v2548
        %2554 = vst.msk [vmem:[#allocation4 + $0x180] sm:$0x3f] %vm1745, %v2547
        %v2555 = vrot.slane %v2542, 3
        %v2556 = vrot.slane %v2543, 3
        %v2557 = vsel %vm1818, %v2555, %v2556
        %2558 = vrot.lane.b32.xlu0 %v2555, 32
        %v2559 = vpop.permute.xlu0 %2558
        %2560 = vrot.lane.b32.xlu0 %v2557, 32
        %v2561 = vpop.permute.xlu0 %2560
        %2562 = vrot.lane.b32.xlu0 %v2556, 32
        %v2563 = vpop.permute.xlu0 %2562
        %2567 = vst.msk [vmem:[#allocation4 + $0x160] sm:$0xe0] %vm1831, %v2559
        %2568 = vst.msk [vmem:[#allocation4 + $0x170] sm:$0xff] %vm1703, %v2561
        %2569 = vst.msk [vmem:[#allocation4 + $0x180] sm:$0x1f] %vm1834, %v2563
        %v2570 = vrot.slane %v2542, 4
        %v2571 = vrot.slane %v2543, 4
        %v2572 = vsel %vm1836, %v2570, %v2571
        %2573 = vrot.lane.b32.xlu0 %v2570, 64
        %v2574 = vpop.permute.xlu0 %2573
        %2575 = vrot.lane.b32.xlu0 %v2572, 64
        %v2576 = vpop.permute.xlu0 %2575
        %2577 = vrot.lane.b32.xlu0 %v2571, 64
        %v2578 = vpop.permute.xlu0 %2577
        %2582 = vst.msk [vmem:[#allocation4 + $0x160] sm:$0xf0] %vm1849, %v2574
        %2583 = vst.msk [vmem:[#allocation4 + $0x170] sm:$0xff] %vm1713, %v2576
        %2584 = vst.msk [vmem:[#allocation4 + $0x180] sm:$0xf] %vm1852, %v2578
        %v2585 = vrot.slane %v2542, 5
        %v2586 = vrot.slane %v2543, 5
        %v2587 = vsel %vm1048, %v2585, %v2586
        %2588 = vrot.lane.b32.xlu0 %v2585, 96
        %v2589 = vpop.permute.xlu0 %2588
        %2590 = vrot.lane.b32.xlu0 %v2587, 96
        %v2591 = vpop.permute.xlu0 %2590
        %2592 = vrot.lane.b32.xlu0 %v2586, 96
        %v2593 = vpop.permute.xlu0 %2592
        %2597 = vst.msk [vmem:[#allocation4 + $0x160] sm:$0xf8] %vm1866, %v2589
        %2598 = vst.msk [vmem:[#allocation4 + $0x170] sm:$0xff] %vm1731, %v2591
        %2599 = vst.msk [vmem:[#allocation4 + $0x180] sm:$0x7] %vm1869, %v2593
        %v2600 = vrot.slane %v2542, 6
        %v2601 = vrot.slane %v2543, 6
        %v2602 = vsel %vm1676, %v2600, %v2601
        %2606 = vst.msk [vmem:[#allocation4 + $0x168] sm:$0xfc] %vm1683, %v2600
        %2607 = vst.msk [vmem:[#allocation4 + $0x178] sm:$0xff] %vm385, %v2602
        %2608 = vst.msk [vmem:[#allocation4 + $0x188] sm:$0x3] %vm1686, %v2601
        %v2609 = vld [vmem:[#allocation2 + $0x200] sm:$0xff]
        %v2610 = vld [vmem:[#allocation2 + $0x208] sm:$0xff]
        %v2611 = vld [vmem:[#allocation2 + $0x210] sm:$0xff]
        %v2612 = vld [vmem:[#allocation2 + $0x218] sm:$0xff]
        %v2613 = vld [vmem:[#allocation2 + $0x220] sm:$0xff]
        %v2614 = vld [vmem:[#allocation2 + $0x228] sm:$0xff]
        %v2615 = vld [vmem:[#allocation2 + $0x230] sm:$0xff]
        %v2616 = vld [vmem:[#allocation2 + $0x238] sm:$0xff]
        %v2617 = vmax.f32 %v2609, %v2613
        %v2618 = vmax.f32 %v2610, %v2614
        %v2619 = vmax.f32 %v2611, %v2615
        %v2620 = vmax.f32 %v2612, %v2616
        %2621 = vmatpush.msra.mxu0 0.0
        %2622 = vmatpush.msra.mxu0 0.0
        %2623 = vmatpush.msra.mxu0 0.0
        %2624 = vmatpush.msra.mxu0 0.0
        %2625 = vmatpush.msra.mxu0 0.0
        %2626 = vmatpush.msra.mxu0 0.0
        %2627 = vmatpush.msra.mxu0 0.0
        %2628 = vmatpush.msra.mxu0 0.0
        %2629 = vmatpush.msra.mxu0 0.0
        %2630 = vmatpush.msra.mxu0 0.0
        %2631 = vmatpush.msra.mxu0 0.0
        %2632 = vmatpush.msra.mxu0 0.0
        %2633 = vmatpush.msra.mxu0 %v2620
        %2634 = vmatpush.msra.mxu0 %v2619
        %2635 = vmatpush.msra.mxu0 %v2618
        %2636 = vmatpush.msra.mxu0 %v2617
        %2637 = vmatmul.f32.gmra.mxu0 %v1615
        %v2638 = vpop.f32.mrf.mxu0
        %v2639 = vadd.f32 0.0, %v2638
        %2640 = vmatmul.f32.gmra.mxu0 %v1618
        %v2641 = vpop.f32.mrf.mxu0
        %v2642 = vadd.f32 0.0, %v2641
        %2643 = vdwg.mxu0
        %2644 = vmatpush.msra.mxu0 0.0
        %2645 = vmatpush.msra.mxu0 0.0
        %2646 = vmatpush.msra.mxu0 0.0
        %2647 = vmatpush.msra.mxu0 0.0
        %2648 = vmatpush.msra.mxu0 0.0
        %2649 = vmatpush.msra.mxu0 0.0
        %2650 = vmatpush.msra.mxu0 0.0
        %2651 = vmatpush.msra.mxu0 0.0
        %2652 = vmatpush.msra.mxu0 0.0
        %2653 = vmatpush.msra.mxu0 0.0
        %2654 = vmatpush.msra.mxu0 0.0
        %2655 = vmatpush.msra.mxu0 0.0
        %2656 = vmatpush.msra.mxu0 %v2620
        %2657 = vmatpush.msra.mxu0 %v2619
        %2658 = vmatpush.msra.mxu0 %v2618
        %2659 = vmatpush.msra.mxu0 %v2617
        %2660 = vmatmul.f32.gmra.mxu0 %v1644
        %v2661 = vpop.f32.mrf.mxu0
        %v2662 = vadd.f32 0.0, %v2661
        %2663 = vmatmul.f32.gmra.mxu0 %v1647
        %v2664 = vpop.f32.mrf.mxu0
        %v2665 = vadd.f32 0.0, %v2664
        %2666 = vdwg.mxu0
        %v2667 = vmax.f32 %v2639, %v2662
        %v2668 = vmax.f32 %v2642, %v2665
        %v2671 = vrot.slane %v2667, 6
        %v2672 = vrot.slane %v2668, 6
        %v2673 = vsel %vm1676, %v2671, %v2672
        %2677 = vst.msk [vmem:[#allocation4 + $0x190] sm:$0xfc] %vm1683, %v2671
        %2678 = vst.msk [vmem:[#allocation4 + $0x1a0] sm:$0xff] %vm385, %v2673
        %2679 = vst.msk [vmem:[#allocation4 + $0x1b0] sm:$0x3] %vm1686, %v2672
        %v2680 = vrot.slane %v2667, 7
        %v2681 = vrot.slane %v2668, 7
        %v2682 = vsel %vm1688, %v2680, %v2681
        %2683 = vrot.lane.b32.xlu0 %v2680, 32
        %v2684 = vpop.permute.xlu0 %2683
        %2685 = vrot.lane.b32.xlu0 %v2682, 32
        %v2686 = vpop.permute.xlu0 %2685
        %2687 = vrot.lane.b32.xlu0 %v2681, 32
        %v2688 = vpop.permute.xlu0 %2687
        %2692 = vst.msk [vmem:[#allocation4 + $0x190] sm:$0xfe] %vm1701, %v2684
        %2693 = vst.msk [vmem:[#allocation4 + $0x1a0] sm:$0xff] %vm1703, %v2686
        %2694 = vst.msk [vmem:[#allocation4 + $0x1b0] sm:$0x1] %vm1705, %v2688
        %2695 = vrot.lane.b32.xlu0 %v2667, 64
        %v2696 = vpop.permute.xlu0 %2695
        %2697 = vrot.lane.b32.xlu0 %v2668, 64
        %v2698 = vpop.permute.xlu0 %2697
        %2701 = vst.msk [vmem:[#allocation4 + $0x190] sm:$0xff] %vm1713, %v2696
        %2702 = vst.msk [vmem:[#allocation4 + $0x1a0] sm:$0xff] %vm1713, %v2698
        %v2703 = vrot.slane %v2667, 1
        %v2704 = vrot.slane %v2668, 1
        %v2705 = vsel %vm1716, %v2703, %v2704
        %2706 = vrot.lane.b32.xlu0 %v2703, 96
        %v2707 = vpop.permute.xlu0 %2706
        %2708 = vrot.lane.b32.xlu0 %v2705, 96
        %v2709 = vpop.permute.xlu0 %2708
        %2710 = vrot.lane.b32.xlu0 %v2704, 96
        %v2711 = vpop.permute.xlu0 %2710
        %2715 = vst.msk [vmem:[#allocation4 + $0x180] sm:$0x80] %vm1729, %v2707
        %2716 = vst.msk [vmem:[#allocation4 + $0x190] sm:$0xff] %vm1731, %v2709
        %2717 = vst.msk [vmem:[#allocation4 + $0x1a0] sm:$0x7f] %vm1733, %v2711
        %v2718 = vrot.slane %v2667, 2
        %v2719 = vrot.slane %v2668, 2
        %v2720 = vsel %vm1735, %v2718, %v2719
        %2724 = vst.msk [vmem:[#allocation4 + $0x188] sm:$0xc0] %vm1742, %v2718
        %2725 = vst.msk [vmem:[#allocation4 + $0x198] sm:$0xff] %vm385, %v2720
        %2726 = vst.msk [vmem:[#allocation4 + $0x1a8] sm:$0x3f] %vm1745, %v2719
        %v2727 = vld [vmem:[#allocation2 + $0x240] sm:$0xff]
        %v2728 = vld [vmem:[#allocation2 + $0x248] sm:$0xff]
        %v2729 = vld [vmem:[#allocation2 + $0x250] sm:$0xff]
        %v2730 = vld [vmem:[#allocation2 + $0x258] sm:$0xff]
        %v2731 = vld [vmem:[#allocation2 + $0x260] sm:$0xff]
        %v2732 = vld [vmem:[#allocation2 + $0x268] sm:$0xff]
        %v2733 = vld [vmem:[#allocation2 + $0x270] sm:$0xff]
        %v2734 = vld [vmem:[#allocation2 + $0x278] sm:$0xff]
        %v2735 = vmax.f32 %v2727, %v2731
        %v2736 = vmax.f32 %v2728, %v2732
        %v2737 = vmax.f32 %v2729, %v2733
        %v2738 = vmax.f32 %v2730, %v2734
        %2739 = vmatpush.msra.mxu0 0.0
        %2740 = vmatpush.msra.mxu0 0.0
        %2741 = vmatpush.msra.mxu0 0.0
        %2742 = vmatpush.msra.mxu0 0.0
        %2743 = vmatpush.msra.mxu0 0.0
        %2744 = vmatpush.msra.mxu0 0.0
        %2745 = vmatpush.msra.mxu0 0.0
        %2746 = vmatpush.msra.mxu0 0.0
        %2747 = vmatpush.msra.mxu0 0.0
        %2748 = vmatpush.msra.mxu0 0.0
        %2749 = vmatpush.msra.mxu0 0.0
        %2750 = vmatpush.msra.mxu0 0.0
        %2751 = vmatpush.msra.mxu0 %v2738
        %2752 = vmatpush.msra.mxu0 %v2737
        %2753 = vmatpush.msra.mxu0 %v2736
        %2754 = vmatpush.msra.mxu0 %v2735
        %2755 = vmatmul.f32.gmra.mxu0 %v1615
        %v2756 = vpop.f32.mrf.mxu0
        %v2757 = vadd.f32 0.0, %v2756
        %2758 = vmatmul.f32.gmra.mxu0 %v1618
        %v2759 = vpop.f32.mrf.mxu0
        %v2760 = vadd.f32 0.0, %v2759
        %2761 = vdwg.mxu0
        %2762 = vmatpush.msra.mxu0 0.0
        %2763 = vmatpush.msra.mxu0 0.0
        %2764 = vmatpush.msra.mxu0 0.0
        %2765 = vmatpush.msra.mxu0 0.0
        %2766 = vmatpush.msra.mxu0 0.0
        %2767 = vmatpush.msra.mxu0 0.0
        %2768 = vmatpush.msra.mxu0 0.0
        %2769 = vmatpush.msra.mxu0 0.0
        %2770 = vmatpush.msra.mxu0 0.0
        %2771 = vmatpush.msra.mxu0 0.0
        %2772 = vmatpush.msra.mxu0 0.0
        %2773 = vmatpush.msra.mxu0 0.0
        %2774 = vmatpush.msra.mxu0 %v2738
        %2775 = vmatpush.msra.mxu0 %v2737
        %2776 = vmatpush.msra.mxu0 %v2736
        %2777 = vmatpush.msra.mxu0 %v2735
        %2778 = vmatmul.f32.gmra.mxu0 %v1644
        %v2779 = vpop.f32.mrf.mxu0
        %v2780 = vadd.f32 0.0, %v2779
        %2781 = vmatmul.f32.gmra.mxu0 %v1647
        %v2782 = vpop.f32.mrf.mxu0
        %v2783 = vadd.f32 0.0, %v2782
        %2784 = vdwg.mxu0
        %v2785 = vmax.f32 %v2757, %v2780
        %v2786 = vmax.f32 %v2760, %v2783
        %v2789 = vrot.slane %v2785, 2
        %v2790 = vrot.slane %v2786, 2
        %v2791 = vsel %vm1735, %v2789, %v2790
        %2795 = vst.msk [vmem:[#allocation4 + $0x1b0] sm:$0xc0] %vm1742, %v2789
        %2796 = vst.msk [vmem:[#allocation4 + $0x1c0] sm:$0xff] %vm385, %v2791
        %2797 = vst.msk [vmem:[#allocation4 + $0x1d0] sm:$0x3f] %vm1745, %v2790
        %v2798 = vrot.slane %v2785, 3
        %v2799 = vrot.slane %v2786, 3
        %v2800 = vsel %vm1818, %v2798, %v2799
        %2801 = vrot.lane.b32.xlu0 %v2798, 32
        %v2802 = vpop.permute.xlu0 %2801
        %2803 = vrot.lane.b32.xlu0 %v2800, 32
        %v2804 = vpop.permute.xlu0 %2803
        %2805 = vrot.lane.b32.xlu0 %v2799, 32
        %v2806 = vpop.permute.xlu0 %2805
        %2810 = vst.msk [vmem:[#allocation4 + $0x1b0] sm:$0xe0] %vm1831, %v2802
        %2811 = vst.msk [vmem:[#allocation4 + $0x1c0] sm:$0xff] %vm1703, %v2804
        %2812 = vst.msk [vmem:[#allocation4 + $0x1d0] sm:$0x1f] %vm1834, %v2806
        %v2813 = vrot.slane %v2785, 4
        %v2814 = vrot.slane %v2786, 4
        %v2815 = vsel %vm1836, %v2813, %v2814
        %2816 = vrot.lane.b32.xlu0 %v2813, 64
        %v2817 = vpop.permute.xlu0 %2816
        %2818 = vrot.lane.b32.xlu0 %v2815, 64
        %v2819 = vpop.permute.xlu0 %2818
        %2820 = vrot.lane.b32.xlu0 %v2814, 64
        %v2821 = vpop.permute.xlu0 %2820
        %2825 = vst.msk [vmem:[#allocation4 + $0x1b0] sm:$0xf0] %vm1849, %v2817
        %2826 = vst.msk [vmem:[#allocation4 + $0x1c0] sm:$0xff] %vm1713, %v2819
        %2827 = vst.msk [vmem:[#allocation4 + $0x1d0] sm:$0xf] %vm1852, %v2821
        %v2828 = vrot.slane %v2785, 5
        %v2829 = vrot.slane %v2786, 5
        %v2830 = vsel %vm1048, %v2828, %v2829
        %2831 = vrot.lane.b32.xlu0 %v2828, 96
        %v2832 = vpop.permute.xlu0 %2831
        %2833 = vrot.lane.b32.xlu0 %v2830, 96
        %v2834 = vpop.permute.xlu0 %2833
        %2835 = vrot.lane.b32.xlu0 %v2829, 96
        %v2836 = vpop.permute.xlu0 %2835
        %2840 = vst.msk [vmem:[#allocation4 + $0x1b0] sm:$0xf8] %vm1866, %v2832
        %2841 = vst.msk [vmem:[#allocation4 + $0x1c0] sm:$0xff] %vm1731, %v2834
        %2842 = vst.msk [vmem:[#allocation4 + $0x1d0] sm:$0x7] %vm1869, %v2836
        %v2843 = vrot.slane %v2785, 6
        %v2844 = vrot.slane %v2786, 6
        %v2845 = vsel %vm1676, %v2843, %v2844
        %2849 = vst.msk [vmem:[#allocation4 + $0x1b8] sm:$0xfc] %vm1683, %v2843
        %2850 = vst.msk [vmem:[#allocation4 + $0x1c8] sm:$0xff] %vm385, %v2845
        %2851 = vst.msk [vmem:[#allocation4 + $0x1d8] sm:$0x3] %vm1686, %v2844
        %v2852 = vld [vmem:[#allocation2 + $0x280] sm:$0xff]
        %v2853 = vld [vmem:[#allocation2 + $0x288] sm:$0xff]
        %v2854 = vld [vmem:[#allocation2 + $0x290] sm:$0xff]
        %v2855 = vld [vmem:[#allocation2 + $0x298] sm:$0xff]
        %v2856 = vld [vmem:[#allocation2 + $0x2a0] sm:$0xff]
        %v2857 = vld [vmem:[#allocation2 + $0x2a8] sm:$0xff]
        %v2858 = vld [vmem:[#allocation2 + $0x2b0] sm:$0xff]
        %v2859 = vld [vmem:[#allocation2 + $0x2b8] sm:$0xff]
        %v2860 = vmax.f32 %v2852, %v2856
        %v2861 = vmax.f32 %v2853, %v2857
        %v2862 = vmax.f32 %v2854, %v2858
        %v2863 = vmax.f32 %v2855, %v2859
        %2864 = vmatpush.msra.mxu0 0.0
        %2865 = vmatpush.msra.mxu0 0.0
        %2866 = vmatpush.msra.mxu0 0.0
        %2867 = vmatpush.msra.mxu0 0.0
        %2868 = vmatpush.msra.mxu0 0.0
        %2869 = vmatpush.msra.mxu0 0.0
        %2870 = vmatpush.msra.mxu0 0.0
        %2871 = vmatpush.msra.mxu0 0.0
        %2872 = vmatpush.msra.mxu0 0.0
        %2873 = vmatpush.msra.mxu0 0.0
        %2874 = vmatpush.msra.mxu0 0.0
        %2875 = vmatpush.msra.mxu0 0.0
        %2876 = vmatpush.msra.mxu0 %v2863
        %2877 = vmatpush.msra.mxu0 %v2862
        %2878 = vmatpush.msra.mxu0 %v2861
        %2879 = vmatpush.msra.mxu0 %v2860
        %2880 = vmatmul.f32.gmra.mxu0 %v1615
        %v2881 = vpop.f32.mrf.mxu0
        %v2882 = vadd.f32 0.0, %v2881
        %2883 = vmatmul.f32.gmra.mxu0 %v1618
        %v2884 = vpop.f32.mrf.mxu0
        %v2885 = vadd.f32 0.0, %v2884
        %2886 = vdwg.mxu0
        %2887 = vmatpush.msra.mxu0 0.0
        %2888 = vmatpush.msra.mxu0 0.0
        %2889 = vmatpush.msra.mxu0 0.0
        %2890 = vmatpush.msra.mxu0 0.0
        %2891 = vmatpush.msra.mxu0 0.0
        %2892 = vmatpush.msra.mxu0 0.0
        %2893 = vmatpush.msra.mxu0 0.0
        %2894 = vmatpush.msra.mxu0 0.0
        %2895 = vmatpush.msra.mxu0 0.0
        %2896 = vmatpush.msra.mxu0 0.0
        %2897 = vmatpush.msra.mxu0 0.0
        %2898 = vmatpush.msra.mxu0 0.0
        %2899 = vmatpush.msra.mxu0 %v2863
        %2900 = vmatpush.msra.mxu0 %v2862
        %2901 = vmatpush.msra.mxu0 %v2861
        %2902 = vmatpush.msra.mxu0 %v2860
        %2903 = vmatmul.f32.gmra.mxu0 %v1644
        %v2904 = vpop.f32.mrf.mxu0
        %v2905 = vadd.f32 0.0, %v2904
        %2906 = vmatmul.f32.gmra.mxu0 %v1647
        %v2907 = vpop.f32.mrf.mxu0
        %v2908 = vadd.f32 0.0, %v2907
        %2909 = vdwg.mxu0
        %v2910 = vmax.f32 %v2882, %v2905
        %v2911 = vmax.f32 %v2885, %v2908
        %v2914 = vrot.slane %v2910, 6
        %v2915 = vrot.slane %v2911, 6
        %v2916 = vsel %vm1676, %v2914, %v2915
        %2920 = vst.msk [vmem:[#allocation4 + $0x1e0] sm:$0xfc] %vm1683, %v2914
        %2921 = vst.msk [vmem:[#allocation4 + $0x1f0] sm:$0xff] %vm385, %v2916
        %2922 = vst.msk [vmem:[#allocation4 + $0x200] sm:$0x3] %vm1686, %v2915
        %v2923 = vrot.slane %v2910, 7
        %v2924 = vrot.slane %v2911, 7
        %v2925 = vsel %vm1688, %v2923, %v2924
        %2926 = vrot.lane.b32.xlu0 %v2923, 32
        %v2927 = vpop.permute.xlu0 %2926
        %2928 = vrot.lane.b32.xlu0 %v2925, 32
        %v2929 = vpop.permute.xlu0 %2928
        %2930 = vrot.lane.b32.xlu0 %v2924, 32
        %v2931 = vpop.permute.xlu0 %2930
        %2935 = vst.msk [vmem:[#allocation4 + $0x1e0] sm:$0xfe] %vm1701, %v2927
        %2936 = vst.msk [vmem:[#allocation4 + $0x1f0] sm:$0xff] %vm1703, %v2929
        %2937 = vst.msk [vmem:[#allocation4 + $0x200] sm:$0x1] %vm1705, %v2931
        %2938 = vrot.lane.b32.xlu0 %v2910, 64
        %v2939 = vpop.permute.xlu0 %2938
        %2940 = vrot.lane.b32.xlu0 %v2911, 64
        %v2941 = vpop.permute.xlu0 %2940
        %2944 = vst.msk [vmem:[#allocation4 + $0x1e0] sm:$0xff] %vm1713, %v2939
        %2945 = vst.msk [vmem:[#allocation4 + $0x1f0] sm:$0xff] %vm1713, %v2941
        %v2946 = vrot.slane %v2910, 1
        %v2947 = vrot.slane %v2911, 1
        %v2948 = vsel %vm1716, %v2946, %v2947
        %2949 = vrot.lane.b32.xlu0 %v2946, 96
        %v2950 = vpop.permute.xlu0 %2949
        %2951 = vrot.lane.b32.xlu0 %v2948, 96
        %v2952 = vpop.permute.xlu0 %2951
        %2953 = vrot.lane.b32.xlu0 %v2947, 96
        %v2954 = vpop.permute.xlu0 %2953
        %2958 = vst.msk [vmem:[#allocation4 + $0x1d0] sm:$0x80] %vm1729, %v2950
        %2959 = vst.msk [vmem:[#allocation4 + $0x1e0] sm:$0xff] %vm1731, %v2952
        %2960 = vst.msk [vmem:[#allocation4 + $0x1f0] sm:$0x7f] %vm1733, %v2954
        %v2961 = vrot.slane %v2910, 2
        %v2962 = vrot.slane %v2911, 2
        %v2963 = vsel %vm1735, %v2961, %v2962
        %2967 = vst.msk [vmem:[#allocation4 + $0x1d8] sm:$0xc0] %vm1742, %v2961
        %2968 = vst.msk [vmem:[#allocation4 + $0x1e8] sm:$0xff] %vm385, %v2963
        %2969 = vst.msk [vmem:[#allocation4 + $0x1f8] sm:$0x3f] %vm1745, %v2962
        %v2970 = vld [vmem:[#allocation2 + $0x2c0] sm:$0xff]
        %v2971 = vld [vmem:[#allocation2 + $0x2c8] sm:$0xff]
        %v2972 = vld [vmem:[#allocation2 + $0x2d0] sm:$0xff]
        %v2973 = vld [vmem:[#allocation2 + $0x2d8] sm:$0xff]
        %v2974 = vld [vmem:[#allocation2 + $0x2e0] sm:$0xff]
        %v2975 = vld [vmem:[#allocation2 + $0x2e8] sm:$0xff]
        %v2976 = vld [vmem:[#allocation2 + $0x2f0] sm:$0xff]
        %v2977 = vld [vmem:[#allocation2 + $0x2f8] sm:$0xff]
        %v2978 = vmax.f32 %v2970, %v2974
        %v2979 = vmax.f32 %v2971, %v2975
        %v2980 = vmax.f32 %v2972, %v2976
        %v2981 = vmax.f32 %v2973, %v2977
        %2982 = vmatpush.msra.mxu0 0.0
        %2983 = vmatpush.msra.mxu0 0.0
        %2984 = vmatpush.msra.mxu0 0.0
        %2985 = vmatpush.msra.mxu0 0.0
        %2986 = vmatpush.msra.mxu0 0.0
        %2987 = vmatpush.msra.mxu0 0.0
        %2988 = vmatpush.msra.mxu0 0.0
        %2989 = vmatpush.msra.mxu0 0.0
        %2990 = vmatpush.msra.mxu0 0.0
        %2991 = vmatpush.msra.mxu0 0.0
        %2992 = vmatpush.msra.mxu0 0.0
        %2993 = vmatpush.msra.mxu0 0.0
        %2994 = vmatpush.msra.mxu0 %v2981
        %2995 = vmatpush.msra.mxu0 %v2980
        %2996 = vmatpush.msra.mxu0 %v2979
        %2997 = vmatpush.msra.mxu0 %v2978
        %2998 = vmatmul.f32.gmra.mxu0 %v1615
        %v2999 = vpop.f32.mrf.mxu0
        %v3000 = vadd.f32 0.0, %v2999
        %3001 = vmatmul.f32.gmra.mxu0 %v1618
        %v3002 = vpop.f32.mrf.mxu0
        %v3003 = vadd.f32 0.0, %v3002
        %3004 = vdwg.mxu0
        %3005 = vmatpush.msra.mxu0 0.0
        %3006 = vmatpush.msra.mxu0 0.0
        %3007 = vmatpush.msra.mxu0 0.0
        %3008 = vmatpush.msra.mxu0 0.0
        %3009 = vmatpush.msra.mxu0 0.0
        %3010 = vmatpush.msra.mxu0 0.0
        %3011 = vmatpush.msra.mxu0 0.0
        %3012 = vmatpush.msra.mxu0 0.0
        %3013 = vmatpush.msra.mxu0 0.0
        %3014 = vmatpush.msra.mxu0 0.0
        %3015 = vmatpush.msra.mxu0 0.0
        %3016 = vmatpush.msra.mxu0 0.0
        %3017 = vmatpush.msra.mxu0 %v2981
        %3018 = vmatpush.msra.mxu0 %v2980
        %3019 = vmatpush.msra.mxu0 %v2979
        %3020 = vmatpush.msra.mxu0 %v2978
        %3021 = vmatmul.f32.gmra.mxu0 %v1644
        %v3022 = vpop.f32.mrf.mxu0
        %v3023 = vadd.f32 0.0, %v3022
        %3024 = vmatmul.f32.gmra.mxu0 %v1647
        %v3025 = vpop.f32.mrf.mxu0
        %v3026 = vadd.f32 0.0, %v3025
        %3027 = vdwg.mxu0
        %v3028 = vmax.f32 %v3000, %v3023
        %v3029 = vmax.f32 %v3003, %v3026
        %v3032 = vrot.slane %v3028, 2
        %v3033 = vrot.slane %v3029, 2
        %v3034 = vsel %vm1735, %v3032, %v3033
        %3038 = vst.msk [vmem:[#allocation4 + $0x200] sm:$0xc0] %vm1742, %v3032
        %3039 = vst.msk [vmem:[#allocation4 + $0x210] sm:$0xff] %vm385, %v3034
        %3040 = vst.msk [vmem:[#allocation4 + $0x220] sm:$0x3f] %vm1745, %v3033
        %v3041 = vrot.slane %v3028, 3
        %v3042 = vrot.slane %v3029, 3
        %v3043 = vsel %vm1818, %v3041, %v3042
        %3044 = vrot.lane.b32.xlu0 %v3041, 32
        %v3045 = vpop.permute.xlu0 %3044
        %3046 = vrot.lane.b32.xlu0 %v3043, 32
        %v3047 = vpop.permute.xlu0 %3046
        %3048 = vrot.lane.b32.xlu0 %v3042, 32
        %v3049 = vpop.permute.xlu0 %3048
        %3053 = vst.msk [vmem:[#allocation4 + $0x200] sm:$0xe0] %vm1831, %v3045
        %3054 = vst.msk [vmem:[#allocation4 + $0x210] sm:$0xff] %vm1703, %v3047
        %3055 = vst.msk [vmem:[#allocation4 + $0x220] sm:$0x1f] %vm1834, %v3049
        %v3056 = vrot.slane %v3028, 4
        %v3057 = vrot.slane %v3029, 4
        %v3058 = vsel %vm1836, %v3056, %v3057
        %3059 = vrot.lane.b32.xlu0 %v3056, 64
        %v3060 = vpop.permute.xlu0 %3059
        %3061 = vrot.lane.b32.xlu0 %v3058, 64
        %v3062 = vpop.permute.xlu0 %3061
        %3063 = vrot.lane.b32.xlu0 %v3057, 64
        %v3064 = vpop.permute.xlu0 %3063
        %3068 = vst.msk [vmem:[#allocation4 + $0x200] sm:$0xf0] %vm1849, %v3060
        %3069 = vst.msk [vmem:[#allocation4 + $0x210] sm:$0xff] %vm1713, %v3062
        %3070 = vst.msk [vmem:[#allocation4 + $0x220] sm:$0xf] %vm1852, %v3064
        %v3071 = vrot.slane %v3028, 5
        %v3072 = vrot.slane %v3029, 5
        %v3073 = vsel %vm1048, %v3071, %v3072
        %3074 = vrot.lane.b32.xlu0 %v3071, 96
        %v3075 = vpop.permute.xlu0 %3074
        %3076 = vrot.lane.b32.xlu0 %v3073, 96
        %v3077 = vpop.permute.xlu0 %3076
        %3078 = vrot.lane.b32.xlu0 %v3072, 96
        %v3079 = vpop.permute.xlu0 %3078
        %3083 = vst.msk [vmem:[#allocation4 + $0x200] sm:$0xf8] %vm1866, %v3075
        %3084 = vst.msk [vmem:[#allocation4 + $0x210] sm:$0xff] %vm1731, %v3077
        %3085 = vst.msk [vmem:[#allocation4 + $0x220] sm:$0x7] %vm1869, %v3079
        %v3086 = vrot.slane %v3028, 6
        %v3087 = vrot.slane %v3029, 6
        %v3088 = vsel %vm1676, %v3086, %v3087
        %3092 = vst.msk [vmem:[#allocation4 + $0x208] sm:$0xfc] %vm1683, %v3086
        %3093 = vst.msk [vmem:[#allocation4 + $0x218] sm:$0xff] %vm385, %v3088
        %3094 = vst.msk [vmem:[#allocation4 + $0x228] sm:$0x3] %vm1686, %v3087
        %v3095 = vld [vmem:[#allocation2 + $0x300] sm:$0xff]
        %v3096 = vld [vmem:[#allocation2 + $0x308] sm:$0xff]
        %v3097 = vld [vmem:[#allocation2 + $0x310] sm:$0xff]
        %v3098 = vld [vmem:[#allocation2 + $0x318] sm:$0xff]
        %v3099 = vld [vmem:[#allocation2 + $0x320] sm:$0xff]
        %v3100 = vld [vmem:[#allocation2 + $0x328] sm:$0xff]
        %v3101 = vld [vmem:[#allocation2 + $0x330] sm:$0xff]
        %v3102 = vld [vmem:[#allocation2 + $0x338] sm:$0xff]
        %v3103 = vmax.f32 %v3095, %v3099
        %v3104 = vmax.f32 %v3096, %v3100
        %v3105 = vmax.f32 %v3097, %v3101
        %v3106 = vmax.f32 %v3098, %v3102
        %3107 = vmatpush.msra.mxu0 0.0
        %3108 = vmatpush.msra.mxu0 0.0
        %3109 = vmatpush.msra.mxu0 0.0
        %3110 = vmatpush.msra.mxu0 0.0
        %3111 = vmatpush.msra.mxu0 0.0
        %3112 = vmatpush.msra.mxu0 0.0
        %3113 = vmatpush.msra.mxu0 0.0
        %3114 = vmatpush.msra.mxu0 0.0
        %3115 = vmatpush.msra.mxu0 0.0
        %3116 = vmatpush.msra.mxu0 0.0
        %3117 = vmatpush.msra.mxu0 0.0
        %3118 = vmatpush.msra.mxu0 0.0
        %3119 = vmatpush.msra.mxu0 %v3106
        %3120 = vmatpush.msra.mxu0 %v3105
        %3121 = vmatpush.msra.mxu0 %v3104
        %3122 = vmatpush.msra.mxu0 %v3103
        %3123 = vmatmul.f32.gmra.mxu0 %v1615
        %v3124 = vpop.f32.mrf.mxu0
        %v3125 = vadd.f32 0.0, %v3124
        %3126 = vmatmul.f32.gmra.mxu0 %v1618
        %v3127 = vpop.f32.mrf.mxu0
        %v3128 = vadd.f32 0.0, %v3127
        %3129 = vdwg.mxu0
        %3130 = vmatpush.msra.mxu0 0.0
        %3131 = vmatpush.msra.mxu0 0.0
        %3132 = vmatpush.msra.mxu0 0.0
        %3133 = vmatpush.msra.mxu0 0.0
        %3134 = vmatpush.msra.mxu0 0.0
        %3135 = vmatpush.msra.mxu0 0.0
        %3136 = vmatpush.msra.mxu0 0.0
        %3137 = vmatpush.msra.mxu0 0.0
        %3138 = vmatpush.msra.mxu0 0.0
        %3139 = vmatpush.msra.mxu0 0.0
        %3140 = vmatpush.msra.mxu0 0.0
        %3141 = vmatpush.msra.mxu0 0.0
        %3142 = vmatpush.msra.mxu0 %v3106
        %3143 = vmatpush.msra.mxu0 %v3105
        %3144 = vmatpush.msra.mxu0 %v3104
        %3145 = vmatpush.msra.mxu0 %v3103
        %3146 = vmatmul.f32.gmra.mxu0 %v1644
        %v3147 = vpop.f32.mrf.mxu0
        %v3148 = vadd.f32 0.0, %v3147
        %3149 = vmatmul.f32.gmra.mxu0 %v1647
        %v3150 = vpop.f32.mrf.mxu0
        %v3151 = vadd.f32 0.0, %v3150
        %3152 = vdwg.mxu0
        %v3153 = vmax.f32 %v3125, %v3148
        %v3154 = vmax.f32 %v3128, %v3151
        %v3157 = vrot.slane %v3153, 6
        %v3158 = vrot.slane %v3154, 6
        %v3159 = vsel %vm1676, %v3157, %v3158
        %3163 = vst.msk [vmem:[#allocation4 + $0x230] sm:$0xfc] %vm1683, %v3157
        %3164 = vst.msk [vmem:[#allocation4 + $0x240] sm:$0xff] %vm385, %v3159
        %3165 = vst.msk [vmem:[#allocation4 + $0x250] sm:$0x3] %vm1686, %v3158
        %v3166 = vrot.slane %v3153, 7
        %v3167 = vrot.slane %v3154, 7
        %v3168 = vsel %vm1688, %v3166, %v3167
        %3169 = vrot.lane.b32.xlu0 %v3166, 32
        %v3170 = vpop.permute.xlu0 %3169
        %3171 = vrot.lane.b32.xlu0 %v3168, 32
        %v3172 = vpop.permute.xlu0 %3171
        %3173 = vrot.lane.b32.xlu0 %v3167, 32
        %v3174 = vpop.permute.xlu0 %3173
        %3178 = vst.msk [vmem:[#allocation4 + $0x230] sm:$0xfe] %vm1701, %v3170
        %3179 = vst.msk [vmem:[#allocation4 + $0x240] sm:$0xff] %vm1703, %v3172
        %3180 = vst.msk [vmem:[#allocation4 + $0x250] sm:$0x1] %vm1705, %v3174
        %3181 = vrot.lane.b32.xlu0 %v3153, 64
        %v3182 = vpop.permute.xlu0 %3181
        %3183 = vrot.lane.b32.xlu0 %v3154, 64
        %v3184 = vpop.permute.xlu0 %3183
        %3187 = vst.msk [vmem:[#allocation4 + $0x230] sm:$0xff] %vm1713, %v3182
        %3188 = vst.msk [vmem:[#allocation4 + $0x240] sm:$0xff] %vm1713, %v3184
        %v3189 = vrot.slane %v3153, 1
        %v3190 = vrot.slane %v3154, 1
        %v3191 = vsel %vm1716, %v3189, %v3190
        %3192 = vrot.lane.b32.xlu0 %v3189, 96
        %v3193 = vpop.permute.xlu0 %3192
        %3194 = vrot.lane.b32.xlu0 %v3191, 96
        %v3195 = vpop.permute.xlu0 %3194
        %3196 = vrot.lane.b32.xlu0 %v3190, 96
        %v3197 = vpop.permute.xlu0 %3196
        %3201 = vst.msk [vmem:[#allocation4 + $0x220] sm:$0x80] %vm1729, %v3193
        %3202 = vst.msk [vmem:[#allocation4 + $0x230] sm:$0xff] %vm1731, %v3195
        %3203 = vst.msk [vmem:[#allocation4 + $0x240] sm:$0x7f] %vm1733, %v3197
        %v3204 = vrot.slane %v3153, 2
        %v3205 = vrot.slane %v3154, 2
        %v3206 = vsel %vm1735, %v3204, %v3205
        %3210 = vst.msk [vmem:[#allocation4 + $0x228] sm:$0xc0] %vm1742, %v3204
        %3211 = vst.msk [vmem:[#allocation4 + $0x238] sm:$0xff] %vm385, %v3206
        %3212 = vst.msk [vmem:[#allocation4 + $0x248] sm:$0x3f] %vm1745, %v3205
        %v3213 = vld [vmem:[#allocation2 + $0x340] sm:$0xff]
        %v3214 = vld [vmem:[#allocation2 + $0x348] sm:$0xff]
        %v3215 = vld [vmem:[#allocation2 + $0x350] sm:$0xff]
        %v3216 = vld [vmem:[#allocation2 + $0x358] sm:$0xff]
        %v3217 = vld [vmem:[#allocation2 + $0x360] sm:$0xff]
        %v3218 = vld [vmem:[#allocation2 + $0x368] sm:$0xff]
        %v3219 = vld [vmem:[#allocation2 + $0x370] sm:$0xff]
        %v3220 = vld [vmem:[#allocation2 + $0x378] sm:$0xff]
        %v3221 = vmax.f32 %v3213, %v3217
        %v3222 = vmax.f32 %v3214, %v3218
        %v3223 = vmax.f32 %v3215, %v3219
        %v3224 = vmax.f32 %v3216, %v3220
        %3225 = vmatpush.msra.mxu0 0.0
        %3226 = vmatpush.msra.mxu0 0.0
        %3227 = vmatpush.msra.mxu0 0.0
        %3228 = vmatpush.msra.mxu0 0.0
        %3229 = vmatpush.msra.mxu0 0.0
        %3230 = vmatpush.msra.mxu0 0.0
        %3231 = vmatpush.msra.mxu0 0.0
        %3232 = vmatpush.msra.mxu0 0.0
        %3233 = vmatpush.msra.mxu0 0.0
        %3234 = vmatpush.msra.mxu0 0.0
        %3235 = vmatpush.msra.mxu0 0.0
        %3236 = vmatpush.msra.mxu0 0.0
        %3237 = vmatpush.msra.mxu0 %v3224
        %3238 = vmatpush.msra.mxu0 %v3223
        %3239 = vmatpush.msra.mxu0 %v3222
        %3240 = vmatpush.msra.mxu0 %v3221
        %3241 = vmatmul.f32.gmra.mxu0 %v1615
        %v3242 = vpop.f32.mrf.mxu0
        %v3243 = vadd.f32 0.0, %v3242
        %3244 = vmatmul.f32.gmra.mxu0 %v1618
        %v3245 = vpop.f32.mrf.mxu0
        %v3246 = vadd.f32 0.0, %v3245
        %3247 = vdwg.mxu0
        %3248 = vmatpush.msra.mxu0 0.0
        %3249 = vmatpush.msra.mxu0 0.0
        %3250 = vmatpush.msra.mxu0 0.0
        %3251 = vmatpush.msra.mxu0 0.0
        %3252 = vmatpush.msra.mxu0 0.0
        %3253 = vmatpush.msra.mxu0 0.0
        %3254 = vmatpush.msra.mxu0 0.0
        %3255 = vmatpush.msra.mxu0 0.0
        %3256 = vmatpush.msra.mxu0 0.0
        %3257 = vmatpush.msra.mxu0 0.0
        %3258 = vmatpush.msra.mxu0 0.0
        %3259 = vmatpush.msra.mxu0 0.0
        %3260 = vmatpush.msra.mxu0 %v3224
        %3261 = vmatpush.msra.mxu0 %v3223
        %3262 = vmatpush.msra.mxu0 %v3222
        %3263 = vmatpush.msra.mxu0 %v3221
        %3264 = vmatmul.f32.gmra.mxu0 %v1644
        %v3265 = vpop.f32.mrf.mxu0
        %v3266 = vadd.f32 0.0, %v3265
        %3267 = vmatmul.f32.gmra.mxu0 %v1647
        %v3268 = vpop.f32.mrf.mxu0
        %v3269 = vadd.f32 0.0, %v3268
        %3270 = vdwg.mxu0
        %v3271 = vmax.f32 %v3243, %v3266
        %v3272 = vmax.f32 %v3246, %v3269
        %v3275 = vrot.slane %v3271, 2
        %v3276 = vrot.slane %v3272, 2
        %v3277 = vsel %vm1735, %v3275, %v3276
        %3281 = vst.msk [vmem:[#allocation4 + $0x250] sm:$0xc0] %vm1742, %v3275
        %3282 = vst.msk [vmem:[#allocation4 + $0x260] sm:$0xff] %vm385, %v3277
        %3283 = vst.msk [vmem:[#allocation4 + $0x270] sm:$0x3f] %vm1745, %v3276
        %v3284 = vrot.slane %v3271, 3
        %v3285 = vrot.slane %v3272, 3
        %v3286 = vsel %vm1818, %v3284, %v3285
        %3287 = vrot.lane.b32.xlu0 %v3284, 32
        %v3288 = vpop.permute.xlu0 %3287
        %3289 = vrot.lane.b32.xlu0 %v3286, 32
        %v3290 = vpop.permute.xlu0 %3289
        %3291 = vrot.lane.b32.xlu0 %v3285, 32
        %v3292 = vpop.permute.xlu0 %3291
        %3296 = vst.msk [vmem:[#allocation4 + $0x250] sm:$0xe0] %vm1831, %v3288
        %3297 = vst.msk [vmem:[#allocation4 + $0x260] sm:$0xff] %vm1703, %v3290
        %3298 = vst.msk [vmem:[#allocation4 + $0x270] sm:$0x1f] %vm1834, %v3292
        %v3299 = vrot.slane %v3271, 4
        %v3300 = vrot.slane %v3272, 4
        %v3301 = vsel %vm1836, %v3299, %v3300
        %3302 = vrot.lane.b32.xlu0 %v3299, 64
        %v3303 = vpop.permute.xlu0 %3302
        %3304 = vrot.lane.b32.xlu0 %v3301, 64
        %v3305 = vpop.permute.xlu0 %3304
        %3306 = vrot.lane.b32.xlu0 %v3300, 64
        %v3307 = vpop.permute.xlu0 %3306
        %3311 = vst.msk [vmem:[#allocation4 + $0x250] sm:$0xf0] %vm1849, %v3303
        %3312 = vst.msk [vmem:[#allocation4 + $0x260] sm:$0xff] %vm1713, %v3305
        %3313 = vst.msk [vmem:[#allocation4 + $0x270] sm:$0xf] %vm1852, %v3307
        %v3314 = vrot.slane %v3271, 5
        %v3315 = vrot.slane %v3272, 5
        %v3316 = vsel %vm1048, %v3314, %v3315
        %3317 = vrot.lane.b32.xlu0 %v3314, 96
        %v3318 = vpop.permute.xlu0 %3317
        %3319 = vrot.lane.b32.xlu0 %v3316, 96
        %v3320 = vpop.permute.xlu0 %3319
        %3321 = vrot.lane.b32.xlu0 %v3315, 96
        %v3322 = vpop.permute.xlu0 %3321
        %3326 = vst.msk [vmem:[#allocation4 + $0x250] sm:$0xf8] %vm1866, %v3318
        %3327 = vst.msk [vmem:[#allocation4 + $0x260] sm:$0xff] %vm1731, %v3320
        %3328 = vst.msk [vmem:[#allocation4 + $0x270] sm:$0x7] %vm1869, %v3322
        %v3329 = vrot.slane %v3271, 6
        %v3330 = vrot.slane %v3272, 6
        %v3331 = vsel %vm1676, %v3329, %v3330
        %3335 = vst.msk [vmem:[#allocation4 + $0x258] sm:$0xfc] %vm1683, %v3329
        %3336 = vst.msk [vmem:[#allocation4 + $0x268] sm:$0xff] %vm385, %v3331
        %3337 = vst.msk [vmem:[#allocation4 + $0x278] sm:$0x3] %vm1686, %v3330
        %v3338 = vld [vmem:[#allocation2 + $0x380] sm:$0xff]
        %v3339 = vld [vmem:[#allocation2 + $0x388] sm:$0xff]
        %v3340 = vld [vmem:[#allocation2 + $0x390] sm:$0xff]
        %v3341 = vld [vmem:[#allocation2 + $0x398] sm:$0xff]
        %v3342 = vld [vmem:[#allocation2 + $0x3a0] sm:$0xff]
        %v3343 = vld [vmem:[#allocation2 + $0x3a8] sm:$0xff]
        %v3344 = vld [vmem:[#allocation2 + $0x3b0] sm:$0xff]
        %v3345 = vld [vmem:[#allocation2 + $0x3b8] sm:$0xff]
        %v3346 = vmax.f32 %v3338, %v3342
        %v3347 = vmax.f32 %v3339, %v3343
        %v3348 = vmax.f32 %v3340, %v3344
        %v3349 = vmax.f32 %v3341, %v3345
        %3350 = vmatpush.msra.mxu0 0.0
        %3351 = vmatpush.msra.mxu0 0.0
        %3352 = vmatpush.msra.mxu0 0.0
        %3353 = vmatpush.msra.mxu0 0.0
        %3354 = vmatpush.msra.mxu0 0.0
        %3355 = vmatpush.msra.mxu0 0.0
        %3356 = vmatpush.msra.mxu0 0.0
        %3357 = vmatpush.msra.mxu0 0.0
        %3358 = vmatpush.msra.mxu0 0.0
        %3359 = vmatpush.msra.mxu0 0.0
        %3360 = vmatpush.msra.mxu0 0.0
        %3361 = vmatpush.msra.mxu0 0.0
        %3362 = vmatpush.msra.mxu0 %v3349
        %3363 = vmatpush.msra.mxu0 %v3348
        %3364 = vmatpush.msra.mxu0 %v3347
        %3365 = vmatpush.msra.mxu0 %v3346
        %3366 = vmatmul.f32.gmra.mxu0 %v1615
        %v3367 = vpop.f32.mrf.mxu0
        %v3368 = vadd.f32 0.0, %v3367
        %3369 = vmatmul.f32.gmra.mxu0 %v1618
        %v3370 = vpop.f32.mrf.mxu0
        %v3371 = vadd.f32 0.0, %v3370
        %3372 = vdwg.mxu0
        %3373 = vmatpush.msra.mxu0 0.0
        %3374 = vmatpush.msra.mxu0 0.0
        %3375 = vmatpush.msra.mxu0 0.0
        %3376 = vmatpush.msra.mxu0 0.0
        %3377 = vmatpush.msra.mxu0 0.0
        %3378 = vmatpush.msra.mxu0 0.0
        %3379 = vmatpush.msra.mxu0 0.0
        %3380 = vmatpush.msra.mxu0 0.0
        %3381 = vmatpush.msra.mxu0 0.0
        %3382 = vmatpush.msra.mxu0 0.0
        %3383 = vmatpush.msra.mxu0 0.0
        %3384 = vmatpush.msra.mxu0 0.0
        %3385 = vmatpush.msra.mxu0 %v3349
        %3386 = vmatpush.msra.mxu0 %v3348
        %3387 = vmatpush.msra.mxu0 %v3347
        %3388 = vmatpush.msra.mxu0 %v3346
        %3389 = vmatmul.f32.gmra.mxu0 %v1644
        %v3390 = vpop.f32.mrf.mxu0
        %v3391 = vadd.f32 0.0, %v3390
        %3392 = vmatmul.f32.gmra.mxu0 %v1647
        %v3393 = vpop.f32.mrf.mxu0
        %v3394 = vadd.f32 0.0, %v3393
        %3395 = vdwg.mxu0
        %v3396 = vmax.f32 %v3368, %v3391
        %v3397 = vmax.f32 %v3371, %v3394
        %v3400 = vrot.slane %v3396, 6
        %v3401 = vrot.slane %v3397, 6
        %v3402 = vsel %vm1676, %v3400, %v3401
        %3406 = vst.msk [vmem:[#allocation4 + $0x280] sm:$0xfc] %vm1683, %v3400
        %3407 = vst.msk [vmem:[#allocation4 + $0x290] sm:$0xff] %vm385, %v3402
        %3408 = vst.msk [vmem:[#allocation4 + $0x2a0] sm:$0x3] %vm1686, %v3401
        %v3409 = vrot.slane %v3396, 7
        %v3410 = vrot.slane %v3397, 7
        %v3411 = vsel %vm1688, %v3409, %v3410
        %3412 = vrot.lane.b32.xlu0 %v3409, 32
        %v3413 = vpop.permute.xlu0 %3412
        %3414 = vrot.lane.b32.xlu0 %v3411, 32
        %v3415 = vpop.permute.xlu0 %3414
        %3416 = vrot.lane.b32.xlu0 %v3410, 32
        %v3417 = vpop.permute.xlu0 %3416
        %3421 = vst.msk [vmem:[#allocation4 + $0x280] sm:$0xfe] %vm1701, %v3413
        %3422 = vst.msk [vmem:[#allocation4 + $0x290] sm:$0xff] %vm1703, %v3415
        %3423 = vst.msk [vmem:[#allocation4 + $0x2a0] sm:$0x1] %vm1705, %v3417
        %3424 = vrot.lane.b32.xlu0 %v3396, 64
        %v3425 = vpop.permute.xlu0 %3424
        %3426 = vrot.lane.b32.xlu0 %v3397, 64
        %v3427 = vpop.permute.xlu0 %3426
        %3430 = vst.msk [vmem:[#allocation4 + $0x280] sm:$0xff] %vm1713, %v3425
        %3431 = vst.msk [vmem:[#allocation4 + $0x290] sm:$0xff] %vm1713, %v3427
        %v3432 = vrot.slane %v3396, 1
        %v3433 = vrot.slane %v3397, 1
        %v3434 = vsel %vm1716, %v3432, %v3433
        %3435 = vrot.lane.b32.xlu0 %v3432, 96
        %v3436 = vpop.permute.xlu0 %3435
        %3437 = vrot.lane.b32.xlu0 %v3434, 96
        %v3438 = vpop.permute.xlu0 %3437
        %3439 = vrot.lane.b32.xlu0 %v3433, 96
        %v3440 = vpop.permute.xlu0 %3439
        %3444 = vst.msk [vmem:[#allocation4 + $0x270] sm:$0x80] %vm1729, %v3436
        %3445 = vst.msk [vmem:[#allocation4 + $0x280] sm:$0xff] %vm1731, %v3438
        %3446 = vst.msk [vmem:[#allocation4 + $0x290] sm:$0x7f] %vm1733, %v3440
        %v3447 = vrot.slane %v3396, 2
        %v3448 = vrot.slane %v3397, 2
        %v3449 = vsel %vm1735, %v3447, %v3448
        %3453 = vst.msk [vmem:[#allocation4 + $0x278] sm:$0xc0] %vm1742, %v3447
        %3454 = vst.msk [vmem:[#allocation4 + $0x288] sm:$0xff] %vm385, %v3449
        %3455 = vst.msk [vmem:[#allocation4 + $0x298] sm:$0x3f] %vm1745, %v3448
        %v3456 = vld [vmem:[#allocation2 + $0x3c0] sm:$0xff]
        %v3457 = vld [vmem:[#allocation2 + $0x3c8] sm:$0xff]
        %v3458 = vld [vmem:[#allocation2 + $0x3d0] sm:$0xff]
        %v3459 = vld [vmem:[#allocation2 + $0x3d8] sm:$0xff]
        %v3460 = vld [vmem:[#allocation2 + $0x3e0] sm:$0xff]
        %v3461 = vld [vmem:[#allocation2 + $0x3e8] sm:$0xff]
        %v3462 = vld [vmem:[#allocation2 + $0x3f0] sm:$0xff]
        %v3463 = vld [vmem:[#allocation2 + $0x3f8] sm:$0xff]
        %v3464 = vmax.f32 %v3456, %v3460
        %v3465 = vmax.f32 %v3457, %v3461
        %v3466 = vmax.f32 %v3458, %v3462
        %v3467 = vmax.f32 %v3459, %v3463
        %3468 = vmatpush.msra.mxu0 0.0
        %3469 = vmatpush.msra.mxu0 0.0
        %3470 = vmatpush.msra.mxu0 0.0
        %3471 = vmatpush.msra.mxu0 0.0
        %3472 = vmatpush.msra.mxu0 0.0
        %3473 = vmatpush.msra.mxu0 0.0
        %3474 = vmatpush.msra.mxu0 0.0
        %3475 = vmatpush.msra.mxu0 0.0
        %3476 = vmatpush.msra.mxu0 0.0
        %3477 = vmatpush.msra.mxu0 0.0
        %3478 = vmatpush.msra.mxu0 0.0
        %3479 = vmatpush.msra.mxu0 0.0
        %3480 = vmatpush.msra.mxu0 %v3467
        %3481 = vmatpush.msra.mxu0 %v3466
        %3482 = vmatpush.msra.mxu0 %v3465
        %3483 = vmatpush.msra.mxu0 %v3464
        %3484 = vmatmul.f32.gmra.mxu0 %v1615
        %v3485 = vpop.f32.mrf.mxu0
        %v3486 = vadd.f32 0.0, %v3485
        %3487 = vmatmul.f32.gmra.mxu0 %v1618
        %v3488 = vpop.f32.mrf.mxu0
        %v3489 = vadd.f32 0.0, %v3488
        %3490 = vdwg.mxu0
        %3491 = vmatpush.msra.mxu0 0.0
        %3492 = vmatpush.msra.mxu0 0.0
        %3493 = vmatpush.msra.mxu0 0.0
        %3494 = vmatpush.msra.mxu0 0.0
        %3495 = vmatpush.msra.mxu0 0.0
        %3496 = vmatpush.msra.mxu0 0.0
        %3497 = vmatpush.msra.mxu0 0.0
        %3498 = vmatpush.msra.mxu0 0.0
        %3499 = vmatpush.msra.mxu0 0.0
        %3500 = vmatpush.msra.mxu0 0.0
        %3501 = vmatpush.msra.mxu0 0.0
        %3502 = vmatpush.msra.mxu0 0.0
        %3503 = vmatpush.msra.mxu0 %v3467
        %3504 = vmatpush.msra.mxu0 %v3466
        %3505 = vmatpush.msra.mxu0 %v3465
        %3506 = vmatpush.msra.mxu0 %v3464
        %3507 = vmatmul.f32.gmra.mxu0 %v1644
        %v3508 = vpop.f32.mrf.mxu0
        %v3509 = vadd.f32 0.0, %v3508
        %3510 = vmatmul.f32.gmra.mxu0 %v1647
        %v3511 = vpop.f32.mrf.mxu0
        %v3512 = vadd.f32 0.0, %v3511
        %3513 = vdwg.mxu0
        %v3514 = vmax.f32 %v3486, %v3509
        %v3515 = vmax.f32 %v3489, %v3512
        %v3518 = vrot.slane %v3514, 2
        %v3519 = vrot.slane %v3515, 2
        %v3520 = vsel %vm1735, %v3518, %v3519
        %3524 = vst.msk [vmem:[#allocation4 + $0x2a0] sm:$0xc0] %vm1742, %v3518
        %3525 = vst.msk [vmem:[#allocation4 + $0x2b0] sm:$0xff] %vm385, %v3520
        %3526 = vst.msk [vmem:[#allocation4 + $0x2c0] sm:$0x3f] %vm1745, %v3519
        %v3527 = vrot.slane %v3514, 3
        %v3528 = vrot.slane %v3515, 3
        %v3529 = vsel %vm1818, %v3527, %v3528
        %3530 = vrot.lane.b32.xlu0 %v3527, 32
        %v3531 = vpop.permute.xlu0 %3530
        %3532 = vrot.lane.b32.xlu0 %v3529, 32
        %v3533 = vpop.permute.xlu0 %3532
        %3534 = vrot.lane.b32.xlu0 %v3528, 32
        %v3535 = vpop.permute.xlu0 %3534
        %3539 = vst.msk [vmem:[#allocation4 + $0x2a0] sm:$0xe0] %vm1831, %v3531
        %3540 = vst.msk [vmem:[#allocation4 + $0x2b0] sm:$0xff] %vm1703, %v3533
        %3541 = vst.msk [vmem:[#allocation4 + $0x2c0] sm:$0x1f] %vm1834, %v3535
        %v3542 = vrot.slane %v3514, 4
        %v3543 = vrot.slane %v3515, 4
        %v3544 = vsel %vm1836, %v3542, %v3543
        %3545 = vrot.lane.b32.xlu0 %v3542, 64
        %v3546 = vpop.permute.xlu0 %3545
        %3547 = vrot.lane.b32.xlu0 %v3544, 64
        %v3548 = vpop.permute.xlu0 %3547
        %3549 = vrot.lane.b32.xlu0 %v3543, 64
        %v3550 = vpop.permute.xlu0 %3549
        %3554 = vst.msk [vmem:[#allocation4 + $0x2a0] sm:$0xf0] %vm1849, %v3546
        %3555 = vst.msk [vmem:[#allocation4 + $0x2b0] sm:$0xff] %vm1713, %v3548
        %3556 = vst.msk [vmem:[#allocation4 + $0x2c0] sm:$0xf] %vm1852, %v3550
        %v3557 = vrot.slane %v3514, 5
        %v3558 = vrot.slane %v3515, 5
        %v3559 = vsel %vm1048, %v3557, %v3558
        %3560 = vrot.lane.b32.xlu0 %v3557, 96
        %v3561 = vpop.permute.xlu0 %3560
        %3562 = vrot.lane.b32.xlu0 %v3559, 96
        %v3563 = vpop.permute.xlu0 %3562
        %3564 = vrot.lane.b32.xlu0 %v3558, 96
        %v3565 = vpop.permute.xlu0 %3564
        %3569 = vst.msk [vmem:[#allocation4 + $0x2a0] sm:$0xf8] %vm1866, %v3561
        %3570 = vst.msk [vmem:[#allocation4 + $0x2b0] sm:$0xff] %vm1731, %v3563
        %3571 = vst.msk [vmem:[#allocation4 + $0x2c0] sm:$0x7] %vm1869, %v3565
        %v3572 = vrot.slane %v3514, 6
        %v3573 = vrot.slane %v3515, 6
        %v3574 = vsel %vm1676, %v3572, %v3573
        %3578 = vst.msk [vmem:[#allocation4 + $0x2a8] sm:$0xfc] %vm1683, %v3572
        %3579 = vst.msk [vmem:[#allocation4 + $0x2b8] sm:$0xff] %vm385, %v3574
        %3580 = vst.msk [vmem:[#allocation4 + $0x2c8] sm:$0x3] %vm1686, %v3573
        %v3581 = vld [vmem:[#allocation4] sm:$0xff]
        %v3582 = vld [vmem:[#allocation4 + $0x8] sm:$0xff]
        %v3583 = vld [vmem:[#allocation4 + $0x10] sm:$0xff]
        %v3584 = vld [vmem:[#allocation4 + $0x18] sm:$0xff]
        %v3585 = vld [vmem:[#allocation4 + $0x20] sm:$0xff]
        %v3586 = vld [vmem:[#allocation4 + $0x28] sm:$0xff]
        %v3587 = vld [vmem:[#allocation4 + $0x30] sm:$0xff]
        %v3588 = vld [vmem:[#allocation4 + $0x38] sm:$0xff]
        %v3589 = vld [vmem:[#allocation4 + $0x40] sm:$0xff]
        %v3590 = vld [vmem:[#allocation4 + $0x48] sm:$0xff]
        %v3591 = vld [vmem:[#allocation4 + $0x50] sm:$0xff]
        %v3592 = vld [vmem:[#allocation4 + $0x58] sm:$0xff]
        %v3593 = vld [vmem:[#allocation4 + $0x60] sm:$0xff]
        %v3594 = vld [vmem:[#allocation4 + $0x68] sm:$0xff]
        %v3595 = vld [vmem:[#allocation4 + $0x70] sm:$0xff]
        %v3596 = vld [vmem:[#allocation4 + $0x78] sm:$0xff]
        %v3597 = vld [vmem:[#allocation4 + $0x80] sm:$0xff]
        %v3598 = vld [vmem:[#allocation4 + $0x88] sm:$0xff]
        %v3599 = vld [vmem:[#allocation4 + $0x90] sm:$0xff]
        %v3600 = vld [vmem:[#allocation4 + $0x98] sm:$0xff]
        %v3601 = vld [vmem:[#allocation4 + $0xa0] sm:$0xff]
        %v3602 = vld [vmem:[#allocation4 + $0xa8] sm:$0xff]
        %v3603 = vld [vmem:[#allocation4 + $0xb0] sm:$0xff]
        %v3604 = vld [vmem:[#allocation4 + $0xb8] sm:$0xff]
        %v3605 = vld [vmem:[#allocation4 + $0xc0] sm:$0xff]
        %v3606 = vld [vmem:[#allocation4 + $0xc8] sm:$0xff]
        %v3607 = vld [vmem:[#allocation4 + $0xd0] sm:$0xff]
        %v3608 = vld [vmem:[#allocation4 + $0xd8] sm:$0xff]
        %v3609 = vld [vmem:[#allocation4 + $0xe0] sm:$0xff]
        %v3610 = vld [vmem:[#allocation4 + $0xe8] sm:$0xff]
        %v3611 = vld [vmem:[#allocation4 + $0xf0] sm:$0xff]
        %v3612 = vld [vmem:[#allocation4 + $0xf8] sm:$0xff]
        %v3613 = vld [vmem:[#allocation4 + $0x100] sm:$0xff]
        %v3614 = vld [vmem:[#allocation4 + $0x108] sm:$0xff]
        %v3615 = vld [vmem:[#allocation4 + $0x110] sm:$0xff]
        %v3616 = vld [vmem:[#allocation4 + $0x118] sm:$0xff]
        %v3617 = vld [vmem:[#allocation4 + $0x120] sm:$0xff]
        %v3618 = vld [vmem:[#allocation4 + $0x128] sm:$0xff]
        %v3619 = vld [vmem:[#allocation4 + $0x130] sm:$0xff]
        %v3620 = vld [vmem:[#allocation4 + $0x138] sm:$0xff]
        %v3621 = vld [vmem:[#allocation4 + $0x140] sm:$0xff]
        %v3622 = vld [vmem:[#allocation4 + $0x148] sm:$0xff]
        %v3623 = vld [vmem:[#allocation4 + $0x150] sm:$0xff]
        %v3624 = vld [vmem:[#allocation4 + $0x158] sm:$0xff]
        %v3625 = vld [vmem:[#allocation4 + $0x160] sm:$0xff]
        %v3626 = vld [vmem:[#allocation4 + $0x168] sm:$0xff]
        %v3627 = vld [vmem:[#allocation4 + $0x170] sm:$0xff]
        %v3628 = vld [vmem:[#allocation4 + $0x178] sm:$0xff]
        %v3629 = vld [vmem:[#allocation4 + $0x180] sm:$0xff]
        %v3630 = vld [vmem:[#allocation4 + $0x188] sm:$0xff]
        %v3631 = vld [vmem:[#allocation4 + $0x190] sm:$0xff]
        %v3632 = vld [vmem:[#allocation4 + $0x198] sm:$0xff]
        %v3633 = vld [vmem:[#allocation4 + $0x1a0] sm:$0xff]
        %v3634 = vld [vmem:[#allocation4 + $0x1a8] sm:$0xff]
        %v3635 = vld [vmem:[#allocation4 + $0x1b0] sm:$0xff]
        %v3636 = vld [vmem:[#allocation4 + $0x1b8] sm:$0xff]
        %v3637 = vld [vmem:[#allocation4 + $0x1c0] sm:$0xff]
        %v3638 = vld [vmem:[#allocation4 + $0x1c8] sm:$0xff]
        %v3639 = vld [vmem:[#allocation4 + $0x1d0] sm:$0xff]
        %v3640 = vld [vmem:[#allocation4 + $0x1d8] sm:$0xff]
        %v3641 = vld [vmem:[#allocation4 + $0x1e0] sm:$0xff]
        %v3642 = vld [vmem:[#allocation4 + $0x1e8] sm:$0xff]
        %v3643 = vld [vmem:[#allocation4 + $0x1f0] sm:$0xff]
        %v3644 = vld [vmem:[#allocation4 + $0x1f8] sm:$0xff]
        %v3645 = vld [vmem:[#allocation4 + $0x200] sm:$0xff]
        %v3646 = vld [vmem:[#allocation4 + $0x208] sm:$0xff]
        %v3647 = vld [vmem:[#allocation4 + $0x210] sm:$0xff]
        %v3648 = vld [vmem:[#allocation4 + $0x218] sm:$0xff]
        %v3649 = vld [vmem:[#allocation4 + $0x220] sm:$0xff]
        %v3650 = vld [vmem:[#allocation4 + $0x228] sm:$0xff]
        %v3651 = vld [vmem:[#allocation4 + $0x230] sm:$0xff]
        %v3652 = vld [vmem:[#allocation4 + $0x238] sm:$0xff]
        %v3653 = vld [vmem:[#allocation4 + $0x240] sm:$0xff]
        %v3654 = vld [vmem:[#allocation4 + $0x248] sm:$0xff]
        %v3655 = vld [vmem:[#allocation4 + $0x250] sm:$0xff]
        %v3656 = vld [vmem:[#allocation4 + $0x258] sm:$0xff]
        %v3657 = vld [vmem:[#allocation4 + $0x260] sm:$0xff]
        %v3658 = vld [vmem:[#allocation4 + $0x268] sm:$0xff]
        %v3659 = vld [vmem:[#allocation4 + $0x270] sm:$0xff]
        %v3660 = vld [vmem:[#allocation4 + $0x278] sm:$0xff]
        %v3661 = vld [vmem:[%s3] sm:$0xff]
        %v3662 = vld [vmem:[%s3 + $0x8] sm:$0xff]
        %v3663 = vld [vmem:[%s3 + $0x10] sm:$0xff]
        %v3664 = vld [vmem:[%s3 + $0x18] sm:$0xff]
        %v3665 = vld [vmem:[%s3 + $0x20] sm:$0xff]
        %v3666 = vld [vmem:[%s3 + $0x28] sm:$0xff]
        %v3667 = vld [vmem:[%s3 + $0x30] sm:$0xff]
        %v3668 = vld [vmem:[%s3 + $0x38] sm:$0xff]
        %v3669 = vld [vmem:[%s3 + $0x40] sm:$0xff]
        %v3670 = vld [vmem:[%s3 + $0x48] sm:$0xff]
        %v3671 = vld [vmem:[%s3 + $0x50] sm:$0xff]
        %v3672 = vld [vmem:[%s3 + $0x58] sm:$0xff]
        %v3673 = vld [vmem:[%s3 + $0x60] sm:$0xff]
        %v3674 = vld [vmem:[%s3 + $0x68] sm:$0xff]
        %v3675 = vld [vmem:[%s3 + $0x70] sm:$0xff]
        %v3676 = vld [vmem:[%s3 + $0x78] sm:$0xff]
        %v3677 = vld [vmem:[%s3 + $0x80] sm:$0xff]
        %v3678 = vld [vmem:[%s3 + $0x88] sm:$0xff]
        %v3679 = vld [vmem:[%s3 + $0x90] sm:$0xff]
        %v3680 = vld [vmem:[%s3 + $0x98] sm:$0xff]
        %v3681 = vld [vmem:[#allocation4 + $0x20] sm:$0xf0]
        %v3682 = vld [vmem:[#allocation4 + $0x28] sm:$0xf0]
        %v3683 = vld [vmem:[#allocation4 + $0x280] sm:$0xff]
        %v3684 = vld [vmem:[#allocation4 + $0x288] sm:$0xff]
        %v3685 = vld [vmem:[#allocation4 + $0x290] sm:$0xff]
        %v3686 = vld [vmem:[#allocation4 + $0x298] sm:$0xff]
        %v3687 = vld [vmem:[#allocation4 + $0x2a0] sm:$0xf]
        %v3688 = vld [vmem:[#allocation4 + $0x2a8] sm:$0xf]
        %s3689 = scalar_lea.vmem %s3, 160
        %v3690 = vld [vmem:[%s3689] sm:$0xff]
        %v3691 = vld [vmem:[%s3689 + $0x8] sm:$0xff]
        %v3692 = vld [vmem:[%s3689 + $0x10] sm:$0xff]
        %v3693 = vld [vmem:[%s3689 + $0x18] sm:$0xff]
        %v3694 = vld [vmem:[%s3689 + $0x20] sm:$0xff]
        %v3695 = vld [vmem:[%s3689 + $0x28] sm:$0xff]
        %v3696 = vld [vmem:[%s3689 + $0x30] sm:$0xff]
        %v3697 = vld [vmem:[%s3689 + $0x38] sm:$0xff]
        %v3698 = vld [vmem:[%s3689 + $0x40] sm:$0xff]
        %v3699 = vld [vmem:[%s3689 + $0x48] sm:$0xff]
        %v3700 = vld [vmem:[%s3689 + $0x50] sm:$0xff]
        %v3701 = vld [vmem:[%s3689 + $0x58] sm:$0xff]
        %v3702 = vld [vmem:[%s3689 + $0x60] sm:$0xff]
        %v3703 = vld [vmem:[%s3689 + $0x68] sm:$0xff]
        %v3704 = vld [vmem:[%s3689 + $0x70] sm:$0xff]
        %v3705 = vld [vmem:[%s3689 + $0x78] sm:$0xff]
        %v3706 = vld [vmem:[%s3689 + $0x80] sm:$0xff]
        %v3707 = vld [vmem:[%s3689 + $0x88] sm:$0xff]
        %v3708 = vld [vmem:[%s3689 + $0x90] sm:$0xff]
        %v3709 = vld [vmem:[%s3689 + $0x98] sm:$0xff]
        %v3792 = vrot.slane %v3681, 4
        %v3793 = vrot.slane %v3587, 4
        %v3794 = vsel %vm1836, %v3792, %v3793
        %v3795 = vrot.slane %v3682, 4
        %v3796 = vrot.slane %v3588, 4
        %v3797 = vsel %vm1836, %v3795, %v3796
        %v3798 = vrot.slane %v3589, 4
        %v3799 = vsel %vm1836, %v3793, %v3798
        %v3800 = vrot.slane %v3590, 4
        %v3801 = vsel %vm1836, %v3796, %v3800
        %v3802 = vrot.slane %v3591, 4
        %v3803 = vsel %vm1836, %v3798, %v3802
        %v3804 = vrot.slane %v3592, 4
        %v3805 = vsel %vm1836, %v3800, %v3804
        %v3806 = vrot.slane %v3593, 4
        %v3807 = vsel %vm1836, %v3802, %v3806
        %v3808 = vrot.slane %v3594, 4
        %v3809 = vsel %vm1836, %v3804, %v3808
        %v3810 = vrot.slane %v3595, 4
        %v3811 = vsel %vm1836, %v3806, %v3810
        %v3812 = vrot.slane %v3596, 4
        %v3813 = vsel %vm1836, %v3808, %v3812
        %v3814 = vrot.slane %v3597, 4
        %v3815 = vsel %vm1836, %v3810, %v3814
        %v3816 = vrot.slane %v3598, 4
        %v3817 = vsel %vm1836, %v3812, %v3816
        %v3818 = vrot.slane %v3599, 4
        %v3819 = vsel %vm1836, %v3814, %v3818
        %v3820 = vrot.slane %v3600, 4
        %v3821 = vsel %vm1836, %v3816, %v3820
        %v3822 = vrot.slane %v3601, 4
        %v3823 = vsel %vm1836, %v3818, %v3822
        %v3824 = vrot.slane %v3602, 4
        %v3825 = vsel %vm1836, %v3820, %v3824
        %v3826 = vrot.slane %v3603, 4
        %v3827 = vsel %vm1836, %v3822, %v3826
        %v3828 = vrot.slane %v3604, 4
        %v3829 = vsel %vm1836, %v3824, %v3828
        %v3830 = vrot.slane %v3605, 4
        %v3831 = vsel %vm1836, %v3826, %v3830
        %v3832 = vrot.slane %v3606, 4
        %v3833 = vsel %vm1836, %v3828, %v3832
        %v3834 = vrot.slane %v3607, 4
        %v3835 = vsel %vm1836, %v3830, %v3834
        %v3836 = vrot.slane %v3608, 4
        %v3837 = vsel %vm1836, %v3832, %v3836
        %v3838 = vrot.slane %v3609, 4
        %v3839 = vsel %vm1836, %v3834, %v3838
        %v3840 = vrot.slane %v3610, 4
        %v3841 = vsel %vm1836, %v3836, %v3840
        %v3842 = vrot.slane %v3611, 4
        %v3843 = vsel %vm1836, %v3838, %v3842
        %v3844 = vrot.slane %v3612, 4
        %v3845 = vsel %vm1836, %v3840, %v3844
        %v3846 = vrot.slane %v3613, 4
        %v3847 = vsel %vm1836, %v3842, %v3846
        %v3848 = vrot.slane %v3614, 4
        %v3849 = vsel %vm1836, %v3844, %v3848
        %v3850 = vrot.slane %v3615, 4
        %v3851 = vsel %vm1836, %v3846, %v3850
        %v3852 = vrot.slane %v3616, 4
        %v3853 = vsel %vm1836, %v3848, %v3852
        %v3854 = vrot.slane %v3617, 4
        %v3855 = vsel %vm1836, %v3850, %v3854
        %v3856 = vrot.slane %v3618, 4
        %v3857 = vsel %vm1836, %v3852, %v3856
        %v3858 = vrot.slane %v3619, 4
        %v3859 = vsel %vm1836, %v3854, %v3858
        %v3860 = vrot.slane %v3620, 4
        %v3861 = vsel %vm1836, %v3856, %v3860
        %v3862 = vrot.slane %v3621, 4
        %v3863 = vsel %vm1836, %v3858, %v3862
        %v3864 = vrot.slane %v3622, 4
        %v3865 = vsel %vm1836, %v3860, %v3864
        %v3866 = vrot.slane %v3623, 4
        %v3867 = vsel %vm1836, %v3862, %v3866
        %v3868 = vrot.slane %v3624, 4
        %v3869 = vsel %vm1836, %v3864, %v3868
        %v3870 = vrot.slane %v3625, 4
        %v3871 = vsel %vm1836, %v3866, %v3870
        %v3872 = vrot.slane %v3626, 4
        %v3873 = vsel %vm1836, %v3868, %v3872
        %v3874 = vrot.slane %v3627, 4
        %v3875 = vsel %vm1836, %v3870, %v3874
        %v3876 = vrot.slane %v3628, 4
        %v3877 = vsel %vm1836, %v3872, %v3876
        %v3878 = vrot.slane %v3629, 4
        %v3879 = vsel %vm1836, %v3874, %v3878
        %v3880 = vrot.slane %v3630, 4
        %v3881 = vsel %vm1836, %v3876, %v3880
        %v3882 = vrot.slane %v3631, 4
        %v3883 = vsel %vm1836, %v3878, %v3882
        %v3884 = vrot.slane %v3632, 4
        %v3885 = vsel %vm1836, %v3880, %v3884
        %v3886 = vrot.slane %v3633, 4
        %v3887 = vsel %vm1836, %v3882, %v3886
        %v3888 = vrot.slane %v3634, 4
        %v3889 = vsel %vm1836, %v3884, %v3888
        %v3890 = vrot.slane %v3635, 4
        %v3891 = vsel %vm1836, %v3886, %v3890
        %v3892 = vrot.slane %v3636, 4
        %v3893 = vsel %vm1836, %v3888, %v3892
        %v3894 = vrot.slane %v3637, 4
        %v3895 = vsel %vm1836, %v3890, %v3894
        %v3896 = vrot.slane %v3638, 4
        %v3897 = vsel %vm1836, %v3892, %v3896
        %v3898 = vrot.slane %v3639, 4
        %v3899 = vsel %vm1836, %v3894, %v3898
        %v3900 = vrot.slane %v3640, 4
        %v3901 = vsel %vm1836, %v3896, %v3900
        %v3902 = vrot.slane %v3641, 4
        %v3903 = vsel %vm1836, %v3898, %v3902
        %v3904 = vrot.slane %v3642, 4
        %v3905 = vsel %vm1836, %v3900, %v3904
        %v3906 = vrot.slane %v3643, 4
        %v3907 = vsel %vm1836, %v3902, %v3906
        %v3908 = vrot.slane %v3644, 4
        %v3909 = vsel %vm1836, %v3904, %v3908
        %v3910 = vrot.slane %v3645, 4
        %v3911 = vsel %vm1836, %v3906, %v3910
        %v3912 = vrot.slane %v3646, 4
        %v3913 = vsel %vm1836, %v3908, %v3912
        %v3914 = vrot.slane %v3647, 4
        %v3915 = vsel %vm1836, %v3910, %v3914
        %v3916 = vrot.slane %v3648, 4
        %v3917 = vsel %vm1836, %v3912, %v3916
        %v3918 = vrot.slane %v3649, 4
        %v3919 = vsel %vm1836, %v3914, %v3918
        %v3920 = vrot.slane %v3650, 4
        %v3921 = vsel %vm1836, %v3916, %v3920
        %v3922 = vrot.slane %v3651, 4
        %v3923 = vsel %vm1836, %v3918, %v3922
        %v3924 = vrot.slane %v3652, 4
        %v3925 = vsel %vm1836, %v3920, %v3924
        %v3926 = vrot.slane %v3653, 4
        %v3927 = vsel %vm1836, %v3922, %v3926
        %v3928 = vrot.slane %v3654, 4
        %v3929 = vsel %vm1836, %v3924, %v3928
        %v3930 = vrot.slane %v3655, 4
        %v3931 = vsel %vm1836, %v3926, %v3930
        %v3932 = vrot.slane %v3656, 4
        %v3933 = vsel %vm1836, %v3928, %v3932
        %v3934 = vrot.slane %v3657, 4
        %v3935 = vsel %vm1836, %v3930, %v3934
        %v3936 = vrot.slane %v3658, 4
        %v3937 = vsel %vm1836, %v3932, %v3936
        %v3938 = vrot.slane %v3659, 4
        %v3939 = vsel %vm1836, %v3934, %v3938
        %v3940 = vrot.slane %v3660, 4
        %v3941 = vsel %vm1836, %v3936, %v3940
        %v3942 = vrot.slane %v3683, 4
        %v3943 = vsel %vm1836, %v3938, %v3942
        %v3944 = vrot.slane %v3684, 4
        %v3945 = vsel %vm1836, %v3940, %v3944
        %v3946 = vrot.slane %v3685, 4
        %v3947 = vsel %vm1836, %v3942, %v3946
        %v3948 = vrot.slane %v3686, 4
        %v3949 = vsel %vm1836, %v3944, %v3948
        %v3950 = vrot.slane %v3687, 4
        %v3951 = vsel %vm1836, %v3946, %v3950
        %v3952 = vrot.slane %v3688, 4
        %v3953 = vsel %vm1836, %v3948, %v3952
        %v3994 = vsel %vm385, %v3797, 0
        %v3996 = vsel %vm385, %v3801, 0
        %v3998 = vsel %vm385, %v3805, 0
        %v4000 = vsel %vm385, %v3809, 0
        %v4002 = vsel %vm385, %v3813, 0
        %v4004 = vsel %vm385, %v3817, 0
        %v4006 = vsel %vm385, %v3821, 0
        %v4008 = vsel %vm385, %v3825, 0
        %v4010 = vsel %vm385, %v3829, 0
        %v4012 = vsel %vm385, %v3833, 0
        %v4014 = vsel %vm385, %v3837, 0
        %v4016 = vsel %vm385, %v3841, 0
        %v4018 = vsel %vm385, %v3845, 0
        %v4020 = vsel %vm385, %v3849, 0
        %v4022 = vsel %vm385, %v3853, 0
        %v4024 = vsel %vm385, %v3857, 0
        %v4026 = vsel %vm385, %v3861, 0
        %v4028 = vsel %vm385, %v3865, 0
        %v4030 = vsel %vm385, %v3869, 0
        %v4032 = vsel %vm385, %v3873, 0
        %v4034 = vsel %vm385, %v3877, 0
        %v4036 = vsel %vm385, %v3881, 0
        %v4038 = vsel %vm385, %v3885, 0
        %v4040 = vsel %vm385, %v3889, 0
        %v4042 = vsel %vm385, %v3893, 0
        %v4044 = vsel %vm385, %v3897, 0
        %v4046 = vsel %vm385, %v3901, 0
        %v4048 = vsel %vm385, %v3905, 0
        %v4050 = vsel %vm385, %v3909, 0
        %v4052 = vsel %vm385, %v3913, 0
        %v4054 = vsel %vm385, %v3917, 0
        %v4056 = vsel %vm385, %v3921, 0
        %v4058 = vsel %vm385, %v3925, 0
        %v4060 = vsel %vm385, %v3929, 0
        %v4062 = vsel %vm385, %v3933, 0
        %v4064 = vsel %vm385, %v3937, 0
        %v4066 = vsel %vm385, %v3941, 0
        %v4068 = vsel %vm385, %v3945, 0
        %v4070 = vsel %vm385, %v3949, 0
        %v4072 = vsel %vm385, %v3953, 0
        %4074 = vmatpush.msra.mxu0 %v3705
        %4075 = vmatpush.msra.mxu0 %v3704
        %4076 = vmatpush.msra.mxu0 %v3703
        %4077 = vmatpush.msra.mxu0 %v3702
        %4078 = vmatpush.msra.mxu0 %v3701
        %4079 = vmatpush.msra.mxu0 %v3700
        %4080 = vmatpush.msra.mxu0 %v3699
        %4081 = vmatpush.msra.mxu0 %v3698
        %4082 = vmatpush.msra.mxu0 %v3697
        %4083 = vmatpush.msra.mxu0 %v3696
        %4084 = vmatpush.msra.mxu0 %v3695
        %4085 = vmatpush.msra.mxu0 %v3694
        %4086 = vmatpush.msra.mxu0 %v3693
        %4087 = vmatpush.msra.mxu0 %v3692
        %4088 = vmatpush.msra.mxu0 %v3691
        %4089 = vmatpush.msra.mxu0 %v3690
        %4090 = vmatmul.f32.gmra.mxu0 %v3794
        %v4091 = vpop.f32.mrf.mxu0
        %v4092 = vadd.f32 0.0, %v4091
        %4093 = vmatmul.f32.gmra.mxu0 %v3799
        %v4094 = vpop.f32.mrf.mxu0
        %v4095 = vadd.f32 0.0, %v4094
        %4096 = vmatmul.f32.gmra.mxu0 %v3803
        %v4097 = vpop.f32.mrf.mxu0
        %v4098 = vadd.f32 0.0, %v4097
        %4099 = vmatmul.f32.gmra.mxu0 %v3807
        %v4100 = vpop.f32.mrf.mxu0
        %v4101 = vadd.f32 0.0, %v4100
        %4102 = vmatmul.f32.gmra.mxu0 %v3811
        %v4103 = vpop.f32.mrf.mxu0
        %v4104 = vadd.f32 0.0, %v4103
        %4105 = vmatmul.f32.gmra.mxu0 %v3815
        %v4106 = vpop.f32.mrf.mxu0
        %v4107 = vadd.f32 0.0, %v4106
        %4108 = vmatmul.f32.gmra.mxu0 %v3819
        %v4109 = vpop.f32.mrf.mxu0
        %v4110 = vadd.f32 0.0, %v4109
        %4111 = vmatmul.f32.gmra.mxu0 %v3823
        %v4112 = vpop.f32.mrf.mxu0
        %v4113 = vadd.f32 0.0, %v4112
        %4114 = vmatmul.f32.gmra.mxu0 %v3827
        %v4115 = vpop.f32.mrf.mxu0
        %v4116 = vadd.f32 0.0, %v4115
        %4117 = vmatmul.f32.gmra.mxu0 %v3831
        %v4118 = vpop.f32.mrf.mxu0
        %v4119 = vadd.f32 0.0, %v4118
        %4120 = vmatmul.f32.gmra.mxu0 %v3835
        %v4121 = vpop.f32.mrf.mxu0
        %v4122 = vadd.f32 0.0, %v4121
        %4123 = vmatmul.f32.gmra.mxu0 %v3839
        %v4124 = vpop.f32.mrf.mxu0
        %v4125 = vadd.f32 0.0, %v4124
        %4126 = vmatmul.f32.gmra.mxu0 %v3843
        %v4127 = vpop.f32.mrf.mxu0
        %v4128 = vadd.f32 0.0, %v4127
        %4129 = vmatmul.f32.gmra.mxu0 %v3847
        %v4130 = vpop.f32.mrf.mxu0
        %v4131 = vadd.f32 0.0, %v4130
        %4132 = vmatmul.f32.gmra.mxu0 %v3851
        %v4133 = vpop.f32.mrf.mxu0
        %v4134 = vadd.f32 0.0, %v4133
        %4135 = vmatmul.f32.gmra.mxu0 %v3855
        %v4136 = vpop.f32.mrf.mxu0
        %v4137 = vadd.f32 0.0, %v4136
        %4138 = vmatmul.f32.gmra.mxu0 %v3859
        %v4139 = vpop.f32.mrf.mxu0
        %v4140 = vadd.f32 0.0, %v4139
        %4141 = vmatmul.f32.gmra.mxu0 %v3863
        %v4142 = vpop.f32.mrf.mxu0
        %v4143 = vadd.f32 0.0, %v4142
        %4144 = vmatmul.f32.gmra.mxu0 %v3867
        %v4145 = vpop.f32.mrf.mxu0
        %v4146 = vadd.f32 0.0, %v4145
        %4147 = vmatmul.f32.gmra.mxu0 %v3871
        %v4148 = vpop.f32.mrf.mxu0
        %v4149 = vadd.f32 0.0, %v4148
        %4150 = vmatmul.f32.gmra.mxu0 %v3875
        %v4151 = vpop.f32.mrf.mxu0
        %v4152 = vadd.f32 0.0, %v4151
        %4153 = vmatmul.f32.gmra.mxu0 %v3879
        %v4154 = vpop.f32.mrf.mxu0
        %v4155 = vadd.f32 0.0, %v4154
        %4156 = vmatmul.f32.gmra.mxu0 %v3883
        %v4157 = vpop.f32.mrf.mxu0
        %v4158 = vadd.f32 0.0, %v4157
        %4159 = vmatmul.f32.gmra.mxu0 %v3887
        %v4160 = vpop.f32.mrf.mxu0
        %v4161 = vadd.f32 0.0, %v4160
        %4162 = vmatmul.f32.gmra.mxu0 %v3891
        %v4163 = vpop.f32.mrf.mxu0
        %v4164 = vadd.f32 0.0, %v4163
        %4165 = vmatmul.f32.gmra.mxu0 %v3895
        %v4166 = vpop.f32.mrf.mxu0
        %v4167 = vadd.f32 0.0, %v4166
        %4168 = vmatmul.f32.gmra.mxu0 %v3899
        %v4169 = vpop.f32.mrf.mxu0
        %v4170 = vadd.f32 0.0, %v4169
        %4171 = vmatmul.f32.gmra.mxu0 %v3903
        %v4172 = vpop.f32.mrf.mxu0
        %v4173 = vadd.f32 0.0, %v4172
        %4174 = vmatmul.f32.gmra.mxu0 %v3907
        %v4175 = vpop.f32.mrf.mxu0
        %v4176 = vadd.f32 0.0, %v4175
        %4177 = vmatmul.f32.gmra.mxu0 %v3911
        %v4178 = vpop.f32.mrf.mxu0
        %v4179 = vadd.f32 0.0, %v4178
        %4180 = vmatmul.f32.gmra.mxu0 %v3915
        %v4181 = vpop.f32.mrf.mxu0
        %v4182 = vadd.f32 0.0, %v4181
        %4183 = vmatmul.f32.gmra.mxu0 %v3919
        %v4184 = vpop.f32.mrf.mxu0
        %v4185 = vadd.f32 0.0, %v4184
        %4186 = vmatmul.f32.gmra.mxu0 %v3923
        %v4187 = vpop.f32.mrf.mxu0
        %v4188 = vadd.f32 0.0, %v4187
        %4189 = vmatmul.f32.gmra.mxu0 %v3927
        %v4190 = vpop.f32.mrf.mxu0
        %v4191 = vadd.f32 0.0, %v4190
        %4192 = vmatmul.f32.gmra.mxu0 %v3931
        %v4193 = vpop.f32.mrf.mxu0
        %v4194 = vadd.f32 0.0, %v4193
        %4195 = vmatmul.f32.gmra.mxu0 %v3935
        %v4196 = vpop.f32.mrf.mxu0
        %v4197 = vadd.f32 0.0, %v4196
        %4198 = vmatmul.f32.gmra.mxu0 %v3939
        %v4199 = vpop.f32.mrf.mxu0
        %v4200 = vadd.f32 0.0, %v4199
        %4201 = vmatmul.f32.gmra.mxu0 %v3943
        %v4202 = vpop.f32.mrf.mxu0
        %v4203 = vadd.f32 0.0, %v4202
        %4204 = vmatmul.f32.gmra.mxu0 %v3947
        %v4205 = vpop.f32.mrf.mxu0
        %v4206 = vadd.f32 0.0, %v4205
        %4207 = vmatmul.f32.gmra.mxu0 %v3951
        %v4208 = vpop.f32.mrf.mxu0
        %v4209 = vadd.f32 0.0, %v4208
        %4210 = vdwg.mxu0
        %4211 = vmatpush.msra.mxu0 0.0
        %4212 = vmatpush.msra.mxu0 0.0
        %4213 = vmatpush.msra.mxu0 0.0
        %4214 = vmatpush.msra.mxu0 0.0
        %4215 = vmatpush.msra.mxu0 0.0
        %4216 = vmatpush.msra.mxu0 0.0
        %4217 = vmatpush.msra.mxu0 0.0
        %4218 = vmatpush.msra.mxu0 0.0
        %4219 = vmatpush.msra.mxu0 0.0
        %4220 = vmatpush.msra.mxu0 0.0
        %4221 = vmatpush.msra.mxu0 0.0
        %4222 = vmatpush.msra.mxu0 0.0
        %4223 = vmatpush.msra.mxu0 %v3709
        %4224 = vmatpush.msra.mxu0 %v3708
        %4225 = vmatpush.msra.mxu0 %v3707
        %4226 = vmatpush.msra.mxu0 %v3706
        %4227 = vmatmul.f32.gmra.mxu0 %v3994
        %v4228 = vpop.f32.mrf.mxu0
        %v4229 = vadd.f32 %v4092, %v4228
        %4230 = vmatmul.f32.gmra.mxu0 %v3996
        %v4231 = vpop.f32.mrf.mxu0
        %v4232 = vadd.f32 %v4095, %v4231
        %4233 = vmatmul.f32.gmra.mxu0 %v3998
        %v4234 = vpop.f32.mrf.mxu0
        %v4235 = vadd.f32 %v4098, %v4234
        %4236 = vmatmul.f32.gmra.mxu0 %v4000
        %v4237 = vpop.f32.mrf.mxu0
        %v4238 = vadd.f32 %v4101, %v4237
        %4239 = vmatmul.f32.gmra.mxu0 %v4002
        %v4240 = vpop.f32.mrf.mxu0
        %v4241 = vadd.f32 %v4104, %v4240
        %4242 = vmatmul.f32.gmra.mxu0 %v4004
        %v4243 = vpop.f32.mrf.mxu0
        %v4244 = vadd.f32 %v4107, %v4243
        %4245 = vmatmul.f32.gmra.mxu0 %v4006
        %v4246 = vpop.f32.mrf.mxu0
        %v4247 = vadd.f32 %v4110, %v4246
        %4248 = vmatmul.f32.gmra.mxu0 %v4008
        %v4249 = vpop.f32.mrf.mxu0
        %v4250 = vadd.f32 %v4113, %v4249
        %4251 = vmatmul.f32.gmra.mxu0 %v4010
        %v4252 = vpop.f32.mrf.mxu0
        %v4253 = vadd.f32 %v4116, %v4252
        %4254 = vmatmul.f32.gmra.mxu0 %v4012
        %v4255 = vpop.f32.mrf.mxu0
        %v4256 = vadd.f32 %v4119, %v4255
        %4257 = vmatmul.f32.gmra.mxu0 %v4014
        %v4258 = vpop.f32.mrf.mxu0
        %v4259 = vadd.f32 %v4122, %v4258
        %4260 = vmatmul.f32.gmra.mxu0 %v4016
        %v4261 = vpop.f32.mrf.mxu0
        %v4262 = vadd.f32 %v4125, %v4261
        %4263 = vmatmul.f32.gmra.mxu0 %v4018
        %v4264 = vpop.f32.mrf.mxu0
        %v4265 = vadd.f32 %v4128, %v4264
        %4266 = vmatmul.f32.gmra.mxu0 %v4020
        %v4267 = vpop.f32.mrf.mxu0
        %v4268 = vadd.f32 %v4131, %v4267
        %4269 = vmatmul.f32.gmra.mxu0 %v4022
        %v4270 = vpop.f32.mrf.mxu0
        %v4271 = vadd.f32 %v4134, %v4270
        %4272 = vmatmul.f32.gmra.mxu0 %v4024
        %v4273 = vpop.f32.mrf.mxu0
        %v4274 = vadd.f32 %v4137, %v4273
        %4275 = vmatmul.f32.gmra.mxu0 %v4026
        %v4276 = vpop.f32.mrf.mxu0
        %v4277 = vadd.f32 %v4140, %v4276
        %4278 = vmatmul.f32.gmra.mxu0 %v4028
        %v4279 = vpop.f32.mrf.mxu0
        %v4280 = vadd.f32 %v4143, %v4279
        %4281 = vmatmul.f32.gmra.mxu0 %v4030
        %v4282 = vpop.f32.mrf.mxu0
        %v4283 = vadd.f32 %v4146, %v4282
        %4284 = vmatmul.f32.gmra.mxu0 %v4032
        %v4285 = vpop.f32.mrf.mxu0
        %v4286 = vadd.f32 %v4149, %v4285
        %4287 = vmatmul.f32.gmra.mxu0 %v4034
        %v4288 = vpop.f32.mrf.mxu0
        %v4289 = vadd.f32 %v4152, %v4288
        %4290 = vmatmul.f32.gmra.mxu0 %v4036
        %v4291 = vpop.f32.mrf.mxu0
        %v4292 = vadd.f32 %v4155, %v4291
        %4293 = vmatmul.f32.gmra.mxu0 %v4038
        %v4294 = vpop.f32.mrf.mxu0
        %v4295 = vadd.f32 %v4158, %v4294
        %4296 = vmatmul.f32.gmra.mxu0 %v4040
        %v4297 = vpop.f32.mrf.mxu0
        %v4298 = vadd.f32 %v4161, %v4297
        %4299 = vmatmul.f32.gmra.mxu0 %v4042
        %v4300 = vpop.f32.mrf.mxu0
        %v4301 = vadd.f32 %v4164, %v4300
        %4302 = vmatmul.f32.gmra.mxu0 %v4044
        %v4303 = vpop.f32.mrf.mxu0
        %v4304 = vadd.f32 %v4167, %v4303
        %4305 = vmatmul.f32.gmra.mxu0 %v4046
        %v4306 = vpop.f32.mrf.mxu0
        %v4307 = vadd.f32 %v4170, %v4306
        %4308 = vmatmul.f32.gmra.mxu0 %v4048
        %v4309 = vpop.f32.mrf.mxu0
        %v4310 = vadd.f32 %v4173, %v4309
        %4311 = vmatmul.f32.gmra.mxu0 %v4050
        %v4312 = vpop.f32.mrf.mxu0
        %v4313 = vadd.f32 %v4176, %v4312
        %4314 = vmatmul.f32.gmra.mxu0 %v4052
        %v4315 = vpop.f32.mrf.mxu0
        %v4316 = vadd.f32 %v4179, %v4315
        %4317 = vmatmul.f32.gmra.mxu0 %v4054
        %v4318 = vpop.f32.mrf.mxu0
        %v4319 = vadd.f32 %v4182, %v4318
        %4320 = vmatmul.f32.gmra.mxu0 %v4056
        %v4321 = vpop.f32.mrf.mxu0
        %v4322 = vadd.f32 %v4185, %v4321
        %4323 = vmatmul.f32.gmra.mxu0 %v4058
        %v4324 = vpop.f32.mrf.mxu0
        %v4325 = vadd.f32 %v4188, %v4324
        %4326 = vmatmul.f32.gmra.mxu0 %v4060
        %v4327 = vpop.f32.mrf.mxu0
        %v4328 = vadd.f32 %v4191, %v4327
        %4329 = vmatmul.f32.gmra.mxu0 %v4062
        %v4330 = vpop.f32.mrf.mxu0
        %v4331 = vadd.f32 %v4194, %v4330
        %4332 = vmatmul.f32.gmra.mxu0 %v4064
        %v4333 = vpop.f32.mrf.mxu0
        %v4334 = vadd.f32 %v4197, %v4333
        %4335 = vmatmul.f32.gmra.mxu0 %v4066
        %v4336 = vpop.f32.mrf.mxu0
        %v4337 = vadd.f32 %v4200, %v4336
        %4338 = vmatmul.f32.gmra.mxu0 %v4068
        %v4339 = vpop.f32.mrf.mxu0
        %v4340 = vadd.f32 %v4203, %v4339
        %4341 = vmatmul.f32.gmra.mxu0 %v4070
        %v4342 = vpop.f32.mrf.mxu0
        %v4343 = vadd.f32 %v4206, %v4342
        %4344 = vmatmul.f32.gmra.mxu0 %v4072
        %v4345 = vpop.f32.mrf.mxu0
        %v4346 = vadd.f32 %v4209, %v4345
        %4347 = vdwg.mxu0
        %v4349 = vsel %vm385, %v3582, 0
        %v4352 = vsel %vm385, %v3584, 0
        %v4355 = vsel %vm385, %v3586, 0
        %v4357 = vsel %vm385, %v3588, 0
        %v4359 = vsel %vm385, %v3590, 0
        %v4361 = vsel %vm385, %v3592, 0
        %v4363 = vsel %vm385, %v3594, 0
        %v4365 = vsel %vm385, %v3596, 0
        %v4367 = vsel %vm385, %v3598, 0
        %v4369 = vsel %vm385, %v3600, 0
        %v4371 = vsel %vm385, %v3602, 0
        %v4373 = vsel %vm385, %v3604, 0
        %v4375 = vsel %vm385, %v3606, 0
        %v4377 = vsel %vm385, %v3608, 0
        %v4379 = vsel %vm385, %v3610, 0
        %v4381 = vsel %vm385, %v3612, 0
        %v4383 = vsel %vm385, %v3614, 0
        %v4385 = vsel %vm385, %v3616, 0
        %v4387 = vsel %vm385, %v3618, 0
        %v4389 = vsel %vm385, %v3620, 0
        %v4391 = vsel %vm385, %v3622, 0
        %v4393 = vsel %vm385, %v3624, 0
        %v4395 = vsel %vm385, %v3626, 0
        %v4397 = vsel %vm385, %v3628, 0
        %v4399 = vsel %vm385, %v3630, 0
        %v4401 = vsel %vm385, %v3632, 0
        %v4403 = vsel %vm385, %v3634, 0
        %v4405 = vsel %vm385, %v3636, 0
        %v4407 = vsel %vm385, %v3638, 0
        %v4409 = vsel %vm385, %v3640, 0
        %v4411 = vsel %vm385, %v3642, 0
        %v4413 = vsel %vm385, %v3644, 0
        %v4415 = vsel %vm385, %v3646, 0
        %v4417 = vsel %vm385, %v3648, 0
        %v4419 = vsel %vm385, %v3650, 0
        %v4421 = vsel %vm385, %v3652, 0
        %v4423 = vsel %vm385, %v3654, 0
        %v4425 = vsel %vm385, %v3656, 0
        %v4427 = vsel %vm385, %v3658, 0
        %v4429 = vsel %vm385, %v3660, 0
        %4431 = vmatpush.msra.mxu0 %v3676
        %4432 = vmatpush.msra.mxu0 %v3675
        %4433 = vmatpush.msra.mxu0 %v3674
        %4434 = vmatpush.msra.mxu0 %v3673
        %4435 = vmatpush.msra.mxu0 %v3672
        %4436 = vmatpush.msra.mxu0 %v3671
        %4437 = vmatpush.msra.mxu0 %v3670
        %4438 = vmatpush.msra.mxu0 %v3669
        %4439 = vmatpush.msra.mxu0 %v3668
        %4440 = vmatpush.msra.mxu0 %v3667
        %4441 = vmatpush.msra.mxu0 %v3666
        %4442 = vmatpush.msra.mxu0 %v3665
        %4443 = vmatpush.msra.mxu0 %v3664
        %4444 = vmatpush.msra.mxu0 %v3663
        %4445 = vmatpush.msra.mxu0 %v3662
        %4446 = vmatpush.msra.mxu0 %v3661
        %4447 = vmatmul.f32.gmra.mxu0 %v3581
        %v4448 = vpop.f32.mrf.mxu0
        %v4449 = vadd.f32 %v4229, %v4448
        %4450 = vmatmul.f32.gmra.mxu0 %v3583
        %v4451 = vpop.f32.mrf.mxu0
        %v4452 = vadd.f32 %v4232, %v4451
        %4453 = vmatmul.f32.gmra.mxu0 %v3585
        %v4454 = vpop.f32.mrf.mxu0
        %v4455 = vadd.f32 %v4235, %v4454
        %4456 = vmatmul.f32.gmra.mxu0 %v3587
        %v4457 = vpop.f32.mrf.mxu0
        %v4458 = vadd.f32 %v4238, %v4457
        %4459 = vmatmul.f32.gmra.mxu0 %v3589
        %v4460 = vpop.f32.mrf.mxu0
        %v4461 = vadd.f32 %v4241, %v4460
        %4462 = vmatmul.f32.gmra.mxu0 %v3591
        %v4463 = vpop.f32.mrf.mxu0
        %v4464 = vadd.f32 %v4244, %v4463
        %4465 = vmatmul.f32.gmra.mxu0 %v3593
        %v4466 = vpop.f32.mrf.mxu0
        %v4467 = vadd.f32 %v4247, %v4466
        %4468 = vmatmul.f32.gmra.mxu0 %v3595
        %v4469 = vpop.f32.mrf.mxu0
        %v4470 = vadd.f32 %v4250, %v4469
        %4471 = vmatmul.f32.gmra.mxu0 %v3597
        %v4472 = vpop.f32.mrf.mxu0
        %v4473 = vadd.f32 %v4253, %v4472
        %4474 = vmatmul.f32.gmra.mxu0 %v3599
        %v4475 = vpop.f32.mrf.mxu0
        %v4476 = vadd.f32 %v4256, %v4475
        %4477 = vmatmul.f32.gmra.mxu0 %v3601
        %v4478 = vpop.f32.mrf.mxu0
        %v4479 = vadd.f32 %v4259, %v4478
        %4480 = vmatmul.f32.gmra.mxu0 %v3603
        %v4481 = vpop.f32.mrf.mxu0
        %v4482 = vadd.f32 %v4262, %v4481
        %4483 = vmatmul.f32.gmra.mxu0 %v3605
        %v4484 = vpop.f32.mrf.mxu0
        %v4485 = vadd.f32 %v4265, %v4484
        %4486 = vmatmul.f32.gmra.mxu0 %v3607
        %v4487 = vpop.f32.mrf.mxu0
        %v4488 = vadd.f32 %v4268, %v4487
        %4489 = vmatmul.f32.gmra.mxu0 %v3609
        %v4490 = vpop.f32.mrf.mxu0
        %v4491 = vadd.f32 %v4271, %v4490
        %4492 = vmatmul.f32.gmra.mxu0 %v3611
        %v4493 = vpop.f32.mrf.mxu0
        %v4494 = vadd.f32 %v4274, %v4493
        %4495 = vmatmul.f32.gmra.mxu0 %v3613
        %v4496 = vpop.f32.mrf.mxu0
        %v4497 = vadd.f32 %v4277, %v4496
        %4498 = vmatmul.f32.gmra.mxu0 %v3615
        %v4499 = vpop.f32.mrf.mxu0
        %v4500 = vadd.f32 %v4280, %v4499
        %4501 = vmatmul.f32.gmra.mxu0 %v3617
        %v4502 = vpop.f32.mrf.mxu0
        %v4503 = vadd.f32 %v4283, %v4502
        %4504 = vmatmul.f32.gmra.mxu0 %v3619
        %v4505 = vpop.f32.mrf.mxu0
        %v4506 = vadd.f32 %v4286, %v4505
        %4507 = vmatmul.f32.gmra.mxu0 %v3621
        %v4508 = vpop.f32.mrf.mxu0
        %v4509 = vadd.f32 %v4289, %v4508
        %4510 = vmatmul.f32.gmra.mxu0 %v3623
        %v4511 = vpop.f32.mrf.mxu0
        %v4512 = vadd.f32 %v4292, %v4511
        %4513 = vmatmul.f32.gmra.mxu0 %v3625
        %v4514 = vpop.f32.mrf.mxu0
        %v4515 = vadd.f32 %v4295, %v4514
        %4516 = vmatmul.f32.gmra.mxu0 %v3627
        %v4517 = vpop.f32.mrf.mxu0
        %v4518 = vadd.f32 %v4298, %v4517
        %4519 = vmatmul.f32.gmra.mxu0 %v3629
        %v4520 = vpop.f32.mrf.mxu0
        %v4521 = vadd.f32 %v4301, %v4520
        %4522 = vmatmul.f32.gmra.mxu0 %v3631
        %v4523 = vpop.f32.mrf.mxu0
        %v4524 = vadd.f32 %v4304, %v4523
        %4525 = vmatmul.f32.gmra.mxu0 %v3633
        %v4526 = vpop.f32.mrf.mxu0
        %v4527 = vadd.f32 %v4307, %v4526
        %4528 = vmatmul.f32.gmra.mxu0 %v3635
        %v4529 = vpop.f32.mrf.mxu0
        %v4530 = vadd.f32 %v4310, %v4529
        %4531 = vmatmul.f32.gmra.mxu0 %v3637
        %v4532 = vpop.f32.mrf.mxu0
        %v4533 = vadd.f32 %v4313, %v4532
        %4534 = vmatmul.f32.gmra.mxu0 %v3639
        %v4535 = vpop.f32.mrf.mxu0
        %v4536 = vadd.f32 %v4316, %v4535
        %4537 = vmatmul.f32.gmra.mxu0 %v3641
        %v4538 = vpop.f32.mrf.mxu0
        %v4539 = vadd.f32 %v4319, %v4538
        %4540 = vmatmul.f32.gmra.mxu0 %v3643
        %v4541 = vpop.f32.mrf.mxu0
        %v4542 = vadd.f32 %v4322, %v4541
        %4543 = vmatmul.f32.gmra.mxu0 %v3645
        %v4544 = vpop.f32.mrf.mxu0
        %v4545 = vadd.f32 %v4325, %v4544
        %4546 = vmatmul.f32.gmra.mxu0 %v3647
        %v4547 = vpop.f32.mrf.mxu0
        %v4548 = vadd.f32 %v4328, %v4547
        %4549 = vmatmul.f32.gmra.mxu0 %v3649
        %v4550 = vpop.f32.mrf.mxu0
        %v4551 = vadd.f32 %v4331, %v4550
        %4552 = vmatmul.f32.gmra.mxu0 %v3651
        %v4553 = vpop.f32.mrf.mxu0
        %v4554 = vadd.f32 %v4334, %v4553
        %4555 = vmatmul.f32.gmra.mxu0 %v3653
        %v4556 = vpop.f32.mrf.mxu0
        %v4557 = vadd.f32 %v4337, %v4556
        %4558 = vmatmul.f32.gmra.mxu0 %v3655
        %v4559 = vpop.f32.mrf.mxu0
        %v4560 = vadd.f32 %v4340, %v4559
        %4561 = vmatmul.f32.gmra.mxu0 %v3657
        %v4562 = vpop.f32.mrf.mxu0
        %v4563 = vadd.f32 %v4343, %v4562
        %4564 = vmatmul.f32.gmra.mxu0 %v3659
        %v4565 = vpop.f32.mrf.mxu0
        %v4566 = vadd.f32 %v4346, %v4565
        %4567 = vdwg.mxu0
        %4568 = vmatpush.msra.mxu0 0.0
        %4569 = vmatpush.msra.mxu0 0.0
        %4570 = vmatpush.msra.mxu0 0.0
        %4571 = vmatpush.msra.mxu0 0.0
        %4572 = vmatpush.msra.mxu0 0.0
        %4573 = vmatpush.msra.mxu0 0.0
        %4574 = vmatpush.msra.mxu0 0.0
        %4575 = vmatpush.msra.mxu0 0.0
        %4576 = vmatpush.msra.mxu0 0.0
        %4577 = vmatpush.msra.mxu0 0.0
        %4578 = vmatpush.msra.mxu0 0.0
        %4579 = vmatpush.msra.mxu0 0.0
        %4580 = vmatpush.msra.mxu0 %v3680
        %4581 = vmatpush.msra.mxu0 %v3679
        %4582 = vmatpush.msra.mxu0 %v3678
        %4583 = vmatpush.msra.mxu0 %v3677
        %4584 = vmatmul.f32.gmra.mxu0 %v4349
        %v4585 = vpop.f32.mrf.mxu0
        %v4586 = vadd.f32 %v4449, %v4585
        %4587 = vmatmul.f32.gmra.mxu0 %v4352
        %v4588 = vpop.f32.mrf.mxu0
        %v4589 = vadd.f32 %v4452, %v4588
        %4590 = vmatmul.f32.gmra.mxu0 %v4355
        %v4591 = vpop.f32.mrf.mxu0
        %v4592 = vadd.f32 %v4455, %v4591
        %4593 = vmatmul.f32.gmra.mxu0 %v4357
        %v4594 = vpop.f32.mrf.mxu0
        %v4595 = vadd.f32 %v4458, %v4594
        %4596 = vmatmul.f32.gmra.mxu0 %v4359
        %v4597 = vpop.f32.mrf.mxu0
        %v4598 = vadd.f32 %v4461, %v4597
        %4599 = vmatmul.f32.gmra.mxu0 %v4361
        %v4600 = vpop.f32.mrf.mxu0
        %v4601 = vadd.f32 %v4464, %v4600
        %4602 = vmatmul.f32.gmra.mxu0 %v4363
        %v4603 = vpop.f32.mrf.mxu0
        %v4604 = vadd.f32 %v4467, %v4603
        %4605 = vmatmul.f32.gmra.mxu0 %v4365
        %v4606 = vpop.f32.mrf.mxu0
        %v4607 = vadd.f32 %v4470, %v4606
        %4608 = vmatmul.f32.gmra.mxu0 %v4367
        %v4609 = vpop.f32.mrf.mxu0
        %v4610 = vadd.f32 %v4473, %v4609
        %4611 = vmatmul.f32.gmra.mxu0 %v4369
        %v4612 = vpop.f32.mrf.mxu0
        %v4613 = vadd.f32 %v4476, %v4612
        %4614 = vmatmul.f32.gmra.mxu0 %v4371
        %v4615 = vpop.f32.mrf.mxu0
        %v4616 = vadd.f32 %v4479, %v4615
        %4617 = vmatmul.f32.gmra.mxu0 %v4373
        %v4618 = vpop.f32.mrf.mxu0
        %v4619 = vadd.f32 %v4482, %v4618
        %4620 = vmatmul.f32.gmra.mxu0 %v4375
        %v4621 = vpop.f32.mrf.mxu0
        %v4622 = vadd.f32 %v4485, %v4621
        %4623 = vmatmul.f32.gmra.mxu0 %v4377
        %v4624 = vpop.f32.mrf.mxu0
        %v4625 = vadd.f32 %v4488, %v4624
        %4626 = vmatmul.f32.gmra.mxu0 %v4379
        %v4627 = vpop.f32.mrf.mxu0
        %v4628 = vadd.f32 %v4491, %v4627
        %4629 = vmatmul.f32.gmra.mxu0 %v4381
        %v4630 = vpop.f32.mrf.mxu0
        %v4631 = vadd.f32 %v4494, %v4630
        %4632 = vmatmul.f32.gmra.mxu0 %v4383
        %v4633 = vpop.f32.mrf.mxu0
        %v4634 = vadd.f32 %v4497, %v4633
        %4635 = vmatmul.f32.gmra.mxu0 %v4385
        %v4636 = vpop.f32.mrf.mxu0
        %v4637 = vadd.f32 %v4500, %v4636
        %4638 = vmatmul.f32.gmra.mxu0 %v4387
        %v4639 = vpop.f32.mrf.mxu0
        %v4640 = vadd.f32 %v4503, %v4639
        %4641 = vmatmul.f32.gmra.mxu0 %v4389
        %v4642 = vpop.f32.mrf.mxu0
        %v4643 = vadd.f32 %v4506, %v4642
        %4644 = vmatmul.f32.gmra.mxu0 %v4391
        %v4645 = vpop.f32.mrf.mxu0
        %v4646 = vadd.f32 %v4509, %v4645
        %4647 = vmatmul.f32.gmra.mxu0 %v4393
        %v4648 = vpop.f32.mrf.mxu0
        %v4649 = vadd.f32 %v4512, %v4648
        %4650 = vmatmul.f32.gmra.mxu0 %v4395
        %v4651 = vpop.f32.mrf.mxu0
        %v4652 = vadd.f32 %v4515, %v4651
        %4653 = vmatmul.f32.gmra.mxu0 %v4397
        %v4654 = vpop.f32.mrf.mxu0
        %v4655 = vadd.f32 %v4518, %v4654
        %4656 = vmatmul.f32.gmra.mxu0 %v4399
        %v4657 = vpop.f32.mrf.mxu0
        %v4658 = vadd.f32 %v4521, %v4657
        %4659 = vmatmul.f32.gmra.mxu0 %v4401
        %v4660 = vpop.f32.mrf.mxu0
        %v4661 = vadd.f32 %v4524, %v4660
        %4662 = vmatmul.f32.gmra.mxu0 %v4403
        %v4663 = vpop.f32.mrf.mxu0
        %v4664 = vadd.f32 %v4527, %v4663
        %4665 = vmatmul.f32.gmra.mxu0 %v4405
        %v4666 = vpop.f32.mrf.mxu0
        %v4667 = vadd.f32 %v4530, %v4666
        %4668 = vmatmul.f32.gmra.mxu0 %v4407
        %v4669 = vpop.f32.mrf.mxu0
        %v4670 = vadd.f32 %v4533, %v4669
        %4671 = vmatmul.f32.gmra.mxu0 %v4409
        %v4672 = vpop.f32.mrf.mxu0
        %v4673 = vadd.f32 %v4536, %v4672
        %4674 = vmatmul.f32.gmra.mxu0 %v4411
        %v4675 = vpop.f32.mrf.mxu0
        %v4676 = vadd.f32 %v4539, %v4675
        %4677 = vmatmul.f32.gmra.mxu0 %v4413
        %v4678 = vpop.f32.mrf.mxu0
        %v4679 = vadd.f32 %v4542, %v4678
        %4680 = vmatmul.f32.gmra.mxu0 %v4415
        %v4681 = vpop.f32.mrf.mxu0
        %v4682 = vadd.f32 %v4545, %v4681
        %4683 = vmatmul.f32.gmra.mxu0 %v4417
        %v4684 = vpop.f32.mrf.mxu0
        %v4685 = vadd.f32 %v4548, %v4684
        %4686 = vmatmul.f32.gmra.mxu0 %v4419
        %v4687 = vpop.f32.mrf.mxu0
        %v4688 = vadd.f32 %v4551, %v4687
        %4689 = vmatmul.f32.gmra.mxu0 %v4421
        %v4690 = vpop.f32.mrf.mxu0
        %v4691 = vadd.f32 %v4554, %v4690
        %4692 = vmatmul.f32.gmra.mxu0 %v4423
        %v4693 = vpop.f32.mrf.mxu0
        %v4694 = vadd.f32 %v4557, %v4693
        %4695 = vmatmul.f32.gmra.mxu0 %v4425
        %v4696 = vpop.f32.mrf.mxu0
        %v4697 = vadd.f32 %v4560, %v4696
        %4698 = vmatmul.f32.gmra.mxu0 %v4427
        %v4699 = vpop.f32.mrf.mxu0
        %v4700 = vadd.f32 %v4563, %v4699
        %4701 = vmatmul.f32.gmra.mxu0 %v4429
        %v4702 = vpop.f32.mrf.mxu0
        %v4703 = vadd.f32 %v4566, %v4702
        %4704 = vdwg.mxu0
        %v4705 = vld [vmem:[#allocation4 + $0x50] sm:$0xff]
        %v4706 = vld [vmem:[#allocation4 + $0x58] sm:$0xff]
        %v4707 = vld [vmem:[#allocation4 + $0x60] sm:$0xff]
        %v4708 = vld [vmem:[#allocation4 + $0x68] sm:$0xff]
        %v4709 = vld [vmem:[#allocation4 + $0x70] sm:$0xff]
        %v4710 = vld [vmem:[#allocation4 + $0x78] sm:$0xff]
        %v4711 = vld [vmem:[#allocation4 + $0x80] sm:$0xff]
        %v4712 = vld [vmem:[#allocation4 + $0x88] sm:$0xff]
        %v4713 = vld [vmem:[#allocation4 + $0x90] sm:$0xff]
        %v4714 = vld [vmem:[#allocation4 + $0x98] sm:$0xff]
        %v4715 = vld [vmem:[#allocation4 + $0xa0] sm:$0xff]
        %v4716 = vld [vmem:[#allocation4 + $0xa8] sm:$0xff]
        %v4717 = vld [vmem:[#allocation4 + $0xb0] sm:$0xff]
        %v4718 = vld [vmem:[#allocation4 + $0xb8] sm:$0xff]
        %v4719 = vld [vmem:[#allocation4 + $0xc0] sm:$0xff]
        %v4720 = vld [vmem:[#allocation4 + $0xc8] sm:$0xff]
        %v4721 = vld [vmem:[#allocation4 + $0xd0] sm:$0xff]
        %v4722 = vld [vmem:[#allocation4 + $0xd8] sm:$0xff]
        %v4723 = vld [vmem:[#allocation4 + $0xe0] sm:$0xff]
        %v4724 = vld [vmem:[#allocation4 + $0xe8] sm:$0xff]
        %v4725 = vld [vmem:[#allocation4 + $0xf0] sm:$0xff]
        %v4726 = vld [vmem:[#allocation4 + $0xf8] sm:$0xff]
        %v4727 = vld [vmem:[#allocation4 + $0x100] sm:$0xff]
        %v4728 = vld [vmem:[#allocation4 + $0x108] sm:$0xff]
        %v4729 = vld [vmem:[#allocation4 + $0x110] sm:$0xff]
        %v4730 = vld [vmem:[#allocation4 + $0x118] sm:$0xff]
        %v4731 = vld [vmem:[#allocation4 + $0x120] sm:$0xff]
        %v4732 = vld [vmem:[#allocation4 + $0x128] sm:$0xff]
        %v4733 = vld [vmem:[#allocation4 + $0x130] sm:$0xff]
        %v4734 = vld [vmem:[#allocation4 + $0x138] sm:$0xff]
        %v4735 = vld [vmem:[#allocation4 + $0x140] sm:$0xff]
        %v4736 = vld [vmem:[#allocation4 + $0x148] sm:$0xff]
        %v4737 = vld [vmem:[#allocation4 + $0x150] sm:$0xff]
        %v4738 = vld [vmem:[#allocation4 + $0x158] sm:$0xff]
        %v4739 = vld [vmem:[#allocation4 + $0x160] sm:$0xff]
        %v4740 = vld [vmem:[#allocation4 + $0x168] sm:$0xff]
        %v4741 = vld [vmem:[#allocation4 + $0x170] sm:$0xff]
        %v4742 = vld [vmem:[#allocation4 + $0x178] sm:$0xff]
        %v4743 = vld [vmem:[#allocation4 + $0x180] sm:$0xff]
        %v4744 = vld [vmem:[#allocation4 + $0x188] sm:$0xff]
        %v4745 = vld [vmem:[#allocation4 + $0x190] sm:$0xff]
        %v4746 = vld [vmem:[#allocation4 + $0x198] sm:$0xff]
        %v4747 = vld [vmem:[#allocation4 + $0x1a0] sm:$0xff]
        %v4748 = vld [vmem:[#allocation4 + $0x1a8] sm:$0xff]
        %v4749 = vld [vmem:[#allocation4 + $0x1b0] sm:$0xff]
        %v4750 = vld [vmem:[#allocation4 + $0x1b8] sm:$0xff]
        %v4751 = vld [vmem:[#allocation4 + $0x1c0] sm:$0xff]
        %v4752 = vld [vmem:[#allocation4 + $0x1c8] sm:$0xff]
        %v4753 = vld [vmem:[#allocation4 + $0x1d0] sm:$0xff]
        %v4754 = vld [vmem:[#allocation4 + $0x1d8] sm:$0xff]
        %v4755 = vld [vmem:[#allocation4 + $0x1e0] sm:$0xff]
        %v4756 = vld [vmem:[#allocation4 + $0x1e8] sm:$0xff]
        %v4757 = vld [vmem:[#allocation4 + $0x1f0] sm:$0xff]
        %v4758 = vld [vmem:[#allocation4 + $0x1f8] sm:$0xff]
        %v4759 = vld [vmem:[#allocation4 + $0x200] sm:$0xff]
        %v4760 = vld [vmem:[#allocation4 + $0x208] sm:$0xff]
        %v4761 = vld [vmem:[#allocation4 + $0x210] sm:$0xff]
        %v4762 = vld [vmem:[#allocation4 + $0x218] sm:$0xff]
        %v4763 = vld [vmem:[#allocation4 + $0x220] sm:$0xff]
        %v4764 = vld [vmem:[#allocation4 + $0x228] sm:$0xff]
        %v4765 = vld [vmem:[#allocation4 + $0x230] sm:$0xff]
        %v4766 = vld [vmem:[#allocation4 + $0x238] sm:$0xff]
        %v4767 = vld [vmem:[#allocation4 + $0x240] sm:$0xff]
        %v4768 = vld [vmem:[#allocation4 + $0x248] sm:$0xff]
        %v4769 = vld [vmem:[#allocation4 + $0x250] sm:$0xff]
        %v4770 = vld [vmem:[#allocation4 + $0x258] sm:$0xff]
        %v4771 = vld [vmem:[#allocation4 + $0x260] sm:$0xff]
        %v4772 = vld [vmem:[#allocation4 + $0x268] sm:$0xff]
        %v4773 = vld [vmem:[#allocation4 + $0x270] sm:$0xff]
        %v4774 = vld [vmem:[#allocation4 + $0x278] sm:$0xff]
        %v4775 = vld [vmem:[#allocation4 + $0x280] sm:$0xff]
        %v4776 = vld [vmem:[#allocation4 + $0x288] sm:$0xff]
        %v4777 = vld [vmem:[#allocation4 + $0x290] sm:$0xff]
        %v4778 = vld [vmem:[#allocation4 + $0x298] sm:$0xff]
        %v4779 = vld [vmem:[#allocation4 + $0x2a0] sm:$0xff]
        %v4780 = vld [vmem:[#allocation4 + $0x2a8] sm:$0xff]
        %v4781 = vld [vmem:[#allocation4 + $0x2b0] sm:$0xff]
        %v4782 = vld [vmem:[#allocation4 + $0x2b8] sm:$0xff]
        %v4783 = vld [vmem:[#allocation4 + $0x2c0] sm:$0xff]
        %v4784 = vld [vmem:[#allocation4 + $0x2c8] sm:$0xff]
        %s4785 = scalar_lea.vmem %s3, 320
        %v4786 = vld [vmem:[%s4785] sm:$0xff]
        %v4787 = vld [vmem:[%s4785 + $0x8] sm:$0xff]
        %v4788 = vld [vmem:[%s4785 + $0x10] sm:$0xff]
        %v4789 = vld [vmem:[%s4785 + $0x18] sm:$0xff]
        %v4790 = vld [vmem:[%s4785 + $0x20] sm:$0xff]
        %v4791 = vld [vmem:[%s4785 + $0x28] sm:$0xff]
        %v4792 = vld [vmem:[%s4785 + $0x30] sm:$0xff]
        %v4793 = vld [vmem:[%s4785 + $0x38] sm:$0xff]
        %v4794 = vld [vmem:[%s4785 + $0x40] sm:$0xff]
        %v4795 = vld [vmem:[%s4785 + $0x48] sm:$0xff]
        %v4796 = vld [vmem:[%s4785 + $0x50] sm:$0xff]
        %v4797 = vld [vmem:[%s4785 + $0x58] sm:$0xff]
        %v4798 = vld [vmem:[%s4785 + $0x60] sm:$0xff]
        %v4799 = vld [vmem:[%s4785 + $0x68] sm:$0xff]
        %v4800 = vld [vmem:[%s4785 + $0x70] sm:$0xff]
        %v4801 = vld [vmem:[%s4785 + $0x78] sm:$0xff]
        %v4802 = vld [vmem:[%s4785 + $0x80] sm:$0xff]
        %v4803 = vld [vmem:[%s4785 + $0x88] sm:$0xff]
        %v4804 = vld [vmem:[%s4785 + $0x90] sm:$0xff]
        %v4805 = vld [vmem:[%s4785 + $0x98] sm:$0xff]
        %v4807 = vsel %vm385, %v4706, 0
        %v4810 = vsel %vm385, %v4708, 0
        %v4813 = vsel %vm385, %v4710, 0
        %v4816 = vsel %vm385, %v4712, 0
        %v4819 = vsel %vm385, %v4714, 0
        %v4822 = vsel %vm385, %v4716, 0
        %v4825 = vsel %vm385, %v4718, 0
        %v4828 = vsel %vm385, %v4720, 0
        %v4831 = vsel %vm385, %v4722, 0
        %v4834 = vsel %vm385, %v4724, 0
        %v4837 = vsel %vm385, %v4726, 0
        %v4840 = vsel %vm385, %v4728, 0
        %v4843 = vsel %vm385, %v4730, 0
        %v4846 = vsel %vm385, %v4732, 0
        %v4849 = vsel %vm385, %v4734, 0
        %v4852 = vsel %vm385, %v4736, 0
        %v4855 = vsel %vm385, %v4738, 0
        %v4858 = vsel %vm385, %v4740, 0
        %v4861 = vsel %vm385, %v4742, 0
        %v4864 = vsel %vm385, %v4744, 0
        %v4867 = vsel %vm385, %v4746, 0
        %v4870 = vsel %vm385, %v4748, 0
        %v4873 = vsel %vm385, %v4750, 0
        %v4876 = vsel %vm385, %v4752, 0
        %v4879 = vsel %vm385, %v4754, 0
        %v4882 = vsel %vm385, %v4756, 0
        %v4885 = vsel %vm385, %v4758, 0
        %v4888 = vsel %vm385, %v4760, 0
        %v4891 = vsel %vm385, %v4762, 0
        %v4894 = vsel %vm385, %v4764, 0
        %v4897 = vsel %vm385, %v4766, 0
        %v4900 = vsel %vm385, %v4768, 0
        %v4903 = vsel %vm385, %v4770, 0
        %v4906 = vsel %vm385, %v4772, 0
        %v4909 = vsel %vm385, %v4774, 0
        %v4912 = vsel %vm385, %v4776, 0
        %v4915 = vsel %vm385, %v4778, 0
        %v4918 = vsel %vm385, %v4780, 0
        %v4921 = vsel %vm385, %v4782, 0
        %v4924 = vsel %vm385, %v4784, 0
        %4926 = vmatpush.msra.mxu0 %v4801
        %4927 = vmatpush.msra.mxu0 %v4800
        %4928 = vmatpush.msra.mxu0 %v4799
        %4929 = vmatpush.msra.mxu0 %v4798
        %4930 = vmatpush.msra.mxu0 %v4797
        %4931 = vmatpush.msra.mxu0 %v4796
        %4932 = vmatpush.msra.mxu0 %v4795
        %4933 = vmatpush.msra.mxu0 %v4794
        %4934 = vmatpush.msra.mxu0 %v4793
        %4935 = vmatpush.msra.mxu0 %v4792
        %4936 = vmatpush.msra.mxu0 %v4791
        %4937 = vmatpush.msra.mxu0 %v4790
        %4938 = vmatpush.msra.mxu0 %v4789
        %4939 = vmatpush.msra.mxu0 %v4788
        %4940 = vmatpush.msra.mxu0 %v4787
        %4941 = vmatpush.msra.mxu0 %v4786
        %4942 = vmatmul.f32.gmra.mxu0 %v4705
        %v4943 = vpop.f32.mrf.mxu0
        %v4944 = vadd.f32 0.0, %v4943
        %4945 = vmatmul.f32.gmra.mxu0 %v4707
        %v4946 = vpop.f32.mrf.mxu0
        %v4947 = vadd.f32 0.0, %v4946
        %4948 = vmatmul.f32.gmra.mxu0 %v4709
        %v4949 = vpop.f32.mrf.mxu0
        %v4950 = vadd.f32 0.0, %v4949
        %4951 = vmatmul.f32.gmra.mxu0 %v4711
        %v4952 = vpop.f32.mrf.mxu0
        %v4953 = vadd.f32 0.0, %v4952
        %4954 = vmatmul.f32.gmra.mxu0 %v4713
        %v4955 = vpop.f32.mrf.mxu0
        %v4956 = vadd.f32 0.0, %v4955
        %4957 = vmatmul.f32.gmra.mxu0 %v4715
        %v4958 = vpop.f32.mrf.mxu0
        %v4959 = vadd.f32 0.0, %v4958
        %4960 = vmatmul.f32.gmra.mxu0 %v4717
        %v4961 = vpop.f32.mrf.mxu0
        %v4962 = vadd.f32 0.0, %v4961
        %4963 = vmatmul.f32.gmra.mxu0 %v4719
        %v4964 = vpop.f32.mrf.mxu0
        %v4965 = vadd.f32 0.0, %v4964
        %4966 = vmatmul.f32.gmra.mxu0 %v4721
        %v4967 = vpop.f32.mrf.mxu0
        %v4968 = vadd.f32 0.0, %v4967
        %4969 = vmatmul.f32.gmra.mxu0 %v4723
        %v4970 = vpop.f32.mrf.mxu0
        %v4971 = vadd.f32 0.0, %v4970
        %4972 = vmatmul.f32.gmra.mxu0 %v4725
        %v4973 = vpop.f32.mrf.mxu0
        %v4974 = vadd.f32 0.0, %v4973
        %4975 = vmatmul.f32.gmra.mxu0 %v4727
        %v4976 = vpop.f32.mrf.mxu0
        %v4977 = vadd.f32 0.0, %v4976
        %4978 = vmatmul.f32.gmra.mxu0 %v4729
        %v4979 = vpop.f32.mrf.mxu0
        %v4980 = vadd.f32 0.0, %v4979
        %4981 = vmatmul.f32.gmra.mxu0 %v4731
        %v4982 = vpop.f32.mrf.mxu0
        %v4983 = vadd.f32 0.0, %v4982
        %4984 = vmatmul.f32.gmra.mxu0 %v4733
        %v4985 = vpop.f32.mrf.mxu0
        %v4986 = vadd.f32 0.0, %v4985
        %4987 = vmatmul.f32.gmra.mxu0 %v4735
        %v4988 = vpop.f32.mrf.mxu0
        %v4989 = vadd.f32 0.0, %v4988
        %4990 = vmatmul.f32.gmra.mxu0 %v4737
        %v4991 = vpop.f32.mrf.mxu0
        %v4992 = vadd.f32 0.0, %v4991
        %4993 = vmatmul.f32.gmra.mxu0 %v4739
        %v4994 = vpop.f32.mrf.mxu0
        %v4995 = vadd.f32 0.0, %v4994
        %4996 = vmatmul.f32.gmra.mxu0 %v4741
        %v4997 = vpop.f32.mrf.mxu0
        %v4998 = vadd.f32 0.0, %v4997
        %4999 = vmatmul.f32.gmra.mxu0 %v4743
        %v5000 = vpop.f32.mrf.mxu0
        %v5001 = vadd.f32 0.0, %v5000
        %5002 = vmatmul.f32.gmra.mxu0 %v4745
        %v5003 = vpop.f32.mrf.mxu0
        %v5004 = vadd.f32 0.0, %v5003
        %5005 = vmatmul.f32.gmra.mxu0 %v4747
        %v5006 = vpop.f32.mrf.mxu0
        %v5007 = vadd.f32 0.0, %v5006
        %5008 = vmatmul.f32.gmra.mxu0 %v4749
        %v5009 = vpop.f32.mrf.mxu0
        %v5010 = vadd.f32 0.0, %v5009
        %5011 = vmatmul.f32.gmra.mxu0 %v4751
        %v5012 = vpop.f32.mrf.mxu0
        %v5013 = vadd.f32 0.0, %v5012
        %5014 = vmatmul.f32.gmra.mxu0 %v4753
        %v5015 = vpop.f32.mrf.mxu0
        %v5016 = vadd.f32 0.0, %v5015
        %5017 = vmatmul.f32.gmra.mxu0 %v4755
        %v5018 = vpop.f32.mrf.mxu0
        %v5019 = vadd.f32 0.0, %v5018
        %5020 = vmatmul.f32.gmra.mxu0 %v4757
        %v5021 = vpop.f32.mrf.mxu0
        %v5022 = vadd.f32 0.0, %v5021
        %5023 = vmatmul.f32.gmra.mxu0 %v4759
        %v5024 = vpop.f32.mrf.mxu0
        %v5025 = vadd.f32 0.0, %v5024
        %5026 = vmatmul.f32.gmra.mxu0 %v4761
        %v5027 = vpop.f32.mrf.mxu0
        %v5028 = vadd.f32 0.0, %v5027
        %5029 = vmatmul.f32.gmra.mxu0 %v4763
        %v5030 = vpop.f32.mrf.mxu0
        %v5031 = vadd.f32 0.0, %v5030
        %5032 = vmatmul.f32.gmra.mxu0 %v4765
        %v5033 = vpop.f32.mrf.mxu0
        %v5034 = vadd.f32 0.0, %v5033
        %5035 = vmatmul.f32.gmra.mxu0 %v4767
        %v5036 = vpop.f32.mrf.mxu0
        %v5037 = vadd.f32 0.0, %v5036
        %5038 = vmatmul.f32.gmra.mxu0 %v4769
        %v5039 = vpop.f32.mrf.mxu0
        %v5040 = vadd.f32 0.0, %v5039
        %5041 = vmatmul.f32.gmra.mxu0 %v4771
        %v5042 = vpop.f32.mrf.mxu0
        %v5043 = vadd.f32 0.0, %v5042
        %5044 = vmatmul.f32.gmra.mxu0 %v4773
        %v5045 = vpop.f32.mrf.mxu0
        %v5046 = vadd.f32 0.0, %v5045
        %5047 = vmatmul.f32.gmra.mxu0 %v4775
        %v5048 = vpop.f32.mrf.mxu0
        %v5049 = vadd.f32 0.0, %v5048
        %5050 = vmatmul.f32.gmra.mxu0 %v4777
        %v5051 = vpop.f32.mrf.mxu0
        %v5052 = vadd.f32 0.0, %v5051
        %5053 = vmatmul.f32.gmra.mxu0 %v4779
        %v5054 = vpop.f32.mrf.mxu0
        %v5055 = vadd.f32 0.0, %v5054
        %5056 = vmatmul.f32.gmra.mxu0 %v4781
        %v5057 = vpop.f32.mrf.mxu0
        %v5058 = vadd.f32 0.0, %v5057
        %5059 = vmatmul.f32.gmra.mxu0 %v4783
        %v5060 = vpop.f32.mrf.mxu0
        %v5061 = vadd.f32 0.0, %v5060
        %5062 = vdwg.mxu0
        %5063 = vmatpush.msra.mxu0 0.0
        %5064 = vmatpush.msra.mxu0 0.0
        %5065 = vmatpush.msra.mxu0 0.0
        %5066 = vmatpush.msra.mxu0 0.0
        %5067 = vmatpush.msra.mxu0 0.0
        %5068 = vmatpush.msra.mxu0 0.0
        %5069 = vmatpush.msra.mxu0 0.0
        %5070 = vmatpush.msra.mxu0 0.0
        %5071 = vmatpush.msra.mxu0 0.0
        %5072 = vmatpush.msra.mxu0 0.0
        %5073 = vmatpush.msra.mxu0 0.0
        %5074 = vmatpush.msra.mxu0 0.0
        %5075 = vmatpush.msra.mxu0 %v4805
        %5076 = vmatpush.msra.mxu0 %v4804
        %5077 = vmatpush.msra.mxu0 %v4803
        %5078 = vmatpush.msra.mxu0 %v4802
        %5079 = vmatmul.f32.gmra.mxu0 %v4807
        %v5080 = vpop.f32.mrf.mxu0
        %v5081 = vadd.f32 %v4944, %v5080
        %5082 = vmatmul.f32.gmra.mxu0 %v4810
        %v5083 = vpop.f32.mrf.mxu0
        %v5084 = vadd.f32 %v4947, %v5083
        %5085 = vmatmul.f32.gmra.mxu0 %v4813
        %v5086 = vpop.f32.mrf.mxu0
        %v5087 = vadd.f32 %v4950, %v5086
        %5088 = vmatmul.f32.gmra.mxu0 %v4816
        %v5089 = vpop.f32.mrf.mxu0
        %v5090 = vadd.f32 %v4953, %v5089
        %5091 = vmatmul.f32.gmra.mxu0 %v4819
        %v5092 = vpop.f32.mrf.mxu0
        %v5093 = vadd.f32 %v4956, %v5092
        %5094 = vmatmul.f32.gmra.mxu0 %v4822
        %v5095 = vpop.f32.mrf.mxu0
        %v5096 = vadd.f32 %v4959, %v5095
        %5097 = vmatmul.f32.gmra.mxu0 %v4825
        %v5098 = vpop.f32.mrf.mxu0
        %v5099 = vadd.f32 %v4962, %v5098
        %5100 = vmatmul.f32.gmra.mxu0 %v4828
        %v5101 = vpop.f32.mrf.mxu0
        %v5102 = vadd.f32 %v4965, %v5101
        %5103 = vmatmul.f32.gmra.mxu0 %v4831
        %v5104 = vpop.f32.mrf.mxu0
        %v5105 = vadd.f32 %v4968, %v5104
        %5106 = vmatmul.f32.gmra.mxu0 %v4834
        %v5107 = vpop.f32.mrf.mxu0
        %v5108 = vadd.f32 %v4971, %v5107
        %5109 = vmatmul.f32.gmra.mxu0 %v4837
        %v5110 = vpop.f32.mrf.mxu0
        %v5111 = vadd.f32 %v4974, %v5110
        %5112 = vmatmul.f32.gmra.mxu0 %v4840
        %v5113 = vpop.f32.mrf.mxu0
        %v5114 = vadd.f32 %v4977, %v5113
        %5115 = vmatmul.f32.gmra.mxu0 %v4843
        %v5116 = vpop.f32.mrf.mxu0
        %v5117 = vadd.f32 %v4980, %v5116
        %5118 = vmatmul.f32.gmra.mxu0 %v4846
        %v5119 = vpop.f32.mrf.mxu0
        %v5120 = vadd.f32 %v4983, %v5119
        %5121 = vmatmul.f32.gmra.mxu0 %v4849
        %v5122 = vpop.f32.mrf.mxu0
        %v5123 = vadd.f32 %v4986, %v5122
        %5124 = vmatmul.f32.gmra.mxu0 %v4852
        %v5125 = vpop.f32.mrf.mxu0
        %v5126 = vadd.f32 %v4989, %v5125
        %5127 = vmatmul.f32.gmra.mxu0 %v4855
        %v5128 = vpop.f32.mrf.mxu0
        %v5129 = vadd.f32 %v4992, %v5128
        %5130 = vmatmul.f32.gmra.mxu0 %v4858
        %v5131 = vpop.f32.mrf.mxu0
        %v5132 = vadd.f32 %v4995, %v5131
        %5133 = vmatmul.f32.gmra.mxu0 %v4861
        %v5134 = vpop.f32.mrf.mxu0
        %v5135 = vadd.f32 %v4998, %v5134
        %5136 = vmatmul.f32.gmra.mxu0 %v4864
        %v5137 = vpop.f32.mrf.mxu0
        %v5138 = vadd.f32 %v5001, %v5137
        %5139 = vmatmul.f32.gmra.mxu0 %v4867
        %v5140 = vpop.f32.mrf.mxu0
        %v5141 = vadd.f32 %v5004, %v5140
        %5142 = vmatmul.f32.gmra.mxu0 %v4870
        %v5143 = vpop.f32.mrf.mxu0
        %v5144 = vadd.f32 %v5007, %v5143
        %5145 = vmatmul.f32.gmra.mxu0 %v4873
        %v5146 = vpop.f32.mrf.mxu0
        %v5147 = vadd.f32 %v5010, %v5146
        %5148 = vmatmul.f32.gmra.mxu0 %v4876
        %v5149 = vpop.f32.mrf.mxu0
        %v5150 = vadd.f32 %v5013, %v5149
        %5151 = vmatmul.f32.gmra.mxu0 %v4879
        %v5152 = vpop.f32.mrf.mxu0
        %v5153 = vadd.f32 %v5016, %v5152
        %5154 = vmatmul.f32.gmra.mxu0 %v4882
        %v5155 = vpop.f32.mrf.mxu0
        %v5156 = vadd.f32 %v5019, %v5155
        %5157 = vmatmul.f32.gmra.mxu0 %v4885
        %v5158 = vpop.f32.mrf.mxu0
        %v5159 = vadd.f32 %v5022, %v5158
        %5160 = vmatmul.f32.gmra.mxu0 %v4888
        %v5161 = vpop.f32.mrf.mxu0
        %v5162 = vadd.f32 %v5025, %v5161
        %5163 = vmatmul.f32.gmra.mxu0 %v4891
        %v5164 = vpop.f32.mrf.mxu0
        %v5165 = vadd.f32 %v5028, %v5164
        %5166 = vmatmul.f32.gmra.mxu0 %v4894
        %v5167 = vpop.f32.mrf.mxu0
        %v5168 = vadd.f32 %v5031, %v5167
        %5169 = vmatmul.f32.gmra.mxu0 %v4897
        %v5170 = vpop.f32.mrf.mxu0
        %v5171 = vadd.f32 %v5034, %v5170
        %5172 = vmatmul.f32.gmra.mxu0 %v4900
        %v5173 = vpop.f32.mrf.mxu0
        %v5174 = vadd.f32 %v5037, %v5173
        %5175 = vmatmul.f32.gmra.mxu0 %v4903
        %v5176 = vpop.f32.mrf.mxu0
        %v5177 = vadd.f32 %v5040, %v5176
        %5178 = vmatmul.f32.gmra.mxu0 %v4906
        %v5179 = vpop.f32.mrf.mxu0
        %v5180 = vadd.f32 %v5043, %v5179
        %5181 = vmatmul.f32.gmra.mxu0 %v4909
        %v5182 = vpop.f32.mrf.mxu0
        %v5183 = vadd.f32 %v5046, %v5182
        %5184 = vmatmul.f32.gmra.mxu0 %v4912
        %v5185 = vpop.f32.mrf.mxu0
        %v5186 = vadd.f32 %v5049, %v5185
        %5187 = vmatmul.f32.gmra.mxu0 %v4915
        %v5188 = vpop.f32.mrf.mxu0
        %v5189 = vadd.f32 %v5052, %v5188
        %5190 = vmatmul.f32.gmra.mxu0 %v4918
        %v5191 = vpop.f32.mrf.mxu0
        %v5192 = vadd.f32 %v5055, %v5191
        %5193 = vmatmul.f32.gmra.mxu0 %v4921
        %v5194 = vpop.f32.mrf.mxu0
        %v5195 = vadd.f32 %v5058, %v5194
        %5196 = vmatmul.f32.gmra.mxu0 %v4924
        %v5197 = vpop.f32.mrf.mxu0
        %v5198 = vadd.f32 %v5061, %v5197
        %5199 = vdwg.mxu0
        %v5200 = vadd.f32 %v4586, %v5081
        %v5201 = vadd.f32 %v4589, %v5084
        %v5202 = vadd.f32 %v4592, %v5087
        %v5203 = vadd.f32 %v4595, %v5090
        %v5204 = vadd.f32 %v4598, %v5093
        %v5205 = vadd.f32 %v4601, %v5096
        %v5206 = vadd.f32 %v4604, %v5099
        %v5207 = vadd.f32 %v4607, %v5102
        %v5208 = vadd.f32 %v4610, %v5105
        %v5209 = vadd.f32 %v4613, %v5108
        %v5210 = vadd.f32 %v4616, %v5111
        %v5211 = vadd.f32 %v4619, %v5114
        %v5212 = vadd.f32 %v4622, %v5117
        %v5213 = vadd.f32 %v4625, %v5120
        %v5214 = vadd.f32 %v4628, %v5123
        %v5215 = vadd.f32 %v4631, %v5126
        %v5216 = vadd.f32 %v4634, %v5129
        %v5217 = vadd.f32 %v4637, %v5132
        %v5218 = vadd.f32 %v4640, %v5135
        %v5219 = vadd.f32 %v4643, %v5138
        %v5220 = vadd.f32 %v4646, %v5141
        %v5221 = vadd.f32 %v4649, %v5144
        %v5222 = vadd.f32 %v4652, %v5147
        %v5223 = vadd.f32 %v4655, %v5150
        %v5224 = vadd.f32 %v4658, %v5153
        %v5225 = vadd.f32 %v4661, %v5156
        %v5226 = vadd.f32 %v4664, %v5159
        %v5227 = vadd.f32 %v4667, %v5162
        %v5228 = vadd.f32 %v4670, %v5165
        %v5229 = vadd.f32 %v4673, %v5168
        %v5230 = vadd.f32 %v4676, %v5171
        %v5231 = vadd.f32 %v4679, %v5174
        %v5232 = vadd.f32 %v4682, %v5177
        %v5233 = vadd.f32 %v4685, %v5180
        %v5234 = vadd.f32 %v4688, %v5183
        %v5235 = vadd.f32 %v4691, %v5186
        %v5236 = vadd.f32 %v4694, %v5189
        %v5237 = vadd.f32 %v4697, %v5192
        %v5238 = vadd.f32 %v4700, %v5195
        %v5239 = vadd.f32 %v4703, %v5198
        %v5240 = vld [vmem:[#allocation4 + $0x70] sm:$0xf0]
        %v5241 = vld [vmem:[#allocation4 + $0x78] sm:$0xf0]
        %v5242 = vld [vmem:[#allocation4 + $0x80] sm:$0xff]
        %v5243 = vld [vmem:[#allocation4 + $0x88] sm:$0xff]
        %v5244 = vld [vmem:[#allocation4 + $0x90] sm:$0xff]
        %v5245 = vld [vmem:[#allocation4 + $0x98] sm:$0xff]
        %v5246 = vld [vmem:[#allocation4 + $0xa0] sm:$0xff]
        %v5247 = vld [vmem:[#allocation4 + $0xa8] sm:$0xff]
        %v5248 = vld [vmem:[#allocation4 + $0xb0] sm:$0xff]
        %v5249 = vld [vmem:[#allocation4 + $0xb8] sm:$0xff]
        %v5250 = vld [vmem:[#allocation4 + $0xc0] sm:$0xff]
        %v5251 = vld [vmem:[#allocation4 + $0xc8] sm:$0xff]
        %v5252 = vld [vmem:[#allocation4 + $0xd0] sm:$0xff]
        %v5253 = vld [vmem:[#allocation4 + $0xd8] sm:$0xff]
        %v5254 = vld [vmem:[#allocation4 + $0xe0] sm:$0xff]
        %v5255 = vld [vmem:[#allocation4 + $0xe8] sm:$0xff]
        %v5256 = vld [vmem:[#allocation4 + $0xf0] sm:$0xff]
        %v5257 = vld [vmem:[#allocation4 + $0xf8] sm:$0xff]
        %v5258 = vld [vmem:[#allocation4 + $0x100] sm:$0xff]
        %v5259 = vld [vmem:[#allocation4 + $0x108] sm:$0xff]
        %v5260 = vld [vmem:[#allocation4 + $0x110] sm:$0xff]
        %v5261 = vld [vmem:[#allocation4 + $0x118] sm:$0xff]
        %v5262 = vld [vmem:[#allocation4 + $0x120] sm:$0xff]
        %v5263 = vld [vmem:[#allocation4 + $0x128] sm:$0xff]
        %v5264 = vld [vmem:[#allocation4 + $0x130] sm:$0xff]
        %v5265 = vld [vmem:[#allocation4 + $0x138] sm:$0xff]
        %v5266 = vld [vmem:[#allocation4 + $0x140] sm:$0xff]
        %v5267 = vld [vmem:[#allocation4 + $0x148] sm:$0xff]
        %v5268 = vld [vmem:[#allocation4 + $0x150] sm:$0xff]
        %v5269 = vld [vmem:[#allocation4 + $0x158] sm:$0xff]
        %v5270 = vld [vmem:[#allocation4 + $0x160] sm:$0xff]
        %v5271 = vld [vmem:[#allocation4 + $0x168] sm:$0xff]
        %v5272 = vld [vmem:[#allocation4 + $0x170] sm:$0xff]
        %v5273 = vld [vmem:[#allocation4 + $0x178] sm:$0xff]
        %v5274 = vld [vmem:[#allocation4 + $0x180] sm:$0xff]
        %v5275 = vld [vmem:[#allocation4 + $0x188] sm:$0xff]
        %v5276 = vld [vmem:[#allocation4 + $0x190] sm:$0xff]
        %v5277 = vld [vmem:[#allocation4 + $0x198] sm:$0xff]
        %v5278 = vld [vmem:[#allocation4 + $0x1a0] sm:$0xff]
        %v5279 = vld [vmem:[#allocation4 + $0x1a8] sm:$0xff]
        %v5280 = vld [vmem:[#allocation4 + $0x1b0] sm:$0xff]
        %v5281 = vld [vmem:[#allocation4 + $0x1b8] sm:$0xff]
        %v5282 = vld [vmem:[#allocation4 + $0x1c0] sm:$0xff]
        %v5283 = vld [vmem:[#allocation4 + $0x1c8] sm:$0xff]
        %v5284 = vld [vmem:[#allocation4 + $0x1d0] sm:$0xff]
        %v5285 = vld [vmem:[#allocation4 + $0x1d8] sm:$0xff]
        %v5286 = vld [vmem:[#allocation4 + $0x1e0] sm:$0xff]
        %v5287 = vld [vmem:[#allocation4 + $0x1e8] sm:$0xff]
        %v5288 = vld [vmem:[#allocation4 + $0x1f0] sm:$0xff]
        %v5289 = vld [vmem:[#allocation4 + $0x1f8] sm:$0xff]
        %v5290 = vld [vmem:[#allocation4 + $0x200] sm:$0xff]
        %v5291 = vld [vmem:[#allocation4 + $0x208] sm:$0xff]
        %v5292 = vld [vmem:[#allocation4 + $0x210] sm:$0xff]
        %v5293 = vld [vmem:[#allocation4 + $0x218] sm:$0xff]
        %v5294 = vld [vmem:[#allocation4 + $0x220] sm:$0xff]
        %v5295 = vld [vmem:[#allocation4 + $0x228] sm:$0xff]
        %v5296 = vld [vmem:[#allocation4 + $0x230] sm:$0xff]
        %v5297 = vld [vmem:[#allocation4 + $0x238] sm:$0xff]
        %v5298 = vld [vmem:[#allocation4 + $0x240] sm:$0xff]
        %v5299 = vld [vmem:[#allocation4 + $0x248] sm:$0xff]
        %v5300 = vld [vmem:[#allocation4 + $0x250] sm:$0xff]
        %v5301 = vld [vmem:[#allocation4 + $0x258] sm:$0xff]
        %v5302 = vld [vmem:[#allocation4 + $0x260] sm:$0xff]
        %v5303 = vld [vmem:[#allocation4 + $0x268] sm:$0xff]
        %v5304 = vld [vmem:[#allocation4 + $0x270] sm:$0xff]
        %v5305 = vld [vmem:[#allocation4 + $0x278] sm:$0xff]
        %v5306 = vld [vmem:[#allocation4 + $0x280] sm:$0xff]
        %v5307 = vld [vmem:[#allocation4 + $0x288] sm:$0xff]
        %v5308 = vld [vmem:[#allocation4 + $0x290] sm:$0xff]
        %v5309 = vld [vmem:[#allocation4 + $0x298] sm:$0xff]
        %v5310 = vld [vmem:[#allocation4 + $0x2a0] sm:$0xff]
        %v5311 = vld [vmem:[#allocation4 + $0x2a8] sm:$0xff]
        %v5312 = vld [vmem:[#allocation4 + $0x2b0] sm:$0xff]
        %v5313 = vld [vmem:[#allocation4 + $0x2b8] sm:$0xff]
        %v5314 = vld [vmem:[#allocation4 + $0x2c0] sm:$0xff]
        %v5315 = vld [vmem:[#allocation4 + $0x2c8] sm:$0xff]
        %v5316 = vld [vmem:[#allocation4 + $0x2d0] sm:$0xff]
        %v5317 = vld [vmem:[#allocation4 + $0x2d8] sm:$0xff]
        %v5318 = vld [vmem:[#allocation4 + $0x2e0] sm:$0xff]
        %v5319 = vld [vmem:[#allocation4 + $0x2e8] sm:$0xff]
        %v5320 = vld [vmem:[#allocation4 + $0x2f0] sm:$0xf]
        %v5321 = vld [vmem:[#allocation4 + $0x2f8] sm:$0xf]
        %s5322 = scalar_lea.vmem %s3, 480
        %v5323 = vld [vmem:[%s5322] sm:$0xff]
        %v5324 = vld [vmem:[%s5322 + $0x8] sm:$0xff]
        %v5325 = vld [vmem:[%s5322 + $0x10] sm:$0xff]
        %v5326 = vld [vmem:[%s5322 + $0x18] sm:$0xff]
        %v5327 = vld [vmem:[%s5322 + $0x20] sm:$0xff]
        %v5328 = vld [vmem:[%s5322 + $0x28] sm:$0xff]
        %v5329 = vld [vmem:[%s5322 + $0x30] sm:$0xff]
        %v5330 = vld [vmem:[%s5322 + $0x38] sm:$0xff]
        %v5331 = vld [vmem:[%s5322 + $0x40] sm:$0xff]
        %v5332 = vld [vmem:[%s5322 + $0x48] sm:$0xff]
        %v5333 = vld [vmem:[%s5322 + $0x50] sm:$0xff]
        %v5334 = vld [vmem:[%s5322 + $0x58] sm:$0xff]
        %v5335 = vld [vmem:[%s5322 + $0x60] sm:$0xff]
        %v5336 = vld [vmem:[%s5322 + $0x68] sm:$0xff]
        %v5337 = vld [vmem:[%s5322 + $0x70] sm:$0xff]
        %v5338 = vld [vmem:[%s5322 + $0x78] sm:$0xff]
        %v5339 = vld [vmem:[%s5322 + $0x80] sm:$0xff]
        %v5340 = vld [vmem:[%s5322 + $0x88] sm:$0xff]
        %v5341 = vld [vmem:[%s5322 + $0x90] sm:$0xff]
        %v5342 = vld [vmem:[%s5322 + $0x98] sm:$0xff]
        %v5425 = vrot.slane %v5240, 4
        %v5426 = vrot.slane %v5242, 4
        %v5427 = vsel %vm1836, %v5425, %v5426
        %v5428 = vrot.slane %v5241, 4
        %v5429 = vrot.slane %v5243, 4
        %v5430 = vsel %vm1836, %v5428, %v5429
        %v5431 = vrot.slane %v5244, 4
        %v5432 = vsel %vm1836, %v5426, %v5431
        %v5433 = vrot.slane %v5245, 4
        %v5434 = vsel %vm1836, %v5429, %v5433
        %v5435 = vrot.slane %v5246, 4
        %v5436 = vsel %vm1836, %v5431, %v5435
        %v5437 = vrot.slane %v5247, 4
        %v5438 = vsel %vm1836, %v5433, %v5437
        %v5439 = vrot.slane %v5248, 4
        %v5440 = vsel %vm1836, %v5435, %v5439
        %v5441 = vrot.slane %v5249, 4
        %v5442 = vsel %vm1836, %v5437, %v5441
        %v5443 = vrot.slane %v5250, 4
        %v5444 = vsel %vm1836, %v5439, %v5443
        %v5445 = vrot.slane %v5251, 4
        %v5446 = vsel %vm1836, %v5441, %v5445
        %v5447 = vrot.slane %v5252, 4
        %v5448 = vsel %vm1836, %v5443, %v5447
        %v5449 = vrot.slane %v5253, 4
        %v5450 = vsel %vm1836, %v5445, %v5449
        %v5451 = vrot.slane %v5254, 4
        %v5452 = vsel %vm1836, %v5447, %v5451
        %v5453 = vrot.slane %v5255, 4
        %v5454 = vsel %vm1836, %v5449, %v5453
        %v5455 = vrot.slane %v5256, 4
        %v5456 = vsel %vm1836, %v5451, %v5455
        %v5457 = vrot.slane %v5257, 4
        %v5458 = vsel %vm1836, %v5453, %v5457
        %v5459 = vrot.slane %v5258, 4
        %v5460 = vsel %vm1836, %v5455, %v5459
        %v5461 = vrot.slane %v5259, 4
        %v5462 = vsel %vm1836, %v5457, %v5461
        %v5463 = vrot.slane %v5260, 4
        %v5464 = vsel %vm1836, %v5459, %v5463
        %v5465 = vrot.slane %v5261, 4
        %v5466 = vsel %vm1836, %v5461, %v5465
        %v5467 = vrot.slane %v5262, 4
        %v5468 = vsel %vm1836, %v5463, %v5467
        %v5469 = vrot.slane %v5263, 4
        %v5470 = vsel %vm1836, %v5465, %v5469
        %v5471 = vrot.slane %v5264, 4
        %v5472 = vsel %vm1836, %v5467, %v5471
        %v5473 = vrot.slane %v5265, 4
        %v5474 = vsel %vm1836, %v5469, %v5473
        %v5475 = vrot.slane %v5266, 4
        %v5476 = vsel %vm1836, %v5471, %v5475
        %v5477 = vrot.slane %v5267, 4
        %v5478 = vsel %vm1836, %v5473, %v5477
        %v5479 = vrot.slane %v5268, 4
        %v5480 = vsel %vm1836, %v5475, %v5479
        %v5481 = vrot.slane %v5269, 4
        %v5482 = vsel %vm1836, %v5477, %v5481
        %v5483 = vrot.slane %v5270, 4
        %v5484 = vsel %vm1836, %v5479, %v5483
        %v5485 = vrot.slane %v5271, 4
        %v5486 = vsel %vm1836, %v5481, %v5485
        %v5487 = vrot.slane %v5272, 4
        %v5488 = vsel %vm1836, %v5483, %v5487
        %v5489 = vrot.slane %v5273, 4
        %v5490 = vsel %vm1836, %v5485, %v5489
        %v5491 = vrot.slane %v5274, 4
        %v5492 = vsel %vm1836, %v5487, %v5491
        %v5493 = vrot.slane %v5275, 4
        %v5494 = vsel %vm1836, %v5489, %v5493
        %v5495 = vrot.slane %v5276, 4
        %v5496 = vsel %vm1836, %v5491, %v5495
        %v5497 = vrot.slane %v5277, 4
        %v5498 = vsel %vm1836, %v5493, %v5497
        %v5499 = vrot.slane %v5278, 4
        %v5500 = vsel %vm1836, %v5495, %v5499
        %v5501 = vrot.slane %v5279, 4
        %v5502 = vsel %vm1836, %v5497, %v5501
        %v5503 = vrot.slane %v5280, 4
        %v5504 = vsel %vm1836, %v5499, %v5503
        %v5505 = vrot.slane %v5281, 4
        %v5506 = vsel %vm1836, %v5501, %v5505
        %v5507 = vrot.slane %v5282, 4
        %v5508 = vsel %vm1836, %v5503, %v5507
        %v5509 = vrot.slane %v5283, 4
        %v5510 = vsel %vm1836, %v5505, %v5509
        %v5511 = vrot.slane %v5284, 4
        %v5512 = vsel %vm1836, %v5507, %v5511
        %v5513 = vrot.slane %v5285, 4
        %v5514 = vsel %vm1836, %v5509, %v5513
        %v5515 = vrot.slane %v5286, 4
        %v5516 = vsel %vm1836, %v5511, %v5515
        %v5517 = vrot.slane %v5287, 4
        %v5518 = vsel %vm1836, %v5513, %v5517
        %v5519 = vrot.slane %v5288, 4
        %v5520 = vsel %vm1836, %v5515, %v5519
        %v5521 = vrot.slane %v5289, 4
        %v5522 = vsel %vm1836, %v5517, %v5521
        %v5523 = vrot.slane %v5290, 4
        %v5524 = vsel %vm1836, %v5519, %v5523
        %v5525 = vrot.slane %v5291, 4
        %v5526 = vsel %vm1836, %v5521, %v5525
        %v5527 = vrot.slane %v5292, 4
        %v5528 = vsel %vm1836, %v5523, %v5527
        %v5529 = vrot.slane %v5293, 4
        %v5530 = vsel %vm1836, %v5525, %v5529
        %v5531 = vrot.slane %v5294, 4
        %v5532 = vsel %vm1836, %v5527, %v5531
        %v5533 = vrot.slane %v5295, 4
        %v5534 = vsel %vm1836, %v5529, %v5533
        %v5535 = vrot.slane %v5296, 4
        %v5536 = vsel %vm1836, %v5531, %v5535
        %v5537 = vrot.slane %v5297, 4
        %v5538 = vsel %vm1836, %v5533, %v5537
        %v5539 = vrot.slane %v5298, 4
        %v5540 = vsel %vm1836, %v5535, %v5539
        %v5541 = vrot.slane %v5299, 4
        %v5542 = vsel %vm1836, %v5537, %v5541
        %v5543 = vrot.slane %v5300, 4
        %v5544 = vsel %vm1836, %v5539, %v5543
        %v5545 = vrot.slane %v5301, 4
        %v5546 = vsel %vm1836, %v5541, %v5545
        %v5547 = vrot.slane %v5302, 4
        %v5548 = vsel %vm1836, %v5543, %v5547
        %v5549 = vrot.slane %v5303, 4
        %v5550 = vsel %vm1836, %v5545, %v5549
        %v5551 = vrot.slane %v5304, 4
        %v5552 = vsel %vm1836, %v5547, %v5551
        %v5553 = vrot.slane %v5305, 4
        %v5554 = vsel %vm1836, %v5549, %v5553
        %v5555 = vrot.slane %v5306, 4
        %v5556 = vsel %vm1836, %v5551, %v5555
        %v5557 = vrot.slane %v5307, 4
        %v5558 = vsel %vm1836, %v5553, %v5557
        %v5559 = vrot.slane %v5308, 4
        %v5560 = vsel %vm1836, %v5555, %v5559
        %v5561 = vrot.slane %v5309, 4
        %v5562 = vsel %vm1836, %v5557, %v5561
        %v5563 = vrot.slane %v5310, 4
        %v5564 = vsel %vm1836, %v5559, %v5563
        %v5565 = vrot.slane %v5311, 4
        %v5566 = vsel %vm1836, %v5561, %v5565
        %v5567 = vrot.slane %v5312, 4
        %v5568 = vsel %vm1836, %v5563, %v5567
        %v5569 = vrot.slane %v5313, 4
        %v5570 = vsel %vm1836, %v5565, %v5569
        %v5571 = vrot.slane %v5314, 4
        %v5572 = vsel %vm1836, %v5567, %v5571
        %v5573 = vrot.slane %v5315, 4
        %v5574 = vsel %vm1836, %v5569, %v5573
        %v5575 = vrot.slane %v5316, 4
        %v5576 = vsel %vm1836, %v5571, %v5575
        %v5577 = vrot.slane %v5317, 4
        %v5578 = vsel %vm1836, %v5573, %v5577
        %v5579 = vrot.slane %v5318, 4
        %v5580 = vsel %vm1836, %v5575, %v5579
        %v5581 = vrot.slane %v5319, 4
        %v5582 = vsel %vm1836, %v5577, %v5581
        %v5583 = vrot.slane %v5320, 4
        %v5584 = vsel %vm1836, %v5579, %v5583
        %v5585 = vrot.slane %v5321, 4
        %v5586 = vsel %vm1836, %v5581, %v5585
        %v5627 = vsel %vm385, %v5430, 0
        %v5629 = vsel %vm385, %v5434, 0
        %v5631 = vsel %vm385, %v5438, 0
        %v5633 = vsel %vm385, %v5442, 0
        %v5635 = vsel %vm385, %v5446, 0
        %v5637 = vsel %vm385, %v5450, 0
        %v5639 = vsel %vm385, %v5454, 0
        %v5641 = vsel %vm385, %v5458, 0
        %v5643 = vsel %vm385, %v5462, 0
        %v5645 = vsel %vm385, %v5466, 0
        %v5647 = vsel %vm385, %v5470, 0
        %v5649 = vsel %vm385, %v5474, 0
        %v5651 = vsel %vm385, %v5478, 0
        %v5653 = vsel %vm385, %v5482, 0
        %v5655 = vsel %vm385, %v5486, 0
        %v5657 = vsel %vm385, %v5490, 0
        %v5659 = vsel %vm385, %v5494, 0
        %v5661 = vsel %vm385, %v5498, 0
        %v5663 = vsel %vm385, %v5502, 0
        %v5665 = vsel %vm385, %v5506, 0
        %v5667 = vsel %vm385, %v5510, 0
        %v5669 = vsel %vm385, %v5514, 0
        %v5671 = vsel %vm385, %v5518, 0
        %v5673 = vsel %vm385, %v5522, 0
        %v5675 = vsel %vm385, %v5526, 0
        %v5677 = vsel %vm385, %v5530, 0
        %v5679 = vsel %vm385, %v5534, 0
        %v5681 = vsel %vm385, %v5538, 0
        %v5683 = vsel %vm385, %v5542, 0
        %v5685 = vsel %vm385, %v5546, 0
        %v5687 = vsel %vm385, %v5550, 0
        %v5689 = vsel %vm385, %v5554, 0
        %v5691 = vsel %vm385, %v5558, 0
        %v5693 = vsel %vm385, %v5562, 0
        %v5695 = vsel %vm385, %v5566, 0
        %v5697 = vsel %vm385, %v5570, 0
        %v5699 = vsel %vm385, %v5574, 0
        %v5701 = vsel %vm385, %v5578, 0
        %v5703 = vsel %vm385, %v5582, 0
        %v5705 = vsel %vm385, %v5586, 0
        %5707 = vmatpush.msra.mxu0 %v5338
        %5708 = vmatpush.msra.mxu0 %v5337
        %5709 = vmatpush.msra.mxu0 %v5336
        %5710 = vmatpush.msra.mxu0 %v5335
        %5711 = vmatpush.msra.mxu0 %v5334
        %5712 = vmatpush.msra.mxu0 %v5333
        %5713 = vmatpush.msra.mxu0 %v5332
        %5714 = vmatpush.msra.mxu0 %v5331
        %5715 = vmatpush.msra.mxu0 %v5330
        %5716 = vmatpush.msra.mxu0 %v5329
        %5717 = vmatpush.msra.mxu0 %v5328
        %5718 = vmatpush.msra.mxu0 %v5327
        %5719 = vmatpush.msra.mxu0 %v5326
        %5720 = vmatpush.msra.mxu0 %v5325
        %5721 = vmatpush.msra.mxu0 %v5324
        %5722 = vmatpush.msra.mxu0 %v5323
        %5723 = vmatmul.f32.gmra.mxu0 %v5427
        %v5724 = vpop.f32.mrf.mxu0
        %v5725 = vadd.f32 0.0, %v5724
        %5726 = vmatmul.f32.gmra.mxu0 %v5432
        %v5727 = vpop.f32.mrf.mxu0
        %v5728 = vadd.f32 0.0, %v5727
        %5729 = vmatmul.f32.gmra.mxu0 %v5436
        %v5730 = vpop.f32.mrf.mxu0
        %v5731 = vadd.f32 0.0, %v5730
        %5732 = vmatmul.f32.gmra.mxu0 %v5440
        %v5733 = vpop.f32.mrf.mxu0
        %v5734 = vadd.f32 0.0, %v5733
        %5735 = vmatmul.f32.gmra.mxu0 %v5444
        %v5736 = vpop.f32.mrf.mxu0
        %v5737 = vadd.f32 0.0, %v5736
        %5738 = vmatmul.f32.gmra.mxu0 %v5448
        %v5739 = vpop.f32.mrf.mxu0
        %v5740 = vadd.f32 0.0, %v5739
        %5741 = vmatmul.f32.gmra.mxu0 %v5452
        %v5742 = vpop.f32.mrf.mxu0
        %v5743 = vadd.f32 0.0, %v5742
        %5744 = vmatmul.f32.gmra.mxu0 %v5456
        %v5745 = vpop.f32.mrf.mxu0
        %v5746 = vadd.f32 0.0, %v5745
        %5747 = vmatmul.f32.gmra.mxu0 %v5460
        %v5748 = vpop.f32.mrf.mxu0
        %v5749 = vadd.f32 0.0, %v5748
        %5750 = vmatmul.f32.gmra.mxu0 %v5464
        %v5751 = vpop.f32.mrf.mxu0
        %v5752 = vadd.f32 0.0, %v5751
        %5753 = vmatmul.f32.gmra.mxu0 %v5468
        %v5754 = vpop.f32.mrf.mxu0
        %v5755 = vadd.f32 0.0, %v5754
        %5756 = vmatmul.f32.gmra.mxu0 %v5472
        %v5757 = vpop.f32.mrf.mxu0
        %v5758 = vadd.f32 0.0, %v5757
        %5759 = vmatmul.f32.gmra.mxu0 %v5476
        %v5760 = vpop.f32.mrf.mxu0
        %v5761 = vadd.f32 0.0, %v5760
        %5762 = vmatmul.f32.gmra.mxu0 %v5480
        %v5763 = vpop.f32.mrf.mxu0
        %v5764 = vadd.f32 0.0, %v5763
        %5765 = vmatmul.f32.gmra.mxu0 %v5484
        %v5766 = vpop.f32.mrf.mxu0
        %v5767 = vadd.f32 0.0, %v5766
        %5768 = vmatmul.f32.gmra.mxu0 %v5488
        %v5769 = vpop.f32.mrf.mxu0
        %v5770 = vadd.f32 0.0, %v5769
        %5771 = vmatmul.f32.gmra.mxu0 %v5492
        %v5772 = vpop.f32.mrf.mxu0
        %v5773 = vadd.f32 0.0, %v5772
        %5774 = vmatmul.f32.gmra.mxu0 %v5496
        %v5775 = vpop.f32.mrf.mxu0
        %v5776 = vadd.f32 0.0, %v5775
        %5777 = vmatmul.f32.gmra.mxu0 %v5500
        %v5778 = vpop.f32.mrf.mxu0
        %v5779 = vadd.f32 0.0, %v5778
        %5780 = vmatmul.f32.gmra.mxu0 %v5504
        %v5781 = vpop.f32.mrf.mxu0
        %v5782 = vadd.f32 0.0, %v5781
        %5783 = vmatmul.f32.gmra.mxu0 %v5508
        %v5784 = vpop.f32.mrf.mxu0
        %v5785 = vadd.f32 0.0, %v5784
        %5786 = vmatmul.f32.gmra.mxu0 %v5512
        %v5787 = vpop.f32.mrf.mxu0
        %v5788 = vadd.f32 0.0, %v5787
        %5789 = vmatmul.f32.gmra.mxu0 %v5516
        %v5790 = vpop.f32.mrf.mxu0
        %v5791 = vadd.f32 0.0, %v5790
        %5792 = vmatmul.f32.gmra.mxu0 %v5520
        %v5793 = vpop.f32.mrf.mxu0
        %v5794 = vadd.f32 0.0, %v5793
        %5795 = vmatmul.f32.gmra.mxu0 %v5524
        %v5796 = vpop.f32.mrf.mxu0
        %v5797 = vadd.f32 0.0, %v5796
        %5798 = vmatmul.f32.gmra.mxu0 %v5528
        %v5799 = vpop.f32.mrf.mxu0
        %v5800 = vadd.f32 0.0, %v5799
        %5801 = vmatmul.f32.gmra.mxu0 %v5532
        %v5802 = vpop.f32.mrf.mxu0
        %v5803 = vadd.f32 0.0, %v5802
        %5804 = vmatmul.f32.gmra.mxu0 %v5536
        %v5805 = vpop.f32.mrf.mxu0
        %v5806 = vadd.f32 0.0, %v5805
        %5807 = vmatmul.f32.gmra.mxu0 %v5540
        %v5808 = vpop.f32.mrf.mxu0
        %v5809 = vadd.f32 0.0, %v5808
        %5810 = vmatmul.f32.gmra.mxu0 %v5544
        %v5811 = vpop.f32.mrf.mxu0
        %v5812 = vadd.f32 0.0, %v5811
        %5813 = vmatmul.f32.gmra.mxu0 %v5548
        %v5814 = vpop.f32.mrf.mxu0
        %v5815 = vadd.f32 0.0, %v5814
        %5816 = vmatmul.f32.gmra.mxu0 %v5552
        %v5817 = vpop.f32.mrf.mxu0
        %v5818 = vadd.f32 0.0, %v5817
        %5819 = vmatmul.f32.gmra.mxu0 %v5556
        %v5820 = vpop.f32.mrf.mxu0
        %v5821 = vadd.f32 0.0, %v5820
        %5822 = vmatmul.f32.gmra.mxu0 %v5560
        %v5823 = vpop.f32.mrf.mxu0
        %v5824 = vadd.f32 0.0, %v5823
        %5825 = vmatmul.f32.gmra.mxu0 %v5564
        %v5826 = vpop.f32.mrf.mxu0
        %v5827 = vadd.f32 0.0, %v5826
        %5828 = vmatmul.f32.gmra.mxu0 %v5568
        %v5829 = vpop.f32.mrf.mxu0
        %v5830 = vadd.f32 0.0, %v5829
        %5831 = vmatmul.f32.gmra.mxu0 %v5572
        %v5832 = vpop.f32.mrf.mxu0
        %v5833 = vadd.f32 0.0, %v5832
        %5834 = vmatmul.f32.gmra.mxu0 %v5576
        %v5835 = vpop.f32.mrf.mxu0
        %v5836 = vadd.f32 0.0, %v5835
        %5837 = vmatmul.f32.gmra.mxu0 %v5580
        %v5838 = vpop.f32.mrf.mxu0
        %v5839 = vadd.f32 0.0, %v5838
        %5840 = vmatmul.f32.gmra.mxu0 %v5584
        %v5841 = vpop.f32.mrf.mxu0
        %v5842 = vadd.f32 0.0, %v5841
        %5843 = vdwg.mxu0
        %5844 = vmatpush.msra.mxu0 0.0
        %5845 = vmatpush.msra.mxu0 0.0
        %5846 = vmatpush.msra.mxu0 0.0
        %5847 = vmatpush.msra.mxu0 0.0
        %5848 = vmatpush.msra.mxu0 0.0
        %5849 = vmatpush.msra.mxu0 0.0
        %5850 = vmatpush.msra.mxu0 0.0
        %5851 = vmatpush.msra.mxu0 0.0
        %5852 = vmatpush.msra.mxu0 0.0
        %5853 = vmatpush.msra.mxu0 0.0
        %5854 = vmatpush.msra.mxu0 0.0
        %5855 = vmatpush.msra.mxu0 0.0
        %5856 = vmatpush.msra.mxu0 %v5342
        %5857 = vmatpush.msra.mxu0 %v5341
        %5858 = vmatpush.msra.mxu0 %v5340
        %5859 = vmatpush.msra.mxu0 %v5339
        %5860 = vmatmul.f32.gmra.mxu0 %v5627
        %v5861 = vpop.f32.mrf.mxu0
        %v5862 = vadd.f32 %v5725, %v5861
        %5863 = vmatmul.f32.gmra.mxu0 %v5629
        %v5864 = vpop.f32.mrf.mxu0
        %v5865 = vadd.f32 %v5728, %v5864
        %5866 = vmatmul.f32.gmra.mxu0 %v5631
        %v5867 = vpop.f32.mrf.mxu0
        %v5868 = vadd.f32 %v5731, %v5867
        %5869 = vmatmul.f32.gmra.mxu0 %v5633
        %v5870 = vpop.f32.mrf.mxu0
        %v5871 = vadd.f32 %v5734, %v5870
        %5872 = vmatmul.f32.gmra.mxu0 %v5635
        %v5873 = vpop.f32.mrf.mxu0
        %v5874 = vadd.f32 %v5737, %v5873
        %5875 = vmatmul.f32.gmra.mxu0 %v5637
        %v5876 = vpop.f32.mrf.mxu0
        %v5877 = vadd.f32 %v5740, %v5876
        %5878 = vmatmul.f32.gmra.mxu0 %v5639
        %v5879 = vpop.f32.mrf.mxu0
        %v5880 = vadd.f32 %v5743, %v5879
        %5881 = vmatmul.f32.gmra.mxu0 %v5641
        %v5882 = vpop.f32.mrf.mxu0
        %v5883 = vadd.f32 %v5746, %v5882
        %5884 = vmatmul.f32.gmra.mxu0 %v5643
        %v5885 = vpop.f32.mrf.mxu0
        %v5886 = vadd.f32 %v5749, %v5885
        %5887 = vmatmul.f32.gmra.mxu0 %v5645
        %v5888 = vpop.f32.mrf.mxu0
        %v5889 = vadd.f32 %v5752, %v5888
        %5890 = vmatmul.f32.gmra.mxu0 %v5647
        %v5891 = vpop.f32.mrf.mxu0
        %v5892 = vadd.f32 %v5755, %v5891
        %5893 = vmatmul.f32.gmra.mxu0 %v5649
        %v5894 = vpop.f32.mrf.mxu0
        %v5895 = vadd.f32 %v5758, %v5894
        %5896 = vmatmul.f32.gmra.mxu0 %v5651
        %v5897 = vpop.f32.mrf.mxu0
        %v5898 = vadd.f32 %v5761, %v5897
        %5899 = vmatmul.f32.gmra.mxu0 %v5653
        %v5900 = vpop.f32.mrf.mxu0
        %v5901 = vadd.f32 %v5764, %v5900
        %5902 = vmatmul.f32.gmra.mxu0 %v5655
        %v5903 = vpop.f32.mrf.mxu0
        %v5904 = vadd.f32 %v5767, %v5903
        %5905 = vmatmul.f32.gmra.mxu0 %v5657
        %v5906 = vpop.f32.mrf.mxu0
        %v5907 = vadd.f32 %v5770, %v5906
        %5908 = vmatmul.f32.gmra.mxu0 %v5659
        %v5909 = vpop.f32.mrf.mxu0
        %v5910 = vadd.f32 %v5773, %v5909
        %5911 = vmatmul.f32.gmra.mxu0 %v5661
        %v5912 = vpop.f32.mrf.mxu0
        %v5913 = vadd.f32 %v5776, %v5912
        %5914 = vmatmul.f32.gmra.mxu0 %v5663
        %v5915 = vpop.f32.mrf.mxu0
        %v5916 = vadd.f32 %v5779, %v5915
        %5917 = vmatmul.f32.gmra.mxu0 %v5665
        %v5918 = vpop.f32.mrf.mxu0
        %v5919 = vadd.f32 %v5782, %v5918
        %5920 = vmatmul.f32.gmra.mxu0 %v5667
        %v5921 = vpop.f32.mrf.mxu0
        %v5922 = vadd.f32 %v5785, %v5921
        %5923 = vmatmul.f32.gmra.mxu0 %v5669
        %v5924 = vpop.f32.mrf.mxu0
        %v5925 = vadd.f32 %v5788, %v5924
        %5926 = vmatmul.f32.gmra.mxu0 %v5671
        %v5927 = vpop.f32.mrf.mxu0
        %v5928 = vadd.f32 %v5791, %v5927
        %5929 = vmatmul.f32.gmra.mxu0 %v5673
        %v5930 = vpop.f32.mrf.mxu0
        %v5931 = vadd.f32 %v5794, %v5930
        %5932 = vmatmul.f32.gmra.mxu0 %v5675
        %v5933 = vpop.f32.mrf.mxu0
        %v5934 = vadd.f32 %v5797, %v5933
        %5935 = vmatmul.f32.gmra.mxu0 %v5677
        %v5936 = vpop.f32.mrf.mxu0
        %v5937 = vadd.f32 %v5800, %v5936
        %5938 = vmatmul.f32.gmra.mxu0 %v5679
        %v5939 = vpop.f32.mrf.mxu0
        %v5940 = vadd.f32 %v5803, %v5939
        %5941 = vmatmul.f32.gmra.mxu0 %v5681
        %v5942 = vpop.f32.mrf.mxu0
        %v5943 = vadd.f32 %v5806, %v5942
        %5944 = vmatmul.f32.gmra.mxu0 %v5683
        %v5945 = vpop.f32.mrf.mxu0
        %v5946 = vadd.f32 %v5809, %v5945
        %5947 = vmatmul.f32.gmra.mxu0 %v5685
        %v5948 = vpop.f32.mrf.mxu0
        %v5949 = vadd.f32 %v5812, %v5948
        %5950 = vmatmul.f32.gmra.mxu0 %v5687
        %v5951 = vpop.f32.mrf.mxu0
        %v5952 = vadd.f32 %v5815, %v5951
        %5953 = vmatmul.f32.gmra.mxu0 %v5689
        %v5954 = vpop.f32.mrf.mxu0
        %v5955 = vadd.f32 %v5818, %v5954
        %5956 = vmatmul.f32.gmra.mxu0 %v5691
        %v5957 = vpop.f32.mrf.mxu0
        %v5958 = vadd.f32 %v5821, %v5957
        %5959 = vmatmul.f32.gmra.mxu0 %v5693
        %v5960 = vpop.f32.mrf.mxu0
        %v5961 = vadd.f32 %v5824, %v5960
        %5962 = vmatmul.f32.gmra.mxu0 %v5695
        %v5963 = vpop.f32.mrf.mxu0
        %v5964 = vadd.f32 %v5827, %v5963
        %5965 = vmatmul.f32.gmra.mxu0 %v5697
        %v5966 = vpop.f32.mrf.mxu0
        %v5967 = vadd.f32 %v5830, %v5966
        %5968 = vmatmul.f32.gmra.mxu0 %v5699
        %v5969 = vpop.f32.mrf.mxu0
        %v5970 = vadd.f32 %v5833, %v5969
        %5971 = vmatmul.f32.gmra.mxu0 %v5701
        %v5972 = vpop.f32.mrf.mxu0
        %v5973 = vadd.f32 %v5836, %v5972
        %5974 = vmatmul.f32.gmra.mxu0 %v5703
        %v5975 = vpop.f32.mrf.mxu0
        %v5976 = vadd.f32 %v5839, %v5975
        %5977 = vmatmul.f32.gmra.mxu0 %v5705
        %v5978 = vpop.f32.mrf.mxu0
        %v5979 = vadd.f32 %v5842, %v5978
        %5980 = vdwg.mxu0
        %v5981 = vadd.f32 %v5200, %v5862
        %v5982 = vadd.f32 %v5201, %v5865
        %v5983 = vadd.f32 %v5202, %v5868
        %v5984 = vadd.f32 %v5203, %v5871
        %v5985 = vadd.f32 %v5204, %v5874
        %v5986 = vadd.f32 %v5205, %v5877
        %v5987 = vadd.f32 %v5206, %v5880
        %v5988 = vadd.f32 %v5207, %v5883
        %v5989 = vadd.f32 %v5208, %v5886
        %v5990 = vadd.f32 %v5209, %v5889
        %v5991 = vadd.f32 %v5210, %v5892
        %v5992 = vadd.f32 %v5211, %v5895
        %v5993 = vadd.f32 %v5212, %v5898
        %v5994 = vadd.f32 %v5213, %v5901
        %v5995 = vadd.f32 %v5214, %v5904
        %v5996 = vadd.f32 %v5215, %v5907
        %v5997 = vadd.f32 %v5216, %v5910
        %v5998 = vadd.f32 %v5217, %v5913
        %v5999 = vadd.f32 %v5218, %v5916
        %v6000 = vadd.f32 %v5219, %v5919
        %v6001 = vadd.f32 %v5220, %v5922
        %v6002 = vadd.f32 %v5221, %v5925
        %v6003 = vadd.f32 %v5222, %v5928
        %v6004 = vadd.f32 %v5223, %v5931
        %v6005 = vadd.f32 %v5224, %v5934
        %v6006 = vadd.f32 %v5225, %v5937
        %v6007 = vadd.f32 %v5226, %v5940
        %v6008 = vadd.f32 %v5227, %v5943
        %v6009 = vadd.f32 %v5228, %v5946
        %v6010 = vadd.f32 %v5229, %v5949
        %v6011 = vadd.f32 %v5230, %v5952
        %v6012 = vadd.f32 %v5231, %v5955
        %v6013 = vadd.f32 %v5232, %v5958
        %v6014 = vadd.f32 %v5233, %v5961
        %v6015 = vadd.f32 %v5234, %v5964
        %v6016 = vadd.f32 %v5235, %v5967
        %v6017 = vadd.f32 %v5236, %v5970
        %v6018 = vadd.f32 %v5237, %v5973
        %v6019 = vadd.f32 %v5238, %v5976
        %v6020 = vadd.f32 %v5239, %v5979
        %v6021 = vld [vmem:[#allocation4 + $0xa0] sm:$0xff]
        %v6022 = vld [vmem:[#allocation4 + $0xa8] sm:$0xff]
        %v6023 = vld [vmem:[#allocation4 + $0xb0] sm:$0xff]
        %v6024 = vld [vmem:[#allocation4 + $0xb8] sm:$0xff]
        %v6025 = vld [vmem:[#allocation4 + $0xc0] sm:$0xff]
        %v6026 = vld [vmem:[#allocation4 + $0xc8] sm:$0xff]
        %v6027 = vld [vmem:[#allocation4 + $0xd0] sm:$0xff]
        %v6028 = vld [vmem:[#allocation4 + $0xd8] sm:$0xff]
        %v6029 = vld [vmem:[#allocation4 + $0xe0] sm:$0xff]
        %v6030 = vld [vmem:[#allocation4 + $0xe8] sm:$0xff]
        %v6031 = vld [vmem:[#allocation4 + $0xf0] sm:$0xff]
        %v6032 = vld [vmem:[#allocation4 + $0xf8] sm:$0xff]
        %v6033 = vld [vmem:[#allocation4 + $0x100] sm:$0xff]
        %v6034 = vld [vmem:[#allocation4 + $0x108] sm:$0xff]
        %v6035 = vld [vmem:[#allocation4 + $0x110] sm:$0xff]
        %v6036 = vld [vmem:[#allocation4 + $0x118] sm:$0xff]
        %v6037 = vld [vmem:[#allocation4 + $0x120] sm:$0xff]
        %v6038 = vld [vmem:[#allocation4 + $0x128] sm:$0xff]
        %v6039 = vld [vmem:[#allocation4 + $0x130] sm:$0xff]
        %v6040 = vld [vmem:[#allocation4 + $0x138] sm:$0xff]
        %v6041 = vld [vmem:[#allocation4 + $0x140] sm:$0xff]
        %v6042 = vld [vmem:[#allocation4 + $0x148] sm:$0xff]
        %v6043 = vld [vmem:[#allocation4 + $0x150] sm:$0xff]
        %v6044 = vld [vmem:[#allocation4 + $0x158] sm:$0xff]
        %v6045 = vld [vmem:[#allocation4 + $0x160] sm:$0xff]
        %v6046 = vld [vmem:[#allocation4 + $0x168] sm:$0xff]
        %v6047 = vld [vmem:[#allocation4 + $0x170] sm:$0xff]
        %v6048 = vld [vmem:[#allocation4 + $0x178] sm:$0xff]
        %v6049 = vld [vmem:[#allocation4 + $0x180] sm:$0xff]
        %v6050 = vld [vmem:[#allocation4 + $0x188] sm:$0xff]
        %v6051 = vld [vmem:[#allocation4 + $0x190] sm:$0xff]
        %v6052 = vld [vmem:[#allocation4 + $0x198] sm:$0xff]
        %v6053 = vld [vmem:[#allocation4 + $0x1a0] sm:$0xff]
        %v6054 = vld [vmem:[#allocation4 + $0x1a8] sm:$0xff]
        %v6055 = vld [vmem:[#allocation4 + $0x1b0] sm:$0xff]
        %v6056 = vld [vmem:[#allocation4 + $0x1b8] sm:$0xff]
        %v6057 = vld [vmem:[#allocation4 + $0x1c0] sm:$0xff]
        %v6058 = vld [vmem:[#allocation4 + $0x1c8] sm:$0xff]
        %v6059 = vld [vmem:[#allocation4 + $0x1d0] sm:$0xff]
        %v6060 = vld [vmem:[#allocation4 + $0x1d8] sm:$0xff]
        %v6061 = vld [vmem:[#allocation4 + $0x1e0] sm:$0xff]
        %v6062 = vld [vmem:[#allocation4 + $0x1e8] sm:$0xff]
        %v6063 = vld [vmem:[#allocation4 + $0x1f0] sm:$0xff]
        %v6064 = vld [vmem:[#allocation4 + $0x1f8] sm:$0xff]
        %v6065 = vld [vmem:[#allocation4 + $0x200] sm:$0xff]
        %v6066 = vld [vmem:[#allocation4 + $0x208] sm:$0xff]
        %v6067 = vld [vmem:[#allocation4 + $0x210] sm:$0xff]
        %v6068 = vld [vmem:[#allocation4 + $0x218] sm:$0xff]
        %v6069 = vld [vmem:[#allocation4 + $0x220] sm:$0xff]
        %v6070 = vld [vmem:[#allocation4 + $0x228] sm:$0xff]
        %v6071 = vld [vmem:[#allocation4 + $0x230] sm:$0xff]
        %v6072 = vld [vmem:[#allocation4 + $0x238] sm:$0xff]
        %v6073 = vld [vmem:[#allocation4 + $0x240] sm:$0xff]
        %v6074 = vld [vmem:[#allocation4 + $0x248] sm:$0xff]
        %v6075 = vld [vmem:[#allocation4 + $0x250] sm:$0xff]
        %v6076 = vld [vmem:[#allocation4 + $0x258] sm:$0xff]
        %v6077 = vld [vmem:[#allocation4 + $0x260] sm:$0xff]
        %v6078 = vld [vmem:[#allocation4 + $0x268] sm:$0xff]
        %v6079 = vld [vmem:[#allocation4 + $0x270] sm:$0xff]
        %v6080 = vld [vmem:[#allocation4 + $0x278] sm:$0xff]
        %v6081 = vld [vmem:[#allocation4 + $0x280] sm:$0xff]
        %v6082 = vld [vmem:[#allocation4 + $0x288] sm:$0xff]
        %v6083 = vld [vmem:[#allocation4 + $0x290] sm:$0xff]
        %v6084 = vld [vmem:[#allocation4 + $0x298] sm:$0xff]
        %v6085 = vld [vmem:[#allocation4 + $0x2a0] sm:$0xff]
        %v6086 = vld [vmem:[#allocation4 + $0x2a8] sm:$0xff]
        %v6087 = vld [vmem:[#allocation4 + $0x2b0] sm:$0xff]
        %v6088 = vld [vmem:[#allocation4 + $0x2b8] sm:$0xff]
        %v6089 = vld [vmem:[#allocation4 + $0x2c0] sm:$0xff]
        %v6090 = vld [vmem:[#allocation4 + $0x2c8] sm:$0xff]
        %v6091 = vld [vmem:[#allocation4 + $0x2d0] sm:$0xff]
        %v6092 = vld [vmem:[#allocation4 + $0x2d8] sm:$0xff]
        %v6093 = vld [vmem:[#allocation4 + $0x2e0] sm:$0xff]
        %v6094 = vld [vmem:[#allocation4 + $0x2e8] sm:$0xff]
        %v6095 = vld [vmem:[#allocation4 + $0x2f0] sm:$0xff]
        %v6096 = vld [vmem:[#allocation4 + $0x2f8] sm:$0xff]
        %v6097 = vld [vmem:[#allocation4 + $0x300] sm:$0xff]
        %v6098 = vld [vmem:[#allocation4 + $0x308] sm:$0xff]
        %v6099 = vld [vmem:[#allocation4 + $0x310] sm:$0xff]
        %v6100 = vld [vmem:[#allocation4 + $0x318] sm:$0xff]
        %s6101 = scalar_lea.vmem %s3, 640
        %v6102 = vld [vmem:[%s6101] sm:$0xff]
        %v6103 = vld [vmem:[%s6101 + $0x8] sm:$0xff]
        %v6104 = vld [vmem:[%s6101 + $0x10] sm:$0xff]
        %v6105 = vld [vmem:[%s6101 + $0x18] sm:$0xff]
        %v6106 = vld [vmem:[%s6101 + $0x20] sm:$0xff]
        %v6107 = vld [vmem:[%s6101 + $0x28] sm:$0xff]
        %v6108 = vld [vmem:[%s6101 + $0x30] sm:$0xff]
        %v6109 = vld [vmem:[%s6101 + $0x38] sm:$0xff]
        %v6110 = vld [vmem:[%s6101 + $0x40] sm:$0xff]
        %v6111 = vld [vmem:[%s6101 + $0x48] sm:$0xff]
        %v6112 = vld [vmem:[%s6101 + $0x50] sm:$0xff]
        %v6113 = vld [vmem:[%s6101 + $0x58] sm:$0xff]
        %v6114 = vld [vmem:[%s6101 + $0x60] sm:$0xff]
        %v6115 = vld [vmem:[%s6101 + $0x68] sm:$0xff]
        %v6116 = vld [vmem:[%s6101 + $0x70] sm:$0xff]
        %v6117 = vld [vmem:[%s6101 + $0x78] sm:$0xff]
        %v6118 = vld [vmem:[%s6101 + $0x80] sm:$0xff]
        %v6119 = vld [vmem:[%s6101 + $0x88] sm:$0xff]
        %v6120 = vld [vmem:[%s6101 + $0x90] sm:$0xff]
        %v6121 = vld [vmem:[%s6101 + $0x98] sm:$0xff]
        %v6123 = vsel %vm385, %v6022, 0
        %v6126 = vsel %vm385, %v6024, 0
        %v6129 = vsel %vm385, %v6026, 0
        %v6132 = vsel %vm385, %v6028, 0
        %v6135 = vsel %vm385, %v6030, 0
        %v6138 = vsel %vm385, %v6032, 0
        %v6141 = vsel %vm385, %v6034, 0
        %v6144 = vsel %vm385, %v6036, 0
        %v6147 = vsel %vm385, %v6038, 0
        %v6150 = vsel %vm385, %v6040, 0
        %v6153 = vsel %vm385, %v6042, 0
        %v6156 = vsel %vm385, %v6044, 0
        %v6159 = vsel %vm385, %v6046, 0
        %v6162 = vsel %vm385, %v6048, 0
        %v6165 = vsel %vm385, %v6050, 0
        %v6168 = vsel %vm385, %v6052, 0
        %v6171 = vsel %vm385, %v6054, 0
        %v6174 = vsel %vm385, %v6056, 0
        %v6177 = vsel %vm385, %v6058, 0
        %v6180 = vsel %vm385, %v6060, 0
        %v6183 = vsel %vm385, %v6062, 0
        %v6186 = vsel %vm385, %v6064, 0
        %v6189 = vsel %vm385, %v6066, 0
        %v6192 = vsel %vm385, %v6068, 0
        %v6195 = vsel %vm385, %v6070, 0
        %v6198 = vsel %vm385, %v6072, 0
        %v6201 = vsel %vm385, %v6074, 0
        %v6204 = vsel %vm385, %v6076, 0
        %v6207 = vsel %vm385, %v6078, 0
        %v6210 = vsel %vm385, %v6080, 0
        %v6213 = vsel %vm385, %v6082, 0
        %v6216 = vsel %vm385, %v6084, 0
        %v6219 = vsel %vm385, %v6086, 0
        %v6222 = vsel %vm385, %v6088, 0
        %v6225 = vsel %vm385, %v6090, 0
        %v6228 = vsel %vm385, %v6092, 0
        %v6231 = vsel %vm385, %v6094, 0
        %v6234 = vsel %vm385, %v6096, 0
        %v6237 = vsel %vm385, %v6098, 0
        %v6240 = vsel %vm385, %v6100, 0
        %6242 = vmatpush.msra.mxu0 %v6117
        %6243 = vmatpush.msra.mxu0 %v6116
        %6244 = vmatpush.msra.mxu0 %v6115
        %6245 = vmatpush.msra.mxu0 %v6114
        %6246 = vmatpush.msra.mxu0 %v6113
        %6247 = vmatpush.msra.mxu0 %v6112
        %6248 = vmatpush.msra.mxu0 %v6111
        %6249 = vmatpush.msra.mxu0 %v6110
        %6250 = vmatpush.msra.mxu0 %v6109
        %6251 = vmatpush.msra.mxu0 %v6108
        %6252 = vmatpush.msra.mxu0 %v6107
        %6253 = vmatpush.msra.mxu0 %v6106
        %6254 = vmatpush.msra.mxu0 %v6105
        %6255 = vmatpush.msra.mxu0 %v6104
        %6256 = vmatpush.msra.mxu0 %v6103
        %6257 = vmatpush.msra.mxu0 %v6102
        %6258 = vmatmul.f32.gmra.mxu0 %v6021
        %v6259 = vpop.f32.mrf.mxu0
        %v6260 = vadd.f32 0.0, %v6259
        %6261 = vmatmul.f32.gmra.mxu0 %v6023
        %v6262 = vpop.f32.mrf.mxu0
        %v6263 = vadd.f32 0.0, %v6262
        %6264 = vmatmul.f32.gmra.mxu0 %v6025
        %v6265 = vpop.f32.mrf.mxu0
        %v6266 = vadd.f32 0.0, %v6265
        %6267 = vmatmul.f32.gmra.mxu0 %v6027
        %v6268 = vpop.f32.mrf.mxu0
        %v6269 = vadd.f32 0.0, %v6268
        %6270 = vmatmul.f32.gmra.mxu0 %v6029
        %v6271 = vpop.f32.mrf.mxu0
        %v6272 = vadd.f32 0.0, %v6271
        %6273 = vmatmul.f32.gmra.mxu0 %v6031
        %v6274 = vpop.f32.mrf.mxu0
        %v6275 = vadd.f32 0.0, %v6274
        %6276 = vmatmul.f32.gmra.mxu0 %v6033
        %v6277 = vpop.f32.mrf.mxu0
        %v6278 = vadd.f32 0.0, %v6277
        %6279 = vmatmul.f32.gmra.mxu0 %v6035
        %v6280 = vpop.f32.mrf.mxu0
        %v6281 = vadd.f32 0.0, %v6280
        %6282 = vmatmul.f32.gmra.mxu0 %v6037
        %v6283 = vpop.f32.mrf.mxu0
        %v6284 = vadd.f32 0.0, %v6283
        %6285 = vmatmul.f32.gmra.mxu0 %v6039
        %v6286 = vpop.f32.mrf.mxu0
        %v6287 = vadd.f32 0.0, %v6286
        %6288 = vmatmul.f32.gmra.mxu0 %v6041
        %v6289 = vpop.f32.mrf.mxu0
        %v6290 = vadd.f32 0.0, %v6289
        %6291 = vmatmul.f32.gmra.mxu0 %v6043
        %v6292 = vpop.f32.mrf.mxu0
        %v6293 = vadd.f32 0.0, %v6292
        %6294 = vmatmul.f32.gmra.mxu0 %v6045
        %v6295 = vpop.f32.mrf.mxu0
        %v6296 = vadd.f32 0.0, %v6295
        %6297 = vmatmul.f32.gmra.mxu0 %v6047
        %v6298 = vpop.f32.mrf.mxu0
        %v6299 = vadd.f32 0.0, %v6298
        %6300 = vmatmul.f32.gmra.mxu0 %v6049
        %v6301 = vpop.f32.mrf.mxu0
        %v6302 = vadd.f32 0.0, %v6301
        %6303 = vmatmul.f32.gmra.mxu0 %v6051
        %v6304 = vpop.f32.mrf.mxu0
        %v6305 = vadd.f32 0.0, %v6304
        %6306 = vmatmul.f32.gmra.mxu0 %v6053
        %v6307 = vpop.f32.mrf.mxu0
        %v6308 = vadd.f32 0.0, %v6307
        %6309 = vmatmul.f32.gmra.mxu0 %v6055
        %v6310 = vpop.f32.mrf.mxu0
        %v6311 = vadd.f32 0.0, %v6310
        %6312 = vmatmul.f32.gmra.mxu0 %v6057
        %v6313 = vpop.f32.mrf.mxu0
        %v6314 = vadd.f32 0.0, %v6313
        %6315 = vmatmul.f32.gmra.mxu0 %v6059
        %v6316 = vpop.f32.mrf.mxu0
        %v6317 = vadd.f32 0.0, %v6316
        %6318 = vmatmul.f32.gmra.mxu0 %v6061
        %v6319 = vpop.f32.mrf.mxu0
        %v6320 = vadd.f32 0.0, %v6319
        %6321 = vmatmul.f32.gmra.mxu0 %v6063
        %v6322 = vpop.f32.mrf.mxu0
        %v6323 = vadd.f32 0.0, %v6322
        %6324 = vmatmul.f32.gmra.mxu0 %v6065
        %v6325 = vpop.f32.mrf.mxu0
        %v6326 = vadd.f32 0.0, %v6325
        %6327 = vmatmul.f32.gmra.mxu0 %v6067
        %v6328 = vpop.f32.mrf.mxu0
        %v6329 = vadd.f32 0.0, %v6328
        %6330 = vmatmul.f32.gmra.mxu0 %v6069
        %v6331 = vpop.f32.mrf.mxu0
        %v6332 = vadd.f32 0.0, %v6331
        %6333 = vmatmul.f32.gmra.mxu0 %v6071
        %v6334 = vpop.f32.mrf.mxu0
        %v6335 = vadd.f32 0.0, %v6334
        %6336 = vmatmul.f32.gmra.mxu0 %v6073
        %v6337 = vpop.f32.mrf.mxu0
        %v6338 = vadd.f32 0.0, %v6337
        %6339 = vmatmul.f32.gmra.mxu0 %v6075
        %v6340 = vpop.f32.mrf.mxu0
        %v6341 = vadd.f32 0.0, %v6340
        %6342 = vmatmul.f32.gmra.mxu0 %v6077
        %v6343 = vpop.f32.mrf.mxu0
        %v6344 = vadd.f32 0.0, %v6343
        %6345 = vmatmul.f32.gmra.mxu0 %v6079
        %v6346 = vpop.f32.mrf.mxu0
        %v6347 = vadd.f32 0.0, %v6346
        %6348 = vmatmul.f32.gmra.mxu0 %v6081
        %v6349 = vpop.f32.mrf.mxu0
        %v6350 = vadd.f32 0.0, %v6349
        %6351 = vmatmul.f32.gmra.mxu0 %v6083
        %v6352 = vpop.f32.mrf.mxu0
        %v6353 = vadd.f32 0.0, %v6352
        %6354 = vmatmul.f32.gmra.mxu0 %v6085
        %v6355 = vpop.f32.mrf.mxu0
        %v6356 = vadd.f32 0.0, %v6355
        %6357 = vmatmul.f32.gmra.mxu0 %v6087
        %v6358 = vpop.f32.mrf.mxu0
        %v6359 = vadd.f32 0.0, %v6358
        %6360 = vmatmul.f32.gmra.mxu0 %v6089
        %v6361 = vpop.f32.mrf.mxu0
        %v6362 = vadd.f32 0.0, %v6361
        %6363 = vmatmul.f32.gmra.mxu0 %v6091
        %v6364 = vpop.f32.mrf.mxu0
        %v6365 = vadd.f32 0.0, %v6364
        %6366 = vmatmul.f32.gmra.mxu0 %v6093
        %v6367 = vpop.f32.mrf.mxu0
        %v6368 = vadd.f32 0.0, %v6367
        %6369 = vmatmul.f32.gmra.mxu0 %v6095
        %v6370 = vpop.f32.mrf.mxu0
        %v6371 = vadd.f32 0.0, %v6370
        %6372 = vmatmul.f32.gmra.mxu0 %v6097
        %v6373 = vpop.f32.mrf.mxu0
        %v6374 = vadd.f32 0.0, %v6373
        %6375 = vmatmul.f32.gmra.mxu0 %v6099
        %v6376 = vpop.f32.mrf.mxu0
        %v6377 = vadd.f32 0.0, %v6376
        %6378 = vdwg.mxu0
        %6379 = vmatpush.msra.mxu0 0.0
        %6380 = vmatpush.msra.mxu0 0.0
        %6381 = vmatpush.msra.mxu0 0.0
        %6382 = vmatpush.msra.mxu0 0.0
        %6383 = vmatpush.msra.mxu0 0.0
        %6384 = vmatpush.msra.mxu0 0.0
        %6385 = vmatpush.msra.mxu0 0.0
        %6386 = vmatpush.msra.mxu0 0.0
        %6387 = vmatpush.msra.mxu0 0.0
        %6388 = vmatpush.msra.mxu0 0.0
        %6389 = vmatpush.msra.mxu0 0.0
        %6390 = vmatpush.msra.mxu0 0.0
        %6391 = vmatpush.msra.mxu0 %v6121
        %6392 = vmatpush.msra.mxu0 %v6120
        %6393 = vmatpush.msra.mxu0 %v6119
        %6394 = vmatpush.msra.mxu0 %v6118
        %6395 = vmatmul.f32.gmra.mxu0 %v6123
        %v6396 = vpop.f32.mrf.mxu0
        %v6397 = vadd.f32 %v6260, %v6396
        %6398 = vmatmul.f32.gmra.mxu0 %v6126
        %v6399 = vpop.f32.mrf.mxu0
        %v6400 = vadd.f32 %v6263, %v6399
        %6401 = vmatmul.f32.gmra.mxu0 %v6129
        %v6402 = vpop.f32.mrf.mxu0
        %v6403 = vadd.f32 %v6266, %v6402
        %6404 = vmatmul.f32.gmra.mxu0 %v6132
        %v6405 = vpop.f32.mrf.mxu0
        %v6406 = vadd.f32 %v6269, %v6405
        %6407 = vmatmul.f32.gmra.mxu0 %v6135
        %v6408 = vpop.f32.mrf.mxu0
        %v6409 = vadd.f32 %v6272, %v6408
        %6410 = vmatmul.f32.gmra.mxu0 %v6138
        %v6411 = vpop.f32.mrf.mxu0
        %v6412 = vadd.f32 %v6275, %v6411
        %6413 = vmatmul.f32.gmra.mxu0 %v6141
        %v6414 = vpop.f32.mrf.mxu0
        %v6415 = vadd.f32 %v6278, %v6414
        %6416 = vmatmul.f32.gmra.mxu0 %v6144
        %v6417 = vpop.f32.mrf.mxu0
        %v6418 = vadd.f32 %v6281, %v6417
        %6419 = vmatmul.f32.gmra.mxu0 %v6147
        %v6420 = vpop.f32.mrf.mxu0
        %v6421 = vadd.f32 %v6284, %v6420
        %6422 = vmatmul.f32.gmra.mxu0 %v6150
        %v6423 = vpop.f32.mrf.mxu0
        %v6424 = vadd.f32 %v6287, %v6423
        %6425 = vmatmul.f32.gmra.mxu0 %v6153
        %v6426 = vpop.f32.mrf.mxu0
        %v6427 = vadd.f32 %v6290, %v6426
        %6428 = vmatmul.f32.gmra.mxu0 %v6156
        %v6429 = vpop.f32.mrf.mxu0
        %v6430 = vadd.f32 %v6293, %v6429
        %6431 = vmatmul.f32.gmra.mxu0 %v6159
        %v6432 = vpop.f32.mrf.mxu0
        %v6433 = vadd.f32 %v6296, %v6432
        %6434 = vmatmul.f32.gmra.mxu0 %v6162
        %v6435 = vpop.f32.mrf.mxu0
        %v6436 = vadd.f32 %v6299, %v6435
        %6437 = vmatmul.f32.gmra.mxu0 %v6165
        %v6438 = vpop.f32.mrf.mxu0
        %v6439 = vadd.f32 %v6302, %v6438
        %6440 = vmatmul.f32.gmra.mxu0 %v6168
        %v6441 = vpop.f32.mrf.mxu0
        %v6442 = vadd.f32 %v6305, %v6441
        %6443 = vmatmul.f32.gmra.mxu0 %v6171
        %v6444 = vpop.f32.mrf.mxu0
        %v6445 = vadd.f32 %v6308, %v6444
        %6446 = vmatmul.f32.gmra.mxu0 %v6174
        %v6447 = vpop.f32.mrf.mxu0
        %v6448 = vadd.f32 %v6311, %v6447
        %6449 = vmatmul.f32.gmra.mxu0 %v6177
        %v6450 = vpop.f32.mrf.mxu0
        %v6451 = vadd.f32 %v6314, %v6450
        %6452 = vmatmul.f32.gmra.mxu0 %v6180
        %v6453 = vpop.f32.mrf.mxu0
        %v6454 = vadd.f32 %v6317, %v6453
        %6455 = vmatmul.f32.gmra.mxu0 %v6183
        %v6456 = vpop.f32.mrf.mxu0
        %v6457 = vadd.f32 %v6320, %v6456
        %6458 = vmatmul.f32.gmra.mxu0 %v6186
        %v6459 = vpop.f32.mrf.mxu0
        %v6460 = vadd.f32 %v6323, %v6459
        %6461 = vmatmul.f32.gmra.mxu0 %v6189
        %v6462 = vpop.f32.mrf.mxu0
        %v6463 = vadd.f32 %v6326, %v6462
        %6464 = vmatmul.f32.gmra.mxu0 %v6192
        %v6465 = vpop.f32.mrf.mxu0
        %v6466 = vadd.f32 %v6329, %v6465
        %6467 = vmatmul.f32.gmra.mxu0 %v6195
        %v6468 = vpop.f32.mrf.mxu0
        %v6469 = vadd.f32 %v6332, %v6468
        %6470 = vmatmul.f32.gmra.mxu0 %v6198
        %v6471 = vpop.f32.mrf.mxu0
        %v6472 = vadd.f32 %v6335, %v6471
        %6473 = vmatmul.f32.gmra.mxu0 %v6201
        %v6474 = vpop.f32.mrf.mxu0
        %v6475 = vadd.f32 %v6338, %v6474
        %6476 = vmatmul.f32.gmra.mxu0 %v6204
        %v6477 = vpop.f32.mrf.mxu0
        %v6478 = vadd.f32 %v6341, %v6477
        %6479 = vmatmul.f32.gmra.mxu0 %v6207
        %v6480 = vpop.f32.mrf.mxu0
        %v6481 = vadd.f32 %v6344, %v6480
        %6482 = vmatmul.f32.gmra.mxu0 %v6210
        %v6483 = vpop.f32.mrf.mxu0
        %v6484 = vadd.f32 %v6347, %v6483
        %6485 = vmatmul.f32.gmra.mxu0 %v6213
        %v6486 = vpop.f32.mrf.mxu0
        %v6487 = vadd.f32 %v6350, %v6486
        %6488 = vmatmul.f32.gmra.mxu0 %v6216
        %v6489 = vpop.f32.mrf.mxu0
        %v6490 = vadd.f32 %v6353, %v6489
        %6491 = vmatmul.f32.gmra.mxu0 %v6219
        %v6492 = vpop.f32.mrf.mxu0
        %v6493 = vadd.f32 %v6356, %v6492
        %6494 = vmatmul.f32.gmra.mxu0 %v6222
        %v6495 = vpop.f32.mrf.mxu0
        %v6496 = vadd.f32 %v6359, %v6495
        %6497 = vmatmul.f32.gmra.mxu0 %v6225
        %v6498 = vpop.f32.mrf.mxu0
        %v6499 = vadd.f32 %v6362, %v6498
        %6500 = vmatmul.f32.gmra.mxu0 %v6228
        %v6501 = vpop.f32.mrf.mxu0
        %v6502 = vadd.f32 %v6365, %v6501
        %6503 = vmatmul.f32.gmra.mxu0 %v6231
        %v6504 = vpop.f32.mrf.mxu0
        %v6505 = vadd.f32 %v6368, %v6504
        %6506 = vmatmul.f32.gmra.mxu0 %v6234
        %v6507 = vpop.f32.mrf.mxu0
        %v6508 = vadd.f32 %v6371, %v6507
        %6509 = vmatmul.f32.gmra.mxu0 %v6237
        %v6510 = vpop.f32.mrf.mxu0
        %v6511 = vadd.f32 %v6374, %v6510
        %6512 = vmatmul.f32.gmra.mxu0 %v6240
        %v6513 = vpop.f32.mrf.mxu0
        %v6514 = vadd.f32 %v6377, %v6513
        %6515 = vdwg.mxu0
        %v6516 = vadd.f32 %v5981, %v6397
        %v6517 = vadd.f32 %v5982, %v6400
        %v6518 = vadd.f32 %v5983, %v6403
        %v6519 = vadd.f32 %v5984, %v6406
        %v6520 = vadd.f32 %v5985, %v6409
        %v6521 = vadd.f32 %v5986, %v6412
        %v6522 = vadd.f32 %v5987, %v6415
        %v6523 = vadd.f32 %v5988, %v6418
        %v6524 = vadd.f32 %v5989, %v6421
        %v6525 = vadd.f32 %v5990, %v6424
        %v6526 = vadd.f32 %v5991, %v6427
        %v6527 = vadd.f32 %v5992, %v6430
        %v6528 = vadd.f32 %v5993, %v6433
        %v6529 = vadd.f32 %v5994, %v6436
        %v6530 = vadd.f32 %v5995, %v6439
        %v6531 = vadd.f32 %v5996, %v6442
        %v6532 = vadd.f32 %v5997, %v6445
        %v6533 = vadd.f32 %v5998, %v6448
        %v6534 = vadd.f32 %v5999, %v6451
        %v6535 = vadd.f32 %v6000, %v6454
        %v6536 = vadd.f32 %v6001, %v6457
        %v6537 = vadd.f32 %v6002, %v6460
        %v6538 = vadd.f32 %v6003, %v6463
        %v6539 = vadd.f32 %v6004, %v6466
        %v6540 = vadd.f32 %v6005, %v6469
        %v6541 = vadd.f32 %v6006, %v6472
        %v6542 = vadd.f32 %v6007, %v6475
        %v6543 = vadd.f32 %v6008, %v6478
        %v6544 = vadd.f32 %v6009, %v6481
        %v6545 = vadd.f32 %v6010, %v6484
        %v6546 = vadd.f32 %v6011, %v6487
        %v6547 = vadd.f32 %v6012, %v6490
        %v6548 = vadd.f32 %v6013, %v6493
        %v6549 = vadd.f32 %v6014, %v6496
        %v6550 = vadd.f32 %v6015, %v6499
        %v6551 = vadd.f32 %v6016, %v6502
        %v6552 = vadd.f32 %v6017, %v6505
        %v6553 = vadd.f32 %v6018, %v6508
        %v6554 = vadd.f32 %v6019, %v6511
        %v6555 = vadd.f32 %v6020, %v6514
        %v6556 = vld [vmem:[%s4] sm:$0x1]
        %v6558 = vperm.slane %v6556, 0
        %v6560 = vadd.f32 %v6516, %v6558
        %v6561 = vadd.f32 %v6517, %v6558
        %v6562 = vadd.f32 %v6518, %v6558
        %v6563 = vadd.f32 %v6519, %v6558
        %v6564 = vadd.f32 %v6520, %v6558
        %v6565 = vadd.f32 %v6521, %v6558
        %v6566 = vadd.f32 %v6522, %v6558
        %v6567 = vadd.f32 %v6523, %v6558
        %v6568 = vadd.f32 %v6524, %v6558
        %v6569 = vadd.f32 %v6525, %v6558
        %v6570 = vadd.f32 %v6526, %v6558
        %v6571 = vadd.f32 %v6527, %v6558
        %v6572 = vadd.f32 %v6528, %v6558
        %v6573 = vadd.f32 %v6529, %v6558
        %v6574 = vadd.f32 %v6530, %v6558
        %v6575 = vadd.f32 %v6531, %v6558
        %v6576 = vadd.f32 %v6532, %v6558
        %v6577 = vadd.f32 %v6533, %v6558
        %v6578 = vadd.f32 %v6534, %v6558
        %v6579 = vadd.f32 %v6535, %v6558
        %v6580 = vadd.f32 %v6536, %v6558
        %v6581 = vadd.f32 %v6537, %v6558
        %v6582 = vadd.f32 %v6538, %v6558
        %v6583 = vadd.f32 %v6539, %v6558
        %v6584 = vadd.f32 %v6540, %v6558
        %v6585 = vadd.f32 %v6541, %v6558
        %v6586 = vadd.f32 %v6542, %v6558
        %v6587 = vadd.f32 %v6543, %v6558
        %v6588 = vadd.f32 %v6544, %v6558
        %v6589 = vadd.f32 %v6545, %v6558
        %v6590 = vadd.f32 %v6546, %v6558
        %v6591 = vadd.f32 %v6547, %v6558
        %v6592 = vadd.f32 %v6548, %v6558
        %v6593 = vadd.f32 %v6549, %v6558
        %v6594 = vadd.f32 %v6550, %v6558
        %v6595 = vadd.f32 %v6551, %v6558
        %v6596 = vadd.f32 %v6552, %v6558
        %v6597 = vadd.f32 %v6553, %v6558
        %v6598 = vadd.f32 %v6554, %v6558
        %v6599 = vadd.f32 %v6555, %v6558
        %6600 = vst.msk [vmem:[#allocation2] sm:$0xff] %vm385, %v6560
        %6601 = vst.msk [vmem:[#allocation2 + $0x8] sm:$0xff] %vm385, %v6561
        %6602 = vst.msk [vmem:[#allocation2 + $0x10] sm:$0xff] %vm385, %v6562
        %6603 = vst.msk [vmem:[#allocation2 + $0x18] sm:$0xff] %vm385, %v6563
        %6604 = vst.msk [vmem:[#allocation2 + $0x20] sm:$0xff] %vm385, %v6564
        %6605 = vst.msk [vmem:[#allocation2 + $0x28] sm:$0xff] %vm385, %v6565
        %6606 = vst.msk [vmem:[#allocation2 + $0x30] sm:$0xff] %vm385, %v6566
        %6607 = vst.msk [vmem:[#allocation2 + $0x38] sm:$0xff] %vm385, %v6567
        %6608 = vst.msk [vmem:[#allocation2 + $0x40] sm:$0xff] %vm385, %v6568
        %6609 = vst.msk [vmem:[#allocation2 + $0x48] sm:$0xff] %vm385, %v6569
        %6610 = vst.msk [vmem:[#allocation2 + $0x50] sm:$0xff] %vm385, %v6570
        %6611 = vst.msk [vmem:[#allocation2 + $0x58] sm:$0xff] %vm385, %v6571
        %6612 = vst.msk [vmem:[#allocation2 + $0x60] sm:$0xff] %vm385, %v6572
        %6613 = vst.msk [vmem:[#allocation2 + $0x68] sm:$0xff] %vm385, %v6573
        %6614 = vst.msk [vmem:[#allocation2 + $0x70] sm:$0xff] %vm385, %v6574
        %6615 = vst.msk [vmem:[#allocation2 + $0x78] sm:$0xff] %vm385, %v6575
        %6616 = vst.msk [vmem:[#allocation2 + $0x80] sm:$0xff] %vm385, %v6576
        %6617 = vst.msk [vmem:[#allocation2 + $0x88] sm:$0xff] %vm385, %v6577
        %6618 = vst.msk [vmem:[#allocation2 + $0x90] sm:$0xff] %vm385, %v6578
        %6619 = vst.msk [vmem:[#allocation2 + $0x98] sm:$0xff] %vm385, %v6579
        %6620 = vst.msk [vmem:[#allocation2 + $0xa0] sm:$0xff] %vm385, %v6580
        %6621 = vst.msk [vmem:[#allocation2 + $0xa8] sm:$0xff] %vm385, %v6581
        %6622 = vst.msk [vmem:[#allocation2 + $0xb0] sm:$0xff] %vm385, %v6582
        %6623 = vst.msk [vmem:[#allocation2 + $0xb8] sm:$0xff] %vm385, %v6583
        %6624 = vst.msk [vmem:[#allocation2 + $0xc0] sm:$0xff] %vm385, %v6584
        %6625 = vst.msk [vmem:[#allocation2 + $0xc8] sm:$0xff] %vm385, %v6585
        %6626 = vst.msk [vmem:[#allocation2 + $0xd0] sm:$0xff] %vm385, %v6586
        %6627 = vst.msk [vmem:[#allocation2 + $0xd8] sm:$0xff] %vm385, %v6587
        %6628 = vst.msk [vmem:[#allocation2 + $0xe0] sm:$0xff] %vm385, %v6588
        %6629 = vst.msk [vmem:[#allocation2 + $0xe8] sm:$0xff] %vm385, %v6589
        %6630 = vst.msk [vmem:[#allocation2 + $0xf0] sm:$0xff] %vm385, %v6590
        %6631 = vst.msk [vmem:[#allocation2 + $0xf8] sm:$0xff] %vm385, %v6591
        %6632 = vst.msk [vmem:[#allocation2 + $0x100] sm:$0xff] %vm385, %v6592
        %6633 = vst.msk [vmem:[#allocation2 + $0x108] sm:$0xff] %vm385, %v6593
        %6634 = vst.msk [vmem:[#allocation2 + $0x110] sm:$0xff] %vm385, %v6594
        %6635 = vst.msk [vmem:[#allocation2 + $0x118] sm:$0xff] %vm385, %v6595
        %6636 = vst.msk [vmem:[#allocation2 + $0x120] sm:$0xff] %vm385, %v6596
        %6637 = vst.msk [vmem:[#allocation2 + $0x128] sm:$0xff] %vm385, %v6597
        %6638 = vst.msk [vmem:[#allocation2 + $0x130] sm:$0xff] %vm385, %v6598
        %6639 = vst.msk [vmem:[#allocation2 + $0x138] sm:$0xff] %vm385, %v6599
        %v6640 = vld [vmem:[#allocation2] sm:$0xff]
        %v6641 = vld [vmem:[#allocation2 + $0x8] sm:$0xff]
        %v6642 = vld [vmem:[#allocation2 + $0x14] sm:$0xff]
        %v6643 = vld [vmem:[#allocation2 + $0x1c] sm:$0xff]
        %v6644 = vmax.f32 %v6640, %v6642
        %v6645 = vmax.f32 %v6641, %v6643
        %vm6646 = vcmask 130048
        %v6647 = vsel %vm6646, %v1592, 0
        %6649 = vmatpush.msra.mxu0 0.0
        %6650 = vmatpush.msra.mxu0 0.0
        %6651 = vmatpush.msra.mxu0 0.0
        %6652 = vmatpush.msra.mxu0 0.0
        %6653 = vmatpush.msra.mxu0 0.0
        %6654 = vmatpush.msra.mxu0 0.0
        %6655 = vmatpush.msra.mxu0 0.0
        %6656 = vmatpush.msra.mxu0 0.0
        %6657 = vmatpush.msra.mxu0 0.0
        %6658 = vmatpush.msra.mxu0 0.0
        %6659 = vmatpush.msra.mxu0 0.0
        %6660 = vmatpush.msra.mxu0 0.0
        %6661 = vmatpush.msra.mxu0 0.0
        %6662 = vmatpush.msra.mxu0 0.0
        %6663 = vmatpush.msra.mxu0 %v6645
        %6664 = vmatpush.msra.mxu0 %v6644
        %6665 = vmatmul.f32.gmra.mxu0 %v6647
        %v6666 = vpop.f32.mrf.mxu0
        %v6667 = vadd.f32 0.0, %v6666
        %6668 = vdwg.mxu0
        %v6669 = vsel %vm6646, %v1600, 0
        %6671 = vmatpush.msra.mxu0 0.0
        %6672 = vmatpush.msra.mxu0 0.0
        %6673 = vmatpush.msra.mxu0 0.0
        %6674 = vmatpush.msra.mxu0 0.0
        %6675 = vmatpush.msra.mxu0 0.0
        %6676 = vmatpush.msra.mxu0 0.0
        %6677 = vmatpush.msra.mxu0 0.0
        %6678 = vmatpush.msra.mxu0 0.0
        %6679 = vmatpush.msra.mxu0 0.0
        %6680 = vmatpush.msra.mxu0 0.0
        %6681 = vmatpush.msra.mxu0 0.0
        %6682 = vmatpush.msra.mxu0 0.0
        %6683 = vmatpush.msra.mxu0 0.0
        %6684 = vmatpush.msra.mxu0 0.0
        %6685 = vmatpush.msra.mxu0 %v6645
        %6686 = vmatpush.msra.mxu0 %v6644
        %6687 = vmatmul.f32.gmra.mxu0 %v6669
        %v6688 = vpop.f32.mrf.mxu0
        %v6689 = vadd.f32 0.0, %v6688
        %6690 = vdwg.mxu0
        %v6691 = vmax.f32 %v6667, %v6689
        %v6693 = vrot.slane %v6691, 6
        %6695 = vst.msk [vmem:[#allocation5 + $0x30] sm:$0xfc] %vm1683, %v6693
        %6696 = vst.msk [vmem:[#allocation5 + $0x40] sm:$0x3] %vm1686, %v6693
        %v6697 = vrot.slane %v6691, 7
        %6698 = vrot.lane.b32.xlu0 %v6697, 32
        %v6699 = vpop.permute.xlu0 %6698
        %6701 = vst.msk [vmem:[#allocation5 + $0x30] sm:$0xfe] %vm1701, %v6699
        %6702 = vst.msk [vmem:[#allocation5 + $0x40] sm:$0x1] %vm1705, %v6699
        %6703 = vrot.lane.b32.xlu0 %v6691, 64
        %v6704 = vpop.permute.xlu0 %6703
        %6706 = vst.msk [vmem:[#allocation5 + $0x30] sm:$0xff] %vm1713, %v6704
        %v6707 = vrot.slane %v6691, 1
        %6708 = vrot.lane.b32.xlu0 %v6707, 96
        %v6709 = vpop.permute.xlu0 %6708
        %6711 = vst.msk [vmem:[#allocation5 + $0x20] sm:$0x80] %vm1729, %v6709
        %6712 = vst.msk [vmem:[#allocation5 + $0x30] sm:$0x7f] %vm1733, %v6709
        %v6713 = vrot.slane %v6691, 2
        %6715 = vst.msk [vmem:[#allocation5 + $0x28] sm:$0xc0] %vm1742, %v6713
        %6716 = vst.msk [vmem:[#allocation5 + $0x38] sm:$0x3f] %vm1745, %v6713
        %v6717 = vld [vmem:[#allocation2 + $0x28] sm:$0xff]
        %v6718 = vld [vmem:[#allocation2 + $0x30] sm:$0xff]
        %v6719 = vld [vmem:[#allocation2 + $0x3c] sm:$0xff]
        %v6720 = vld [vmem:[#allocation2 + $0x44] sm:$0xff]
        %v6721 = vmax.f32 %v6717, %v6719
        %v6722 = vmax.f32 %v6718, %v6720
        %6723 = vmatpush.msra.mxu0 0.0
        %6724 = vmatpush.msra.mxu0 0.0
        %6725 = vmatpush.msra.mxu0 0.0
        %6726 = vmatpush.msra.mxu0 0.0
        %6727 = vmatpush.msra.mxu0 0.0
        %6728 = vmatpush.msra.mxu0 0.0
        %6729 = vmatpush.msra.mxu0 0.0
        %6730 = vmatpush.msra.mxu0 0.0
        %6731 = vmatpush.msra.mxu0 0.0
        %6732 = vmatpush.msra.mxu0 0.0
        %6733 = vmatpush.msra.mxu0 0.0
        %6734 = vmatpush.msra.mxu0 0.0
        %6735 = vmatpush.msra.mxu0 0.0
        %6736 = vmatpush.msra.mxu0 0.0
        %6737 = vmatpush.msra.mxu0 %v6722
        %6738 = vmatpush.msra.mxu0 %v6721
        %6739 = vmatmul.f32.gmra.mxu0 %v6647
        %v6740 = vpop.f32.mrf.mxu0
        %v6741 = vadd.f32 0.0, %v6740
        %6742 = vdwg.mxu0
        %6743 = vmatpush.msra.mxu0 0.0
        %6744 = vmatpush.msra.mxu0 0.0
        %6745 = vmatpush.msra.mxu0 0.0
        %6746 = vmatpush.msra.mxu0 0.0
        %6747 = vmatpush.msra.mxu0 0.0
        %6748 = vmatpush.msra.mxu0 0.0
        %6749 = vmatpush.msra.mxu0 0.0
        %6750 = vmatpush.msra.mxu0 0.0
        %6751 = vmatpush.msra.mxu0 0.0
        %6752 = vmatpush.msra.mxu0 0.0
        %6753 = vmatpush.msra.mxu0 0.0
        %6754 = vmatpush.msra.mxu0 0.0
        %6755 = vmatpush.msra.mxu0 0.0
        %6756 = vmatpush.msra.mxu0 0.0
        %6757 = vmatpush.msra.mxu0 %v6722
        %6758 = vmatpush.msra.mxu0 %v6721
        %6759 = vmatmul.f32.gmra.mxu0 %v6669
        %v6760 = vpop.f32.mrf.mxu0
        %v6761 = vadd.f32 0.0, %v6760
        %6762 = vdwg.mxu0
        %v6763 = vmax.f32 %v6741, %v6761
        %v6765 = vrot.slane %v6763, 2
        %6767 = vst.msk [vmem:[#allocation5 + $0x40] sm:$0xc0] %vm1742, %v6765
        %6768 = vst.msk [vmem:[#allocation5 + $0x50] sm:$0x3f] %vm1745, %v6765
        %v6769 = vrot.slane %v6763, 3
        %6770 = vrot.lane.b32.xlu0 %v6769, 32
        %v6771 = vpop.permute.xlu0 %6770
        %6773 = vst.msk [vmem:[#allocation5 + $0x40] sm:$0xe0] %vm1831, %v6771
        %6774 = vst.msk [vmem:[#allocation5 + $0x50] sm:$0x1f] %vm1834, %v6771
        %v6775 = vrot.slane %v6763, 4
        %6776 = vrot.lane.b32.xlu0 %v6775, 64
        %v6777 = vpop.permute.xlu0 %6776
        %6779 = vst.msk [vmem:[#allocation5 + $0x40] sm:$0xf0] %vm1849, %v6777
        %6780 = vst.msk [vmem:[#allocation5 + $0x50] sm:$0xf] %vm1852, %v6777
        %v6781 = vrot.slane %v6763, 5
        %6782 = vrot.lane.b32.xlu0 %v6781, 96
        %v6783 = vpop.permute.xlu0 %6782
        %6785 = vst.msk [vmem:[#allocation5 + $0x40] sm:$0xf8] %vm1866, %v6783
        %6786 = vst.msk [vmem:[#allocation5 + $0x50] sm:$0x7] %vm1869, %v6783
        %v6787 = vrot.slane %v6763, 6
        %6789 = vst.msk [vmem:[#allocation5 + $0x48] sm:$0xfc] %vm1683, %v6787
        %6790 = vst.msk [vmem:[#allocation5 + $0x58] sm:$0x3] %vm1686, %v6787
        %v6791 = vld [vmem:[#allocation2 + $0x50] sm:$0xff]
        %v6792 = vld [vmem:[#allocation2 + $0x58] sm:$0xff]
        %v6793 = vld [vmem:[#allocation2 + $0x64] sm:$0xff]
        %v6794 = vld [vmem:[#allocation2 + $0x6c] sm:$0xff]
        %v6795 = vmax.f32 %v6791, %v6793
        %v6796 = vmax.f32 %v6792, %v6794
        %6797 = vmatpush.msra.mxu0 0.0
        %6798 = vmatpush.msra.mxu0 0.0
        %6799 = vmatpush.msra.mxu0 0.0
        %6800 = vmatpush.msra.mxu0 0.0
        %6801 = vmatpush.msra.mxu0 0.0
        %6802 = vmatpush.msra.mxu0 0.0
        %6803 = vmatpush.msra.mxu0 0.0
        %6804 = vmatpush.msra.mxu0 0.0
        %6805 = vmatpush.msra.mxu0 0.0
        %6806 = vmatpush.msra.mxu0 0.0
        %6807 = vmatpush.msra.mxu0 0.0
        %6808 = vmatpush.msra.mxu0 0.0
        %6809 = vmatpush.msra.mxu0 0.0
        %6810 = vmatpush.msra.mxu0 0.0
        %6811 = vmatpush.msra.mxu0 %v6796
        %6812 = vmatpush.msra.mxu0 %v6795
        %6813 = vmatmul.f32.gmra.mxu0 %v6647
        %v6814 = vpop.f32.mrf.mxu0
        %v6815 = vadd.f32 0.0, %v6814
        %6816 = vdwg.mxu0
        %6817 = vmatpush.msra.mxu0 0.0
        %6818 = vmatpush.msra.mxu0 0.0
        %6819 = vmatpush.msra.mxu0 0.0
        %6820 = vmatpush.msra.mxu0 0.0
        %6821 = vmatpush.msra.mxu0 0.0
        %6822 = vmatpush.msra.mxu0 0.0
        %6823 = vmatpush.msra.mxu0 0.0
        %6824 = vmatpush.msra.mxu0 0.0
        %6825 = vmatpush.msra.mxu0 0.0
        %6826 = vmatpush.msra.mxu0 0.0
        %6827 = vmatpush.msra.mxu0 0.0
        %6828 = vmatpush.msra.mxu0 0.0
        %6829 = vmatpush.msra.mxu0 0.0
        %6830 = vmatpush.msra.mxu0 0.0
        %6831 = vmatpush.msra.mxu0 %v6796
        %6832 = vmatpush.msra.mxu0 %v6795
        %6833 = vmatmul.f32.gmra.mxu0 %v6669
        %v6834 = vpop.f32.mrf.mxu0
        %v6835 = vadd.f32 0.0, %v6834
        %6836 = vdwg.mxu0
        %v6837 = vmax.f32 %v6815, %v6835
        %v6839 = vrot.slane %v6837, 6
        %6841 = vst.msk [vmem:[#allocation5 + $0x60] sm:$0xfc] %vm1683, %v6839
        %6842 = vst.msk [vmem:[#allocation5 + $0x70] sm:$0x3] %vm1686, %v6839
        %v6843 = vrot.slane %v6837, 7
        %6844 = vrot.lane.b32.xlu0 %v6843, 32
        %v6845 = vpop.permute.xlu0 %6844
        %6847 = vst.msk [vmem:[#allocation5 + $0x60] sm:$0xfe] %vm1701, %v6845
        %6848 = vst.msk [vmem:[#allocation5 + $0x70] sm:$0x1] %vm1705, %v6845
        %6849 = vrot.lane.b32.xlu0 %v6837, 64
        %v6850 = vpop.permute.xlu0 %6849
        %6852 = vst.msk [vmem:[#allocation5 + $0x60] sm:$0xff] %vm1713, %v6850
        %v6853 = vrot.slane %v6837, 1
        %6854 = vrot.lane.b32.xlu0 %v6853, 96
        %v6855 = vpop.permute.xlu0 %6854
        %6857 = vst.msk [vmem:[#allocation5 + $0x50] sm:$0x80] %vm1729, %v6855
        %6858 = vst.msk [vmem:[#allocation5 + $0x60] sm:$0x7f] %vm1733, %v6855
        %v6859 = vrot.slane %v6837, 2
        %6861 = vst.msk [vmem:[#allocation5 + $0x58] sm:$0xc0] %vm1742, %v6859
        %6862 = vst.msk [vmem:[#allocation5 + $0x68] sm:$0x3f] %vm1745, %v6859
        %v6863 = vld [vmem:[#allocation2 + $0x78] sm:$0xff]
        %v6864 = vld [vmem:[#allocation2 + $0x80] sm:$0xff]
        %v6865 = vld [vmem:[#allocation2 + $0x8c] sm:$0xff]
        %v6866 = vld [vmem:[#allocation2 + $0x94] sm:$0xff]
        %v6867 = vmax.f32 %v6863, %v6865
        %v6868 = vmax.f32 %v6864, %v6866
        %6869 = vmatpush.msra.mxu0 0.0
        %6870 = vmatpush.msra.mxu0 0.0
        %6871 = vmatpush.msra.mxu0 0.0
        %6872 = vmatpush.msra.mxu0 0.0
        %6873 = vmatpush.msra.mxu0 0.0
        %6874 = vmatpush.msra.mxu0 0.0
        %6875 = vmatpush.msra.mxu0 0.0
        %6876 = vmatpush.msra.mxu0 0.0
        %6877 = vmatpush.msra.mxu0 0.0
        %6878 = vmatpush.msra.mxu0 0.0
        %6879 = vmatpush.msra.mxu0 0.0
        %6880 = vmatpush.msra.mxu0 0.0
        %6881 = vmatpush.msra.mxu0 0.0
        %6882 = vmatpush.msra.mxu0 0.0
        %6883 = vmatpush.msra.mxu0 %v6868
        %6884 = vmatpush.msra.mxu0 %v6867
        %6885 = vmatmul.f32.gmra.mxu0 %v6647
        %v6886 = vpop.f32.mrf.mxu0
        %v6887 = vadd.f32 0.0, %v6886
        %6888 = vdwg.mxu0
        %6889 = vmatpush.msra.mxu0 0.0
        %6890 = vmatpush.msra.mxu0 0.0
        %6891 = vmatpush.msra.mxu0 0.0
        %6892 = vmatpush.msra.mxu0 0.0
        %6893 = vmatpush.msra.mxu0 0.0
        %6894 = vmatpush.msra.mxu0 0.0
        %6895 = vmatpush.msra.mxu0 0.0
        %6896 = vmatpush.msra.mxu0 0.0
        %6897 = vmatpush.msra.mxu0 0.0
        %6898 = vmatpush.msra.mxu0 0.0
        %6899 = vmatpush.msra.mxu0 0.0
        %6900 = vmatpush.msra.mxu0 0.0
        %6901 = vmatpush.msra.mxu0 0.0
        %6902 = vmatpush.msra.mxu0 0.0
        %6903 = vmatpush.msra.mxu0 %v6868
        %6904 = vmatpush.msra.mxu0 %v6867
        %6905 = vmatmul.f32.gmra.mxu0 %v6669
        %v6906 = vpop.f32.mrf.mxu0
        %v6907 = vadd.f32 0.0, %v6906
        %6908 = vdwg.mxu0
        %v6909 = vmax.f32 %v6887, %v6907
        %v6911 = vrot.slane %v6909, 2
        %6913 = vst.msk [vmem:[#allocation5 + $0x70] sm:$0xc0] %vm1742, %v6911
        %6914 = vst.msk [vmem:[#allocation5 + $0x80] sm:$0x3f] %vm1745, %v6911
        %v6915 = vrot.slane %v6909, 3
        %6916 = vrot.lane.b32.xlu0 %v6915, 32
        %v6917 = vpop.permute.xlu0 %6916
        %6919 = vst.msk [vmem:[#allocation5 + $0x70] sm:$0xe0] %vm1831, %v6917
        %6920 = vst.msk [vmem:[#allocation5 + $0x80] sm:$0x1f] %vm1834, %v6917
        %v6921 = vrot.slane %v6909, 4
        %6922 = vrot.lane.b32.xlu0 %v6921, 64
        %v6923 = vpop.permute.xlu0 %6922
        %6925 = vst.msk [vmem:[#allocation5 + $0x70] sm:$0xf0] %vm1849, %v6923
        %6926 = vst.msk [vmem:[#allocation5 + $0x80] sm:$0xf] %vm1852, %v6923
        %v6927 = vrot.slane %v6909, 5
        %6928 = vrot.lane.b32.xlu0 %v6927, 96
        %v6929 = vpop.permute.xlu0 %6928
        %6931 = vst.msk [vmem:[#allocation5 + $0x70] sm:$0xf8] %vm1866, %v6929
        %6932 = vst.msk [vmem:[#allocation5 + $0x80] sm:$0x7] %vm1869, %v6929
        %v6933 = vrot.slane %v6909, 6
        %6935 = vst.msk [vmem:[#allocation5 + $0x78] sm:$0xfc] %vm1683, %v6933
        %6936 = vst.msk [vmem:[#allocation5 + $0x88] sm:$0x3] %vm1686, %v6933
        %v6937 = vld [vmem:[#allocation2 + $0xa0] sm:$0xff]
        %v6938 = vld [vmem:[#allocation2 + $0xa8] sm:$0xff]
        %v6939 = vld [vmem:[#allocation2 + $0xb4] sm:$0xff]
        %v6940 = vld [vmem:[#allocation2 + $0xbc] sm:$0xff]
        %v6941 = vmax.f32 %v6937, %v6939
        %v6942 = vmax.f32 %v6938, %v6940
        %6943 = vmatpush.msra.mxu0 0.0
        %6944 = vmatpush.msra.mxu0 0.0
        %6945 = vmatpush.msra.mxu0 0.0
        %6946 = vmatpush.msra.mxu0 0.0
        %6947 = vmatpush.msra.mxu0 0.0
        %6948 = vmatpush.msra.mxu0 0.0
        %6949 = vmatpush.msra.mxu0 0.0
        %6950 = vmatpush.msra.mxu0 0.0
        %6951 = vmatpush.msra.mxu0 0.0
        %6952 = vmatpush.msra.mxu0 0.0
        %6953 = vmatpush.msra.mxu0 0.0
        %6954 = vmatpush.msra.mxu0 0.0
        %6955 = vmatpush.msra.mxu0 0.0
        %6956 = vmatpush.msra.mxu0 0.0
        %6957 = vmatpush.msra.mxu0 %v6942
        %6958 = vmatpush.msra.mxu0 %v6941
        %6959 = vmatmul.f32.gmra.mxu0 %v6647
        %v6960 = vpop.f32.mrf.mxu0
        %v6961 = vadd.f32 0.0, %v6960
        %6962 = vdwg.mxu0
        %6963 = vmatpush.msra.mxu0 0.0
        %6964 = vmatpush.msra.mxu0 0.0
        %6965 = vmatpush.msra.mxu0 0.0
        %6966 = vmatpush.msra.mxu0 0.0
        %6967 = vmatpush.msra.mxu0 0.0
        %6968 = vmatpush.msra.mxu0 0.0
        %6969 = vmatpush.msra.mxu0 0.0
        %6970 = vmatpush.msra.mxu0 0.0
        %6971 = vmatpush.msra.mxu0 0.0
        %6972 = vmatpush.msra.mxu0 0.0
        %6973 = vmatpush.msra.mxu0 0.0
        %6974 = vmatpush.msra.mxu0 0.0
        %6975 = vmatpush.msra.mxu0 0.0
        %6976 = vmatpush.msra.mxu0 0.0
        %6977 = vmatpush.msra.mxu0 %v6942
        %6978 = vmatpush.msra.mxu0 %v6941
        %6979 = vmatmul.f32.gmra.mxu0 %v6669
        %v6980 = vpop.f32.mrf.mxu0
        %v6981 = vadd.f32 0.0, %v6980
        %6982 = vdwg.mxu0
        %v6983 = vmax.f32 %v6961, %v6981
        %v6985 = vrot.slane %v6983, 6
        %6987 = vst.msk [vmem:[#allocation5 + $0x90] sm:$0xfc] %vm1683, %v6985
        %6988 = vst.msk [vmem:[#allocation5 + $0xa0] sm:$0x3] %vm1686, %v6985
        %v6989 = vrot.slane %v6983, 7
        %6990 = vrot.lane.b32.xlu0 %v6989, 32
        %v6991 = vpop.permute.xlu0 %6990
        %6993 = vst.msk [vmem:[#allocation5 + $0x90] sm:$0xfe] %vm1701, %v6991
        %6994 = vst.msk [vmem:[#allocation5 + $0xa0] sm:$0x1] %vm1705, %v6991
        %6995 = vrot.lane.b32.xlu0 %v6983, 64
        %v6996 = vpop.permute.xlu0 %6995
        %6998 = vst.msk [vmem:[#allocation5 + $0x90] sm:$0xff] %vm1713, %v6996
        %v6999 = vrot.slane %v6983, 1
        %7000 = vrot.lane.b32.xlu0 %v6999, 96
        %v7001 = vpop.permute.xlu0 %7000
        %7003 = vst.msk [vmem:[#allocation5 + $0x80] sm:$0x80] %vm1729, %v7001
        %7004 = vst.msk [vmem:[#allocation5 + $0x90] sm:$0x7f] %vm1733, %v7001
        %v7005 = vrot.slane %v6983, 2
        %7007 = vst.msk [vmem:[#allocation5 + $0x88] sm:$0xc0] %vm1742, %v7005
        %7008 = vst.msk [vmem:[#allocation5 + $0x98] sm:$0x3f] %vm1745, %v7005
        %v7009 = vld [vmem:[#allocation2 + $0xc8] sm:$0xff]
        %v7010 = vld [vmem:[#allocation2 + $0xd0] sm:$0xff]
        %v7011 = vld [vmem:[#allocation2 + $0xdc] sm:$0xff]
        %v7012 = vld [vmem:[#allocation2 + $0xe4] sm:$0xff]
        %v7013 = vmax.f32 %v7009, %v7011
        %v7014 = vmax.f32 %v7010, %v7012
        %7015 = vmatpush.msra.mxu0 0.0
        %7016 = vmatpush.msra.mxu0 0.0
        %7017 = vmatpush.msra.mxu0 0.0
        %7018 = vmatpush.msra.mxu0 0.0
        %7019 = vmatpush.msra.mxu0 0.0
        %7020 = vmatpush.msra.mxu0 0.0
        %7021 = vmatpush.msra.mxu0 0.0
        %7022 = vmatpush.msra.mxu0 0.0
        %7023 = vmatpush.msra.mxu0 0.0
        %7024 = vmatpush.msra.mxu0 0.0
        %7025 = vmatpush.msra.mxu0 0.0
        %7026 = vmatpush.msra.mxu0 0.0
        %7027 = vmatpush.msra.mxu0 0.0
        %7028 = vmatpush.msra.mxu0 0.0
        %7029 = vmatpush.msra.mxu0 %v7014
        %7030 = vmatpush.msra.mxu0 %v7013
        %7031 = vmatmul.f32.gmra.mxu0 %v6647
        %v7032 = vpop.f32.mrf.mxu0
        %v7033 = vadd.f32 0.0, %v7032
        %7034 = vdwg.mxu0
        %7035 = vmatpush.msra.mxu0 0.0
        %7036 = vmatpush.msra.mxu0 0.0
        %7037 = vmatpush.msra.mxu0 0.0
        %7038 = vmatpush.msra.mxu0 0.0
        %7039 = vmatpush.msra.mxu0 0.0
        %7040 = vmatpush.msra.mxu0 0.0
        %7041 = vmatpush.msra.mxu0 0.0
        %7042 = vmatpush.msra.mxu0 0.0
        %7043 = vmatpush.msra.mxu0 0.0
        %7044 = vmatpush.msra.mxu0 0.0
        %7045 = vmatpush.msra.mxu0 0.0
        %7046 = vmatpush.msra.mxu0 0.0
        %7047 = vmatpush.msra.mxu0 0.0
        %7048 = vmatpush.msra.mxu0 0.0
        %7049 = vmatpush.msra.mxu0 %v7014
        %7050 = vmatpush.msra.mxu0 %v7013
        %7051 = vmatmul.f32.gmra.mxu0 %v6669
        %v7052 = vpop.f32.mrf.mxu0
        %v7053 = vadd.f32 0.0, %v7052
        %7054 = vdwg.mxu0
        %v7055 = vmax.f32 %v7033, %v7053
        %v7057 = vrot.slane %v7055, 2
        %7059 = vst.msk [vmem:[#allocation5 + $0xa0] sm:$0xc0] %vm1742, %v7057
        %7060 = vst.msk [vmem:[#allocation5 + $0xb0] sm:$0x3f] %vm1745, %v7057
        %v7061 = vrot.slane %v7055, 3
        %7062 = vrot.lane.b32.xlu0 %v7061, 32
        %v7063 = vpop.permute.xlu0 %7062
        %7065 = vst.msk [vmem:[#allocation5 + $0xa0] sm:$0xe0] %vm1831, %v7063
        %7066 = vst.msk [vmem:[#allocation5 + $0xb0] sm:$0x1f] %vm1834, %v7063
        %v7067 = vrot.slane %v7055, 4
        %7068 = vrot.lane.b32.xlu0 %v7067, 64
        %v7069 = vpop.permute.xlu0 %7068
        %7071 = vst.msk [vmem:[#allocation5 + $0xa0] sm:$0xf0] %vm1849, %v7069
        %7072 = vst.msk [vmem:[#allocation5 + $0xb0] sm:$0xf] %vm1852, %v7069
        %v7073 = vrot.slane %v7055, 5
        %7074 = vrot.lane.b32.xlu0 %v7073, 96
        %v7075 = vpop.permute.xlu0 %7074
        %7077 = vst.msk [vmem:[#allocation5 + $0xa0] sm:$0xf8] %vm1866, %v7075
        %7078 = vst.msk [vmem:[#allocation5 + $0xb0] sm:$0x7] %vm1869, %v7075
        %v7079 = vrot.slane %v7055, 6
        %7081 = vst.msk [vmem:[#allocation5 + $0xa8] sm:$0xfc] %vm1683, %v7079
        %7082 = vst.msk [vmem:[#allocation5 + $0xb8] sm:$0x3] %vm1686, %v7079
        %v7083 = vld [vmem:[#allocation2 + $0xf0] sm:$0xff]
        %v7084 = vld [vmem:[#allocation2 + $0xf8] sm:$0xff]
        %v7085 = vld [vmem:[#allocation2 + $0x104] sm:$0xff]
        %v7086 = vld [vmem:[#allocation2 + $0x10c] sm:$0xff]
        %v7087 = vmax.f32 %v7083, %v7085
        %v7088 = vmax.f32 %v7084, %v7086
        %7089 = vmatpush.msra.mxu0 0.0
        %7090 = vmatpush.msra.mxu0 0.0
        %7091 = vmatpush.msra.mxu0 0.0
        %7092 = vmatpush.msra.mxu0 0.0
        %7093 = vmatpush.msra.mxu0 0.0
        %7094 = vmatpush.msra.mxu0 0.0
        %7095 = vmatpush.msra.mxu0 0.0
        %7096 = vmatpush.msra.mxu0 0.0
        %7097 = vmatpush.msra.mxu0 0.0
        %7098 = vmatpush.msra.mxu0 0.0
        %7099 = vmatpush.msra.mxu0 0.0
        %7100 = vmatpush.msra.mxu0 0.0
        %7101 = vmatpush.msra.mxu0 0.0
        %7102 = vmatpush.msra.mxu0 0.0
        %7103 = vmatpush.msra.mxu0 %v7088
        %7104 = vmatpush.msra.mxu0 %v7087
        %7105 = vmatmul.f32.gmra.mxu0 %v6647
        %v7106 = vpop.f32.mrf.mxu0
        %v7107 = vadd.f32 0.0, %v7106
        %7108 = vdwg.mxu0
        %7109 = vmatpush.msra.mxu0 0.0
        %7110 = vmatpush.msra.mxu0 0.0
        %7111 = vmatpush.msra.mxu0 0.0
        %7112 = vmatpush.msra.mxu0 0.0
        %7113 = vmatpush.msra.mxu0 0.0
        %7114 = vmatpush.msra.mxu0 0.0
        %7115 = vmatpush.msra.mxu0 0.0
        %7116 = vmatpush.msra.mxu0 0.0
        %7117 = vmatpush.msra.mxu0 0.0
        %7118 = vmatpush.msra.mxu0 0.0
        %7119 = vmatpush.msra.mxu0 0.0
        %7120 = vmatpush.msra.mxu0 0.0
        %7121 = vmatpush.msra.mxu0 0.0
        %7122 = vmatpush.msra.mxu0 0.0
        %7123 = vmatpush.msra.mxu0 %v7088
        %7124 = vmatpush.msra.mxu0 %v7087
        %7125 = vmatmul.f32.gmra.mxu0 %v6669
        %v7126 = vpop.f32.mrf.mxu0
        %v7127 = vadd.f32 0.0, %v7126
        %7128 = vdwg.mxu0
        %v7129 = vmax.f32 %v7107, %v7127
        %v7131 = vrot.slane %v7129, 6
        %7133 = vst.msk [vmem:[#allocation5 + $0xc0] sm:$0xfc] %vm1683, %v7131
        %7134 = vst.msk [vmem:[#allocation5 + $0xd0] sm:$0x3] %vm1686, %v7131
        %v7135 = vrot.slane %v7129, 7
        %7136 = vrot.lane.b32.xlu0 %v7135, 32
        %v7137 = vpop.permute.xlu0 %7136
        %7139 = vst.msk [vmem:[#allocation5 + $0xc0] sm:$0xfe] %vm1701, %v7137
        %7140 = vst.msk [vmem:[#allocation5 + $0xd0] sm:$0x1] %vm1705, %v7137
        %7141 = vrot.lane.b32.xlu0 %v7129, 64
        %v7142 = vpop.permute.xlu0 %7141
        %7144 = vst.msk [vmem:[#allocation5 + $0xc0] sm:$0xff] %vm1713, %v7142
        %v7145 = vrot.slane %v7129, 1
        %7146 = vrot.lane.b32.xlu0 %v7145, 96
        %v7147 = vpop.permute.xlu0 %7146
        %7149 = vst.msk [vmem:[#allocation5 + $0xb0] sm:$0x80] %vm1729, %v7147
        %7150 = vst.msk [vmem:[#allocation5 + $0xc0] sm:$0x7f] %vm1733, %v7147
        %v7151 = vrot.slane %v7129, 2
        %7153 = vst.msk [vmem:[#allocation5 + $0xb8] sm:$0xc0] %vm1742, %v7151
        %7154 = vst.msk [vmem:[#allocation5 + $0xc8] sm:$0x3f] %vm1745, %v7151
        %v7155 = vld [vmem:[#allocation2 + $0x118] sm:$0xff]
        %v7156 = vld [vmem:[#allocation2 + $0x120] sm:$0xff]
        %v7157 = vld [vmem:[#allocation2 + $0x12c] sm:$0xff]
        %v7158 = vld [vmem:[#allocation2 + $0x134] sm:$0xff]
        %v7159 = vmax.f32 %v7155, %v7157
        %v7160 = vmax.f32 %v7156, %v7158
        %7161 = vmatpush.msra.mxu0 0.0
        %7162 = vmatpush.msra.mxu0 0.0
        %7163 = vmatpush.msra.mxu0 0.0
        %7164 = vmatpush.msra.mxu0 0.0
        %7165 = vmatpush.msra.mxu0 0.0
        %7166 = vmatpush.msra.mxu0 0.0
        %7167 = vmatpush.msra.mxu0 0.0
        %7168 = vmatpush.msra.mxu0 0.0
        %7169 = vmatpush.msra.mxu0 0.0
        %7170 = vmatpush.msra.mxu0 0.0
        %7171 = vmatpush.msra.mxu0 0.0
        %7172 = vmatpush.msra.mxu0 0.0
        %7173 = vmatpush.msra.mxu0 0.0
        %7174 = vmatpush.msra.mxu0 0.0
        %7175 = vmatpush.msra.mxu0 %v7160
        %7176 = vmatpush.msra.mxu0 %v7159
        %7177 = vmatmul.f32.gmra.mxu0 %v6647
        %v7178 = vpop.f32.mrf.mxu0
        %v7179 = vadd.f32 0.0, %v7178
        %7180 = vdwg.mxu0
        %7181 = vmatpush.msra.mxu0 0.0
        %7182 = vmatpush.msra.mxu0 0.0
        %7183 = vmatpush.msra.mxu0 0.0
        %7184 = vmatpush.msra.mxu0 0.0
        %7185 = vmatpush.msra.mxu0 0.0
        %7186 = vmatpush.msra.mxu0 0.0
        %7187 = vmatpush.msra.mxu0 0.0
        %7188 = vmatpush.msra.mxu0 0.0
        %7189 = vmatpush.msra.mxu0 0.0
        %7190 = vmatpush.msra.mxu0 0.0
        %7191 = vmatpush.msra.mxu0 0.0
        %7192 = vmatpush.msra.mxu0 0.0
        %7193 = vmatpush.msra.mxu0 0.0
        %7194 = vmatpush.msra.mxu0 0.0
        %7195 = vmatpush.msra.mxu0 %v7160
        %7196 = vmatpush.msra.mxu0 %v7159
        %7197 = vmatmul.f32.gmra.mxu0 %v6669
        %v7198 = vpop.f32.mrf.mxu0
        %v7199 = vadd.f32 0.0, %v7198
        %7200 = vdwg.mxu0
        %v7201 = vmax.f32 %v7179, %v7199
        %v7203 = vrot.slane %v7201, 2
        %7205 = vst.msk [vmem:[#allocation5 + $0xd0] sm:$0xc0] %vm1742, %v7203
        %7206 = vst.msk [vmem:[#allocation5 + $0xe0] sm:$0x3f] %vm1745, %v7203
        %v7207 = vrot.slane %v7201, 3
        %7208 = vrot.lane.b32.xlu0 %v7207, 32
        %v7209 = vpop.permute.xlu0 %7208
        %7211 = vst.msk [vmem:[#allocation5 + $0xd0] sm:$0xe0] %vm1831, %v7209
        %7212 = vst.msk [vmem:[#allocation5 + $0xe0] sm:$0x1f] %vm1834, %v7209
        %v7213 = vrot.slane %v7201, 4
        %7214 = vrot.lane.b32.xlu0 %v7213, 64
        %v7215 = vpop.permute.xlu0 %7214
        %7217 = vst.msk [vmem:[#allocation5 + $0xd0] sm:$0xf0] %vm1849, %v7215
        %7218 = vst.msk [vmem:[#allocation5 + $0xe0] sm:$0xf] %vm1852, %v7215
        %v7219 = vrot.slane %v7201, 5
        %7220 = vrot.lane.b32.xlu0 %v7219, 96
        %v7221 = vpop.permute.xlu0 %7220
        %7223 = vst.msk [vmem:[#allocation5 + $0xd0] sm:$0xf8] %vm1866, %v7221
        %7224 = vst.msk [vmem:[#allocation5 + $0xe0] sm:$0x7] %vm1869, %v7221
        %v7225 = vrot.slane %v7201, 6
        %7227 = vst.msk [vmem:[#allocation5 + $0xd8] sm:$0xfc] %vm1683, %v7225
        %7228 = vst.msk [vmem:[#allocation5 + $0xe8] sm:$0x3] %vm1686, %v7225
        %v7229 = vld [vmem:[#allocation5] sm:$0xff]
        %v7230 = vld [vmem:[#allocation5 + $0x8] sm:$0xff]
        %v7231 = vld [vmem:[#allocation5 + $0x10] sm:$0xff]
        %v7232 = vld [vmem:[#allocation5 + $0x18] sm:$0xff]
        %v7233 = vld [vmem:[#allocation5 + $0x20] sm:$0xff]
        %v7234 = vld [vmem:[#allocation5 + $0x28] sm:$0xff]
        %v7235 = vld [vmem:[#allocation5 + $0x30] sm:$0xff]
        %v7236 = vld [vmem:[#allocation5 + $0x38] sm:$0xff]
        %v7237 = vld [vmem:[#allocation5 + $0x40] sm:$0xff]
        %v7238 = vld [vmem:[#allocation5 + $0x48] sm:$0xff]
        %v7239 = vld [vmem:[#allocation5 + $0x50] sm:$0xff]
        %v7240 = vld [vmem:[#allocation5 + $0x58] sm:$0xff]
        %v7241 = vld [vmem:[#allocation5 + $0x60] sm:$0xff]
        %v7242 = vld [vmem:[#allocation5 + $0x68] sm:$0xff]
        %v7243 = vld [vmem:[#allocation5 + $0x70] sm:$0xff]
        %v7244 = vld [vmem:[#allocation5 + $0x78] sm:$0xff]
        %v7245 = vld [vmem:[#allocation5 + $0x80] sm:$0xff]
        %v7246 = vld [vmem:[#allocation5 + $0x88] sm:$0xff]
        %v7247 = vld [vmem:[#allocation5 + $0x90] sm:$0xff]
        %v7248 = vld [vmem:[#allocation5 + $0x98] sm:$0xff]
        %v7249 = vld [vmem:[#allocation5 + $0xa0] sm:$0xff]
        %v7250 = vld [vmem:[#allocation5 + $0xa8] sm:$0xff]
        %v7251 = vld [vmem:[#allocation5 + $0xb0] sm:$0xff]
        %v7252 = vld [vmem:[#allocation5 + $0xb8] sm:$0xff]
        %v7253 = vld [vmem:[%s5] sm:$0xff]
        %v7254 = vld [vmem:[%s5 + $0x8] sm:$0xff]
        %v7255 = vld [vmem:[%s5 + $0x10] sm:$0xff]
        %v7256 = vld [vmem:[%s5 + $0x18] sm:$0xff]
        %v7257 = vld [vmem:[%s5 + $0x20] sm:$0xff]
        %v7258 = vld [vmem:[%s5 + $0x28] sm:$0xff]
        %v7259 = vld [vmem:[%s5 + $0x30] sm:$0xff]
        %v7260 = vld [vmem:[%s5 + $0x38] sm:$0xff]
        %v7261 = vld [vmem:[%s5 + $0x40] sm:$0xff]
        %v7262 = vld [vmem:[%s5 + $0x48] sm:$0xff]
        %v7263 = vld [vmem:[%s5 + $0x50] sm:$0xff]
        %v7264 = vld [vmem:[%s5 + $0x58] sm:$0xff]
        %v7265 = vld [vmem:[%s5 + $0x60] sm:$0xff]
        %v7266 = vld [vmem:[%s5 + $0x68] sm:$0xff]
        %v7267 = vld [vmem:[%s5 + $0x70] sm:$0xff]
        %v7268 = vld [vmem:[%s5 + $0x78] sm:$0xff]
        %v7269 = vld [vmem:[%s5 + $0x80] sm:$0xff]
        %v7270 = vld [vmem:[%s5 + $0x88] sm:$0xff]
        %v7271 = vld [vmem:[%s5 + $0x90] sm:$0xff]
        %v7272 = vld [vmem:[%s5 + $0x98] sm:$0xff]
        %v7273 = vld [vmem:[#allocation5 + $0x10] sm:$0xf0]
        %v7274 = vld [vmem:[#allocation5 + $0x18] sm:$0xf0]
        %v7275 = vld [vmem:[#allocation5 + $0xc0] sm:$0xff]
        %v7276 = vld [vmem:[#allocation5 + $0xc8] sm:$0xff]
        %v7277 = vld [vmem:[#allocation5 + $0xd0] sm:$0xf]
        %v7278 = vld [vmem:[#allocation5 + $0xd8] sm:$0xf]
        %s7279 = scalar_lea.vmem %s5, 160
        %v7280 = vld [vmem:[%s7279] sm:$0xff]
        %v7281 = vld [vmem:[%s7279 + $0x8] sm:$0xff]
        %v7282 = vld [vmem:[%s7279 + $0x10] sm:$0xff]
        %v7283 = vld [vmem:[%s7279 + $0x18] sm:$0xff]
        %v7284 = vld [vmem:[%s7279 + $0x20] sm:$0xff]
        %v7285 = vld [vmem:[%s7279 + $0x28] sm:$0xff]
        %v7286 = vld [vmem:[%s7279 + $0x30] sm:$0xff]
        %v7287 = vld [vmem:[%s7279 + $0x38] sm:$0xff]
        %v7288 = vld [vmem:[%s7279 + $0x40] sm:$0xff]
        %v7289 = vld [vmem:[%s7279 + $0x48] sm:$0xff]
        %v7290 = vld [vmem:[%s7279 + $0x50] sm:$0xff]
        %v7291 = vld [vmem:[%s7279 + $0x58] sm:$0xff]
        %v7292 = vld [vmem:[%s7279 + $0x60] sm:$0xff]
        %v7293 = vld [vmem:[%s7279 + $0x68] sm:$0xff]
        %v7294 = vld [vmem:[%s7279 + $0x70] sm:$0xff]
        %v7295 = vld [vmem:[%s7279 + $0x78] sm:$0xff]
        %v7296 = vld [vmem:[%s7279 + $0x80] sm:$0xff]
        %v7297 = vld [vmem:[%s7279 + $0x88] sm:$0xff]
        %v7298 = vld [vmem:[%s7279 + $0x90] sm:$0xff]
        %v7299 = vld [vmem:[%s7279 + $0x98] sm:$0xff]
        %v7326 = vrot.slane %v7273, 4
        %v7327 = vrot.slane %v7233, 4
        %v7328 = vsel %vm1836, %v7326, %v7327
        %v7329 = vrot.slane %v7274, 4
        %v7330 = vrot.slane %v7234, 4
        %v7331 = vsel %vm1836, %v7329, %v7330
        %v7332 = vrot.slane %v7235, 4
        %v7333 = vsel %vm1836, %v7327, %v7332
        %v7334 = vrot.slane %v7236, 4
        %v7335 = vsel %vm1836, %v7330, %v7334
        %v7336 = vrot.slane %v7237, 4
        %v7337 = vsel %vm1836, %v7332, %v7336
        %v7338 = vrot.slane %v7238, 4
        %v7339 = vsel %vm1836, %v7334, %v7338
        %v7340 = vrot.slane %v7239, 4
        %v7341 = vsel %vm1836, %v7336, %v7340
        %v7342 = vrot.slane %v7240, 4
        %v7343 = vsel %vm1836, %v7338, %v7342
        %v7344 = vrot.slane %v7241, 4
        %v7345 = vsel %vm1836, %v7340, %v7344
        %v7346 = vrot.slane %v7242, 4
        %v7347 = vsel %vm1836, %v7342, %v7346
        %v7348 = vrot.slane %v7243, 4
        %v7349 = vsel %vm1836, %v7344, %v7348
        %v7350 = vrot.slane %v7244, 4
        %v7351 = vsel %vm1836, %v7346, %v7350
        %v7352 = vrot.slane %v7245, 4
        %v7353 = vsel %vm1836, %v7348, %v7352
        %v7354 = vrot.slane %v7246, 4
        %v7355 = vsel %vm1836, %v7350, %v7354
        %v7356 = vrot.slane %v7247, 4
        %v7357 = vsel %vm1836, %v7352, %v7356
        %v7358 = vrot.slane %v7248, 4
        %v7359 = vsel %vm1836, %v7354, %v7358
        %v7360 = vrot.slane %v7249, 4
        %v7361 = vsel %vm1836, %v7356, %v7360
        %v7362 = vrot.slane %v7250, 4
        %v7363 = vsel %vm1836, %v7358, %v7362
        %v7364 = vrot.slane %v7251, 4
        %v7365 = vsel %vm1836, %v7360, %v7364
        %v7366 = vrot.slane %v7252, 4
        %v7367 = vsel %vm1836, %v7362, %v7366
        %v7368 = vrot.slane %v7275, 4
        %v7369 = vsel %vm1836, %v7364, %v7368
        %v7370 = vrot.slane %v7276, 4
        %v7371 = vsel %vm1836, %v7366, %v7370
        %v7372 = vrot.slane %v7277, 4
        %v7373 = vsel %vm1836, %v7368, %v7372
        %v7374 = vrot.slane %v7278, 4
        %v7375 = vsel %vm1836, %v7370, %v7374
        %v7388 = vsel %vm385, %v7331, 0
        %v7390 = vsel %vm385, %v7335, 0
        %v7392 = vsel %vm385, %v7339, 0
        %v7394 = vsel %vm385, %v7343, 0
        %v7396 = vsel %vm385, %v7347, 0
        %v7398 = vsel %vm385, %v7351, 0
        %v7400 = vsel %vm385, %v7355, 0
        %v7402 = vsel %vm385, %v7359, 0
        %v7404 = vsel %vm385, %v7363, 0
        %v7406 = vsel %vm385, %v7367, 0
        %v7408 = vsel %vm385, %v7371, 0
        %v7410 = vsel %vm385, %v7375, 0
        %7412 = vmatpush.msra.mxu0 %v7295
        %7413 = vmatpush.msra.mxu0 %v7294
        %7414 = vmatpush.msra.mxu0 %v7293
        %7415 = vmatpush.msra.mxu0 %v7292
        %7416 = vmatpush.msra.mxu0 %v7291
        %7417 = vmatpush.msra.mxu0 %v7290
        %7418 = vmatpush.msra.mxu0 %v7289
        %7419 = vmatpush.msra.mxu0 %v7288
        %7420 = vmatpush.msra.mxu0 %v7287
        %7421 = vmatpush.msra.mxu0 %v7286
        %7422 = vmatpush.msra.mxu0 %v7285
        %7423 = vmatpush.msra.mxu0 %v7284
        %7424 = vmatpush.msra.mxu0 %v7283
        %7425 = vmatpush.msra.mxu0 %v7282
        %7426 = vmatpush.msra.mxu0 %v7281
        %7427 = vmatpush.msra.mxu0 %v7280
        %7428 = vmatmul.f32.gmra.mxu0 %v7328
        %v7429 = vpop.f32.mrf.mxu0
        %v7430 = vadd.f32 0.0, %v7429
        %7431 = vmatmul.f32.gmra.mxu0 %v7333
        %v7432 = vpop.f32.mrf.mxu0
        %v7433 = vadd.f32 0.0, %v7432
        %7434 = vmatmul.f32.gmra.mxu0 %v7337
        %v7435 = vpop.f32.mrf.mxu0
        %v7436 = vadd.f32 0.0, %v7435
        %7437 = vmatmul.f32.gmra.mxu0 %v7341
        %v7438 = vpop.f32.mrf.mxu0
        %v7439 = vadd.f32 0.0, %v7438
        %7440 = vmatmul.f32.gmra.mxu0 %v7345
        %v7441 = vpop.f32.mrf.mxu0
        %v7442 = vadd.f32 0.0, %v7441
        %7443 = vmatmul.f32.gmra.mxu0 %v7349
        %v7444 = vpop.f32.mrf.mxu0
        %v7445 = vadd.f32 0.0, %v7444
        %7446 = vmatmul.f32.gmra.mxu0 %v7353
        %v7447 = vpop.f32.mrf.mxu0
        %v7448 = vadd.f32 0.0, %v7447
        %7449 = vmatmul.f32.gmra.mxu0 %v7357
        %v7450 = vpop.f32.mrf.mxu0
        %v7451 = vadd.f32 0.0, %v7450
        %7452 = vmatmul.f32.gmra.mxu0 %v7361
        %v7453 = vpop.f32.mrf.mxu0
        %v7454 = vadd.f32 0.0, %v7453
        %7455 = vmatmul.f32.gmra.mxu0 %v7365
        %v7456 = vpop.f32.mrf.mxu0
        %v7457 = vadd.f32 0.0, %v7456
        %7458 = vmatmul.f32.gmra.mxu0 %v7369
        %v7459 = vpop.f32.mrf.mxu0
        %v7460 = vadd.f32 0.0, %v7459
        %7461 = vmatmul.f32.gmra.mxu0 %v7373
        %v7462 = vpop.f32.mrf.mxu0
        %v7463 = vadd.f32 0.0, %v7462
        %7464 = vdwg.mxu0
        %7465 = vmatpush.msra.mxu0 0.0
        %7466 = vmatpush.msra.mxu0 0.0
        %7467 = vmatpush.msra.mxu0 0.0
        %7468 = vmatpush.msra.mxu0 0.0
        %7469 = vmatpush.msra.mxu0 0.0
        %7470 = vmatpush.msra.mxu0 0.0
        %7471 = vmatpush.msra.mxu0 0.0
        %7472 = vmatpush.msra.mxu0 0.0
        %7473 = vmatpush.msra.mxu0 0.0
        %7474 = vmatpush.msra.mxu0 0.0
        %7475 = vmatpush.msra.mxu0 0.0
        %7476 = vmatpush.msra.mxu0 0.0
        %7477 = vmatpush.msra.mxu0 %v7299
        %7478 = vmatpush.msra.mxu0 %v7298
        %7479 = vmatpush.msra.mxu0 %v7297
        %7480 = vmatpush.msra.mxu0 %v7296
        %7481 = vmatmul.f32.gmra.mxu0 %v7388
        %v7482 = vpop.f32.mrf.mxu0
        %v7483 = vadd.f32 %v7430, %v7482
        %7484 = vmatmul.f32.gmra.mxu0 %v7390
        %v7485 = vpop.f32.mrf.mxu0
        %v7486 = vadd.f32 %v7433, %v7485
        %7487 = vmatmul.f32.gmra.mxu0 %v7392
        %v7488 = vpop.f32.mrf.mxu0
        %v7489 = vadd.f32 %v7436, %v7488
        %7490 = vmatmul.f32.gmra.mxu0 %v7394
        %v7491 = vpop.f32.mrf.mxu0
        %v7492 = vadd.f32 %v7439, %v7491
        %7493 = vmatmul.f32.gmra.mxu0 %v7396
        %v7494 = vpop.f32.mrf.mxu0
        %v7495 = vadd.f32 %v7442, %v7494
        %7496 = vmatmul.f32.gmra.mxu0 %v7398
        %v7497 = vpop.f32.mrf.mxu0
        %v7498 = vadd.f32 %v7445, %v7497
        %7499 = vmatmul.f32.gmra.mxu0 %v7400
        %v7500 = vpop.f32.mrf.mxu0
        %v7501 = vadd.f32 %v7448, %v7500
        %7502 = vmatmul.f32.gmra.mxu0 %v7402
        %v7503 = vpop.f32.mrf.mxu0
        %v7504 = vadd.f32 %v7451, %v7503
        %7505 = vmatmul.f32.gmra.mxu0 %v7404
        %v7506 = vpop.f32.mrf.mxu0
        %v7507 = vadd.f32 %v7454, %v7506
        %7508 = vmatmul.f32.gmra.mxu0 %v7406
        %v7509 = vpop.f32.mrf.mxu0
        %v7510 = vadd.f32 %v7457, %v7509
        %7511 = vmatmul.f32.gmra.mxu0 %v7408
        %v7512 = vpop.f32.mrf.mxu0
        %v7513 = vadd.f32 %v7460, %v7512
        %7514 = vmatmul.f32.gmra.mxu0 %v7410
        %v7515 = vpop.f32.mrf.mxu0
        %v7516 = vadd.f32 %v7463, %v7515
        %7517 = vdwg.mxu0
        %v7519 = vsel %vm385, %v7230, 0
        %v7522 = vsel %vm385, %v7232, 0
        %v7524 = vsel %vm385, %v7234, 0
        %v7526 = vsel %vm385, %v7236, 0
        %v7528 = vsel %vm385, %v7238, 0
        %v7530 = vsel %vm385, %v7240, 0
        %v7532 = vsel %vm385, %v7242, 0
        %v7534 = vsel %vm385, %v7244, 0
        %v7536 = vsel %vm385, %v7246, 0
        %v7538 = vsel %vm385, %v7248, 0
        %v7540 = vsel %vm385, %v7250, 0
        %v7542 = vsel %vm385, %v7252, 0
        %7544 = vmatpush.msra.mxu0 %v7268
        %7545 = vmatpush.msra.mxu0 %v7267
        %7546 = vmatpush.msra.mxu0 %v7266
        %7547 = vmatpush.msra.mxu0 %v7265
        %7548 = vmatpush.msra.mxu0 %v7264
        %7549 = vmatpush.msra.mxu0 %v7263
        %7550 = vmatpush.msra.mxu0 %v7262
        %7551 = vmatpush.msra.mxu0 %v7261
        %7552 = vmatpush.msra.mxu0 %v7260
        %7553 = vmatpush.msra.mxu0 %v7259
        %7554 = vmatpush.msra.mxu0 %v7258
        %7555 = vmatpush.msra.mxu0 %v7257
        %7556 = vmatpush.msra.mxu0 %v7256
        %7557 = vmatpush.msra.mxu0 %v7255
        %7558 = vmatpush.msra.mxu0 %v7254
        %7559 = vmatpush.msra.mxu0 %v7253
        %7560 = vmatmul.f32.gmra.mxu0 %v7229
        %v7561 = vpop.f32.mrf.mxu0
        %v7562 = vadd.f32 %v7483, %v7561
        %7563 = vmatmul.f32.gmra.mxu0 %v7231
        %v7564 = vpop.f32.mrf.mxu0
        %v7565 = vadd.f32 %v7486, %v7564
        %7566 = vmatmul.f32.gmra.mxu0 %v7233
        %v7567 = vpop.f32.mrf.mxu0
        %v7568 = vadd.f32 %v7489, %v7567
        %7569 = vmatmul.f32.gmra.mxu0 %v7235
        %v7570 = vpop.f32.mrf.mxu0
        %v7571 = vadd.f32 %v7492, %v7570
        %7572 = vmatmul.f32.gmra.mxu0 %v7237
        %v7573 = vpop.f32.mrf.mxu0
        %v7574 = vadd.f32 %v7495, %v7573
        %7575 = vmatmul.f32.gmra.mxu0 %v7239
        %v7576 = vpop.f32.mrf.mxu0
        %v7577 = vadd.f32 %v7498, %v7576
        %7578 = vmatmul.f32.gmra.mxu0 %v7241
        %v7579 = vpop.f32.mrf.mxu0
        %v7580 = vadd.f32 %v7501, %v7579
        %7581 = vmatmul.f32.gmra.mxu0 %v7243
        %v7582 = vpop.f32.mrf.mxu0
        %v7583 = vadd.f32 %v7504, %v7582
        %7584 = vmatmul.f32.gmra.mxu0 %v7245
        %v7585 = vpop.f32.mrf.mxu0
        %v7586 = vadd.f32 %v7507, %v7585
        %7587 = vmatmul.f32.gmra.mxu0 %v7247
        %v7588 = vpop.f32.mrf.mxu0
        %v7589 = vadd.f32 %v7510, %v7588
        %7590 = vmatmul.f32.gmra.mxu0 %v7249
        %v7591 = vpop.f32.mrf.mxu0
        %v7592 = vadd.f32 %v7513, %v7591
        %7593 = vmatmul.f32.gmra.mxu0 %v7251
        %v7594 = vpop.f32.mrf.mxu0
        %v7595 = vadd.f32 %v7516, %v7594
        %7596 = vdwg.mxu0
        %7597 = vmatpush.msra.mxu0 0.0
        %7598 = vmatpush.msra.mxu0 0.0
        %7599 = vmatpush.msra.mxu0 0.0
        %7600 = vmatpush.msra.mxu0 0.0
        %7601 = vmatpush.msra.mxu0 0.0
        %7602 = vmatpush.msra.mxu0 0.0
        %7603 = vmatpush.msra.mxu0 0.0
        %7604 = vmatpush.msra.mxu0 0.0
        %7605 = vmatpush.msra.mxu0 0.0
        %7606 = vmatpush.msra.mxu0 0.0
        %7607 = vmatpush.msra.mxu0 0.0
        %7608 = vmatpush.msra.mxu0 0.0
        %7609 = vmatpush.msra.mxu0 %v7272
        %7610 = vmatpush.msra.mxu0 %v7271
        %7611 = vmatpush.msra.mxu0 %v7270
        %7612 = vmatpush.msra.mxu0 %v7269
        %7613 = vmatmul.f32.gmra.mxu0 %v7519
        %v7614 = vpop.f32.mrf.mxu0
        %v7615 = vadd.f32 %v7562, %v7614
        %7616 = vmatmul.f32.gmra.mxu0 %v7522
        %v7617 = vpop.f32.mrf.mxu0
        %v7618 = vadd.f32 %v7565, %v7617
        %7619 = vmatmul.f32.gmra.mxu0 %v7524
        %v7620 = vpop.f32.mrf.mxu0
        %v7621 = vadd.f32 %v7568, %v7620
        %7622 = vmatmul.f32.gmra.mxu0 %v7526
        %v7623 = vpop.f32.mrf.mxu0
        %v7624 = vadd.f32 %v7571, %v7623
        %7625 = vmatmul.f32.gmra.mxu0 %v7528
        %v7626 = vpop.f32.mrf.mxu0
        %v7627 = vadd.f32 %v7574, %v7626
        %7628 = vmatmul.f32.gmra.mxu0 %v7530
        %v7629 = vpop.f32.mrf.mxu0
        %v7630 = vadd.f32 %v7577, %v7629
        %7631 = vmatmul.f32.gmra.mxu0 %v7532
        %v7632 = vpop.f32.mrf.mxu0
        %v7633 = vadd.f32 %v7580, %v7632
        %7634 = vmatmul.f32.gmra.mxu0 %v7534
        %v7635 = vpop.f32.mrf.mxu0
        %v7636 = vadd.f32 %v7583, %v7635
        %7637 = vmatmul.f32.gmra.mxu0 %v7536
        %v7638 = vpop.f32.mrf.mxu0
        %v7639 = vadd.f32 %v7586, %v7638
        %7640 = vmatmul.f32.gmra.mxu0 %v7538
        %v7641 = vpop.f32.mrf.mxu0
        %v7642 = vadd.f32 %v7589, %v7641
        %7643 = vmatmul.f32.gmra.mxu0 %v7540
        %v7644 = vpop.f32.mrf.mxu0
        %v7645 = vadd.f32 %v7592, %v7644
        %7646 = vmatmul.f32.gmra.mxu0 %v7542
        %v7647 = vpop.f32.mrf.mxu0
        %v7648 = vadd.f32 %v7595, %v7647
        %7649 = vdwg.mxu0
        %v7650 = vld [vmem:[#allocation5 + $0x30] sm:$0xff]
        %v7651 = vld [vmem:[#allocation5 + $0x38] sm:$0xff]
        %v7652 = vld [vmem:[#allocation5 + $0x40] sm:$0xff]
        %v7653 = vld [vmem:[#allocation5 + $0x48] sm:$0xff]
        %v7654 = vld [vmem:[#allocation5 + $0x50] sm:$0xff]
        %v7655 = vld [vmem:[#allocation5 + $0x58] sm:$0xff]
        %v7656 = vld [vmem:[#allocation5 + $0x60] sm:$0xff]
        %v7657 = vld [vmem:[#allocation5 + $0x68] sm:$0xff]
        %v7658 = vld [vmem:[#allocation5 + $0x70] sm:$0xff]
        %v7659 = vld [vmem:[#allocation5 + $0x78] sm:$0xff]
        %v7660 = vld [vmem:[#allocation5 + $0x80] sm:$0xff]
        %v7661 = vld [vmem:[#allocation5 + $0x88] sm:$0xff]
        %v7662 = vld [vmem:[#allocation5 + $0x90] sm:$0xff]
        %v7663 = vld [vmem:[#allocation5 + $0x98] sm:$0xff]
        %v7664 = vld [vmem:[#allocation5 + $0xa0] sm:$0xff]
        %v7665 = vld [vmem:[#allocation5 + $0xa8] sm:$0xff]
        %v7666 = vld [vmem:[#allocation5 + $0xb0] sm:$0xff]
        %v7667 = vld [vmem:[#allocation5 + $0xb8] sm:$0xff]
        %v7668 = vld [vmem:[#allocation5 + $0xc0] sm:$0xff]
        %v7669 = vld [vmem:[#allocation5 + $0xc8] sm:$0xff]
        %v7670 = vld [vmem:[#allocation5 + $0xd0] sm:$0xff]
        %v7671 = vld [vmem:[#allocation5 + $0xd8] sm:$0xff]
        %v7672 = vld [vmem:[#allocation5 + $0xe0] sm:$0xff]
        %v7673 = vld [vmem:[#allocation5 + $0xe8] sm:$0xff]
        %s7674 = scalar_lea.vmem %s5, 320
        %v7675 = vld [vmem:[%s7674] sm:$0xff]
        %v7676 = vld [vmem:[%s7674 + $0x8] sm:$0xff]
        %v7677 = vld [vmem:[%s7674 + $0x10] sm:$0xff]
        %v7678 = vld [vmem:[%s7674 + $0x18] sm:$0xff]
        %v7679 = vld [vmem:[%s7674 + $0x20] sm:$0xff]
        %v7680 = vld [vmem:[%s7674 + $0x28] sm:$0xff]
        %v7681 = vld [vmem:[%s7674 + $0x30] sm:$0xff]
        %v7682 = vld [vmem:[%s7674 + $0x38] sm:$0xff]
        %v7683 = vld [vmem:[%s7674 + $0x40] sm:$0xff]
        %v7684 = vld [vmem:[%s7674 + $0x48] sm:$0xff]
        %v7685 = vld [vmem:[%s7674 + $0x50] sm:$0xff]
        %v7686 = vld [vmem:[%s7674 + $0x58] sm:$0xff]
        %v7687 = vld [vmem:[%s7674 + $0x60] sm:$0xff]
        %v7688 = vld [vmem:[%s7674 + $0x68] sm:$0xff]
        %v7689 = vld [vmem:[%s7674 + $0x70] sm:$0xff]
        %v7690 = vld [vmem:[%s7674 + $0x78] sm:$0xff]
        %v7691 = vld [vmem:[%s7674 + $0x80] sm:$0xff]
        %v7692 = vld [vmem:[%s7674 + $0x88] sm:$0xff]
        %v7693 = vld [vmem:[%s7674 + $0x90] sm:$0xff]
        %v7694 = vld [vmem:[%s7674 + $0x98] sm:$0xff]
        %v7696 = vsel %vm385, %v7651, 0
        %v7699 = vsel %vm385, %v7653, 0
        %v7702 = vsel %vm385, %v7655, 0
        %v7705 = vsel %vm385, %v7657, 0
        %v7708 = vsel %vm385, %v7659, 0
        %v7711 = vsel %vm385, %v7661, 0
        %v7714 = vsel %vm385, %v7663, 0
        %v7717 = vsel %vm385, %v7665, 0
        %v7720 = vsel %vm385, %v7667, 0
        %v7723 = vsel %vm385, %v7669, 0
        %v7726 = vsel %vm385, %v7671, 0
        %v7729 = vsel %vm385, %v7673, 0
        %7731 = vmatpush.msra.mxu0 %v7690
        %7732 = vmatpush.msra.mxu0 %v7689
        %7733 = vmatpush.msra.mxu0 %v7688
        %7734 = vmatpush.msra.mxu0 %v7687
        %7735 = vmatpush.msra.mxu0 %v7686
        %7736 = vmatpush.msra.mxu0 %v7685
        %7737 = vmatpush.msra.mxu0 %v7684
        %7738 = vmatpush.msra.mxu0 %v7683
        %7739 = vmatpush.msra.mxu0 %v7682
        %7740 = vmatpush.msra.mxu0 %v7681
        %7741 = vmatpush.msra.mxu0 %v7680
        %7742 = vmatpush.msra.mxu0 %v7679
        %7743 = vmatpush.msra.mxu0 %v7678
        %7744 = vmatpush.msra.mxu0 %v7677
        %7745 = vmatpush.msra.mxu0 %v7676
        %7746 = vmatpush.msra.mxu0 %v7675
        %7747 = vmatmul.f32.gmra.mxu0 %v7650
        %v7748 = vpop.f32.mrf.mxu0
        %v7749 = vadd.f32 0.0, %v7748
        %7750 = vmatmul.f32.gmra.mxu0 %v7652
        %v7751 = vpop.f32.mrf.mxu0
        %v7752 = vadd.f32 0.0, %v7751
        %7753 = vmatmul.f32.gmra.mxu0 %v7654
        %v7754 = vpop.f32.mrf.mxu0
        %v7755 = vadd.f32 0.0, %v7754
        %7756 = vmatmul.f32.gmra.mxu0 %v7656
        %v7757 = vpop.f32.mrf.mxu0
        %v7758 = vadd.f32 0.0, %v7757
        %7759 = vmatmul.f32.gmra.mxu0 %v7658
        %v7760 = vpop.f32.mrf.mxu0
        %v7761 = vadd.f32 0.0, %v7760
        %7762 = vmatmul.f32.gmra.mxu0 %v7660
        %v7763 = vpop.f32.mrf.mxu0
        %v7764 = vadd.f32 0.0, %v7763
        %7765 = vmatmul.f32.gmra.mxu0 %v7662
        %v7766 = vpop.f32.mrf.mxu0
        %v7767 = vadd.f32 0.0, %v7766
        %7768 = vmatmul.f32.gmra.mxu0 %v7664
        %v7769 = vpop.f32.mrf.mxu0
        %v7770 = vadd.f32 0.0, %v7769
        %7771 = vmatmul.f32.gmra.mxu0 %v7666
        %v7772 = vpop.f32.mrf.mxu0
        %v7773 = vadd.f32 0.0, %v7772
        %7774 = vmatmul.f32.gmra.mxu0 %v7668
        %v7775 = vpop.f32.mrf.mxu0
        %v7776 = vadd.f32 0.0, %v7775
        %7777 = vmatmul.f32.gmra.mxu0 %v7670
        %v7778 = vpop.f32.mrf.mxu0
        %v7779 = vadd.f32 0.0, %v7778
        %7780 = vmatmul.f32.gmra.mxu0 %v7672
        %v7781 = vpop.f32.mrf.mxu0
        %v7782 = vadd.f32 0.0, %v7781
        %7783 = vdwg.mxu0
        %7784 = vmatpush.msra.mxu0 0.0
        %7785 = vmatpush.msra.mxu0 0.0
        %7786 = vmatpush.msra.mxu0 0.0
        %7787 = vmatpush.msra.mxu0 0.0
        %7788 = vmatpush.msra.mxu0 0.0
        %7789 = vmatpush.msra.mxu0 0.0
        %7790 = vmatpush.msra.mxu0 0.0
        %7791 = vmatpush.msra.mxu0 0.0
        %7792 = vmatpush.msra.mxu0 0.0
        %7793 = vmatpush.msra.mxu0 0.0
        %7794 = vmatpush.msra.mxu0 0.0
        %7795 = vmatpush.msra.mxu0 0.0
        %7796 = vmatpush.msra.mxu0 %v7694
        %7797 = vmatpush.msra.mxu0 %v7693
        %7798 = vmatpush.msra.mxu0 %v7692
        %7799 = vmatpush.msra.mxu0 %v7691
        %7800 = vmatmul.f32.gmra.mxu0 %v7696
        %v7801 = vpop.f32.mrf.mxu0
        %v7802 = vadd.f32 %v7749, %v7801
        %7803 = vmatmul.f32.gmra.mxu0 %v7699
        %v7804 = vpop.f32.mrf.mxu0
        %v7805 = vadd.f32 %v7752, %v7804
        %7806 = vmatmul.f32.gmra.mxu0 %v7702
        %v7807 = vpop.f32.mrf.mxu0
        %v7808 = vadd.f32 %v7755, %v7807
        %7809 = vmatmul.f32.gmra.mxu0 %v7705
        %v7810 = vpop.f32.mrf.mxu0
        %v7811 = vadd.f32 %v7758, %v7810
        %7812 = vmatmul.f32.gmra.mxu0 %v7708
        %v7813 = vpop.f32.mrf.mxu0
        %v7814 = vadd.f32 %v7761, %v7813
        %7815 = vmatmul.f32.gmra.mxu0 %v7711
        %v7816 = vpop.f32.mrf.mxu0
        %v7817 = vadd.f32 %v7764, %v7816
        %7818 = vmatmul.f32.gmra.mxu0 %v7714
        %v7819 = vpop.f32.mrf.mxu0
        %v7820 = vadd.f32 %v7767, %v7819
        %7821 = vmatmul.f32.gmra.mxu0 %v7717
        %v7822 = vpop.f32.mrf.mxu0
        %v7823 = vadd.f32 %v7770, %v7822
        %7824 = vmatmul.f32.gmra.mxu0 %v7720
        %v7825 = vpop.f32.mrf.mxu0
        %v7826 = vadd.f32 %v7773, %v7825
        %7827 = vmatmul.f32.gmra.mxu0 %v7723
        %v7828 = vpop.f32.mrf.mxu0
        %v7829 = vadd.f32 %v7776, %v7828
        %7830 = vmatmul.f32.gmra.mxu0 %v7726
        %v7831 = vpop.f32.mrf.mxu0
        %v7832 = vadd.f32 %v7779, %v7831
        %7833 = vmatmul.f32.gmra.mxu0 %v7729
        %v7834 = vpop.f32.mrf.mxu0
        %v7835 = vadd.f32 %v7782, %v7834
        %7836 = vdwg.mxu0
        %v7837 = vadd.f32 %v7615, %v7802
        %v7838 = vadd.f32 %v7618, %v7805
        %v7839 = vadd.f32 %v7621, %v7808
        %v7840 = vadd.f32 %v7624, %v7811
        %v7841 = vadd.f32 %v7627, %v7814
        %v7842 = vadd.f32 %v7630, %v7817
        %v7843 = vadd.f32 %v7633, %v7820
        %v7844 = vadd.f32 %v7636, %v7823
        %v7845 = vadd.f32 %v7639, %v7826
        %v7846 = vadd.f32 %v7642, %v7829
        %v7847 = vadd.f32 %v7645, %v7832
        %v7848 = vadd.f32 %v7648, %v7835
        %v7849 = vld [vmem:[#allocation5 + $0x40] sm:$0xf0]
        %v7850 = vld [vmem:[#allocation5 + $0x48] sm:$0xf0]
        %v7851 = vld [vmem:[#allocation5 + $0x50] sm:$0xff]
        %v7852 = vld [vmem:[#allocation5 + $0x58] sm:$0xff]
        %v7853 = vld [vmem:[#allocation5 + $0x60] sm:$0xff]
        %v7854 = vld [vmem:[#allocation5 + $0x68] sm:$0xff]
        %v7855 = vld [vmem:[#allocation5 + $0x70] sm:$0xff]
        %v7856 = vld [vmem:[#allocation5 + $0x78] sm:$0xff]
        %v7857 = vld [vmem:[#allocation5 + $0x80] sm:$0xff]
        %v7858 = vld [vmem:[#allocation5 + $0x88] sm:$0xff]
        %v7859 = vld [vmem:[#allocation5 + $0x90] sm:$0xff]
        %v7860 = vld [vmem:[#allocation5 + $0x98] sm:$0xff]
        %v7861 = vld [vmem:[#allocation5 + $0xa0] sm:$0xff]
        %v7862 = vld [vmem:[#allocation5 + $0xa8] sm:$0xff]
        %v7863 = vld [vmem:[#allocation5 + $0xb0] sm:$0xff]
        %v7864 = vld [vmem:[#allocation5 + $0xb8] sm:$0xff]
        %v7865 = vld [vmem:[#allocation5 + $0xc0] sm:$0xff]
        %v7866 = vld [vmem:[#allocation5 + $0xc8] sm:$0xff]
        %v7867 = vld [vmem:[#allocation5 + $0xd0] sm:$0xff]
        %v7868 = vld [vmem:[#allocation5 + $0xd8] sm:$0xff]
        %v7869 = vld [vmem:[#allocation5 + $0xe0] sm:$0xff]
        %v7870 = vld [vmem:[#allocation5 + $0xe8] sm:$0xff]
        %v7871 = vld [vmem:[#allocation5 + $0xf0] sm:$0xff]
        %v7872 = vld [vmem:[#allocation5 + $0xf8] sm:$0xff]
        %v7873 = vld [vmem:[#allocation5 + $0x100] sm:$0xf]
        %v7874 = vld [vmem:[#allocation5 + $0x108] sm:$0xf]
        %s7875 = scalar_lea.vmem %s5, 480
        %v7876 = vld [vmem:[%s7875] sm:$0xff]
        %v7877 = vld [vmem:[%s7875 + $0x8] sm:$0xff]
        %v7878 = vld [vmem:[%s7875 + $0x10] sm:$0xff]
        %v7879 = vld [vmem:[%s7875 + $0x18] sm:$0xff]
        %v7880 = vld [vmem:[%s7875 + $0x20] sm:$0xff]
        %v7881 = vld [vmem:[%s7875 + $0x28] sm:$0xff]
        %v7882 = vld [vmem:[%s7875 + $0x30] sm:$0xff]
        %v7883 = vld [vmem:[%s7875 + $0x38] sm:$0xff]
        %v7884 = vld [vmem:[%s7875 + $0x40] sm:$0xff]
        %v7885 = vld [vmem:[%s7875 + $0x48] sm:$0xff]
        %v7886 = vld [vmem:[%s7875 + $0x50] sm:$0xff]
        %v7887 = vld [vmem:[%s7875 + $0x58] sm:$0xff]
        %v7888 = vld [vmem:[%s7875 + $0x60] sm:$0xff]
        %v7889 = vld [vmem:[%s7875 + $0x68] sm:$0xff]
        %v7890 = vld [vmem:[%s7875 + $0x70] sm:$0xff]
        %v7891 = vld [vmem:[%s7875 + $0x78] sm:$0xff]
        %v7892 = vld [vmem:[%s7875 + $0x80] sm:$0xff]
        %v7893 = vld [vmem:[%s7875 + $0x88] sm:$0xff]
        %v7894 = vld [vmem:[%s7875 + $0x90] sm:$0xff]
        %v7895 = vld [vmem:[%s7875 + $0x98] sm:$0xff]
        %v7922 = vrot.slane %v7849, 4
        %v7923 = vrot.slane %v7851, 4
        %v7924 = vsel %vm1836, %v7922, %v7923
        %v7925 = vrot.slane %v7850, 4
        %v7926 = vrot.slane %v7852, 4
        %v7927 = vsel %vm1836, %v7925, %v7926
        %v7928 = vrot.slane %v7853, 4
        %v7929 = vsel %vm1836, %v7923, %v7928
        %v7930 = vrot.slane %v7854, 4
        %v7931 = vsel %vm1836, %v7926, %v7930
        %v7932 = vrot.slane %v7855, 4
        %v7933 = vsel %vm1836, %v7928, %v7932
        %v7934 = vrot.slane %v7856, 4
        %v7935 = vsel %vm1836, %v7930, %v7934
        %v7936 = vrot.slane %v7857, 4
        %v7937 = vsel %vm1836, %v7932, %v7936
        %v7938 = vrot.slane %v7858, 4
        %v7939 = vsel %vm1836, %v7934, %v7938
        %v7940 = vrot.slane %v7859, 4
        %v7941 = vsel %vm1836, %v7936, %v7940
        %v7942 = vrot.slane %v7860, 4
        %v7943 = vsel %vm1836, %v7938, %v7942
        %v7944 = vrot.slane %v7861, 4
        %v7945 = vsel %vm1836, %v7940, %v7944
        %v7946 = vrot.slane %v7862, 4
        %v7947 = vsel %vm1836, %v7942, %v7946
        %v7948 = vrot.slane %v7863, 4
        %v7949 = vsel %vm1836, %v7944, %v7948
        %v7950 = vrot.slane %v7864, 4
        %v7951 = vsel %vm1836, %v7946, %v7950
        %v7952 = vrot.slane %v7865, 4
        %v7953 = vsel %vm1836, %v7948, %v7952
        %v7954 = vrot.slane %v7866, 4
        %v7955 = vsel %vm1836, %v7950, %v7954
        %v7956 = vrot.slane %v7867, 4
        %v7957 = vsel %vm1836, %v7952, %v7956
        %v7958 = vrot.slane %v7868, 4
        %v7959 = vsel %vm1836, %v7954, %v7958
        %v7960 = vrot.slane %v7869, 4
        %v7961 = vsel %vm1836, %v7956, %v7960
        %v7962 = vrot.slane %v7870, 4
        %v7963 = vsel %vm1836, %v7958, %v7962
        %v7964 = vrot.slane %v7871, 4
        %v7965 = vsel %vm1836, %v7960, %v7964
        %v7966 = vrot.slane %v7872, 4
        %v7967 = vsel %vm1836, %v7962, %v7966
        %v7968 = vrot.slane %v7873, 4
        %v7969 = vsel %vm1836, %v7964, %v7968
        %v7970 = vrot.slane %v7874, 4
        %v7971 = vsel %vm1836, %v7966, %v7970
        %v7984 = vsel %vm385, %v7927, 0
        %v7986 = vsel %vm385, %v7931, 0
        %v7988 = vsel %vm385, %v7935, 0
        %v7990 = vsel %vm385, %v7939, 0
        %v7992 = vsel %vm385, %v7943, 0
        %v7994 = vsel %vm385, %v7947, 0
        %v7996 = vsel %vm385, %v7951, 0
        %v7998 = vsel %vm385, %v7955, 0
        %v8000 = vsel %vm385, %v7959, 0
        %v8002 = vsel %vm385, %v7963, 0
        %v8004 = vsel %vm385, %v7967, 0
        %v8006 = vsel %vm385, %v7971, 0
        %8008 = vmatpush.msra.mxu0 %v7891
        %8009 = vmatpush.msra.mxu0 %v7890
        %8010 = vmatpush.msra.mxu0 %v7889
        %8011 = vmatpush.msra.mxu0 %v7888
        %8012 = vmatpush.msra.mxu0 %v7887
        %8013 = vmatpush.msra.mxu0 %v7886
        %8014 = vmatpush.msra.mxu0 %v7885
        %8015 = vmatpush.msra.mxu0 %v7884
        %8016 = vmatpush.msra.mxu0 %v7883
        %8017 = vmatpush.msra.mxu0 %v7882
        %8018 = vmatpush.msra.mxu0 %v7881
        %8019 = vmatpush.msra.mxu0 %v7880
        %8020 = vmatpush.msra.mxu0 %v7879
        %8021 = vmatpush.msra.mxu0 %v7878
        %8022 = vmatpush.msra.mxu0 %v7877
        %8023 = vmatpush.msra.mxu0 %v7876
        %8024 = vmatmul.f32.gmra.mxu0 %v7924
        %v8025 = vpop.f32.mrf.mxu0
        %v8026 = vadd.f32 0.0, %v8025
        %8027 = vmatmul.f32.gmra.mxu0 %v7929
        %v8028 = vpop.f32.mrf.mxu0
        %v8029 = vadd.f32 0.0, %v8028
        %8030 = vmatmul.f32.gmra.mxu0 %v7933
        %v8031 = vpop.f32.mrf.mxu0
        %v8032 = vadd.f32 0.0, %v8031
        %8033 = vmatmul.f32.gmra.mxu0 %v7937
        %v8034 = vpop.f32.mrf.mxu0
        %v8035 = vadd.f32 0.0, %v8034
        %8036 = vmatmul.f32.gmra.mxu0 %v7941
        %v8037 = vpop.f32.mrf.mxu0
        %v8038 = vadd.f32 0.0, %v8037
        %8039 = vmatmul.f32.gmra.mxu0 %v7945
        %v8040 = vpop.f32.mrf.mxu0
        %v8041 = vadd.f32 0.0, %v8040
        %8042 = vmatmul.f32.gmra.mxu0 %v7949
        %v8043 = vpop.f32.mrf.mxu0
        %v8044 = vadd.f32 0.0, %v8043
        %8045 = vmatmul.f32.gmra.mxu0 %v7953
        %v8046 = vpop.f32.mrf.mxu0
        %v8047 = vadd.f32 0.0, %v8046
        %8048 = vmatmul.f32.gmra.mxu0 %v7957
        %v8049 = vpop.f32.mrf.mxu0
        %v8050 = vadd.f32 0.0, %v8049
        %8051 = vmatmul.f32.gmra.mxu0 %v7961
        %v8052 = vpop.f32.mrf.mxu0
        %v8053 = vadd.f32 0.0, %v8052
        %8054 = vmatmul.f32.gmra.mxu0 %v7965
        %v8055 = vpop.f32.mrf.mxu0
        %v8056 = vadd.f32 0.0, %v8055
        %8057 = vmatmul.f32.gmra.mxu0 %v7969
        %v8058 = vpop.f32.mrf.mxu0
        %v8059 = vadd.f32 0.0, %v8058
        %8060 = vdwg.mxu0
        %8061 = vmatpush.msra.mxu0 0.0
        %8062 = vmatpush.msra.mxu0 0.0
        %8063 = vmatpush.msra.mxu0 0.0
        %8064 = vmatpush.msra.mxu0 0.0
        %8065 = vmatpush.msra.mxu0 0.0
        %8066 = vmatpush.msra.mxu0 0.0
        %8067 = vmatpush.msra.mxu0 0.0
        %8068 = vmatpush.msra.mxu0 0.0
        %8069 = vmatpush.msra.mxu0 0.0
        %8070 = vmatpush.msra.mxu0 0.0
        %8071 = vmatpush.msra.mxu0 0.0
        %8072 = vmatpush.msra.mxu0 0.0
        %8073 = vmatpush.msra.mxu0 %v7895
        %8074 = vmatpush.msra.mxu0 %v7894
        %8075 = vmatpush.msra.mxu0 %v7893
        %8076 = vmatpush.msra.mxu0 %v7892
        %8077 = vmatmul.f32.gmra.mxu0 %v7984
        %v8078 = vpop.f32.mrf.mxu0
        %v8079 = vadd.f32 %v8026, %v8078
        %8080 = vmatmul.f32.gmra.mxu0 %v7986
        %v8081 = vpop.f32.mrf.mxu0
        %v8082 = vadd.f32 %v8029, %v8081
        %8083 = vmatmul.f32.gmra.mxu0 %v7988
        %v8084 = vpop.f32.mrf.mxu0
        %v8085 = vadd.f32 %v8032, %v8084
        %8086 = vmatmul.f32.gmra.mxu0 %v7990
        %v8087 = vpop.f32.mrf.mxu0
        %v8088 = vadd.f32 %v8035, %v8087
        %8089 = vmatmul.f32.gmra.mxu0 %v7992
        %v8090 = vpop.f32.mrf.mxu0
        %v8091 = vadd.f32 %v8038, %v8090
        %8092 = vmatmul.f32.gmra.mxu0 %v7994
        %v8093 = vpop.f32.mrf.mxu0
        %v8094 = vadd.f32 %v8041, %v8093
        %8095 = vmatmul.f32.gmra.mxu0 %v7996
        %v8096 = vpop.f32.mrf.mxu0
        %v8097 = vadd.f32 %v8044, %v8096
        %8098 = vmatmul.f32.gmra.mxu0 %v7998
        %v8099 = vpop.f32.mrf.mxu0
        %v8100 = vadd.f32 %v8047, %v8099
        %8101 = vmatmul.f32.gmra.mxu0 %v8000
        %v8102 = vpop.f32.mrf.mxu0
        %v8103 = vadd.f32 %v8050, %v8102
        %8104 = vmatmul.f32.gmra.mxu0 %v8002
        %v8105 = vpop.f32.mrf.mxu0
        %v8106 = vadd.f32 %v8053, %v8105
        %8107 = vmatmul.f32.gmra.mxu0 %v8004
        %v8108 = vpop.f32.mrf.mxu0
        %v8109 = vadd.f32 %v8056, %v8108
        %8110 = vmatmul.f32.gmra.mxu0 %v8006
        %v8111 = vpop.f32.mrf.mxu0
        %v8112 = vadd.f32 %v8059, %v8111
        %8113 = vdwg.mxu0
        %v8114 = vadd.f32 %v7837, %v8079
        %v8115 = vadd.f32 %v7838, %v8082
        %v8116 = vadd.f32 %v7839, %v8085
        %v8117 = vadd.f32 %v7840, %v8088
        %v8118 = vadd.f32 %v7841, %v8091
        %v8119 = vadd.f32 %v7842, %v8094
        %v8120 = vadd.f32 %v7843, %v8097
        %v8121 = vadd.f32 %v7844, %v8100
        %v8122 = vadd.f32 %v7845, %v8103
        %v8123 = vadd.f32 %v7846, %v8106
        %v8124 = vadd.f32 %v7847, %v8109
        %v8125 = vadd.f32 %v7848, %v8112
        %v8126 = vld [vmem:[#allocation5 + $0x60] sm:$0xff]
        %v8127 = vld [vmem:[#allocation5 + $0x68] sm:$0xff]
        %v8128 = vld [vmem:[#allocation5 + $0x70] sm:$0xff]
        %v8129 = vld [vmem:[#allocation5 + $0x78] sm:$0xff]
        %v8130 = vld [vmem:[#allocation5 + $0x80] sm:$0xff]
        %v8131 = vld [vmem:[#allocation5 + $0x88] sm:$0xff]
        %v8132 = vld [vmem:[#allocation5 + $0x90] sm:$0xff]
        %v8133 = vld [vmem:[#allocation5 + $0x98] sm:$0xff]
        %v8134 = vld [vmem:[#allocation5 + $0xa0] sm:$0xff]
        %v8135 = vld [vmem:[#allocation5 + $0xa8] sm:$0xff]
        %v8136 = vld [vmem:[#allocation5 + $0xb0] sm:$0xff]
        %v8137 = vld [vmem:[#allocation5 + $0xb8] sm:$0xff]
        %v8138 = vld [vmem:[#allocation5 + $0xc0] sm:$0xff]
        %v8139 = vld [vmem:[#allocation5 + $0xc8] sm:$0xff]
        %v8140 = vld [vmem:[#allocation5 + $0xd0] sm:$0xff]
        %v8141 = vld [vmem:[#allocation5 + $0xd8] sm:$0xff]
        %v8142 = vld [vmem:[#allocation5 + $0xe0] sm:$0xff]
        %v8143 = vld [vmem:[#allocation5 + $0xe8] sm:$0xff]
        %v8144 = vld [vmem:[#allocation5 + $0xf0] sm:$0xff]
        %v8145 = vld [vmem:[#allocation5 + $0xf8] sm:$0xff]
        %v8146 = vld [vmem:[#allocation5 + $0x100] sm:$0xff]
        %v8147 = vld [vmem:[#allocation5 + $0x108] sm:$0xff]
        %v8148 = vld [vmem:[#allocation5 + $0x110] sm:$0xff]
        %v8149 = vld [vmem:[#allocation5 + $0x118] sm:$0xff]
        %s8150 = scalar_lea.vmem %s5, 640
        %v8151 = vld [vmem:[%s8150] sm:$0xff]
        %v8152 = vld [vmem:[%s8150 + $0x8] sm:$0xff]
        %v8153 = vld [vmem:[%s8150 + $0x10] sm:$0xff]
        %v8154 = vld [vmem:[%s8150 + $0x18] sm:$0xff]
        %v8155 = vld [vmem:[%s8150 + $0x20] sm:$0xff]
        %v8156 = vld [vmem:[%s8150 + $0x28] sm:$0xff]
        %v8157 = vld [vmem:[%s8150 + $0x30] sm:$0xff]
        %v8158 = vld [vmem:[%s8150 + $0x38] sm:$0xff]
        %v8159 = vld [vmem:[%s8150 + $0x40] sm:$0xff]
        %v8160 = vld [vmem:[%s8150 + $0x48] sm:$0xff]
        %v8161 = vld [vmem:[%s8150 + $0x50] sm:$0xff]
        %v8162 = vld [vmem:[%s8150 + $0x58] sm:$0xff]
        %v8163 = vld [vmem:[%s8150 + $0x60] sm:$0xff]
        %v8164 = vld [vmem:[%s8150 + $0x68] sm:$0xff]
        %v8165 = vld [vmem:[%s8150 + $0x70] sm:$0xff]
        %v8166 = vld [vmem:[%s8150 + $0x78] sm:$0xff]
        %v8167 = vld [vmem:[%s8150 + $0x80] sm:$0xff]
        %v8168 = vld [vmem:[%s8150 + $0x88] sm:$0xff]
        %v8169 = vld [vmem:[%s8150 + $0x90] sm:$0xff]
        %v8170 = vld [vmem:[%s8150 + $0x98] sm:$0xff]
        %v8172 = vsel %vm385, %v8127, 0
        %v8175 = vsel %vm385, %v8129, 0
        %v8178 = vsel %vm385, %v8131, 0
        %v8181 = vsel %vm385, %v8133, 0
        %v8184 = vsel %vm385, %v8135, 0
        %v8187 = vsel %vm385, %v8137, 0
        %v8190 = vsel %vm385, %v8139, 0
        %v8193 = vsel %vm385, %v8141, 0
        %v8196 = vsel %vm385, %v8143, 0
        %v8199 = vsel %vm385, %v8145, 0
        %v8202 = vsel %vm385, %v8147, 0
        %v8205 = vsel %vm385, %v8149, 0
        %8207 = vmatpush.msra.mxu0 %v8166
        %8208 = vmatpush.msra.mxu0 %v8165
        %8209 = vmatpush.msra.mxu0 %v8164
        %8210 = vmatpush.msra.mxu0 %v8163
        %8211 = vmatpush.msra.mxu0 %v8162
        %8212 = vmatpush.msra.mxu0 %v8161
        %8213 = vmatpush.msra.mxu0 %v8160
        %8214 = vmatpush.msra.mxu0 %v8159
        %8215 = vmatpush.msra.mxu0 %v8158
        %8216 = vmatpush.msra.mxu0 %v8157
        %8217 = vmatpush.msra.mxu0 %v8156
        %8218 = vmatpush.msra.mxu0 %v8155
        %8219 = vmatpush.msra.mxu0 %v8154
        %8220 = vmatpush.msra.mxu0 %v8153
        %8221 = vmatpush.msra.mxu0 %v8152
        %8222 = vmatpush.msra.mxu0 %v8151
        %8223 = vmatmul.f32.gmra.mxu0 %v8126
        %v8224 = vpop.f32.mrf.mxu0
        %v8225 = vadd.f32 0.0, %v8224
        %8226 = vmatmul.f32.gmra.mxu0 %v8128
        %v8227 = vpop.f32.mrf.mxu0
        %v8228 = vadd.f32 0.0, %v8227
        %8229 = vmatmul.f32.gmra.mxu0 %v8130
        %v8230 = vpop.f32.mrf.mxu0
        %v8231 = vadd.f32 0.0, %v8230
        %8232 = vmatmul.f32.gmra.mxu0 %v8132
        %v8233 = vpop.f32.mrf.mxu0
        %v8234 = vadd.f32 0.0, %v8233
        %8235 = vmatmul.f32.gmra.mxu0 %v8134
        %v8236 = vpop.f32.mrf.mxu0
        %v8237 = vadd.f32 0.0, %v8236
        %8238 = vmatmul.f32.gmra.mxu0 %v8136
        %v8239 = vpop.f32.mrf.mxu0
        %v8240 = vadd.f32 0.0, %v8239
        %8241 = vmatmul.f32.gmra.mxu0 %v8138
        %v8242 = vpop.f32.mrf.mxu0
        %v8243 = vadd.f32 0.0, %v8242
        %8244 = vmatmul.f32.gmra.mxu0 %v8140
        %v8245 = vpop.f32.mrf.mxu0
        %v8246 = vadd.f32 0.0, %v8245
        %8247 = vmatmul.f32.gmra.mxu0 %v8142
        %v8248 = vpop.f32.mrf.mxu0
        %v8249 = vadd.f32 0.0, %v8248
        %8250 = vmatmul.f32.gmra.mxu0 %v8144
        %v8251 = vpop.f32.mrf.mxu0
        %v8252 = vadd.f32 0.0, %v8251
        %8253 = vmatmul.f32.gmra.mxu0 %v8146
        %v8254 = vpop.f32.mrf.mxu0
        %v8255 = vadd.f32 0.0, %v8254
        %8256 = vmatmul.f32.gmra.mxu0 %v8148
        %v8257 = vpop.f32.mrf.mxu0
        %v8258 = vadd.f32 0.0, %v8257
        %8259 = vdwg.mxu0
        %8260 = vmatpush.msra.mxu0 0.0
        %8261 = vmatpush.msra.mxu0 0.0
        %8262 = vmatpush.msra.mxu0 0.0
        %8263 = vmatpush.msra.mxu0 0.0
        %8264 = vmatpush.msra.mxu0 0.0
        %8265 = vmatpush.msra.mxu0 0.0
        %8266 = vmatpush.msra.mxu0 0.0
        %8267 = vmatpush.msra.mxu0 0.0
        %8268 = vmatpush.msra.mxu0 0.0
        %8269 = vmatpush.msra.mxu0 0.0
        %8270 = vmatpush.msra.mxu0 0.0
        %8271 = vmatpush.msra.mxu0 0.0
        %8272 = vmatpush.msra.mxu0 %v8170
        %8273 = vmatpush.msra.mxu0 %v8169
        %8274 = vmatpush.msra.mxu0 %v8168
        %8275 = vmatpush.msra.mxu0 %v8167
        %8276 = vmatmul.f32.gmra.mxu0 %v8172
        %v8277 = vpop.f32.mrf.mxu0
        %v8278 = vadd.f32 %v8225, %v8277
        %8279 = vmatmul.f32.gmra.mxu0 %v8175
        %v8280 = vpop.f32.mrf.mxu0
        %v8281 = vadd.f32 %v8228, %v8280
        %8282 = vmatmul.f32.gmra.mxu0 %v8178
        %v8283 = vpop.f32.mrf.mxu0
        %v8284 = vadd.f32 %v8231, %v8283
        %8285 = vmatmul.f32.gmra.mxu0 %v8181
        %v8286 = vpop.f32.mrf.mxu0
        %v8287 = vadd.f32 %v8234, %v8286
        %8288 = vmatmul.f32.gmra.mxu0 %v8184
        %v8289 = vpop.f32.mrf.mxu0
        %v8290 = vadd.f32 %v8237, %v8289
        %8291 = vmatmul.f32.gmra.mxu0 %v8187
        %v8292 = vpop.f32.mrf.mxu0
        %v8293 = vadd.f32 %v8240, %v8292
        %8294 = vmatmul.f32.gmra.mxu0 %v8190
        %v8295 = vpop.f32.mrf.mxu0
        %v8296 = vadd.f32 %v8243, %v8295
        %8297 = vmatmul.f32.gmra.mxu0 %v8193
        %v8298 = vpop.f32.mrf.mxu0
        %v8299 = vadd.f32 %v8246, %v8298
        %8300 = vmatmul.f32.gmra.mxu0 %v8196
        %v8301 = vpop.f32.mrf.mxu0
        %v8302 = vadd.f32 %v8249, %v8301
        %8303 = vmatmul.f32.gmra.mxu0 %v8199
        %v8304 = vpop.f32.mrf.mxu0
        %v8305 = vadd.f32 %v8252, %v8304
        %8306 = vmatmul.f32.gmra.mxu0 %v8202
        %v8307 = vpop.f32.mrf.mxu0
        %v8308 = vadd.f32 %v8255, %v8307
        %8309 = vmatmul.f32.gmra.mxu0 %v8205
        %v8310 = vpop.f32.mrf.mxu0
        %v8311 = vadd.f32 %v8258, %v8310
        %8312 = vdwg.mxu0
        %v8313 = vadd.f32 %v8114, %v8278
        %v8314 = vadd.f32 %v8115, %v8281
        %v8315 = vadd.f32 %v8116, %v8284
        %v8316 = vadd.f32 %v8117, %v8287
        %v8317 = vadd.f32 %v8118, %v8290
        %v8318 = vadd.f32 %v8119, %v8293
        %v8319 = vadd.f32 %v8120, %v8296
        %v8320 = vadd.f32 %v8121, %v8299
        %v8321 = vadd.f32 %v8122, %v8302
        %v8322 = vadd.f32 %v8123, %v8305
        %v8323 = vadd.f32 %v8124, %v8308
        %v8324 = vadd.f32 %v8125, %v8311
        %v8325 = vld [vmem:[%s6] sm:$0x1]
        %v8327 = vperm.slane %v8325, 0
        %v8329 = vadd.f32 %v8313, %v8327
        %v8330 = vadd.f32 %v8314, %v8327
        %v8331 = vadd.f32 %v8315, %v8327
        %v8332 = vadd.f32 %v8316, %v8327
        %v8333 = vadd.f32 %v8317, %v8327
        %v8334 = vadd.f32 %v8318, %v8327
        %v8335 = vadd.f32 %v8319, %v8327
        %v8336 = vadd.f32 %v8320, %v8327
        %v8337 = vadd.f32 %v8321, %v8327
        %v8338 = vadd.f32 %v8322, %v8327
        %v8339 = vadd.f32 %v8323, %v8327
        %v8340 = vadd.f32 %v8324, %v8327
        %vm8341 = vcmask 523264
        %8342 = vst.msk [vmem:[#allocation3] sm:$0xff] %vm8341, %v8329
        %8343 = vst.msk [vmem:[#allocation3 + $0x8] sm:$0xff] %vm8341, %v8330
        %8344 = vst.msk [vmem:[#allocation3 + $0x10] sm:$0xff] %vm8341, %v8331
        %8345 = vst.msk [vmem:[#allocation3 + $0x18] sm:$0xff] %vm8341, %v8332
        %8346 = vst.msk [vmem:[#allocation3 + $0x20] sm:$0xff] %vm8341, %v8333
        %8347 = vst.msk [vmem:[#allocation3 + $0x28] sm:$0xff] %vm8341, %v8334
        %8348 = vst.msk [vmem:[#allocation3 + $0x30] sm:$0xff] %vm8341, %v8335
        %8349 = vst.msk [vmem:[#allocation3 + $0x38] sm:$0xff] %vm8341, %v8336
        %8350 = vst.msk [vmem:[#allocation3 + $0x40] sm:$0xff] %vm8341, %v8337
        %8351 = vst.msk [vmem:[#allocation3 + $0x48] sm:$0xff] %vm8341, %v8338
        %8352 = vst.msk [vmem:[#allocation3 + $0x50] sm:$0xff] %vm8341, %v8339
        %8353 = vst.msk [vmem:[#allocation3 + $0x58] sm:$0xff] %vm8341, %v8340
        %v8354 = vld [vmem:[#allocation3] sm:$0xff]
        %v8355 = vld [vmem:[#allocation3 + $0xc] sm:$0xff]
        %v8356 = vmax.f32 %v8354, %v8355
        %vm8357 = vcmask 64512
        %v8358 = vsel %vm8357, %v1592, 0
        %8360 = vmatpush.msra.mxu0 0.0
        %8361 = vmatpush.msra.mxu0 0.0
        %8362 = vmatpush.msra.mxu0 0.0
        %8363 = vmatpush.msra.mxu0 0.0
        %8364 = vmatpush.msra.mxu0 0.0
        %8365 = vmatpush.msra.mxu0 0.0
        %8366 = vmatpush.msra.mxu0 0.0
        %8367 = vmatpush.msra.mxu0 0.0
        %8368 = vmatpush.msra.mxu0 0.0
        %8369 = vmatpush.msra.mxu0 0.0
        %8370 = vmatpush.msra.mxu0 0.0
        %8371 = vmatpush.msra.mxu0 0.0
        %8372 = vmatpush.msra.mxu0 0.0
        %8373 = vmatpush.msra.mxu0 0.0
        %8374 = vmatpush.msra.mxu0 0.0
        %8375 = vmatpush.msra.mxu0 %v8356
        %8376 = vmatmul.f32.gmra.mxu0 %v8358
        %v8377 = vpop.f32.mrf.mxu0
        %v8378 = vadd.f32 0.0, %v8377
        %8379 = vdwg.mxu0
        %v8380 = vsel %vm8357, %v1600, 0
        %8382 = vmatpush.msra.mxu0 0.0
        %8383 = vmatpush.msra.mxu0 0.0
        %8384 = vmatpush.msra.mxu0 0.0
        %8385 = vmatpush.msra.mxu0 0.0
        %8386 = vmatpush.msra.mxu0 0.0
        %8387 = vmatpush.msra.mxu0 0.0
        %8388 = vmatpush.msra.mxu0 0.0
        %8389 = vmatpush.msra.mxu0 0.0
        %8390 = vmatpush.msra.mxu0 0.0
        %8391 = vmatpush.msra.mxu0 0.0
        %8392 = vmatpush.msra.mxu0 0.0
        %8393 = vmatpush.msra.mxu0 0.0
        %8394 = vmatpush.msra.mxu0 0.0
        %8395 = vmatpush.msra.mxu0 0.0
        %8396 = vmatpush.msra.mxu0 0.0
        %8397 = vmatpush.msra.mxu0 %v8356
        %8398 = vmatmul.f32.gmra.mxu0 %v8380
        %v8399 = vpop.f32.mrf.mxu0
        %v8400 = vadd.f32 0.0, %v8399
        %8401 = vdwg.mxu0
        %v8402 = vmax.f32 %v8378, %v8400
        %vm8403 = vcmask 519168
        %8404 = vst.msk [vmem:[#allocation6] sm:$0xf] %vm8403, %v8402
        %v8405 = vld [vmem:[#allocation3 + $0x18] sm:$0xff]
        %v8406 = vld [vmem:[#allocation3 + $0x24] sm:$0xff]
        %v8407 = vmax.f32 %v8405, %v8406
        %8408 = vmatpush.msra.mxu0 0.0
        %8409 = vmatpush.msra.mxu0 0.0
        %8410 = vmatpush.msra.mxu0 0.0
        %8411 = vmatpush.msra.mxu0 0.0
        %8412 = vmatpush.msra.mxu0 0.0
        %8413 = vmatpush.msra.mxu0 0.0
        %8414 = vmatpush.msra.mxu0 0.0
        %8415 = vmatpush.msra.mxu0 0.0
        %8416 = vmatpush.msra.mxu0 0.0
        %8417 = vmatpush.msra.mxu0 0.0
        %8418 = vmatpush.msra.mxu0 0.0
        %8419 = vmatpush.msra.mxu0 0.0
        %8420 = vmatpush.msra.mxu0 0.0
        %8421 = vmatpush.msra.mxu0 0.0
        %8422 = vmatpush.msra.mxu0 0.0
        %8423 = vmatpush.msra.mxu0 %v8407
        %8424 = vmatmul.f32.gmra.mxu0 %v8358
        %v8425 = vpop.f32.mrf.mxu0
        %v8426 = vadd.f32 0.0, %v8425
        %8427 = vdwg.mxu0
        %8428 = vmatpush.msra.mxu0 0.0
        %8429 = vmatpush.msra.mxu0 0.0
        %8430 = vmatpush.msra.mxu0 0.0
        %8431 = vmatpush.msra.mxu0 0.0
        %8432 = vmatpush.msra.mxu0 0.0
        %8433 = vmatpush.msra.mxu0 0.0
        %8434 = vmatpush.msra.mxu0 0.0
        %8435 = vmatpush.msra.mxu0 0.0
        %8436 = vmatpush.msra.mxu0 0.0
        %8437 = vmatpush.msra.mxu0 0.0
        %8438 = vmatpush.msra.mxu0 0.0
        %8439 = vmatpush.msra.mxu0 0.0
        %8440 = vmatpush.msra.mxu0 0.0
        %8441 = vmatpush.msra.mxu0 0.0
        %8442 = vmatpush.msra.mxu0 0.0
        %8443 = vmatpush.msra.mxu0 %v8407
        %8444 = vmatmul.f32.gmra.mxu0 %v8380
        %v8445 = vpop.f32.mrf.mxu0
        %v8446 = vadd.f32 0.0, %v8445
        %8447 = vdwg.mxu0
        %v8448 = vmax.f32 %v8426, %v8446
        %8449 = vst.msk [vmem:[#allocation6 + $0x4] sm:$0xf] %vm8403, %v8448
        %v8450 = vld [vmem:[#allocation3 + $0x30] sm:$0xff]
        %v8451 = vld [vmem:[#allocation3 + $0x3c] sm:$0xff]
        %v8452 = vmax.f32 %v8450, %v8451
        %8453 = vmatpush.msra.mxu0 0.0
        %8454 = vmatpush.msra.mxu0 0.0
        %8455 = vmatpush.msra.mxu0 0.0
        %8456 = vmatpush.msra.mxu0 0.0
        %8457 = vmatpush.msra.mxu0 0.0
        %8458 = vmatpush.msra.mxu0 0.0
        %8459 = vmatpush.msra.mxu0 0.0
        %8460 = vmatpush.msra.mxu0 0.0
        %8461 = vmatpush.msra.mxu0 0.0
        %8462 = vmatpush.msra.mxu0 0.0
        %8463 = vmatpush.msra.mxu0 0.0
        %8464 = vmatpush.msra.mxu0 0.0
        %8465 = vmatpush.msra.mxu0 0.0
        %8466 = vmatpush.msra.mxu0 0.0
        %8467 = vmatpush.msra.mxu0 0.0
        %8468 = vmatpush.msra.mxu0 %v8452
        %8469 = vmatmul.f32.gmra.mxu0 %v8358
        %v8470 = vpop.f32.mrf.mxu0
        %v8471 = vadd.f32 0.0, %v8470
        %8472 = vdwg.mxu0
        %8473 = vmatpush.msra.mxu0 0.0
        %8474 = vmatpush.msra.mxu0 0.0
        %8475 = vmatpush.msra.mxu0 0.0
        %8476 = vmatpush.msra.mxu0 0.0
        %8477 = vmatpush.msra.mxu0 0.0
        %8478 = vmatpush.msra.mxu0 0.0
        %8479 = vmatpush.msra.mxu0 0.0
        %8480 = vmatpush.msra.mxu0 0.0
        %8481 = vmatpush.msra.mxu0 0.0
        %8482 = vmatpush.msra.mxu0 0.0
        %8483 = vmatpush.msra.mxu0 0.0
        %8484 = vmatpush.msra.mxu0 0.0
        %8485 = vmatpush.msra.mxu0 0.0
        %8486 = vmatpush.msra.mxu0 0.0
        %8487 = vmatpush.msra.mxu0 0.0
        %8488 = vmatpush.msra.mxu0 %v8452
        %8489 = vmatmul.f32.gmra.mxu0 %v8380
        %v8490 = vpop.f32.mrf.mxu0
        %v8491 = vadd.f32 0.0, %v8490
        %8492 = vdwg.mxu0
        %v8493 = vmax.f32 %v8471, %v8491
        %8494 = vst.msk [vmem:[#allocation6 + $0x8] sm:$0xf] %vm8403, %v8493
        %v8495 = vld [vmem:[#allocation3 + $0x48] sm:$0xff]
        %v8496 = vld [vmem:[#allocation3 + $0x54] sm:$0xff]
        %v8497 = vmax.f32 %v8495, %v8496
        %8498 = vmatpush.msra.mxu0 0.0
        %8499 = vmatpush.msra.mxu0 0.0
        %8500 = vmatpush.msra.mxu0 0.0
        %8501 = vmatpush.msra.mxu0 0.0
        %8502 = vmatpush.msra.mxu0 0.0
        %8503 = vmatpush.msra.mxu0 0.0
        %8504 = vmatpush.msra.mxu0 0.0
        %8505 = vmatpush.msra.mxu0 0.0
        %8506 = vmatpush.msra.mxu0 0.0
        %8507 = vmatpush.msra.mxu0 0.0
        %8508 = vmatpush.msra.mxu0 0.0
        %8509 = vmatpush.msra.mxu0 0.0
        %8510 = vmatpush.msra.mxu0 0.0
        %8511 = vmatpush.msra.mxu0 0.0
        %8512 = vmatpush.msra.mxu0 0.0
        %8513 = vmatpush.msra.mxu0 %v8497
        %8514 = vmatmul.f32.gmra.mxu0 %v8358
        %v8515 = vpop.f32.mrf.mxu0
        %v8516 = vadd.f32 0.0, %v8515
        %8517 = vdwg.mxu0
        %8518 = vmatpush.msra.mxu0 0.0
        %8519 = vmatpush.msra.mxu0 0.0
        %8520 = vmatpush.msra.mxu0 0.0
        %8521 = vmatpush.msra.mxu0 0.0
        %8522 = vmatpush.msra.mxu0 0.0
        %8523 = vmatpush.msra.mxu0 0.0
        %8524 = vmatpush.msra.mxu0 0.0
        %8525 = vmatpush.msra.mxu0 0.0
        %8526 = vmatpush.msra.mxu0 0.0
        %8527 = vmatpush.msra.mxu0 0.0
        %8528 = vmatpush.msra.mxu0 0.0
        %8529 = vmatpush.msra.mxu0 0.0
        %8530 = vmatpush.msra.mxu0 0.0
        %8531 = vmatpush.msra.mxu0 0.0
        %8532 = vmatpush.msra.mxu0 0.0
        %8533 = vmatpush.msra.mxu0 %v8497
        %8534 = vmatmul.f32.gmra.mxu0 %v8380
        %v8535 = vpop.f32.mrf.mxu0
        %v8536 = vadd.f32 0.0, %v8535
        %8537 = vdwg.mxu0
        %v8538 = vmax.f32 %v8516, %v8536
        %8539 = vst.msk [vmem:[#allocation6 + $0xc] sm:$0xf] %vm8403, %v8538
        %v8540 = vld [vmem:[%s8] sm:$0x1]
        %v8541 = vld [vmem:[#allocation6] sm:$0x1]
        %v8542 = vld [vmem:[%s7] sm:$0xff]
        %v8543 = vld [vmem:[%s7 + $0x8] sm:$0xff]
        %v8544 = vld [vmem:[%s7 + $0x10] sm:$0xff]
        %v8545 = vld [vmem:[%s7 + $0x18] sm:$0xff]
        %v8546 = vld [vmem:[%s7 + $0x20] sm:$0xff]
        %v8547 = vld [vmem:[%s7 + $0x28] sm:$0xff]
        %v8548 = vld [vmem:[%s7 + $0x30] sm:$0xff]
        %v8549 = vld [vmem:[%s7 + $0x38] sm:$0xff]
        %v8551 = vsel %vm8341, %v8541, 0
        %8553 = vmatpush.msra.mxu0 0.0
        %8554 = vmatpush.msra.mxu0 0.0
        %8555 = vmatpush.msra.mxu0 0.0
        %8556 = vmatpush.msra.mxu0 0.0
        %8557 = vmatpush.msra.mxu0 0.0
        %8558 = vmatpush.msra.mxu0 0.0
        %8559 = vmatpush.msra.mxu0 0.0
        %8560 = vmatpush.msra.mxu0 0.0
        %8561 = vmatpush.msra.mxu0 %v8549
        %8562 = vmatpush.msra.mxu0 %v8548
        %8563 = vmatpush.msra.mxu0 %v8547
        %8564 = vmatpush.msra.mxu0 %v8546
        %8565 = vmatpush.msra.mxu0 %v8545
        %8566 = vmatpush.msra.mxu0 %v8544
        %8567 = vmatpush.msra.mxu0 %v8543
        %8568 = vmatpush.msra.mxu0 %v8542
        %8569 = vmatmul.f32.gmra.mxu0 %v8551
        %v8570 = vpop.f32.mrf.mxu0
        %v8571 = vadd.f32 0.0, %v8570
        %8572 = vdwg.mxu0
        %v8573 = vadd.f32 %v8540, %v8571
        %v8574 = vld [vmem:[#allocation6 + $0x1] sm:$0x1]
        %s8575 = scalar_lea.vmem %s7, 64
        %v8576 = vld [vmem:[%s8575] sm:$0xff]
        %v8577 = vld [vmem:[%s8575 + $0x8] sm:$0xff]
        %v8578 = vld [vmem:[%s8575 + $0x10] sm:$0xff]
        %v8579 = vld [vmem:[%s8575 + $0x18] sm:$0xff]
        %v8580 = vld [vmem:[%s8575 + $0x20] sm:$0xff]
        %v8581 = vld [vmem:[%s8575 + $0x28] sm:$0xff]
        %v8582 = vld [vmem:[%s8575 + $0x30] sm:$0xff]
        %v8583 = vld [vmem:[%s8575 + $0x38] sm:$0xff]
        %v8585 = vsel %vm8341, %v8574, 0
        %8587 = vmatpush.msra.mxu0 0.0
        %8588 = vmatpush.msra.mxu0 0.0
        %8589 = vmatpush.msra.mxu0 0.0
        %8590 = vmatpush.msra.mxu0 0.0
        %8591 = vmatpush.msra.mxu0 0.0
        %8592 = vmatpush.msra.mxu0 0.0
        %8593 = vmatpush.msra.mxu0 0.0
        %8594 = vmatpush.msra.mxu0 0.0
        %8595 = vmatpush.msra.mxu0 %v8583
        %8596 = vmatpush.msra.mxu0 %v8582
        %8597 = vmatpush.msra.mxu0 %v8581
        %8598 = vmatpush.msra.mxu0 %v8580
        %8599 = vmatpush.msra.mxu0 %v8579
        %8600 = vmatpush.msra.mxu0 %v8578
        %8601 = vmatpush.msra.mxu0 %v8577
        %8602 = vmatpush.msra.mxu0 %v8576
        %8603 = vmatmul.f32.gmra.mxu0 %v8585
        %v8604 = vpop.f32.mrf.mxu0
        %v8605 = vadd.f32 0.0, %v8604
        %8606 = vdwg.mxu0
        %v8607 = vadd.f32 %v8573, %v8605
        %v8608 = vld [vmem:[#allocation6 + $0x2] sm:$0x1]
        %s8609 = scalar_lea.vmem %s7, 128
        %v8610 = vld [vmem:[%s8609] sm:$0xff]
        %v8611 = vld [vmem:[%s8609 + $0x8] sm:$0xff]
        %v8612 = vld [vmem:[%s8609 + $0x10] sm:$0xff]
        %v8613 = vld [vmem:[%s8609 + $0x18] sm:$0xff]
        %v8614 = vld [vmem:[%s8609 + $0x20] sm:$0xff]
        %v8615 = vld [vmem:[%s8609 + $0x28] sm:$0xff]
        %v8616 = vld [vmem:[%s8609 + $0x30] sm:$0xff]
        %v8617 = vld [vmem:[%s8609 + $0x38] sm:$0xff]
        %v8619 = vsel %vm8341, %v8608, 0
        %8621 = vmatpush.msra.mxu0 0.0
        %8622 = vmatpush.msra.mxu0 0.0
        %8623 = vmatpush.msra.mxu0 0.0
        %8624 = vmatpush.msra.mxu0 0.0
        %8625 = vmatpush.msra.mxu0 0.0
        %8626 = vmatpush.msra.mxu0 0.0
        %8627 = vmatpush.msra.mxu0 0.0
        %8628 = vmatpush.msra.mxu0 0.0
        %8629 = vmatpush.msra.mxu0 %v8617
        %8630 = vmatpush.msra.mxu0 %v8616
        %8631 = vmatpush.msra.mxu0 %v8615
        %8632 = vmatpush.msra.mxu0 %v8614
        %8633 = vmatpush.msra.mxu0 %v8613
        %8634 = vmatpush.msra.mxu0 %v8612
        %8635 = vmatpush.msra.mxu0 %v8611
        %8636 = vmatpush.msra.mxu0 %v8610
        %8637 = vmatmul.f32.gmra.mxu0 %v8619
        %v8638 = vpop.f32.mrf.mxu0
        %v8639 = vadd.f32 0.0, %v8638
        %8640 = vdwg.mxu0
        %v8641 = vadd.f32 %v8607, %v8639
        %v8642 = vld [vmem:[#allocation6 + $0x3] sm:$0x1]
        %s8643 = scalar_lea.vmem %s7, 192
        %v8644 = vld [vmem:[%s8643] sm:$0xff]
        %v8645 = vld [vmem:[%s8643 + $0x8] sm:$0xff]
        %v8646 = vld [vmem:[%s8643 + $0x10] sm:$0xff]
        %v8647 = vld [vmem:[%s8643 + $0x18] sm:$0xff]
        %v8648 = vld [vmem:[%s8643 + $0x20] sm:$0xff]
        %v8649 = vld [vmem:[%s8643 + $0x28] sm:$0xff]
        %v8650 = vld [vmem:[%s8643 + $0x30] sm:$0xff]
        %v8651 = vld [vmem:[%s8643 + $0x38] sm:$0xff]
        %v8653 = vsel %vm8341, %v8642, 0
        %8655 = vmatpush.msra.mxu0 0.0
        %8656 = vmatpush.msra.mxu0 0.0
        %8657 = vmatpush.msra.mxu0 0.0
        %8658 = vmatpush.msra.mxu0 0.0
        %8659 = vmatpush.msra.mxu0 0.0
        %8660 = vmatpush.msra.mxu0 0.0
        %8661 = vmatpush.msra.mxu0 0.0
        %8662 = vmatpush.msra.mxu0 0.0
        %8663 = vmatpush.msra.mxu0 %v8651
        %8664 = vmatpush.msra.mxu0 %v8650
        %8665 = vmatpush.msra.mxu0 %v8649
        %8666 = vmatpush.msra.mxu0 %v8648
        %8667 = vmatpush.msra.mxu0 %v8647
        %8668 = vmatpush.msra.mxu0 %v8646
        %8669 = vmatpush.msra.mxu0 %v8645
        %8670 = vmatpush.msra.mxu0 %v8644
        %8671 = vmatmul.f32.gmra.mxu0 %v8653
        %v8672 = vpop.f32.mrf.mxu0
        %v8673 = vadd.f32 0.0, %v8672
        %8674 = vdwg.mxu0
        %v8675 = vadd.f32 %v8641, %v8673
        %v8676 = vld [vmem:[#allocation6 + $0x4] sm:$0x1]
        %s8677 = scalar_lea.vmem %s7, 256
        %v8678 = vld [vmem:[%s8677] sm:$0xff]
        %v8679 = vld [vmem:[%s8677 + $0x8] sm:$0xff]
        %v8680 = vld [vmem:[%s8677 + $0x10] sm:$0xff]
        %v8681 = vld [vmem:[%s8677 + $0x18] sm:$0xff]
        %v8682 = vld [vmem:[%s8677 + $0x20] sm:$0xff]
        %v8683 = vld [vmem:[%s8677 + $0x28] sm:$0xff]
        %v8684 = vld [vmem:[%s8677 + $0x30] sm:$0xff]
        %v8685 = vld [vmem:[%s8677 + $0x38] sm:$0xff]
        %v8687 = vsel %vm8341, %v8676, 0
        %8689 = vmatpush.msra.mxu0 0.0
        %8690 = vmatpush.msra.mxu0 0.0
        %8691 = vmatpush.msra.mxu0 0.0
        %8692 = vmatpush.msra.mxu0 0.0
        %8693 = vmatpush.msra.mxu0 0.0
        %8694 = vmatpush.msra.mxu0 0.0
        %8695 = vmatpush.msra.mxu0 0.0
        %8696 = vmatpush.msra.mxu0 0.0
        %8697 = vmatpush.msra.mxu0 %v8685
        %8698 = vmatpush.msra.mxu0 %v8684
        %8699 = vmatpush.msra.mxu0 %v8683
        %8700 = vmatpush.msra.mxu0 %v8682
        %8701 = vmatpush.msra.mxu0 %v8681
        %8702 = vmatpush.msra.mxu0 %v8680
        %8703 = vmatpush.msra.mxu0 %v8679
        %8704 = vmatpush.msra.mxu0 %v8678
        %8705 = vmatmul.f32.gmra.mxu0 %v8687
        %v8706 = vpop.f32.mrf.mxu0
        %v8707 = vadd.f32 0.0, %v8706
        %8708 = vdwg.mxu0
        %v8709 = vadd.f32 %v8675, %v8707
        %v8710 = vld [vmem:[#allocation6 + $0x5] sm:$0x1]
        %s8711 = scalar_lea.vmem %s7, 320
        %v8712 = vld [vmem:[%s8711] sm:$0xff]
        %v8713 = vld [vmem:[%s8711 + $0x8] sm:$0xff]
        %v8714 = vld [vmem:[%s8711 + $0x10] sm:$0xff]
        %v8715 = vld [vmem:[%s8711 + $0x18] sm:$0xff]
        %v8716 = vld [vmem:[%s8711 + $0x20] sm:$0xff]
        %v8717 = vld [vmem:[%s8711 + $0x28] sm:$0xff]
        %v8718 = vld [vmem:[%s8711 + $0x30] sm:$0xff]
        %v8719 = vld [vmem:[%s8711 + $0x38] sm:$0xff]
        %v8721 = vsel %vm8341, %v8710, 0
        %8723 = vmatpush.msra.mxu0 0.0
        %8724 = vmatpush.msra.mxu0 0.0
        %8725 = vmatpush.msra.mxu0 0.0
        %8726 = vmatpush.msra.mxu0 0.0
        %8727 = vmatpush.msra.mxu0 0.0
        %8728 = vmatpush.msra.mxu0 0.0
        %8729 = vmatpush.msra.mxu0 0.0
        %8730 = vmatpush.msra.mxu0 0.0
        %8731 = vmatpush.msra.mxu0 %v8719
        %8732 = vmatpush.msra.mxu0 %v8718
        %8733 = vmatpush.msra.mxu0 %v8717
        %8734 = vmatpush.msra.mxu0 %v8716
        %8735 = vmatpush.msra.mxu0 %v8715
        %8736 = vmatpush.msra.mxu0 %v8714
        %8737 = vmatpush.msra.mxu0 %v8713
        %8738 = vmatpush.msra.mxu0 %v8712
        %8739 = vmatmul.f32.gmra.mxu0 %v8721
        %v8740 = vpop.f32.mrf.mxu0
        %v8741 = vadd.f32 0.0, %v8740
        %8742 = vdwg.mxu0
        %v8743 = vadd.f32 %v8709, %v8741
        %v8744 = vld [vmem:[#allocation6 + $0x6] sm:$0x1]
        %s8745 = scalar_lea.vmem %s7, 384
        %v8746 = vld [vmem:[%s8745] sm:$0xff]
        %v8747 = vld [vmem:[%s8745 + $0x8] sm:$0xff]
        %v8748 = vld [vmem:[%s8745 + $0x10] sm:$0xff]
        %v8749 = vld [vmem:[%s8745 + $0x18] sm:$0xff]
        %v8750 = vld [vmem:[%s8745 + $0x20] sm:$0xff]
        %v8751 = vld [vmem:[%s8745 + $0x28] sm:$0xff]
        %v8752 = vld [vmem:[%s8745 + $0x30] sm:$0xff]
        %v8753 = vld [vmem:[%s8745 + $0x38] sm:$0xff]
        %v8755 = vsel %vm8341, %v8744, 0
        %8757 = vmatpush.msra.mxu0 0.0
        %8758 = vmatpush.msra.mxu0 0.0
        %8759 = vmatpush.msra.mxu0 0.0
        %8760 = vmatpush.msra.mxu0 0.0
        %8761 = vmatpush.msra.mxu0 0.0
        %8762 = vmatpush.msra.mxu0 0.0
        %8763 = vmatpush.msra.mxu0 0.0
        %8764 = vmatpush.msra.mxu0 0.0
        %8765 = vmatpush.msra.mxu0 %v8753
        %8766 = vmatpush.msra.mxu0 %v8752
        %8767 = vmatpush.msra.mxu0 %v8751
        %8768 = vmatpush.msra.mxu0 %v8750
        %8769 = vmatpush.msra.mxu0 %v8749
        %8770 = vmatpush.msra.mxu0 %v8748
        %8771 = vmatpush.msra.mxu0 %v8747
        %8772 = vmatpush.msra.mxu0 %v8746
        %8773 = vmatmul.f32.gmra.mxu0 %v8755
        %v8774 = vpop.f32.mrf.mxu0
        %v8775 = vadd.f32 0.0, %v8774
        %8776 = vdwg.mxu0
        %v8777 = vadd.f32 %v8743, %v8775
        %v8778 = vld [vmem:[#allocation6 + $0x7] sm:$0x1]
        %s8779 = scalar_lea.vmem %s7, 448
        %v8780 = vld [vmem:[%s8779] sm:$0xff]
        %v8781 = vld [vmem:[%s8779 + $0x8] sm:$0xff]
        %v8782 = vld [vmem:[%s8779 + $0x10] sm:$0xff]
        %v8783 = vld [vmem:[%s8779 + $0x18] sm:$0xff]
        %v8784 = vld [vmem:[%s8779 + $0x20] sm:$0xff]
        %v8785 = vld [vmem:[%s8779 + $0x28] sm:$0xff]
        %v8786 = vld [vmem:[%s8779 + $0x30] sm:$0xff]
        %v8787 = vld [vmem:[%s8779 + $0x38] sm:$0xff]
        %v8789 = vsel %vm8341, %v8778, 0
        %8791 = vmatpush.msra.mxu0 0.0
        %8792 = vmatpush.msra.mxu0 0.0
        %8793 = vmatpush.msra.mxu0 0.0
        %8794 = vmatpush.msra.mxu0 0.0
        %8795 = vmatpush.msra.mxu0 0.0
        %8796 = vmatpush.msra.mxu0 0.0
        %8797 = vmatpush.msra.mxu0 0.0
        %8798 = vmatpush.msra.mxu0 0.0
        %8799 = vmatpush.msra.mxu0 %v8787
        %8800 = vmatpush.msra.mxu0 %v8786
        %8801 = vmatpush.msra.mxu0 %v8785
        %8802 = vmatpush.msra.mxu0 %v8784
        %8803 = vmatpush.msra.mxu0 %v8783
        %8804 = vmatpush.msra.mxu0 %v8782
        %8805 = vmatpush.msra.mxu0 %v8781
        %8806 = vmatpush.msra.mxu0 %v8780
        %8807 = vmatmul.f32.gmra.mxu0 %v8789
        %v8808 = vpop.f32.mrf.mxu0
        %v8809 = vadd.f32 0.0, %v8808
        %8810 = vdwg.mxu0
        %v8811 = vadd.f32 %v8777, %v8809
        %v8812 = vld [vmem:[#allocation6 + $0x8] sm:$0x1]
        %s8813 = scalar_lea.vmem %s7, 512
        %v8814 = vld [vmem:[%s8813] sm:$0xff]
        %v8815 = vld [vmem:[%s8813 + $0x8] sm:$0xff]
        %v8816 = vld [vmem:[%s8813 + $0x10] sm:$0xff]
        %v8817 = vld [vmem:[%s8813 + $0x18] sm:$0xff]
        %v8818 = vld [vmem:[%s8813 + $0x20] sm:$0xff]
        %v8819 = vld [vmem:[%s8813 + $0x28] sm:$0xff]
        %v8820 = vld [vmem:[%s8813 + $0x30] sm:$0xff]
        %v8821 = vld [vmem:[%s8813 + $0x38] sm:$0xff]
        %v8823 = vsel %vm8341, %v8812, 0
        %8825 = vmatpush.msra.mxu0 0.0
        %8826 = vmatpush.msra.mxu0 0.0
        %8827 = vmatpush.msra.mxu0 0.0
        %8828 = vmatpush.msra.mxu0 0.0
        %8829 = vmatpush.msra.mxu0 0.0
        %8830 = vmatpush.msra.mxu0 0.0
        %8831 = vmatpush.msra.mxu0 0.0
        %8832 = vmatpush.msra.mxu0 0.0
        %8833 = vmatpush.msra.mxu0 %v8821
        %8834 = vmatpush.msra.mxu0 %v8820
        %8835 = vmatpush.msra.mxu0 %v8819
        %8836 = vmatpush.msra.mxu0 %v8818
        %8837 = vmatpush.msra.mxu0 %v8817
        %8838 = vmatpush.msra.mxu0 %v8816
        %8839 = vmatpush.msra.mxu0 %v8815
        %8840 = vmatpush.msra.mxu0 %v8814
        %8841 = vmatmul.f32.gmra.mxu0 %v8823
        %v8842 = vpop.f32.mrf.mxu0
        %v8843 = vadd.f32 0.0, %v8842
        %8844 = vdwg.mxu0
        %v8845 = vadd.f32 %v8811, %v8843
        %v8846 = vld [vmem:[#allocation6 + $0x9] sm:$0x1]
        %s8847 = scalar_lea.vmem %s7, 576
        %v8848 = vld [vmem:[%s8847] sm:$0xff]
        %v8849 = vld [vmem:[%s8847 + $0x8] sm:$0xff]
        %v8850 = vld [vmem:[%s8847 + $0x10] sm:$0xff]
        %v8851 = vld [vmem:[%s8847 + $0x18] sm:$0xff]
        %v8852 = vld [vmem:[%s8847 + $0x20] sm:$0xff]
        %v8853 = vld [vmem:[%s8847 + $0x28] sm:$0xff]
        %v8854 = vld [vmem:[%s8847 + $0x30] sm:$0xff]
        %v8855 = vld [vmem:[%s8847 + $0x38] sm:$0xff]
        %v8857 = vsel %vm8341, %v8846, 0
        %8859 = vmatpush.msra.mxu0 0.0
        %8860 = vmatpush.msra.mxu0 0.0
        %8861 = vmatpush.msra.mxu0 0.0
        %8862 = vmatpush.msra.mxu0 0.0
        %8863 = vmatpush.msra.mxu0 0.0
        %8864 = vmatpush.msra.mxu0 0.0
        %8865 = vmatpush.msra.mxu0 0.0
        %8866 = vmatpush.msra.mxu0 0.0
        %8867 = vmatpush.msra.mxu0 %v8855
        %8868 = vmatpush.msra.mxu0 %v8854
        %8869 = vmatpush.msra.mxu0 %v8853
        %8870 = vmatpush.msra.mxu0 %v8852
        %8871 = vmatpush.msra.mxu0 %v8851
        %8872 = vmatpush.msra.mxu0 %v8850
        %8873 = vmatpush.msra.mxu0 %v8849
        %8874 = vmatpush.msra.mxu0 %v8848
        %8875 = vmatmul.f32.gmra.mxu0 %v8857
        %v8876 = vpop.f32.mrf.mxu0
        %v8877 = vadd.f32 0.0, %v8876
        %8878 = vdwg.mxu0
        %v8879 = vadd.f32 %v8845, %v8877
        %v8880 = vld [vmem:[#allocation6 + $0xa] sm:$0x1]
        %s8881 = scalar_lea.vmem %s7, 640
        %v8882 = vld [vmem:[%s8881] sm:$0xff]
        %v8883 = vld [vmem:[%s8881 + $0x8] sm:$0xff]
        %v8884 = vld [vmem:[%s8881 + $0x10] sm:$0xff]
        %v8885 = vld [vmem:[%s8881 + $0x18] sm:$0xff]
        %v8886 = vld [vmem:[%s8881 + $0x20] sm:$0xff]
        %v8887 = vld [vmem:[%s8881 + $0x28] sm:$0xff]
        %v8888 = vld [vmem:[%s8881 + $0x30] sm:$0xff]
        %v8889 = vld [vmem:[%s8881 + $0x38] sm:$0xff]
        %v8891 = vsel %vm8341, %v8880, 0
        %8893 = vmatpush.msra.mxu0 0.0
        %8894 = vmatpush.msra.mxu0 0.0
        %8895 = vmatpush.msra.mxu0 0.0
        %8896 = vmatpush.msra.mxu0 0.0
        %8897 = vmatpush.msra.mxu0 0.0
        %8898 = vmatpush.msra.mxu0 0.0
        %8899 = vmatpush.msra.mxu0 0.0
        %8900 = vmatpush.msra.mxu0 0.0
        %8901 = vmatpush.msra.mxu0 %v8889
        %8902 = vmatpush.msra.mxu0 %v8888
        %8903 = vmatpush.msra.mxu0 %v8887
        %8904 = vmatpush.msra.mxu0 %v8886
        %8905 = vmatpush.msra.mxu0 %v8885
        %8906 = vmatpush.msra.mxu0 %v8884
        %8907 = vmatpush.msra.mxu0 %v8883
        %8908 = vmatpush.msra.mxu0 %v8882
        %8909 = vmatmul.f32.gmra.mxu0 %v8891
        %v8910 = vpop.f32.mrf.mxu0
        %v8911 = vadd.f32 0.0, %v8910
        %8912 = vdwg.mxu0
        %v8913 = vadd.f32 %v8879, %v8911
        %v8914 = vld [vmem:[#allocation6 + $0xb] sm:$0x1]
        %s8915 = scalar_lea.vmem %s7, 704
        %v8916 = vld [vmem:[%s8915] sm:$0xff]
        %v8917 = vld [vmem:[%s8915 + $0x8] sm:$0xff]
        %v8918 = vld [vmem:[%s8915 + $0x10] sm:$0xff]
        %v8919 = vld [vmem:[%s8915 + $0x18] sm:$0xff]
        %v8920 = vld [vmem:[%s8915 + $0x20] sm:$0xff]
        %v8921 = vld [vmem:[%s8915 + $0x28] sm:$0xff]
        %v8922 = vld [vmem:[%s8915 + $0x30] sm:$0xff]
        %v8923 = vld [vmem:[%s8915 + $0x38] sm:$0xff]
        %v8925 = vsel %vm8341, %v8914, 0
        %8927 = vmatpush.msra.mxu0 0.0
        %8928 = vmatpush.msra.mxu0 0.0
        %8929 = vmatpush.msra.mxu0 0.0
        %8930 = vmatpush.msra.mxu0 0.0
        %8931 = vmatpush.msra.mxu0 0.0
        %8932 = vmatpush.msra.mxu0 0.0
        %8933 = vmatpush.msra.mxu0 0.0
        %8934 = vmatpush.msra.mxu0 0.0
        %8935 = vmatpush.msra.mxu0 %v8923
        %8936 = vmatpush.msra.mxu0 %v8922
        %8937 = vmatpush.msra.mxu0 %v8921
        %8938 = vmatpush.msra.mxu0 %v8920
        %8939 = vmatpush.msra.mxu0 %v8919
        %8940 = vmatpush.msra.mxu0 %v8918
        %8941 = vmatpush.msra.mxu0 %v8917
        %8942 = vmatpush.msra.mxu0 %v8916
        %8943 = vmatmul.f32.gmra.mxu0 %v8925
        %v8944 = vpop.f32.mrf.mxu0
        %v8945 = vadd.f32 0.0, %v8944
        %8946 = vdwg.mxu0
        %v8947 = vadd.f32 %v8913, %v8945
        %v8948 = vld [vmem:[#allocation6 + $0xc] sm:$0x1]
        %s8949 = scalar_lea.vmem %s7, 768
        %v8950 = vld [vmem:[%s8949] sm:$0xff]
        %v8951 = vld [vmem:[%s8949 + $0x8] sm:$0xff]
        %v8952 = vld [vmem:[%s8949 + $0x10] sm:$0xff]
        %v8953 = vld [vmem:[%s8949 + $0x18] sm:$0xff]
        %v8954 = vld [vmem:[%s8949 + $0x20] sm:$0xff]
        %v8955 = vld [vmem:[%s8949 + $0x28] sm:$0xff]
        %v8956 = vld [vmem:[%s8949 + $0x30] sm:$0xff]
        %v8957 = vld [vmem:[%s8949 + $0x38] sm:$0xff]
        %v8959 = vsel %vm8341, %v8948, 0
        %8961 = vmatpush.msra.mxu0 0.0
        %8962 = vmatpush.msra.mxu0 0.0
        %8963 = vmatpush.msra.mxu0 0.0
        %8964 = vmatpush.msra.mxu0 0.0
        %8965 = vmatpush.msra.mxu0 0.0
        %8966 = vmatpush.msra.mxu0 0.0
        %8967 = vmatpush.msra.mxu0 0.0
        %8968 = vmatpush.msra.mxu0 0.0
        %8969 = vmatpush.msra.mxu0 %v8957
        %8970 = vmatpush.msra.mxu0 %v8956
        %8971 = vmatpush.msra.mxu0 %v8955
        %8972 = vmatpush.msra.mxu0 %v8954
        %8973 = vmatpush.msra.mxu0 %v8953
        %8974 = vmatpush.msra.mxu0 %v8952
        %8975 = vmatpush.msra.mxu0 %v8951
        %8976 = vmatpush.msra.mxu0 %v8950
        %8977 = vmatmul.f32.gmra.mxu0 %v8959
        %v8978 = vpop.f32.mrf.mxu0
        %v8979 = vadd.f32 0.0, %v8978
        %8980 = vdwg.mxu0
        %v8981 = vadd.f32 %v8947, %v8979
        %v8982 = vld [vmem:[#allocation6 + $0xd] sm:$0x1]
        %s8983 = scalar_lea.vmem %s7, 832
        %v8984 = vld [vmem:[%s8983] sm:$0xff]
        %v8985 = vld [vmem:[%s8983 + $0x8] sm:$0xff]
        %v8986 = vld [vmem:[%s8983 + $0x10] sm:$0xff]
        %v8987 = vld [vmem:[%s8983 + $0x18] sm:$0xff]
        %v8988 = vld [vmem:[%s8983 + $0x20] sm:$0xff]
        %v8989 = vld [vmem:[%s8983 + $0x28] sm:$0xff]
        %v8990 = vld [vmem:[%s8983 + $0x30] sm:$0xff]
        %v8991 = vld [vmem:[%s8983 + $0x38] sm:$0xff]
        %v8993 = vsel %vm8341, %v8982, 0
        %8995 = vmatpush.msra.mxu0 0.0
        %8996 = vmatpush.msra.mxu0 0.0
        %8997 = vmatpush.msra.mxu0 0.0
        %8998 = vmatpush.msra.mxu0 0.0
        %8999 = vmatpush.msra.mxu0 0.0
        %9000 = vmatpush.msra.mxu0 0.0
        %9001 = vmatpush.msra.mxu0 0.0
        %9002 = vmatpush.msra.mxu0 0.0
        %9003 = vmatpush.msra.mxu0 %v8991
        %9004 = vmatpush.msra.mxu0 %v8990
        %9005 = vmatpush.msra.mxu0 %v8989
        %9006 = vmatpush.msra.mxu0 %v8988
        %9007 = vmatpush.msra.mxu0 %v8987
        %9008 = vmatpush.msra.mxu0 %v8986
        %9009 = vmatpush.msra.mxu0 %v8985
        %9010 = vmatpush.msra.mxu0 %v8984
        %9011 = vmatmul.f32.gmra.mxu0 %v8993
        %v9012 = vpop.f32.mrf.mxu0
        %v9013 = vadd.f32 0.0, %v9012
        %9014 = vdwg.mxu0
        %v9015 = vadd.f32 %v8981, %v9013
        %v9016 = vld [vmem:[#allocation6 + $0xe] sm:$0x1]
        %s9017 = scalar_lea.vmem %s7, 896
        %v9018 = vld [vmem:[%s9017] sm:$0xff]
        %v9019 = vld [vmem:[%s9017 + $0x8] sm:$0xff]
        %v9020 = vld [vmem:[%s9017 + $0x10] sm:$0xff]
        %v9021 = vld [vmem:[%s9017 + $0x18] sm:$0xff]
        %v9022 = vld [vmem:[%s9017 + $0x20] sm:$0xff]
        %v9023 = vld [vmem:[%s9017 + $0x28] sm:$0xff]
        %v9024 = vld [vmem:[%s9017 + $0x30] sm:$0xff]
        %v9025 = vld [vmem:[%s9017 + $0x38] sm:$0xff]
        %v9027 = vsel %vm8341, %v9016, 0
        %9029 = vmatpush.msra.mxu0 0.0
        %9030 = vmatpush.msra.mxu0 0.0
        %9031 = vmatpush.msra.mxu0 0.0
        %9032 = vmatpush.msra.mxu0 0.0
        %9033 = vmatpush.msra.mxu0 0.0
        %9034 = vmatpush.msra.mxu0 0.0
        %9035 = vmatpush.msra.mxu0 0.0
        %9036 = vmatpush.msra.mxu0 0.0
        %9037 = vmatpush.msra.mxu0 %v9025
        %9038 = vmatpush.msra.mxu0 %v9024
        %9039 = vmatpush.msra.mxu0 %v9023
        %9040 = vmatpush.msra.mxu0 %v9022
        %9041 = vmatpush.msra.mxu0 %v9021
        %9042 = vmatpush.msra.mxu0 %v9020
        %9043 = vmatpush.msra.mxu0 %v9019
        %9044 = vmatpush.msra.mxu0 %v9018
        %9045 = vmatmul.f32.gmra.mxu0 %v9027
        %v9046 = vpop.f32.mrf.mxu0
        %v9047 = vadd.f32 0.0, %v9046
        %9048 = vdwg.mxu0
        %v9049 = vadd.f32 %v9015, %v9047
        %v9050 = vld [vmem:[#allocation6 + $0xf] sm:$0x1]
        %s9051 = scalar_lea.vmem %s7, 960
        %v9052 = vld [vmem:[%s9051] sm:$0xff]
        %v9053 = vld [vmem:[%s9051 + $0x8] sm:$0xff]
        %v9054 = vld [vmem:[%s9051 + $0x10] sm:$0xff]
        %v9055 = vld [vmem:[%s9051 + $0x18] sm:$0xff]
        %v9056 = vld [vmem:[%s9051 + $0x20] sm:$0xff]
        %v9057 = vld [vmem:[%s9051 + $0x28] sm:$0xff]
        %v9058 = vld [vmem:[%s9051 + $0x30] sm:$0xff]
        %v9059 = vld [vmem:[%s9051 + $0x38] sm:$0xff]
        %v9061 = vsel %vm8341, %v9050, 0
        %9063 = vmatpush.msra.mxu0 0.0
        %9064 = vmatpush.msra.mxu0 0.0
        %9065 = vmatpush.msra.mxu0 0.0
        %9066 = vmatpush.msra.mxu0 0.0
        %9067 = vmatpush.msra.mxu0 0.0
        %9068 = vmatpush.msra.mxu0 0.0
        %9069 = vmatpush.msra.mxu0 0.0
        %9070 = vmatpush.msra.mxu0 0.0
        %9071 = vmatpush.msra.mxu0 %v9059
        %9072 = vmatpush.msra.mxu0 %v9058
        %9073 = vmatpush.msra.mxu0 %v9057
        %9074 = vmatpush.msra.mxu0 %v9056
        %9075 = vmatpush.msra.mxu0 %v9055
        %9076 = vmatpush.msra.mxu0 %v9054
        %9077 = vmatpush.msra.mxu0 %v9053
        %9078 = vmatpush.msra.mxu0 %v9052
        %9079 = vmatmul.f32.gmra.mxu0 %v9061
        %v9080 = vpop.f32.mrf.mxu0
        %v9081 = vadd.f32 0.0, %v9080
        %9082 = vdwg.mxu0
        %v9083 = vadd.f32 %v9049, %v9081
        %v9084 = vld [vmem:[%s9] sm:$0xff]
        %v9085 = vld [vmem:[%s9 + $0x8] sm:$0xff]
        %v9086 = vld [vmem:[%s9 + $0x10] sm:$0xff]
        %v9087 = vld [vmem:[%s9 + $0x18] sm:$0xff]
        %v9088 = vld [vmem:[%s9 + $0x20] sm:$0xff]
        %v9089 = vld [vmem:[%s9 + $0x28] sm:$0xff]
        %v9090 = vld [vmem:[%s9 + $0x30] sm:$0xff]
        %v9091 = vld [vmem:[%s9 + $0x38] sm:$0xff]
        %v9092 = vld [vmem:[%s10] sm:$0x1]
        %v9094 = vsel %vm8341, %v9083, 0
        %9096 = vmatpush.msra.mxu0 0.0
        %9097 = vmatpush.msra.mxu0 0.0
        %9098 = vmatpush.msra.mxu0 0.0
        %9099 = vmatpush.msra.mxu0 0.0
        %9100 = vmatpush.msra.mxu0 0.0
        %9101 = vmatpush.msra.mxu0 0.0
        %9102 = vmatpush.msra.mxu0 0.0
        %9103 = vmatpush.msra.mxu0 0.0
        %9104 = vmatpush.msra.mxu0 %v9091
        %9105 = vmatpush.msra.mxu0 %v9090
        %9106 = vmatpush.msra.mxu0 %v9089
        %9107 = vmatpush.msra.mxu0 %v9088
        %9108 = vmatpush.msra.mxu0 %v9087
        %9109 = vmatpush.msra.mxu0 %v9086
        %9110 = vmatpush.msra.mxu0 %v9085
        %9111 = vmatpush.msra.mxu0 %v9084
        %9112 = vmatmul.f32.gmra.mxu0 %v9094
        %v9113 = vpop.f32.mrf.mxu0
        %v9114 = vadd.f32 %v9092, %v9113
        %9115 = vdwg.mxu0
        %vm9116 = vcmask 73728
        %9117 = vst.msk [vmem:[%s378] sm:$0x1] %vm9116, %v9114
        %s9118 = sand.u32 %s269, 1
        %s9119 = scalar_lea.sflag [#allocation8], %s9118
        %s9120 = sand.u32 %s269, 1
        %s9121 = scalar_lea.vmem [#allocation7], %s9120
        // Predicated region
        $region65: #{network_forward.1} parent=63 // pred_check
          %p9122 = pneg %p279
        $region66: #{network_forward.1} parent=63 // pred_check_branch
          %9124 = sbr.rel (%p9122) target = $region68
        $region67: #{network_forward.1} parent=63 // pred_region
          %9126 = vsyncadd %s9119, 0
          %s9127 = scalar_lea.hbm %s11, %s25
          %s9129 = sshll.u32 %s9121, 4
          %s9130 = int_to_ptr.vmem [resolvable:$true] %s9129
          %s9131 = sshll.u32 %s9127, 4
          %s9132 = int_to_ptr.hbm [resolvable:$true] %s9131
          %9134 = dma.vmem_to_hbm [thread:$0]  %s9130, 16, %s9132, %s9119
        $region68: #{network_forward.1} parent=63 // pred_fallthru
          _
      $region64: #{network_forward.1} parent=5 // pred_fallthru
        _
      %p9135 = scmp.le.s32.totalorder 2, %s20
      // Predicated region
      $region69: #{network_forward.1} parent=5 // pred_check
        %p9136 = pneg %p9135
      $region70: #{network_forward.1} parent=5 // pred_check_branch
        %9138 = sbr.rel (%p9136) target = $region72
      $region71: #{network_forward.1} parent=5 // pred_region
        %s9139 = ssub.s32 %s20, 2
        // Predicated region
        $region73: #{network_forward.1} parent=71 // pred_check
          %p9140 = pneg %p285
        $region74: #{network_forward.1} parent=71 // pred_check_branch
          %9142 = sbr.rel (%p9140) target = $region76
        $region75: #{network_forward.1} parent=71 // pred_region
          %s9143 = sand.u32 %s270, 1
          %s9144 = scalar_lea.sflag [#allocation8], %s9143
          %s9145 = sand.u32 %s270, 1
          %s9146 = scalar_lea.vmem [#allocation7], %s9145
          %9148 = dma.done %s9144, 16
        $region76: #{network_forward.1} parent=71 // pred_fallthru
          _
      $region72: #{network_forward.1} parent=5 // pred_fallthru
        _
    $region6: #{network_forward.1} parent=1 // loop_footer
      %s24 = sadd.s32 1, %s20
    $region7: #{network_forward.1} parent=1 // loop_footer_branch
      %19 = sbr.rel target = $region3
    $region8: #{network_forward.1} parent=1 // loop_exit
      _
    %9149 = vsyncpa [#allocation8], 1
    %s9150 = scalar_lea.sflag [#allocation8], 1
    %9151 = vsyncpa %s9150, 1

</llo_original>
